<compile_context>
chip_gen: v7x
topology: tpu7x:2x2x1
jax: 0.10.0
libtpu: 0.0.40
codegen_flags: <defaults>
</compile_context>

<pallas_src>
import functools

import jax
import jax.numpy as jnp
from jax.experimental import pallas as pl
from jax.experimental.pallas import tpu as pltpu

C_IN = 2048        # layer4 channels
C_MID = 128        # conv1 output channels
N_POOL = 16        # 4 * 4 pooled positions
N_PAD = 128        # fc2 output padded to a full lane width
ROWS_TARGET = 2048  # target x rows (bt*H*W) per grid step: ~8 MiB bf16 per branch buffer


# ----------------------------------------------------------------------------
# Kernel: fully fused dim_reduce, BOTH branches per grid step.
#   conv1 (1x1 conv == channel matmul) + ReLU -> 4x4 adaptive avg pool -> fc1 -> fc2 -> sigmoid
# Grid: (batch tiles,). All intermediates stay in VMEM/vregs; only the (2, bt, 128)
# sigmoid outputs go back to HBM.
# ----------------------------------------------------------------------------
def _dim_reduce_kernel(x1_ref, x2_ref, w0_ref, b0_ref, w1_ref, b1_ref,
                       w2_ref, b2_ref, out_ref, *, bt, H, W):
    kh, kw = H // 4, W // 4
    inv = 1.0 / float(kh * kw)

    for br, x_ref in enumerate((x1_ref, x2_ref)):          # unrolled: both branches/step
        # conv1 (1x1 conv over channels) + ReLU -- bf16 MXU operands, f32 accum/epilogue.
        # (N=128 half-fills a 256-wide MXU on v6e/v7x; kernel is HBM-bound so that is
        #  not the binding slot -- intentionally left as-is.)
        y = jnp.dot(x_ref[...], w0_ref[br], preferred_element_type=jnp.float32)
        y = jnp.maximum(y + b0_ref[br], 0.0)                # (bt*H*W, 128) f32

        # AdaptiveAvgPool2d((4,4)): each window (i,j) is kh contiguous runs of kw rows
        # -> contiguous slice + sublane reduce (no strided single-row gathers).
        # TODO(synk): assumes H % 4 == 0 and W % 4 == 0 (uniform adaptive windows); the
        #             general torch adaptive windows (e.g. 7x7 layer4) need per-window sizes.
        y3 = y.reshape(bt, H * W, C_MID)
        blocks = []
        for i in range(4):
            for j in range(4):
                s = jnp.zeros((bt, C_MID), jnp.float32)
                for dh in range(kh):
                    r0 = (i * kh + dh) * W + j * kw
                    s = s + jnp.sum(y3[:, r0:r0 + kw, :], axis=1)
                blocks.append((s * inv).astype(jnp.bfloat16))   # (bt, 128)

        # fc1 folded into ONE K=2048 matmul: pooled blocks laid out lane-dense in
        # NHWC (i, j, c) flatten order to match the stored w1 layout.
        fc1_in = jnp.concatenate(blocks, axis=-1)               # (bt, 2048) bf16
        h1 = jnp.dot(fc1_in, w1_ref[br],
                     preferred_element_type=jnp.float32) + b1_ref[br]   # (bt, 128) f32
        # torch forward has NO relu/dropout between fc1 and fc2.

        # fc2 (padded to 128 output lanes) + sigmoid; lane-dense f32 store.
        out = jnp.dot(h1.astype(jnp.bfloat16), w2_ref[br],
                      preferred_element_type=jnp.float32)
        out_ref[br] = jax.nn.sigmoid(out + b2_ref[br])           # (bt, 128)


def _pick_batch_tile(B, H, W, rows_target=ROWS_TARGET):
    """Target ~rows_target bf16 x rows per step; tile must be 8-aligned or cover all of B."""
    bt = max(1, rows_target // (H * W))
    if bt >= B:
        return B                       # whole batch in one grid step (block == full array)
    bt = max(8, (bt // 8) * 8)         # output-block sublane alignment when tiling
    # TODO(synk): for pathologically large H*W (>~rows_target/8) this 8-row floor can
    #             exceed the VMEM target; layer4 feature maps (<=16x16) never hit it.
    return min(bt, B)


def dim_reduce_pair(x1, x2, params, *, B, H, W, bt):
    """x1, x2: (B*H*W, 2048) bf16 layer4 features. Returns (2, B, 128) sigmoid outputs."""
    M, Cin = x1.shape
    n_m = pl.cdiv(B, bt)
    kernel = functools.partial(_dim_reduce_kernel, bt=bt, H=H, W=W)
    return pl.pallas_call(
        kernel,
        grid=(n_m,),
        in_specs=[
            pl.BlockSpec((bt * H * W, Cin), lambda m: (m, 0)),        # x1 tile (bf16)
            pl.BlockSpec((bt * H * W, Cin), lambda m: (m, 0)),        # x2 tile (bf16)
            pl.BlockSpec((2, Cin, C_MID), lambda m: (0, 0, 0)),       # conv1 w (both branches)
            pl.BlockSpec((2, 1, C_MID), lambda m: (0, 0, 0)),         # conv1 b
            pl.BlockSpec((2, N_POOL * C_MID, C_MID), lambda m: (0, 0, 0)),  # fc1 w
            pl.BlockSpec((2, 1, C_MID), lambda m: (0, 0, 0)),         # fc1 b
            pl.BlockSpec((2, C_MID, N_PAD), lambda m: (0, 0, 0)),     # fc2 w (padded)
            pl.BlockSpec((2, 1, N_PAD), lambda m: (0, 0, 0)),         # fc2 b (padded)
        ],
        out_specs=pl.BlockSpec((2, bt, N_PAD), lambda m: (0, m, 0)),
        out_shape=jax.ShapeDtypeStruct((2, B, N_PAD), jnp.float32),
        compiler_params=pltpu.CompilerParams(
            # batch axis parallel (needs n_m >= 2 to use both v7x TensorCores;
            # no effect on single-TC v5e/v6e).
            dimension_semantics=("parallel",),
            # x: 2 branches x 2 pipeline buffers x <=8 MiB bf16 = <=32 MiB, + ~4 MiB
            # weights + ~2 MiB f32 scratch -> fits v7x's 64 MiB physical VMEM; also
            # raises v5e's 16 MiB scoped default.
            vmem_limit_bytes=48 * 1024 * 1024),
    )(x1, x2, params["w0"], params["b0"], params["w1"], params["b1"],
      params["w2"], params["b2"])


# ----------------------------------------------------------------------------
# Distance + BNN_loss: a few KB of work -> plain jnp (XLA fuses it); no extra
# pallas_call launch or (B,128) HBM round-trip.
# ----------------------------------------------------------------------------
def distance_and_loss(out1, out2, label, alpha):
    d = out1 - out2
    # torch: distance = sqrt(mean((out_1 - out_2)^2, dim=1, keepdim=True))
    distance = jnp.sqrt(jnp.mean(d * d, axis=1, keepdims=True))          # (B, 1)
    labels = jnp.reshape(label, (-1, 1)).astype(jnp.float32)
    labels_ = 1.0 - labels
    loss_ = (distance - labels_) ** 2
    pos_loss = jnp.sum(loss_ * labels) / (jnp.sum(labels) + 1e-05)
    neg_loss = jnp.sum(loss_ * labels_) / (jnp.sum(labels_) + 1e-05)
    loss = (pos_loss + alpha * neg_loss) / (1.0 + alpha)
    return loss, pos_loss, neg_loss, distance


# ----------------------------------------------------------------------------
# Parameters (both branches stacked along a leading axis of size 2; MXU weights bf16)
# ----------------------------------------------------------------------------
def init_bnn_params(key, out_dim, n_branches=2):
    ks = jax.random.split(key, 6)
    s = 0.02
    assert out_dim <= N_PAD
    w2 = jax.random.normal(ks[4], (n_branches, C_MID, out_dim), jnp.float32) * s
    b2 = jax.random.normal(ks[5], (n_branches, 1, out_dim), jnp.float32) * s
    w2 = jnp.pad(w2, ((0, 0), (0, 0), (0, N_PAD - out_dim)))             # pad to 128 lanes
    b2 = jnp.pad(b2, ((0, 0), (0, 0), (0, N_PAD - out_dim)))
    return {
        # conv1: 1x1 conv, 2048 -> 128, stored (Cin, Cout) for the channel matmul
        "w0": (jax.random.normal(ks[0], (n_branches, C_IN, C_MID), jnp.float32) * s
               ).astype(jnp.bfloat16),
        "b0": jax.random.normal(ks[1], (n_branches, 1, C_MID), jnp.float32) * s,
        # fc1: 4*4*128 -> 128 as a single (2048, 128) matrix; rows ordered NHWC (i, j, c).
        # TODO(synk): torch-trained fc1 weights use NCHW (c, i, j) flatten order and need
        #             a row permutation (plus transpose) when porting.
        "w1": (jax.random.normal(ks[2], (n_branches, N_POOL * C_MID, C_MID),
                                 jnp.float32) * s).astype(jnp.bfloat16),
        "b1": jax.random.normal(ks[3], (n_branches, 1, C_MID), jnp.float32) * s,
        # fc2: 128 -> out_dim (padded to 128 output lanes; pad lanes give sigmoid(0)=0.5
        # in `outs`, which the wrapper slices off before the distance/loss).
        "w2": w2.astype(jnp.bfloat16),
        "b2": b2,
    }


def bnn_forward(params, x1, x2, label, alpha, out_dim):
    # x1, x2: (B, H, W, 2048) layer4 features (NHWC), ideally already bf16.
    B, H, W, C = x1.shape
    assert x2.shape == x1.shape and C == C_IN
    assert H % 4 == 0 and W % 4 == 0, "in-kernel pool assumes uniform adaptive windows"
    # Kernel DMAs x as bf16 (no-op cast if the backbone already emits bf16); the
    # (B,H,W,C)->(B*H*W,C) reshape is a free collapse, no HBM round-trip.
    x1f = x1.reshape(B * H * W, C).astype(jnp.bfloat16)
    x2f = x2.reshape(B * H * W, C).astype(jnp.bfloat16)
    bt = _pick_batch_tile(B, H, W)
    outs = dim_reduce_pair(x1f, x2f, params, B=B, H=H, W=W, bt=bt)       # (2, B, 128) f32
    o = outs[:, :, :out_dim]                                             # drop pad lanes
    return distance_and_loss(o[0], o[1], label, alpha)


if __name__ == "__main__":
    key = jax.random.PRNGKey(0)
    kx1, kx2, klab, kp = jax.random.split(key, 4)

    B, H, W = 2, 8, 8           # small layer4-sized spatial extent
    out_dim = 32
    alpha = 0.5

    # layer4 features stored bf16 so the kernel streams bf16 from HBM.
    x1 = jax.random.normal(kx1, (B, H, W, C_IN), jnp.float32).astype(jnp.bfloat16)
    x2 = jax.random.normal(kx2, (B, H, W, C_IN), jnp.float32).astype(jnp.bfloat16)
    label = jax.random.bernoulli(klab, 0.5, (B,)).astype(jnp.float32)

    params = init_bnn_params(kp, out_dim)

    fwd = jax.jit(functools.partial(bnn_forward, alpha=alpha, out_dim=out_dim))
    loss, pos_loss, neg_loss, distance = fwd(params, x1, x2, label)
    jax.block_until_ready((loss, pos_loss, neg_loss, distance))
    print("KERNEL_OK")
</pallas_src>

<mosaic_0001>
module attributes {stable_mosaic.version = 11 : i64} {
  func.func @_dim_reduce_kernel(%arg0: i32, %arg1: memref<128x2048xbf16, #tpu.memory_space<vmem>>, %arg2: memref<128x2048xbf16, #tpu.memory_space<vmem>>, %arg3: memref<2x2048x128xbf16, #tpu.memory_space<vmem>>, %arg4: memref<2x1x128xf32, #tpu.memory_space<vmem>>, %arg5: memref<2x2048x128xbf16, #tpu.memory_space<vmem>>, %arg6: memref<2x1x128xf32, #tpu.memory_space<vmem>>, %arg7: memref<2x128x128xbf16, #tpu.memory_space<vmem>>, %arg8: memref<2x1x128xf32, #tpu.memory_space<vmem>>, %arg9: memref<2x2x128xf32, #tpu.memory_space<vmem>>) attributes {dimension_semantics = [#tpu.dimension_semantics<parallel>], iteration_bounds = array<i64: 1>, scalar_prefetch = 0 : i64, scratch_operands = 0 : i64, tpu.core_type = #tpu.core_type<tc>, window_params = [{transform_indices = @transform_0, window_bounds = array<i64: 128, 2048>}, {transform_indices = @transform_1, window_bounds = array<i64: 128, 2048>}, {pipeline_mode = #tpu.pipeline_mode<synchronous>, transform_indices = @transform_2, window_bounds = array<i64: 2, 2048, 128>}, {pipeline_mode = #tpu.pipeline_mode<synchronous>, transform_indices = @transform_3, window_bounds = array<i64: 2, 1, 128>}, {pipeline_mode = #tpu.pipeline_mode<synchronous>, transform_indices = @transform_4, window_bounds = array<i64: 2, 2048, 128>}, {pipeline_mode = #tpu.pipeline_mode<synchronous>, transform_indices = @transform_5, window_bounds = array<i64: 2, 1, 128>}, {pipeline_mode = #tpu.pipeline_mode<synchronous>, transform_indices = @transform_6, window_bounds = array<i64: 2, 128, 128>}, {pipeline_mode = #tpu.pipeline_mode<synchronous>, transform_indices = @transform_7, window_bounds = array<i64: 2, 1, 128>}, {transform_indices = @transform_8, window_bounds = array<i64: 2, 2, 128>}]} {
    %c0 = arith.constant 0 : index
    %c0_0 = arith.constant 0 : index
    %0 = vector.load %arg1[%c0, %c0_0] : memref<128x2048xbf16, #tpu.memory_space<vmem>>, vector<128x2048xbf16>
    %c0_1 = arith.constant 0 : index
    %c0_2 = arith.constant 0 : index
    %c0_3 = arith.constant 0 : index
    %1 = vector.load %arg3[%c0_1, %c0_2, %c0_3] : memref<2x2048x128xbf16, #tpu.memory_space<vmem>>, vector<1x2048x128xbf16>
    %2 = vector.shape_cast %1 : vector<1x2048x128xbf16> to vector<2048x128xbf16>
    %cst = arith.constant dense<0.000000e+00> : vector<128x128xf32>
    %3 = tpu.matmul %0, %2, %cst {dimension_numbers = #tpu.dot_dimension_numbers<[1], [0], [0], [1], [0, 0, 1, 1], [], []>} : vector<128x2048xbf16>, vector<2048x128xbf16>, vector<128x128xf32> -> vector<128x128xf32>
    %c0_4 = arith.constant 0 : index
    %c0_5 = arith.constant 0 : index
    %c0_6 = arith.constant 0 : index
    %4 = vector.load %arg4[%c0_4, %c0_5, %c0_6] : memref<2x1x128xf32, #tpu.memory_space<vmem>>, vector<1x1x128xf32>
    %5 = vector.shape_cast %4 : vector<1x1x128xf32> to vector<1x128xf32>
    %6 = vector.broadcast %5 : vector<1x128xf32> to vector<128x128xf32>
    %7 = arith.addf %3, %6 : vector<128x128xf32>
    %cst_7 = arith.constant 0.000000e+00 : f32
    %8 = vector.broadcast %cst_7 : f32 to vector<128x128xf32>
    %9 = arith.maximumf %7, %8 : vector<128x128xf32>
    %10 = vector.shape_cast %9 : vector<128x128xf32> to vector<2x64x128xf32>
    %cst_8 = arith.constant 0.000000e+00 : f32
    %11 = vector.broadcast %cst_8 : f32 to vector<2x128xf32>
    %12 = vector.extract_strided_slice %10 {offsets = [0, 0, 0], sizes = [2, 2, 128], strides = [1, 1, 1]} : vector<2x64x128xf32> to vector<2x2x128xf32>
    %cst_9 = arith.constant dense<0.000000e+00> : vector<2x128xf32>
    %13 = vector.multi_reduction <add>, %12, %cst_9 [1] : vector<2x2x128xf32> to vector<2x128xf32>
    %14 = arith.addf %11, %13 : vector<2x128xf32>
    %15 = vector.extract_strided_slice %10 {offsets = [0, 8, 0], sizes = [2, 2, 128], strides = [1, 1, 1]} : vector<2x64x128xf32> to vector<2x2x128xf32>
    %cst_10 = arith.constant dense<0.000000e+00> : vector<2x128xf32>
    %16 = vector.multi_reduction <add>, %15, %cst_10 [1] : vector<2x2x128xf32> to vector<2x128xf32>
    %17 = arith.addf %14, %16 : vector<2x128xf32>
    %cst_11 = arith.constant 2.500000e-01 : f32
    %18 = vector.broadcast %cst_11 : f32 to vector<2x128xf32>
    %19 = arith.mulf %17, %18 : vector<2x128xf32>
    %20 = arith.truncf %19 : vector<2x128xf32> to vector<2x128xbf16>
    %cst_12 = arith.constant 0.000000e+00 : f32
    %21 = vector.broadcast %cst_12 : f32 to vector<2x128xf32>
    %22 = vector.extract_strided_slice %10 {offsets = [0, 2, 0], sizes = [2, 2, 128], strides = [1, 1, 1]} : vector<2x64x128xf32> to vector<2x2x128xf32>
    %cst_13 = arith.constant dense<0.000000e+00> : vector<2x128xf32>
    %23 = vector.multi_reduction <add>, %22, %cst_13 [1] : vector<2x2x128xf32> to vector<2x128xf32>
    %24 = arith.addf %21, %23 : vector<2x128xf32>
    %25 = vector.extract_strided_slice %10 {offsets = [0, 10, 0], sizes = [2, 2, 128], strides = [1, 1, 1]} : vector<2x64x128xf32> to vector<2x2x128xf32>
    %cst_14 = arith.constant dense<0.000000e+00> : vector<2x128xf32>
    %26 = vector.multi_reduction <add>, %25, %cst_14 [1] : vector<2x2x128xf32> to vector<2x128xf32>
    %27 = arith.addf %24, %26 : vector<2x128xf32>
    %cst_15 = arith.constant 2.500000e-01 : f32
    %28 = vector.broadcast %cst_15 : f32 to vector<2x128xf32>
    %29 = arith.mulf %27, %28 : vector<2x128xf32>
    %30 = arith.truncf %29 : vector<2x128xf32> to vector<2x128xbf16>
    %cst_16 = arith.constant 0.000000e+00 : f32
    %31 = vector.broadcast %cst_16 : f32 to vector<2x128xf32>
    %32 = vector.extract_strided_slice %10 {offsets = [0, 4, 0], sizes = [2, 2, 128], strides = [1, 1, 1]} : vector<2x64x128xf32> to vector<2x2x128xf32>
    %cst_17 = arith.constant dense<0.000000e+00> : vector<2x128xf32>
    %33 = vector.multi_reduction <add>, %32, %cst_17 [1] : vector<2x2x128xf32> to vector<2x128xf32>
    %34 = arith.addf %31, %33 : vector<2x128xf32>
    %35 = vector.extract_strided_slice %10 {offsets = [0, 12, 0], sizes = [2, 2, 128], strides = [1, 1, 1]} : vector<2x64x128xf32> to vector<2x2x128xf32>
    %cst_18 = arith.constant dense<0.000000e+00> : vector<2x128xf32>
    %36 = vector.multi_reduction <add>, %35, %cst_18 [1] : vector<2x2x128xf32> to vector<2x128xf32>
    %37 = arith.addf %34, %36 : vector<2x128xf32>
    %cst_19 = arith.constant 2.500000e-01 : f32
    %38 = vector.broadcast %cst_19 : f32 to vector<2x128xf32>
    %39 = arith.mulf %37, %38 : vector<2x128xf32>
    %40 = arith.truncf %39 : vector<2x128xf32> to vector<2x128xbf16>
    %cst_20 = arith.constant 0.000000e+00 : f32
    %41 = vector.broadcast %cst_20 : f32 to vector<2x128xf32>
    %42 = vector.extract_strided_slice %10 {offsets = [0, 6, 0], sizes = [2, 2, 128], strides = [1, 1, 1]} : vector<2x64x128xf32> to vector<2x2x128xf32>
    %cst_21 = arith.constant dense<0.000000e+00> : vector<2x128xf32>
    %43 = vector.multi_reduction <add>, %42, %cst_21 [1] : vector<2x2x128xf32> to vector<2x128xf32>
    %44 = arith.addf %41, %43 : vector<2x128xf32>
    %45 = vector.extract_strided_slice %10 {offsets = [0, 14, 0], sizes = [2, 2, 128], strides = [1, 1, 1]} : vector<2x64x128xf32> to vector<2x2x128xf32>
    %cst_22 = arith.constant dense<0.000000e+00> : vector<2x128xf32>
    %46 = vector.multi_reduction <add>, %45, %cst_22 [1] : vector<2x2x128xf32> to vector<2x128xf32>
    %47 = arith.addf %44, %46 : vector<2x128xf32>
    %cst_23 = arith.constant 2.500000e-01 : f32
    %48 = vector.broadcast %cst_23 : f32 to vector<2x128xf32>
    %49 = arith.mulf %47, %48 : vector<2x128xf32>
    %50 = arith.truncf %49 : vector<2x128xf32> to vector<2x128xbf16>
    %cst_24 = arith.constant 0.000000e+00 : f32
    %51 = vector.broadcast %cst_24 : f32 to vector<2x128xf32>
    %52 = vector.extract_strided_slice %10 {offsets = [0, 16, 0], sizes = [2, 2, 128], strides = [1, 1, 1]} : vector<2x64x128xf32> to vector<2x2x128xf32>
    %cst_25 = arith.constant dense<0.000000e+00> : vector<2x128xf32>
    %53 = vector.multi_reduction <add>, %52, %cst_25 [1] : vector<2x2x128xf32> to vector<2x128xf32>
    %54 = arith.addf %51, %53 : vector<2x128xf32>
    %55 = vector.extract_strided_slice %10 {offsets = [0, 24, 0], sizes = [2, 2, 128], strides = [1, 1, 1]} : vector<2x64x128xf32> to vector<2x2x128xf32>
    %cst_26 = arith.constant dense<0.000000e+00> : vector<2x128xf32>
    %56 = vector.multi_reduction <add>, %55, %cst_26 [1] : vector<2x2x128xf32> to vector<2x128xf32>
    %57 = arith.addf %54, %56 : vector<2x128xf32>
    %cst_27 = arith.constant 2.500000e-01 : f32
    %58 = vector.broadcast %cst_27 : f32 to vector<2x128xf32>
    %59 = arith.mulf %57, %58 : vector<2x128xf32>
    %60 = arith.truncf %59 : vector<2x128xf32> to vector<2x128xbf16>
    %cst_28 = arith.constant 0.000000e+00 : f32
    %61 = vector.broadcast %cst_28 : f32 to vector<2x128xf32>
    %62 = vector.extract_strided_slice %10 {offsets = [0, 18, 0], sizes = [2, 2, 128], strides = [1, 1, 1]} : vector<2x64x128xf32> to vector<2x2x128xf32>
    %cst_29 = arith.constant dense<0.000000e+00> : vector<2x128xf32>
    %63 = vector.multi_reduction <add>, %62, %cst_29 [1] : vector<2x2x128xf32> to vector<2x128xf32>
    %64 = arith.addf %61, %63 : vector<2x128xf32>
    %65 = vector.extract_strided_slice %10 {offsets = [0, 26, 0], sizes = [2, 2, 128], strides = [1, 1, 1]} : vector<2x64x128xf32> to vector<2x2x128xf32>
    %cst_30 = arith.constant dense<0.000000e+00> : vector<2x128xf32>
    %66 = vector.multi_reduction <add>, %65, %cst_30 [1] : vector<2x2x128xf32> to vector<2x128xf32>
    %67 = arith.addf %64, %66 : vector<2x128xf32>
    %cst_31 = arith.constant 2.500000e-01 : f32
    %68 = vector.broadcast %cst_31 : f32 to vector<2x128xf32>
    %69 = arith.mulf %67, %68 : vector<2x128xf32>
    %70 = arith.truncf %69 : vector<2x128xf32> to vector<2x128xbf16>
    %cst_32 = arith.constant 0.000000e+00 : f32
    %71 = vector.broadcast %cst_32 : f32 to vector<2x128xf32>
    %72 = vector.extract_strided_slice %10 {offsets = [0, 20, 0], sizes = [2, 2, 128], strides = [1, 1, 1]} : vector<2x64x128xf32> to vector<2x2x128xf32>
    %cst_33 = arith.constant dense<0.000000e+00> : vector<2x128xf32>
    %73 = vector.multi_reduction <add>, %72, %cst_33 [1] : vector<2x2x128xf32> to vector<2x128xf32>
    %74 = arith.addf %71, %73 : vector<2x128xf32>
    %75 = vector.extract_strided_slice %10 {offsets = [0, 28, 0], sizes = [2, 2, 128], strides = [1, 1, 1]} : vector<2x64x128xf32> to vector<2x2x128xf32>
    %cst_34 = arith.constant dense<0.000000e+00> : vector<2x128xf32>
    %76 = vector.multi_reduction <add>, %75, %cst_34 [1] : vector<2x2x128xf32> to vector<2x128xf32>
    %77 = arith.addf %74, %76 : vector<2x128xf32>
    %cst_35 = arith.constant 2.500000e-01 : f32
    %78 = vector.broadcast %cst_35 : f32 to vector<2x128xf32>
    %79 = arith.mulf %77, %78 : vector<2x128xf32>
    %80 = arith.truncf %79 : vector<2x128xf32> to vector<2x128xbf16>
    %cst_36 = arith.constant 0.000000e+00 : f32
    %81 = vector.broadcast %cst_36 : f32 to vector<2x128xf32>
    %82 = vector.extract_strided_slice %10 {offsets = [0, 22, 0], sizes = [2, 2, 128], strides = [1, 1, 1]} : vector<2x64x128xf32> to vector<2x2x128xf32>
    %cst_37 = arith.constant dense<0.000000e+00> : vector<2x128xf32>
    %83 = vector.multi_reduction <add>, %82, %cst_37 [1] : vector<2x2x128xf32> to vector<2x128xf32>
    %84 = arith.addf %81, %83 : vector<2x128xf32>
    %85 = vector.extract_strided_slice %10 {offsets = [0, 30, 0], sizes = [2, 2, 128], strides = [1, 1, 1]} : vector<2x64x128xf32> to vector<2x2x128xf32>
    %cst_38 = arith.constant dense<0.000000e+00> : vector<2x128xf32>
    %86 = vector.multi_reduction <add>, %85, %cst_38 [1] : vector<2x2x128xf32> to vector<2x128xf32>
    %87 = arith.addf %84, %86 : vector<2x128xf32>
    %cst_39 = arith.constant 2.500000e-01 : f32
    %88 = vector.broadcast %cst_39 : f32 to vector<2x128xf32>
    %89 = arith.mulf %87, %88 : vector<2x128xf32>
    %90 = arith.truncf %89 : vector<2x128xf32> to vector<2x128xbf16>
    %cst_40 = arith.constant 0.000000e+00 : f32
    %91 = vector.broadcast %cst_40 : f32 to vector<2x128xf32>
    %92 = vector.extract_strided_slice %10 {offsets = [0, 32, 0], sizes = [2, 2, 128], strides = [1, 1, 1]} : vector<2x64x128xf32> to vector<2x2x128xf32>
    %cst_41 = arith.constant dense<0.000000e+00> : vector<2x128xf32>
    %93 = vector.multi_reduction <add>, %92, %cst_41 [1] : vector<2x2x128xf32> to vector<2x128xf32>
    %94 = arith.addf %91, %93 : vector<2x128xf32>
    %95 = vector.extract_strided_slice %10 {offsets = [0, 40, 0], sizes = [2, 2, 128], strides = [1, 1, 1]} : vector<2x64x128xf32> to vector<2x2x128xf32>
    %cst_42 = arith.constant dense<0.000000e+00> : vector<2x128xf32>
    %96 = vector.multi_reduction <add>, %95, %cst_42 [1] : vector<2x2x128xf32> to vector<2x128xf32>
    %97 = arith.addf %94, %96 : vector<2x128xf32>
    %cst_43 = arith.constant 2.500000e-01 : f32
    %98 = vector.broadcast %cst_43 : f32 to vector<2x128xf32>
    %99 = arith.mulf %97, %98 : vector<2x128xf32>
    %100 = arith.truncf %99 : vector<2x128xf32> to vector<2x128xbf16>
    %cst_44 = arith.constant 0.000000e+00 : f32
    %101 = vector.broadcast %cst_44 : f32 to vector<2x128xf32>
    %102 = vector.extract_strided_slice %10 {offsets = [0, 34, 0], sizes = [2, 2, 128], strides = [1, 1, 1]} : vector<2x64x128xf32> to vector<2x2x128xf32>
    %cst_45 = arith.constant dense<0.000000e+00> : vector<2x128xf32>
    %103 = vector.multi_reduction <add>, %102, %cst_45 [1] : vector<2x2x128xf32> to vector<2x128xf32>
    %104 = arith.addf %101, %103 : vector<2x128xf32>
    %105 = vector.extract_strided_slice %10 {offsets = [0, 42, 0], sizes = [2, 2, 128], strides = [1, 1, 1]} : vector<2x64x128xf32> to vector<2x2x128xf32>
    %cst_46 = arith.constant dense<0.000000e+00> : vector<2x128xf32>
    %106 = vector.multi_reduction <add>, %105, %cst_46 [1] : vector<2x2x128xf32> to vector<2x128xf32>
    %107 = arith.addf %104, %106 : vector<2x128xf32>
    %cst_47 = arith.constant 2.500000e-01 : f32
    %108 = vector.broadcast %cst_47 : f32 to vector<2x128xf32>
    %109 = arith.mulf %107, %108 : vector<2x128xf32>
    %110 = arith.truncf %109 : vector<2x128xf32> to vector<2x128xbf16>
    %cst_48 = arith.constant 0.000000e+00 : f32
    %111 = vector.broadcast %cst_48 : f32 to vector<2x128xf32>
    %112 = vector.extract_strided_slice %10 {offsets = [0, 36, 0], sizes = [2, 2, 128], strides = [1, 1, 1]} : vector<2x64x128xf32> to vector<2x2x128xf32>
    %cst_49 = arith.constant dense<0.000000e+00> : vector<2x128xf32>
    %113 = vector.multi_reduction <add>, %112, %cst_49 [1] : vector<2x2x128xf32> to vector<2x128xf32>
    %114 = arith.addf %111, %113 : vector<2x128xf32>
    %115 = vector.extract_strided_slice %10 {offsets = [0, 44, 0], sizes = [2, 2, 128], strides = [1, 1, 1]} : vector<2x64x128xf32> to vector<2x2x128xf32>
    %cst_50 = arith.constant dense<0.000000e+00> : vector<2x128xf32>
    %116 = vector.multi_reduction <add>, %115, %cst_50 [1] : vector<2x2x128xf32> to vector<2x128xf32>
    %117 = arith.addf %114, %116 : vector<2x128xf32>
    %cst_51 = arith.constant 2.500000e-01 : f32
    %118 = vector.broadcast %cst_51 : f32 to vector<2x128xf32>
    %119 = arith.mulf %117, %118 : vector<2x128xf32>
    %120 = arith.truncf %119 : vector<2x128xf32> to vector<2x128xbf16>
    %cst_52 = arith.constant 0.000000e+00 : f32
    %121 = vector.broadcast %cst_52 : f32 to vector<2x128xf32>
    %122 = vector.extract_strided_slice %10 {offsets = [0, 38, 0], sizes = [2, 2, 128], strides = [1, 1, 1]} : vector<2x64x128xf32> to vector<2x2x128xf32>
    %cst_53 = arith.constant dense<0.000000e+00> : vector<2x128xf32>
    %123 = vector.multi_reduction <add>, %122, %cst_53 [1] : vector<2x2x128xf32> to vector<2x128xf32>
    %124 = arith.addf %121, %123 : vector<2x128xf32>
    %125 = vector.extract_strided_slice %10 {offsets = [0, 46, 0], sizes = [2, 2, 128], strides = [1, 1, 1]} : vector<2x64x128xf32> to vector<2x2x128xf32>
    %cst_54 = arith.constant dense<0.000000e+00> : vector<2x128xf32>
    %126 = vector.multi_reduction <add>, %125, %cst_54 [1] : vector<2x2x128xf32> to vector<2x128xf32>
    %127 = arith.addf %124, %126 : vector<2x128xf32>
    %cst_55 = arith.constant 2.500000e-01 : f32
    %128 = vector.broadcast %cst_55 : f32 to vector<2x128xf32>
    %129 = arith.mulf %127, %128 : vector<2x128xf32>
    %130 = arith.truncf %129 : vector<2x128xf32> to vector<2x128xbf16>
    %cst_56 = arith.constant 0.000000e+00 : f32
    %131 = vector.broadcast %cst_56 : f32 to vector<2x128xf32>
    %132 = vector.extract_strided_slice %10 {offsets = [0, 48, 0], sizes = [2, 2, 128], strides = [1, 1, 1]} : vector<2x64x128xf32> to vector<2x2x128xf32>
    %cst_57 = arith.constant dense<0.000000e+00> : vector<2x128xf32>
    %133 = vector.multi_reduction <add>, %132, %cst_57 [1] : vector<2x2x128xf32> to vector<2x128xf32>
    %134 = arith.addf %131, %133 : vector<2x128xf32>
    %135 = vector.extract_strided_slice %10 {offsets = [0, 56, 0], sizes = [2, 2, 128], strides = [1, 1, 1]} : vector<2x64x128xf32> to vector<2x2x128xf32>
    %cst_58 = arith.constant dense<0.000000e+00> : vector<2x128xf32>
    %136 = vector.multi_reduction <add>, %135, %cst_58 [1] : vector<2x2x128xf32> to vector<2x128xf32>
    %137 = arith.addf %134, %136 : vector<2x128xf32>
    %cst_59 = arith.constant 2.500000e-01 : f32
    %138 = vector.broadcast %cst_59 : f32 to vector<2x128xf32>
    %139 = arith.mulf %137, %138 : vector<2x128xf32>
    %140 = arith.truncf %139 : vector<2x128xf32> to vector<2x128xbf16>
    %cst_60 = arith.constant 0.000000e+00 : f32
    %141 = vector.broadcast %cst_60 : f32 to vector<2x128xf32>
    %142 = vector.extract_strided_slice %10 {offsets = [0, 50, 0], sizes = [2, 2, 128], strides = [1, 1, 1]} : vector<2x64x128xf32> to vector<2x2x128xf32>
    %cst_61 = arith.constant dense<0.000000e+00> : vector<2x128xf32>
    %143 = vector.multi_reduction <add>, %142, %cst_61 [1] : vector<2x2x128xf32> to vector<2x128xf32>
    %144 = arith.addf %141, %143 : vector<2x128xf32>
    %145 = vector.extract_strided_slice %10 {offsets = [0, 58, 0], sizes = [2, 2, 128], strides = [1, 1, 1]} : vector<2x64x128xf32> to vector<2x2x128xf32>
    %cst_62 = arith.constant dense<0.000000e+00> : vector<2x128xf32>
    %146 = vector.multi_reduction <add>, %145, %cst_62 [1] : vector<2x2x128xf32> to vector<2x128xf32>
    %147 = arith.addf %144, %146 : vector<2x128xf32>
    %cst_63 = arith.constant 2.500000e-01 : f32
    %148 = vector.broadcast %cst_63 : f32 to vector<2x128xf32>
    %149 = arith.mulf %147, %148 : vector<2x128xf32>
    %150 = arith.truncf %149 : vector<2x128xf32> to vector<2x128xbf16>
    %cst_64 = arith.constant 0.000000e+00 : f32
    %151 = vector.broadcast %cst_64 : f32 to vector<2x128xf32>
    %152 = vector.extract_strided_slice %10 {offsets = [0, 52, 0], sizes = [2, 2, 128], strides = [1, 1, 1]} : vector<2x64x128xf32> to vector<2x2x128xf32>
    %cst_65 = arith.constant dense<0.000000e+00> : vector<2x128xf32>
    %153 = vector.multi_reduction <add>, %152, %cst_65 [1] : vector<2x2x128xf32> to vector<2x128xf32>
    %154 = arith.addf %151, %153 : vector<2x128xf32>
    %155 = vector.extract_strided_slice %10 {offsets = [0, 60, 0], sizes = [2, 2, 128], strides = [1, 1, 1]} : vector<2x64x128xf32> to vector<2x2x128xf32>
    %cst_66 = arith.constant dense<0.000000e+00> : vector<2x128xf32>
    %156 = vector.multi_reduction <add>, %155, %cst_66 [1] : vector<2x2x128xf32> to vector<2x128xf32>
    %157 = arith.addf %154, %156 : vector<2x128xf32>
    %cst_67 = arith.constant 2.500000e-01 : f32
    %158 = vector.broadcast %cst_67 : f32 to vector<2x128xf32>
    %159 = arith.mulf %157, %158 : vector<2x128xf32>
    %160 = arith.truncf %159 : vector<2x128xf32> to vector<2x128xbf16>
    %cst_68 = arith.constant 0.000000e+00 : f32
    %161 = vector.broadcast %cst_68 : f32 to vector<2x128xf32>
    %162 = vector.extract_strided_slice %10 {offsets = [0, 54, 0], sizes = [2, 2, 128], strides = [1, 1, 1]} : vector<2x64x128xf32> to vector<2x2x128xf32>
    %cst_69 = arith.constant dense<0.000000e+00> : vector<2x128xf32>
    %163 = vector.multi_reduction <add>, %162, %cst_69 [1] : vector<2x2x128xf32> to vector<2x128xf32>
    %164 = arith.addf %161, %163 : vector<2x128xf32>
    %165 = vector.extract_strided_slice %10 {offsets = [0, 62, 0], sizes = [2, 2, 128], strides = [1, 1, 1]} : vector<2x64x128xf32> to vector<2x2x128xf32>
    %cst_70 = arith.constant dense<0.000000e+00> : vector<2x128xf32>
    %166 = vector.multi_reduction <add>, %165, %cst_70 [1] : vector<2x2x128xf32> to vector<2x128xf32>
    %167 = arith.addf %164, %166 : vector<2x128xf32>
    %cst_71 = arith.constant 2.500000e-01 : f32
    %168 = vector.broadcast %cst_71 : f32 to vector<2x128xf32>
    %169 = arith.mulf %167, %168 : vector<2x128xf32>
    %170 = arith.truncf %169 : vector<2x128xf32> to vector<2x128xbf16>
    %171 = tpu.concatenate %20, %30, %40, %50, %60, %70, %80, %90, %100, %110, %120, %130, %140, %150, %160, %170 in 1 : vector<2x128xbf16>, vector<2x128xbf16>, vector<2x128xbf16>, vector<2x128xbf16>, vector<2x128xbf16>, vector<2x128xbf16>, vector<2x128xbf16>, vector<2x128xbf16>, vector<2x128xbf16>, vector<2x128xbf16>, vector<2x128xbf16>, vector<2x128xbf16>, vector<2x128xbf16>, vector<2x128xbf16>, vector<2x128xbf16>, vector<2x128xbf16> -> vector<2x2048xbf16>
    %c0_72 = arith.constant 0 : index
    %c0_73 = arith.constant 0 : index
    %c0_74 = arith.constant 0 : index
    %172 = vector.load %arg5[%c0_72, %c0_73, %c0_74] : memref<2x2048x128xbf16, #tpu.memory_space<vmem>>, vector<1x2048x128xbf16>
    %173 = vector.shape_cast %172 : vector<1x2048x128xbf16> to vector<2048x128xbf16>
    %cst_75 = arith.constant dense<0.000000e+00> : vector<2x128xf32>
    %174 = tpu.matmul %171, %173, %cst_75 {dimension_numbers = #tpu.dot_dimension_numbers<[1], [0], [0], [1], [0, 0, 1, 1], [], []>} : vector<2x2048xbf16>, vector<2048x128xbf16>, vector<2x128xf32> -> vector<2x128xf32>
    %c0_76 = arith.constant 0 : index
    %c0_77 = arith.constant 0 : index
    %c0_78 = arith.constant 0 : index
    %175 = vector.load %arg6[%c0_76, %c0_77, %c0_78] : memref<2x1x128xf32, #tpu.memory_space<vmem>>, vector<1x1x128xf32>
    %176 = vector.shape_cast %175 : vector<1x1x128xf32> to vector<1x128xf32>
    %177 = vector.broadcast %176 : vector<1x128xf32> to vector<2x128xf32>
    %178 = arith.addf %174, %177 : vector<2x128xf32>
    %179 = arith.truncf %178 : vector<2x128xf32> to vector<2x128xbf16>
    %c0_79 = arith.constant 0 : index
    %c0_80 = arith.constant 0 : index
    %c0_81 = arith.constant 0 : index
    %180 = vector.load %arg7[%c0_79, %c0_80, %c0_81] : memref<2x128x128xbf16, #tpu.memory_space<vmem>>, vector<1x128x128xbf16>
    %181 = vector.shape_cast %180 : vector<1x128x128xbf16> to vector<128x128xbf16>
    %cst_82 = arith.constant dense<0.000000e+00> : vector<2x128xf32>
    %182 = tpu.matmul %179, %181, %cst_82 {dimension_numbers = #tpu.dot_dimension_numbers<[1], [0], [0], [1], [0, 0, 1, 1], [], []>} : vector<2x128xbf16>, vector<128x128xbf16>, vector<2x128xf32> -> vector<2x128xf32>
    %c0_83 = arith.constant 0 : index
    %c0_84 = arith.constant 0 : index
    %c0_85 = arith.constant 0 : index
    %183 = vector.load %arg8[%c0_83, %c0_84, %c0_85] : memref<2x1x128xf32, #tpu.memory_space<vmem>>, vector<1x1x128xf32>
    %184 = vector.shape_cast %183 : vector<1x1x128xf32> to vector<1x128xf32>
    %185 = vector.broadcast %184 : vector<1x128xf32> to vector<2x128xf32>
    %186 = arith.addf %182, %185 : vector<2x128xf32>
    %187 = arith.negf %186 : vector<2x128xf32>
    %188 = math.exp %187 : vector<2x128xf32>
    %cst_86 = arith.constant 1.000000e+00 : f32
    %189 = vector.broadcast %cst_86 : f32 to vector<2x128xf32>
    %190 = arith.addf %189, %188 : vector<2x128xf32>
    %191 = arith.divf %189, %190 : vector<2x128xf32>
    %c0_87 = arith.constant 0 : index
    %c0_88 = arith.constant 0 : index
    %c0_89 = arith.constant 0 : index
    %192 = vector.load %arg9[%c0_87, %c0_88, %c0_89] : memref<2x2x128xf32, #tpu.memory_space<vmem>>, vector<1x2x128xf32>
    %193 = vector.shape_cast %192 : vector<1x2x128xf32> to vector<2x128xf32>
    %194 = vector.shape_cast %191 : vector<2x128xf32> to vector<1x2x128xf32>
    tpu.vector_store %arg9[%c0_87, %c0_88, %c0_89], %194 {strides = array<i32>} : memref<2x2x128xf32, #tpu.memory_space<vmem>>, vector<1x2x128xf32>,
    %c0_90 = arith.constant 0 : index
    %c0_91 = arith.constant 0 : index
    %195 = vector.load %arg2[%c0_90, %c0_91] : memref<128x2048xbf16, #tpu.memory_space<vmem>>, vector<128x2048xbf16>
    %c1 = arith.constant 1 : index
    %c0_92 = arith.constant 0 : index
    %c0_93 = arith.constant 0 : index
    %196 = vector.load %arg3[%c1, %c0_92, %c0_93] : memref<2x2048x128xbf16, #tpu.memory_space<vmem>>, vector<1x2048x128xbf16>
    %197 = vector.shape_cast %196 : vector<1x2048x128xbf16> to vector<2048x128xbf16>
    %cst_94 = arith.constant dense<0.000000e+00> : vector<128x128xf32>
    %198 = tpu.matmul %195, %197, %cst_94 {dimension_numbers = #tpu.dot_dimension_numbers<[1], [0], [0], [1], [0, 0, 1, 1], [], []>} : vector<128x2048xbf16>, vector<2048x128xbf16>, vector<128x128xf32> -> vector<128x128xf32>
    %c1_95 = arith.constant 1 : index
    %c0_96 = arith.constant 0 : index
    %c0_97 = arith.constant 0 : index
    %199 = vector.load %arg4[%c1_95, %c0_96, %c0_97] : memref<2x1x128xf32, #tpu.memory_space<vmem>>, vector<1x1x128xf32>
    %200 = vector.shape_cast %199 : vector<1x1x128xf32> to vector<1x128xf32>
    %201 = vector.broadcast %200 : vector<1x128xf32> to vector<128x128xf32>
    %202 = arith.addf %198, %201 : vector<128x128xf32>
    %cst_98 = arith.constant 0.000000e+00 : f32
    %203 = vector.broadcast %cst_98 : f32 to vector<128x128xf32>
    %204 = arith.maximumf %202, %203 : vector<128x128xf32>
    %205 = vector.shape_cast %204 : vector<128x128xf32> to vector<2x64x128xf32>
    %cst_99 = arith.constant 0.000000e+00 : f32
    %206 = vector.broadcast %cst_99 : f32 to vector<2x128xf32>
    %207 = vector.extract_strided_slice %205 {offsets = [0, 0, 0], sizes = [2, 2, 128], strides = [1, 1, 1]} : vector<2x64x128xf32> to vector<2x2x128xf32>
    %cst_100 = arith.constant dense<0.000000e+00> : vector<2x128xf32>
    %208 = vector.multi_reduction <add>, %207, %cst_100 [1] : vector<2x2x128xf32> to vector<2x128xf32>
    %209 = arith.addf %206, %208 : vector<2x128xf32>
    %210 = vector.extract_strided_slice %205 {offsets = [0, 8, 0], sizes = [2, 2, 128], strides = [1, 1, 1]} : vector<2x64x128xf32> to vector<2x2x128xf32>
    %cst_101 = arith.constant dense<0.000000e+00> : vector<2x128xf32>
    %211 = vector.multi_reduction <add>, %210, %cst_101 [1] : vector<2x2x128xf32> to vector<2x128xf32>
    %212 = arith.addf %209, %211 : vector<2x128xf32>
    %cst_102 = arith.constant 2.500000e-01 : f32
    %213 = vector.broadcast %cst_102 : f32 to vector<2x128xf32>
    %214 = arith.mulf %212, %213 : vector<2x128xf32>
    %215 = arith.truncf %214 : vector<2x128xf32> to vector<2x128xbf16>
    %cst_103 = arith.constant 0.000000e+00 : f32
    %216 = vector.broadcast %cst_103 : f32 to vector<2x128xf32>
    %217 = vector.extract_strided_slice %205 {offsets = [0, 2, 0], sizes = [2, 2, 128], strides = [1, 1, 1]} : vector<2x64x128xf32> to vector<2x2x128xf32>
    %cst_104 = arith.constant dense<0.000000e+00> : vector<2x128xf32>
    %218 = vector.multi_reduction <add>, %217, %cst_104 [1] : vector<2x2x128xf32> to vector<2x128xf32>
    %219 = arith.addf %216, %218 : vector<2x128xf32>
    %220 = vector.extract_strided_slice %205 {offsets = [0, 10, 0], sizes = [2, 2, 128], strides = [1, 1, 1]} : vector<2x64x128xf32> to vector<2x2x128xf32>
    %cst_105 = arith.constant dense<0.000000e+00> : vector<2x128xf32>
    %221 = vector.multi_reduction <add>, %220, %cst_105 [1] : vector<2x2x128xf32> to vector<2x128xf32>
    %222 = arith.addf %219, %221 : vector<2x128xf32>
    %cst_106 = arith.constant 2.500000e-01 : f32
    %223 = vector.broadcast %cst_106 : f32 to vector<2x128xf32>
    %224 = arith.mulf %222, %223 : vector<2x128xf32>
    %225 = arith.truncf %224 : vector<2x128xf32> to vector<2x128xbf16>
    %cst_107 = arith.constant 0.000000e+00 : f32
    %226 = vector.broadcast %cst_107 : f32 to vector<2x128xf32>
    %227 = vector.extract_strided_slice %205 {offsets = [0, 4, 0], sizes = [2, 2, 128], strides = [1, 1, 1]} : vector<2x64x128xf32> to vector<2x2x128xf32>
    %cst_108 = arith.constant dense<0.000000e+00> : vector<2x128xf32>
    %228 = vector.multi_reduction <add>, %227, %cst_108 [1] : vector<2x2x128xf32> to vector<2x128xf32>
    %229 = arith.addf %226, %228 : vector<2x128xf32>
    %230 = vector.extract_strided_slice %205 {offsets = [0, 12, 0], sizes = [2, 2, 128], strides = [1, 1, 1]} : vector<2x64x128xf32> to vector<2x2x128xf32>
    %cst_109 = arith.constant dense<0.000000e+00> : vector<2x128xf32>
    %231 = vector.multi_reduction <add>, %230, %cst_109 [1] : vector<2x2x128xf32> to vector<2x128xf32>
    %232 = arith.addf %229, %231 : vector<2x128xf32>
    %cst_110 = arith.constant 2.500000e-01 : f32
    %233 = vector.broadcast %cst_110 : f32 to vector<2x128xf32>
    %234 = arith.mulf %232, %233 : vector<2x128xf32>
    %235 = arith.truncf %234 : vector<2x128xf32> to vector<2x128xbf16>
    %cst_111 = arith.constant 0.000000e+00 : f32
    %236 = vector.broadcast %cst_111 : f32 to vector<2x128xf32>
    %237 = vector.extract_strided_slice %205 {offsets = [0, 6, 0], sizes = [2, 2, 128], strides = [1, 1, 1]} : vector<2x64x128xf32> to vector<2x2x128xf32>
    %cst_112 = arith.constant dense<0.000000e+00> : vector<2x128xf32>
    %238 = vector.multi_reduction <add>, %237, %cst_112 [1] : vector<2x2x128xf32> to vector<2x128xf32>
    %239 = arith.addf %236, %238 : vector<2x128xf32>
    %240 = vector.extract_strided_slice %205 {offsets = [0, 14, 0], sizes = [2, 2, 128], strides = [1, 1, 1]} : vector<2x64x128xf32> to vector<2x2x128xf32>
    %cst_113 = arith.constant dense<0.000000e+00> : vector<2x128xf32>
    %241 = vector.multi_reduction <add>, %240, %cst_113 [1] : vector<2x2x128xf32> to vector<2x128xf32>
    %242 = arith.addf %239, %241 : vector<2x128xf32>
    %cst_114 = arith.constant 2.500000e-01 : f32
    %243 = vector.broadcast %cst_114 : f32 to vector<2x128xf32>
    %244 = arith.mulf %242, %243 : vector<2x128xf32>
    %245 = arith.truncf %244 : vector<2x128xf32> to vector<2x128xbf16>
    %cst_115 = arith.constant 0.000000e+00 : f32
    %246 = vector.broadcast %cst_115 : f32 to vector<2x128xf32>
    %247 = vector.extract_strided_slice %205 {offsets = [0, 16, 0], sizes = [2, 2, 128], strides = [1, 1, 1]} : vector<2x64x128xf32> to vector<2x2x128xf32>
    %cst_116 = arith.constant dense<0.000000e+00> : vector<2x128xf32>
    %248 = vector.multi_reduction <add>, %247, %cst_116 [1] : vector<2x2x128xf32> to vector<2x128xf32>
    %249 = arith.addf %246, %248 : vector<2x128xf32>
    %250 = vector.extract_strided_slice %205 {offsets = [0, 24, 0], sizes = [2, 2, 128], strides = [1, 1, 1]} : vector<2x64x128xf32> to vector<2x2x128xf32>
    %cst_117 = arith.constant dense<0.000000e+00> : vector<2x128xf32>
    %251 = vector.multi_reduction <add>, %250, %cst_117 [1] : vector<2x2x128xf32> to vector<2x128xf32>
    %252 = arith.addf %249, %251 : vector<2x128xf32>
    %cst_118 = arith.constant 2.500000e-01 : f32
    %253 = vector.broadcast %cst_118 : f32 to vector<2x128xf32>
    %254 = arith.mulf %252, %253 : vector<2x128xf32>
    %255 = arith.truncf %254 : vector<2x128xf32> to vector<2x128xbf16>
    %cst_119 = arith.constant 0.000000e+00 : f32
    %256 = vector.broadcast %cst_119 : f32 to vector<2x128xf32>
    %257 = vector.extract_strided_slice %205 {offsets = [0, 18, 0], sizes = [2, 2, 128], strides = [1, 1, 1]} : vector<2x64x128xf32> to vector<2x2x128xf32>
    %cst_120 = arith.constant dense<0.000000e+00> : vector<2x128xf32>
    %258 = vector.multi_reduction <add>, %257, %cst_120 [1] : vector<2x2x128xf32> to vector<2x128xf32>
    %259 = arith.addf %256, %258 : vector<2x128xf32>
    %260 = vector.extract_strided_slice %205 {offsets = [0, 26, 0], sizes = [2, 2, 128], strides = [1, 1, 1]} : vector<2x64x128xf32> to vector<2x2x128xf32>
    %cst_121 = arith.constant dense<0.000000e+00> : vector<2x128xf32>
    %261 = vector.multi_reduction <add>, %260, %cst_121 [1] : vector<2x2x128xf32> to vector<2x128xf32>
    %262 = arith.addf %259, %261 : vector<2x128xf32>
    %cst_122 = arith.constant 2.500000e-01 : f32
    %263 = vector.broadcast %cst_122 : f32 to vector<2x128xf32>
    %264 = arith.mulf %262, %263 : vector<2x128xf32>
    %265 = arith.truncf %264 : vector<2x128xf32> to vector<2x128xbf16>
    %cst_123 = arith.constant 0.000000e+00 : f32
    %266 = vector.broadcast %cst_123 : f32 to vector<2x128xf32>
    %267 = vector.extract_strided_slice %205 {offsets = [0, 20, 0], sizes = [2, 2, 128], strides = [1, 1, 1]} : vector<2x64x128xf32> to vector<2x2x128xf32>
    %cst_124 = arith.constant dense<0.000000e+00> : vector<2x128xf32>
    %268 = vector.multi_reduction <add>, %267, %cst_124 [1] : vector<2x2x128xf32> to vector<2x128xf32>
    %269 = arith.addf %266, %268 : vector<2x128xf32>
    %270 = vector.extract_strided_slice %205 {offsets = [0, 28, 0], sizes = [2, 2, 128], strides = [1, 1, 1]} : vector<2x64x128xf32> to vector<2x2x128xf32>
    %cst_125 = arith.constant dense<0.000000e+00> : vector<2x128xf32>
    %271 = vector.multi_reduction <add>, %270, %cst_125 [1] : vector<2x2x128xf32> to vector<2x128xf32>
    %272 = arith.addf %269, %271 : vector<2x128xf32>
    %cst_126 = arith.constant 2.500000e-01 : f32
    %273 = vector.broadcast %cst_126 : f32 to vector<2x128xf32>
    %274 = arith.mulf %272, %273 : vector<2x128xf32>
    %275 = arith.truncf %274 : vector<2x128xf32> to vector<2x128xbf16>
    %cst_127 = arith.constant 0.000000e+00 : f32
    %276 = vector.broadcast %cst_127 : f32 to vector<2x128xf32>
    %277 = vector.extract_strided_slice %205 {offsets = [0, 22, 0], sizes = [2, 2, 128], strides = [1, 1, 1]} : vector<2x64x128xf32> to vector<2x2x128xf32>
    %cst_128 = arith.constant dense<0.000000e+00> : vector<2x128xf32>
    %278 = vector.multi_reduction <add>, %277, %cst_128 [1] : vector<2x2x128xf32> to vector<2x128xf32>
    %279 = arith.addf %276, %278 : vector<2x128xf32>
    %280 = vector.extract_strided_slice %205 {offsets = [0, 30, 0], sizes = [2, 2, 128], strides = [1, 1, 1]} : vector<2x64x128xf32> to vector<2x2x128xf32>
    %cst_129 = arith.constant dense<0.000000e+00> : vector<2x128xf32>
    %281 = vector.multi_reduction <add>, %280, %cst_129 [1] : vector<2x2x128xf32> to vector<2x128xf32>
    %282 = arith.addf %279, %281 : vector<2x128xf32>
    %cst_130 = arith.constant 2.500000e-01 : f32
    %283 = vector.broadcast %cst_130 : f32 to vector<2x128xf32>
    %284 = arith.mulf %282, %283 : vector<2x128xf32>
    %285 = arith.truncf %284 : vector<2x128xf32> to vector<2x128xbf16>
    %cst_131 = arith.constant 0.000000e+00 : f32
    %286 = vector.broadcast %cst_131 : f32 to vector<2x128xf32>
    %287 = vector.extract_strided_slice %205 {offsets = [0, 32, 0], sizes = [2, 2, 128], strides = [1, 1, 1]} : vector<2x64x128xf32> to vector<2x2x128xf32>
    %cst_132 = arith.constant dense<0.000000e+00> : vector<2x128xf32>
    %288 = vector.multi_reduction <add>, %287, %cst_132 [1] : vector<2x2x128xf32> to vector<2x128xf32>
    %289 = arith.addf %286, %288 : vector<2x128xf32>
    %290 = vector.extract_strided_slice %205 {offsets = [0, 40, 0], sizes = [2, 2, 128], strides = [1, 1, 1]} : vector<2x64x128xf32> to vector<2x2x128xf32>
    %cst_133 = arith.constant dense<0.000000e+00> : vector<2x128xf32>
    %291 = vector.multi_reduction <add>, %290, %cst_133 [1] : vector<2x2x128xf32> to vector<2x128xf32>
    %292 = arith.addf %289, %291 : vector<2x128xf32>
    %cst_134 = arith.constant 2.500000e-01 : f32
    %293 = vector.broadcast %cst_134 : f32 to vector<2x128xf32>
    %294 = arith.mulf %292, %293 : vector<2x128xf32>
    %295 = arith.truncf %294 : vector<2x128xf32> to vector<2x128xbf16>
    %cst_135 = arith.constant 0.000000e+00 : f32
    %296 = vector.broadcast %cst_135 : f32 to vector<2x128xf32>
    %297 = vector.extract_strided_slice %205 {offsets = [0, 34, 0], sizes = [2, 2, 128], strides = [1, 1, 1]} : vector<2x64x128xf32> to vector<2x2x128xf32>
    %cst_136 = arith.constant dense<0.000000e+00> : vector<2x128xf32>
    %298 = vector.multi_reduction <add>, %297, %cst_136 [1] : vector<2x2x128xf32> to vector<2x128xf32>
    %299 = arith.addf %296, %298 : vector<2x128xf32>
    %300 = vector.extract_strided_slice %205 {offsets = [0, 42, 0], sizes = [2, 2, 128], strides = [1, 1, 1]} : vector<2x64x128xf32> to vector<2x2x128xf32>
    %cst_137 = arith.constant dense<0.000000e+00> : vector<2x128xf32>
    %301 = vector.multi_reduction <add>, %300, %cst_137 [1] : vector<2x2x128xf32> to vector<2x128xf32>
    %302 = arith.addf %299, %301 : vector<2x128xf32>
    %cst_138 = arith.constant 2.500000e-01 : f32
    %303 = vector.broadcast %cst_138 : f32 to vector<2x128xf32>
    %304 = arith.mulf %302, %303 : vector<2x128xf32>
    %305 = arith.truncf %304 : vector<2x128xf32> to vector<2x128xbf16>
    %cst_139 = arith.constant 0.000000e+00 : f32
    %306 = vector.broadcast %cst_139 : f32 to vector<2x128xf32>
    %307 = vector.extract_strided_slice %205 {offsets = [0, 36, 0], sizes = [2, 2, 128], strides = [1, 1, 1]} : vector<2x64x128xf32> to vector<2x2x128xf32>
    %cst_140 = arith.constant dense<0.000000e+00> : vector<2x128xf32>
    %308 = vector.multi_reduction <add>, %307, %cst_140 [1] : vector<2x2x128xf32> to vector<2x128xf32>
    %309 = arith.addf %306, %308 : vector<2x128xf32>
    %310 = vector.extract_strided_slice %205 {offsets = [0, 44, 0], sizes = [2, 2, 128], strides = [1, 1, 1]} : vector<2x64x128xf32> to vector<2x2x128xf32>
    %cst_141 = arith.constant dense<0.000000e+00> : vector<2x128xf32>
    %311 = vector.multi_reduction <add>, %310, %cst_141 [1] : vector<2x2x128xf32> to vector<2x128xf32>
    %312 = arith.addf %309, %311 : vector<2x128xf32>
    %cst_142 = arith.constant 2.500000e-01 : f32
    %313 = vector.broadcast %cst_142 : f32 to vector<2x128xf32>
    %314 = arith.mulf %312, %313 : vector<2x128xf32>
    %315 = arith.truncf %314 : vector<2x128xf32> to vector<2x128xbf16>
    %cst_143 = arith.constant 0.000000e+00 : f32
    %316 = vector.broadcast %cst_143 : f32 to vector<2x128xf32>
    %317 = vector.extract_strided_slice %205 {offsets = [0, 38, 0], sizes = [2, 2, 128], strides = [1, 1, 1]} : vector<2x64x128xf32> to vector<2x2x128xf32>
    %cst_144 = arith.constant dense<0.000000e+00> : vector<2x128xf32>
    %318 = vector.multi_reduction <add>, %317, %cst_144 [1] : vector<2x2x128xf32> to vector<2x128xf32>
    %319 = arith.addf %316, %318 : vector<2x128xf32>
    %320 = vector.extract_strided_slice %205 {offsets = [0, 46, 0], sizes = [2, 2, 128], strides = [1, 1, 1]} : vector<2x64x128xf32> to vector<2x2x128xf32>
    %cst_145 = arith.constant dense<0.000000e+00> : vector<2x128xf32>
    %321 = vector.multi_reduction <add>, %320, %cst_145 [1] : vector<2x2x128xf32> to vector<2x128xf32>
    %322 = arith.addf %319, %321 : vector<2x128xf32>
    %cst_146 = arith.constant 2.500000e-01 : f32
    %323 = vector.broadcast %cst_146 : f32 to vector<2x128xf32>
    %324 = arith.mulf %322, %323 : vector<2x128xf32>
    %325 = arith.truncf %324 : vector<2x128xf32> to vector<2x128xbf16>
    %cst_147 = arith.constant 0.000000e+00 : f32
    %326 = vector.broadcast %cst_147 : f32 to vector<2x128xf32>
    %327 = vector.extract_strided_slice %205 {offsets = [0, 48, 0], sizes = [2, 2, 128], strides = [1, 1, 1]} : vector<2x64x128xf32> to vector<2x2x128xf32>
    %cst_148 = arith.constant dense<0.000000e+00> : vector<2x128xf32>
    %328 = vector.multi_reduction <add>, %327, %cst_148 [1] : vector<2x2x128xf32> to vector<2x128xf32>
    %329 = arith.addf %326, %328 : vector<2x128xf32>
    %330 = vector.extract_strided_slice %205 {offsets = [0, 56, 0], sizes = [2, 2, 128], strides = [1, 1, 1]} : vector<2x64x128xf32> to vector<2x2x128xf32>
    %cst_149 = arith.constant dense<0.000000e+00> : vector<2x128xf32>
    %331 = vector.multi_reduction <add>, %330, %cst_149 [1] : vector<2x2x128xf32> to vector<2x128xf32>
    %332 = arith.addf %329, %331 : vector<2x128xf32>
    %cst_150 = arith.constant 2.500000e-01 : f32
    %333 = vector.broadcast %cst_150 : f32 to vector<2x128xf32>
    %334 = arith.mulf %332, %333 : vector<2x128xf32>
    %335 = arith.truncf %334 : vector<2x128xf32> to vector<2x128xbf16>
    %cst_151 = arith.constant 0.000000e+00 : f32
    %336 = vector.broadcast %cst_151 : f32 to vector<2x128xf32>
    %337 = vector.extract_strided_slice %205 {offsets = [0, 50, 0], sizes = [2, 2, 128], strides = [1, 1, 1]} : vector<2x64x128xf32> to vector<2x2x128xf32>
    %cst_152 = arith.constant dense<0.000000e+00> : vector<2x128xf32>
    %338 = vector.multi_reduction <add>, %337, %cst_152 [1] : vector<2x2x128xf32> to vector<2x128xf32>
    %339 = arith.addf %336, %338 : vector<2x128xf32>
    %340 = vector.extract_strided_slice %205 {offsets = [0, 58, 0], sizes = [2, 2, 128], strides = [1, 1, 1]} : vector<2x64x128xf32> to vector<2x2x128xf32>
    %cst_153 = arith.constant dense<0.000000e+00> : vector<2x128xf32>
    %341 = vector.multi_reduction <add>, %340, %cst_153 [1] : vector<2x2x128xf32> to vector<2x128xf32>
    %342 = arith.addf %339, %341 : vector<2x128xf32>
    %cst_154 = arith.constant 2.500000e-01 : f32
    %343 = vector.broadcast %cst_154 : f32 to vector<2x128xf32>
    %344 = arith.mulf %342, %343 : vector<2x128xf32>
    %345 = arith.truncf %344 : vector<2x128xf32> to vector<2x128xbf16>
    %cst_155 = arith.constant 0.000000e+00 : f32
    %346 = vector.broadcast %cst_155 : f32 to vector<2x128xf32>
    %347 = vector.extract_strided_slice %205 {offsets = [0, 52, 0], sizes = [2, 2, 128], strides = [1, 1, 1]} : vector<2x64x128xf32> to vector<2x2x128xf32>
    %cst_156 = arith.constant dense<0.000000e+00> : vector<2x128xf32>
    %348 = vector.multi_reduction <add>, %347, %cst_156 [1] : vector<2x2x128xf32> to vector<2x128xf32>
    %349 = arith.addf %346, %348 : vector<2x128xf32>
    %350 = vector.extract_strided_slice %205 {offsets = [0, 60, 0], sizes = [2, 2, 128], strides = [1, 1, 1]} : vector<2x64x128xf32> to vector<2x2x128xf32>
    %cst_157 = arith.constant dense<0.000000e+00> : vector<2x128xf32>
    %351 = vector.multi_reduction <add>, %350, %cst_157 [1] : vector<2x2x128xf32> to vector<2x128xf32>
    %352 = arith.addf %349, %351 : vector<2x128xf32>
    %cst_158 = arith.constant 2.500000e-01 : f32
    %353 = vector.broadcast %cst_158 : f32 to vector<2x128xf32>
    %354 = arith.mulf %352, %353 : vector<2x128xf32>
    %355 = arith.truncf %354 : vector<2x128xf32> to vector<2x128xbf16>
    %cst_159 = arith.constant 0.000000e+00 : f32
    %356 = vector.broadcast %cst_159 : f32 to vector<2x128xf32>
    %357 = vector.extract_strided_slice %205 {offsets = [0, 54, 0], sizes = [2, 2, 128], strides = [1, 1, 1]} : vector<2x64x128xf32> to vector<2x2x128xf32>
    %cst_160 = arith.constant dense<0.000000e+00> : vector<2x128xf32>
    %358 = vector.multi_reduction <add>, %357, %cst_160 [1] : vector<2x2x128xf32> to vector<2x128xf32>
    %359 = arith.addf %356, %358 : vector<2x128xf32>
    %360 = vector.extract_strided_slice %205 {offsets = [0, 62, 0], sizes = [2, 2, 128], strides = [1, 1, 1]} : vector<2x64x128xf32> to vector<2x2x128xf32>
    %cst_161 = arith.constant dense<0.000000e+00> : vector<2x128xf32>
    %361 = vector.multi_reduction <add>, %360, %cst_161 [1] : vector<2x2x128xf32> to vector<2x128xf32>
    %362 = arith.addf %359, %361 : vector<2x128xf32>
    %cst_162 = arith.constant 2.500000e-01 : f32
    %363 = vector.broadcast %cst_162 : f32 to vector<2x128xf32>
    %364 = arith.mulf %362, %363 : vector<2x128xf32>
    %365 = arith.truncf %364 : vector<2x128xf32> to vector<2x128xbf16>
    %366 = tpu.concatenate %215, %225, %235, %245, %255, %265, %275, %285, %295, %305, %315, %325, %335, %345, %355, %365 in 1 : vector<2x128xbf16>, vector<2x128xbf16>, vector<2x128xbf16>, vector<2x128xbf16>, vector<2x128xbf16>, vector<2x128xbf16>, vector<2x128xbf16>, vector<2x128xbf16>, vector<2x128xbf16>, vector<2x128xbf16>, vector<2x128xbf16>, vector<2x128xbf16>, vector<2x128xbf16>, vector<2x128xbf16>, vector<2x128xbf16>, vector<2x128xbf16> -> vector<2x2048xbf16>
    %c1_163 = arith.constant 1 : index
    %c0_164 = arith.constant 0 : index
    %c0_165 = arith.constant 0 : index
    %367 = vector.load %arg5[%c1_163, %c0_164, %c0_165] : memref<2x2048x128xbf16, #tpu.memory_space<vmem>>, vector<1x2048x128xbf16>
    %368 = vector.shape_cast %367 : vector<1x2048x128xbf16> to vector<2048x128xbf16>
    %cst_166 = arith.constant dense<0.000000e+00> : vector<2x128xf32>
    %369 = tpu.matmul %366, %368, %cst_166 {dimension_numbers = #tpu.dot_dimension_numbers<[1], [0], [0], [1], [0, 0, 1, 1], [], []>} : vector<2x2048xbf16>, vector<2048x128xbf16>, vector<2x128xf32> -> vector<2x128xf32>
    %c1_167 = arith.constant 1 : index
    %c0_168 = arith.constant 0 : index
    %c0_169 = arith.constant 0 : index
    %370 = vector.load %arg6[%c1_167, %c0_168, %c0_169] : memref<2x1x128xf32, #tpu.memory_space<vmem>>, vector<1x1x128xf32>
    %371 = vector.shape_cast %370 : vector<1x1x128xf32> to vector<1x128xf32>
    %372 = vector.broadcast %371 : vector<1x128xf32> to vector<2x128xf32>
    %373 = arith.addf %369, %372 : vector<2x128xf32>
    %374 = arith.truncf %373 : vector<2x128xf32> to vector<2x128xbf16>
    %c1_170 = arith.constant 1 : index
    %c0_171 = arith.constant 0 : index
    %c0_172 = arith.constant 0 : index
    %375 = vector.load %arg7[%c1_170, %c0_171, %c0_172] : memref<2x128x128xbf16, #tpu.memory_space<vmem>>, vector<1x128x128xbf16>
    %376 = vector.shape_cast %375 : vector<1x128x128xbf16> to vector<128x128xbf16>
    %cst_173 = arith.constant dense<0.000000e+00> : vector<2x128xf32>
    %377 = tpu.matmul %374, %376, %cst_173 {dimension_numbers = #tpu.dot_dimension_numbers<[1], [0], [0], [1], [0, 0, 1, 1], [], []>} : vector<2x128xbf16>, vector<128x128xbf16>, vector<2x128xf32> -> vector<2x128xf32>
    %c1_174 = arith.constant 1 : index
    %c0_175 = arith.constant 0 : index
    %c0_176 = arith.constant 0 : index
    %378 = vector.load %arg8[%c1_174, %c0_175, %c0_176] : memref<2x1x128xf32, #tpu.memory_space<vmem>>, vector<1x1x128xf32>
    %379 = vector.shape_cast %378 : vector<1x1x128xf32> to vector<1x128xf32>
    %380 = vector.broadcast %379 : vector<1x128xf32> to vector<2x128xf32>
    %381 = arith.addf %377, %380 : vector<2x128xf32>
    %382 = arith.negf %381 : vector<2x128xf32>
    %383 = math.exp %382 : vector<2x128xf32>
    %cst_177 = arith.constant 1.000000e+00 : f32
    %384 = vector.broadcast %cst_177 : f32 to vector<2x128xf32>
    %385 = arith.addf %384, %383 : vector<2x128xf32>
    %386 = arith.divf %384, %385 : vector<2x128xf32>
    %c1_178 = arith.constant 1 : index
    %c0_179 = arith.constant 0 : index
    %c0_180 = arith.constant 0 : index
    %387 = vector.load %arg9[%c1_178, %c0_179, %c0_180] : memref<2x2x128xf32, #tpu.memory_space<vmem>>, vector<1x2x128xf32>
    %388 = vector.shape_cast %387 : vector<1x2x128xf32> to vector<2x128xf32>
    %389 = vector.shape_cast %386 : vector<2x128xf32> to vector<1x2x128xf32>
    tpu.vector_store %arg9[%c1_178, %c0_179, %c0_180], %389 {strides = array<i32>} : memref<2x2x128xf32, #tpu.memory_space<vmem>>, vector<1x2x128xf32>,
    return
  }
  func.func @transform_0(%arg0: i32) -> (i32, i32) {
    %c0_i32 = arith.constant 0 : i32
    %c0_i32_0 = arith.constant 0 : i32
    return %arg0, %c0_i32 : i32, i32
  }
  func.func @transform_1(%arg0: i32) -> (i32, i32) {
    %c0_i32 = arith.constant 0 : i32
    %c0_i32_0 = arith.constant 0 : i32
    return %arg0, %c0_i32 : i32, i32
  }
  func.func @transform_2(%arg0: i32) -> (i32, i32, i32) {
    %c0_i32 = arith.constant 0 : i32
    %c0_i32_0 = arith.constant 0 : i32
    %c0_i32_1 = arith.constant 0 : i32
    %c0_i32_2 = arith.constant 0 : i32
    return %c0_i32, %c0_i32_0, %c0_i32_1 : i32, i32, i32
  }
  func.func @transform_3(%arg0: i32) -> (i32, i32, i32) {
    %c0_i32 = arith.constant 0 : i32
    %c0_i32_0 = arith.constant 0 : i32
    %c0_i32_1 = arith.constant 0 : i32
    %c0_i32_2 = arith.constant 0 : i32
    return %c0_i32, %c0_i32_0, %c0_i32_1 : i32, i32, i32
  }
  func.func @transform_4(%arg0: i32) -> (i32, i32, i32) {
    %c0_i32 = arith.constant 0 : i32
    %c0_i32_0 = arith.constant 0 : i32
    %c0_i32_1 = arith.constant 0 : i32
    %c0_i32_2 = arith.constant 0 : i32
    return %c0_i32, %c0_i32_0, %c0_i32_1 : i32, i32, i32
  }
  func.func @transform_5(%arg0: i32) -> (i32, i32, i32) {
    %c0_i32 = arith.constant 0 : i32
    %c0_i32_0 = arith.constant 0 : i32
    %c0_i32_1 = arith.constant 0 : i32
    %c0_i32_2 = arith.constant 0 : i32
    return %c0_i32, %c0_i32_0, %c0_i32_1 : i32, i32, i32
  }
  func.func @transform_6(%arg0: i32) -> (i32, i32, i32) {
    %c0_i32 = arith.constant 0 : i32
    %c0_i32_0 = arith.constant 0 : i32
    %c0_i32_1 = arith.constant 0 : i32
    %c0_i32_2 = arith.constant 0 : i32
    return %c0_i32, %c0_i32_0, %c0_i32_1 : i32, i32, i32
  }
  func.func @transform_7(%arg0: i32) -> (i32, i32, i32) {
    %c0_i32 = arith.constant 0 : i32
    %c0_i32_0 = arith.constant 0 : i32
    %c0_i32_1 = arith.constant 0 : i32
    %c0_i32_2 = arith.constant 0 : i32
    return %c0_i32, %c0_i32_0, %c0_i32_1 : i32, i32, i32
  }
  func.func @transform_8(%arg0: i32) -> (i32, i32, i32) {
    %c0_i32 = arith.constant 0 : i32
    %c0_i32_0 = arith.constant 0 : i32
    %c0_i32_1 = arith.constant 0 : i32
    return %c0_i32, %arg0, %c0_i32_0 : i32, i32, i32
  }
}

</mosaic_0001>

<llo_original>
// kernel: bnn_forward.1
$region0: #{bnn_forward.1}
  #allocation0 [shape = 'u32[]', space=smem, size = 0x4, offset = 0x4, fixed_abs, tag = 'smem constant byte address 0x4 - core index']
  #allocation1 [shape = 'u32[144,128]{1,0:T(1,128)}', space=vmem, size = 0x12000, scoped, tag = 'internal scratch']
  %s0 = inlined_call_operand.hbm [shape: bf16[128,2048], index: 0, kind: input, shape index: {}]
  %s1 = inlined_call_operand.hbm [shape: bf16[128,2048], index: 1, kind: input, shape index: {}]
  %s2 = inlined_call_operand.hbm [shape: bf16[2,2048,128], index: 2, kind: input, shape index: {}]
  %s3 = inlined_call_operand.vmem [shape: f32[2,1,128], index: 3, kind: input, shape index: {}]
  %s4 = inlined_call_operand.hbm [shape: bf16[2,2048,128], index: 4, kind: input, shape index: {}]
  %s5 = inlined_call_operand.vmem [shape: f32[2,1,128], index: 5, kind: input, shape index: {}]
  %s6 = inlined_call_operand.hbm [shape: bf16[2,128,128], index: 6, kind: input, shape index: {}]
  %s7 = inlined_call_operand.vmem [shape: f32[2,1,128], index: 7, kind: input, shape index: {}]
  %s8 = inlined_call_operand.vmem [shape: f32[2,2,128], index: 8, kind: output, shape index: {}]
  %s9 = sld [smem:[#allocation0]]
  $region62: #{bnn_forward.1} parent=0
    _
  %s11 = ssub.s32 1, %s9
  %s12 = scalar_select 0, %s11, %s9
  $region1: #{bnn_forward.1} parent=0
    #allocation2 [shape = 'u8[524288]{0}', space=vmem, size = 0x80000, scoped, tag = 'input window, operand 0, single buffered']
    #allocation3 [shape = 's32[1]{0}', space=sflag, size = 0x4, scoped, tag = 'scoped memory for bnn_forward.1']
    #allocation4 [shape = 'u8[524288]{0}', space=vmem, size = 0x80000, scoped, tag = 'input window, operand 1, single buffered']
    #allocation5 [shape = 's32[1]{0}', space=sflag, size = 0x4, scoped, tag = 'scoped memory for bnn_forward.1']
    #allocation6 [shape = 'u8[1048576]{0}', space=vmem, size = 0x100000, scoped, tag = 'input window, operand 2, single buffered']
    #allocation7 [shape = 'u8[1048576]{0}', space=vmem, size = 0x100000, scoped, tag = 'input window, operand 4, single buffered']
    #allocation8 [shape = 's32[1]{0}', space=sflag, size = 0x4, scoped, tag = 'scoped memory for bnn_forward.1']
    #allocation9 [shape = 'u8[65536]{0}', space=vmem, size = 0x10000, scoped, tag = 'input window, operand 6, single buffered']
    %13 = vsyncpa [#allocation3], 0
    %14 = vsyncpa [#allocation5], 0
    %15 = vsyncpa [#allocation8], 0
    // Predicated region
    $region2: #{bnn_forward.1} parent=1 // pred_check
      _
    $region3: #{bnn_forward.1} parent=1 // pred_check_branch
      %17 = sbr.rel (0) target = $region5
    $region4: #{bnn_forward.1} parent=1 // pred_region
      %s19 = ssub.s32 16384, 16384
      %20 = vsyncadd [#allocation3], %s19
      %s21 = sshll.u32 [#allocation2], 4
      %s22 = int_to_ptr.vmem [resolvable:$true] %s21
      %27 = dma.hbm_to_vmem [thread:$0]  %s0, 16384, %s22, [#allocation3], 1024, 1024, 64
    $region5: #{bnn_forward.1} parent=1 // pred_fallthru
      _
    // Predicated region
    $region6: #{bnn_forward.1} parent=1 // pred_check
      _
    $region7: #{bnn_forward.1} parent=1 // pred_check_branch
      %29 = sbr.rel (0) target = $region9
    $region8: #{bnn_forward.1} parent=1 // pred_region
      %s31 = ssub.s32 16384, 16384
      %32 = vsyncadd [#allocation5], %s31
      %s33 = sshll.u32 [#allocation4], 4
      %s34 = int_to_ptr.vmem [resolvable:$true] %s33
      %39 = dma.hbm_to_vmem [thread:$0]  %s1, 16384, %s34, [#allocation5], 1024, 1024, 64
    $region9: #{bnn_forward.1} parent=1 // pred_fallthru
      _
    // Predicated region
    $region10: #{bnn_forward.1} parent=1 // pred_check
      _
    $region11: #{bnn_forward.1} parent=1 // pred_check_branch
      %41 = sbr.rel (0) target = $region13
    $region12: #{bnn_forward.1} parent=1 // pred_region
      %s43 = ssub.s32 32768, 32768
      %44 = vsyncadd [#allocation5], %s43
      %s45 = sshll.u32 [#allocation6], 4
      %s46 = int_to_ptr.vmem [resolvable:$true] %s45
      %51 = dma.hbm_to_vmem [thread:$0]  %s2, 32768, %s46, [#allocation5], 64, 64, 4
    $region13: #{bnn_forward.1} parent=1 // pred_fallthru
      _
    // Predicated region
    $region14: #{bnn_forward.1} parent=1 // pred_check
      _
    $region15: #{bnn_forward.1} parent=1 // pred_check_branch
      %53 = sbr.rel (0) target = $region17
    $region16: #{bnn_forward.1} parent=1 // pred_region
      _
    $region17: #{bnn_forward.1} parent=1 // pred_fallthru
      _
    // Predicated region
    $region18: #{bnn_forward.1} parent=1 // pred_check
      _
    $region19: #{bnn_forward.1} parent=1 // pred_check_branch
      %55 = sbr.rel (0) target = $region21
    $region20: #{bnn_forward.1} parent=1 // pred_region
      %s57 = ssub.s32 32768, 32768
      %58 = vsyncadd [#allocation8], %s57
      %s59 = sshll.u32 [#allocation7], 4
      %s60 = int_to_ptr.vmem [resolvable:$true] %s59
      %65 = dma.hbm_to_vmem [thread:$0]  %s4, 32768, %s60, [#allocation8], 64, 64, 4
    $region21: #{bnn_forward.1} parent=1 // pred_fallthru
      _
    // Predicated region
    $region22: #{bnn_forward.1} parent=1 // pred_check
      _
    $region23: #{bnn_forward.1} parent=1 // pred_check_branch
      %67 = sbr.rel (0) target = $region25
    $region24: #{bnn_forward.1} parent=1 // pred_region
      _
    $region25: #{bnn_forward.1} parent=1 // pred_fallthru
      _
    // Predicated region
    $region26: #{bnn_forward.1} parent=1 // pred_check
      _
    $region27: #{bnn_forward.1} parent=1 // pred_check_branch
      %69 = sbr.rel (0) target = $region29
    $region28: #{bnn_forward.1} parent=1 // pred_region
      %s71 = ssub.s32 2048, 2048
      %72 = vsyncadd [#allocation8], %s71
      %s73 = sshll.u32 [#allocation9], 4
      %s74 = int_to_ptr.vmem [resolvable:$true] %s73
      %79 = dma.hbm_to_vmem [thread:$0]  %s6, 2048, %s74, [#allocation8], 64, 64, 4
    $region29: #{bnn_forward.1} parent=1 // pred_fallthru
      _
    // Predicated region
    $region30: #{bnn_forward.1} parent=1 // pred_check
      _
    $region31: #{bnn_forward.1} parent=1 // pred_check_branch
      %81 = sbr.rel (0) target = $region33
    $region32: #{bnn_forward.1} parent=1 // pred_region
      _
    $region33: #{bnn_forward.1} parent=1 // pred_fallthru
      _
    // Predicated region
    $region34: #{bnn_forward.1} parent=1 // pred_check
      _
    $region35: #{bnn_forward.1} parent=1 // pred_check_branch
      %83 = sbr.rel (0) target = $region37
    $region36: #{bnn_forward.1} parent=1 // pred_region
      %84 = dma.done [#allocation3], 16384
    $region37: #{bnn_forward.1} parent=1 // pred_fallthru
      _
    // Predicated region
    $region38: #{bnn_forward.1} parent=1 // pred_check
      _
    $region39: #{bnn_forward.1} parent=1 // pred_check_branch
      %86 = sbr.rel (0) target = $region41
    $region40: #{bnn_forward.1} parent=1 // pred_region
      %87 = dma.done [#allocation5], 16384
    $region41: #{bnn_forward.1} parent=1 // pred_fallthru
      _
    // Predicated region
    $region42: #{bnn_forward.1} parent=1 // pred_check
      _
    $region43: #{bnn_forward.1} parent=1 // pred_check_branch
      %89 = sbr.rel (0) target = $region45
    $region44: #{bnn_forward.1} parent=1 // pred_region
      %90 = dma.done [#allocation5], 32768
    $region45: #{bnn_forward.1} parent=1 // pred_fallthru
      _
    // Predicated region
    $region46: #{bnn_forward.1} parent=1 // pred_check
      _
    $region47: #{bnn_forward.1} parent=1 // pred_check_branch
      %92 = sbr.rel (0) target = $region49
    $region48: #{bnn_forward.1} parent=1 // pred_region
      %93 = dma.done [#allocation8], 32768
    $region49: #{bnn_forward.1} parent=1 // pred_fallthru
      _
    // Predicated region
    $region50: #{bnn_forward.1} parent=1 // pred_check
      _
    $region51: #{bnn_forward.1} parent=1 // pred_check_branch
      %95 = sbr.rel (0) target = $region53
    $region52: #{bnn_forward.1} parent=1 // pred_region
      %96 = dma.done [#allocation8], 2048
    $region53: #{bnn_forward.1} parent=1 // pred_fallthru
      _
    %v98 = vld [vmem:[#allocation2] sm:$0xff]
    %v99 = vld [vmem:[#allocation2 + $0x8] sm:$0xff]
    %v100 = vld [vmem:[#allocation2 + $0x10] sm:$0xff]
    %v101 = vld [vmem:[#allocation2 + $0x18] sm:$0xff]
    %v102 = vld [vmem:[#allocation2 + $0x20] sm:$0xff]
    %v103 = vld [vmem:[#allocation2 + $0x28] sm:$0xff]
    %v104 = vld [vmem:[#allocation2 + $0x30] sm:$0xff]
    %v105 = vld [vmem:[#allocation2 + $0x38] sm:$0xff]
    %v106 = vld [vmem:[#allocation2 + $0x40] sm:$0xff]
    %v107 = vld [vmem:[#allocation2 + $0x48] sm:$0xff]
    %v108 = vld [vmem:[#allocation2 + $0x50] sm:$0xff]
    %v109 = vld [vmem:[#allocation2 + $0x58] sm:$0xff]
    %v110 = vld [vmem:[#allocation2 + $0x60] sm:$0xff]
    %v111 = vld [vmem:[#allocation2 + $0x68] sm:$0xff]
    %v112 = vld [vmem:[#allocation2 + $0x70] sm:$0xff]
    %v113 = vld [vmem:[#allocation2 + $0x78] sm:$0xff]
    %v114 = vld [vmem:[#allocation2 + $0x80] sm:$0xff]
    %v115 = vld [vmem:[#allocation2 + $0x88] sm:$0xff]
    %v116 = vld [vmem:[#allocation2 + $0x90] sm:$0xff]
    %v117 = vld [vmem:[#allocation2 + $0x98] sm:$0xff]
    %v118 = vld [vmem:[#allocation2 + $0xa0] sm:$0xff]
    %v119 = vld [vmem:[#allocation2 + $0xa8] sm:$0xff]
    %v120 = vld [vmem:[#allocation2 + $0xb0] sm:$0xff]
    %v121 = vld [vmem:[#allocation2 + $0xb8] sm:$0xff]
    %v122 = vld [vmem:[#allocation2 + $0xc0] sm:$0xff]
    %v123 = vld [vmem:[#allocation2 + $0xc8] sm:$0xff]
    %v124 = vld [vmem:[#allocation2 + $0xd0] sm:$0xff]
    %v125 = vld [vmem:[#allocation2 + $0xd8] sm:$0xff]
    %v126 = vld [vmem:[#allocation2 + $0xe0] sm:$0xff]
    %v127 = vld [vmem:[#allocation2 + $0xe8] sm:$0xff]
    %v128 = vld [vmem:[#allocation2 + $0xf0] sm:$0xff]
    %v129 = vld [vmem:[#allocation2 + $0xf8] sm:$0xff]
    %v130 = vld [vmem:[#allocation2 + $0x100] sm:$0xff]
    %v131 = vld [vmem:[#allocation2 + $0x108] sm:$0xff]
    %v132 = vld [vmem:[#allocation2 + $0x110] sm:$0xff]
    %v133 = vld [vmem:[#allocation2 + $0x118] sm:$0xff]
    %v134 = vld [vmem:[#allocation2 + $0x120] sm:$0xff]
    %v135 = vld [vmem:[#allocation2 + $0x128] sm:$0xff]
    %v136 = vld [vmem:[#allocation2 + $0x130] sm:$0xff]
    %v137 = vld [vmem:[#allocation2 + $0x138] sm:$0xff]
    %v138 = vld [vmem:[#allocation2 + $0x140] sm:$0xff]
    %v139 = vld [vmem:[#allocation2 + $0x148] sm:$0xff]
    %v140 = vld [vmem:[#allocation2 + $0x150] sm:$0xff]
    %v141 = vld [vmem:[#allocation2 + $0x158] sm:$0xff]
    %v142 = vld [vmem:[#allocation2 + $0x160] sm:$0xff]
    %v143 = vld [vmem:[#allocation2 + $0x168] sm:$0xff]
    %v144 = vld [vmem:[#allocation2 + $0x170] sm:$0xff]
    %v145 = vld [vmem:[#allocation2 + $0x178] sm:$0xff]
    %v146 = vld [vmem:[#allocation2 + $0x180] sm:$0xff]
    %v147 = vld [vmem:[#allocation2 + $0x188] sm:$0xff]
    %v148 = vld [vmem:[#allocation2 + $0x190] sm:$0xff]
    %v149 = vld [vmem:[#allocation2 + $0x198] sm:$0xff]
    %v150 = vld [vmem:[#allocation2 + $0x1a0] sm:$0xff]
    %v151 = vld [vmem:[#allocation2 + $0x1a8] sm:$0xff]
    %v152 = vld [vmem:[#allocation2 + $0x1b0] sm:$0xff]
    %v153 = vld [vmem:[#allocation2 + $0x1b8] sm:$0xff]
    %v154 = vld [vmem:[#allocation2 + $0x1c0] sm:$0xff]
    %v155 = vld [vmem:[#allocation2 + $0x1c8] sm:$0xff]
    %v156 = vld [vmem:[#allocation2 + $0x1d0] sm:$0xff]
    %v157 = vld [vmem:[#allocation2 + $0x1d8] sm:$0xff]
    %v158 = vld [vmem:[#allocation2 + $0x1e0] sm:$0xff]
    %v159 = vld [vmem:[#allocation2 + $0x1e8] sm:$0xff]
    %v160 = vld [vmem:[#allocation2 + $0x1f0] sm:$0xff]
    %v161 = vld [vmem:[#allocation2 + $0x1f8] sm:$0xff]
    %v162 = vld [vmem:[#allocation2 + $0x200] sm:$0xff]
    %v163 = vld [vmem:[#allocation2 + $0x208] sm:$0xff]
    %v164 = vld [vmem:[#allocation2 + $0x210] sm:$0xff]
    %v165 = vld [vmem:[#allocation2 + $0x218] sm:$0xff]
    %v166 = vld [vmem:[#allocation2 + $0x220] sm:$0xff]
    %v167 = vld [vmem:[#allocation2 + $0x228] sm:$0xff]
    %v168 = vld [vmem:[#allocation2 + $0x230] sm:$0xff]
    %v169 = vld [vmem:[#allocation2 + $0x238] sm:$0xff]
    %v170 = vld [vmem:[#allocation2 + $0x240] sm:$0xff]
    %v171 = vld [vmem:[#allocation2 + $0x248] sm:$0xff]
    %v172 = vld [vmem:[#allocation2 + $0x250] sm:$0xff]
    %v173 = vld [vmem:[#allocation2 + $0x258] sm:$0xff]
    %v174 = vld [vmem:[#allocation2 + $0x260] sm:$0xff]
    %v175 = vld [vmem:[#allocation2 + $0x268] sm:$0xff]
    %v176 = vld [vmem:[#allocation2 + $0x270] sm:$0xff]
    %v177 = vld [vmem:[#allocation2 + $0x278] sm:$0xff]
    %v178 = vld [vmem:[#allocation2 + $0x280] sm:$0xff]
    %v179 = vld [vmem:[#allocation2 + $0x288] sm:$0xff]
    %v180 = vld [vmem:[#allocation2 + $0x290] sm:$0xff]
    %v181 = vld [vmem:[#allocation2 + $0x298] sm:$0xff]
    %v182 = vld [vmem:[#allocation2 + $0x2a0] sm:$0xff]
    %v183 = vld [vmem:[#allocation2 + $0x2a8] sm:$0xff]
    %v184 = vld [vmem:[#allocation2 + $0x2b0] sm:$0xff]
    %v185 = vld [vmem:[#allocation2 + $0x2b8] sm:$0xff]
    %v186 = vld [vmem:[#allocation2 + $0x2c0] sm:$0xff]
    %v187 = vld [vmem:[#allocation2 + $0x2c8] sm:$0xff]
    %v188 = vld [vmem:[#allocation2 + $0x2d0] sm:$0xff]
    %v189 = vld [vmem:[#allocation2 + $0x2d8] sm:$0xff]
    %v190 = vld [vmem:[#allocation2 + $0x2e0] sm:$0xff]
    %v191 = vld [vmem:[#allocation2 + $0x2e8] sm:$0xff]
    %v192 = vld [vmem:[#allocation2 + $0x2f0] sm:$0xff]
    %v193 = vld [vmem:[#allocation2 + $0x2f8] sm:$0xff]
    %v194 = vld [vmem:[#allocation2 + $0x300] sm:$0xff]
    %v195 = vld [vmem:[#allocation2 + $0x308] sm:$0xff]
    %v196 = vld [vmem:[#allocation2 + $0x310] sm:$0xff]
    %v197 = vld [vmem:[#allocation2 + $0x318] sm:$0xff]
    %v198 = vld [vmem:[#allocation2 + $0x320] sm:$0xff]
    %v199 = vld [vmem:[#allocation2 + $0x328] sm:$0xff]
    %v200 = vld [vmem:[#allocation2 + $0x330] sm:$0xff]
    %v201 = vld [vmem:[#allocation2 + $0x338] sm:$0xff]
    %v202 = vld [vmem:[#allocation2 + $0x340] sm:$0xff]
    %v203 = vld [vmem:[#allocation2 + $0x348] sm:$0xff]
    %v204 = vld [vmem:[#allocation2 + $0x350] sm:$0xff]
    %v205 = vld [vmem:[#allocation2 + $0x358] sm:$0xff]
    %v206 = vld [vmem:[#allocation2 + $0x360] sm:$0xff]
    %v207 = vld [vmem:[#allocation2 + $0x368] sm:$0xff]
    %v208 = vld [vmem:[#allocation2 + $0x370] sm:$0xff]
    %v209 = vld [vmem:[#allocation2 + $0x378] sm:$0xff]
    %v210 = vld [vmem:[#allocation2 + $0x380] sm:$0xff]
    %v211 = vld [vmem:[#allocation2 + $0x388] sm:$0xff]
    %v212 = vld [vmem:[#allocation2 + $0x390] sm:$0xff]
    %v213 = vld [vmem:[#allocation2 + $0x398] sm:$0xff]
    %v214 = vld [vmem:[#allocation2 + $0x3a0] sm:$0xff]
    %v215 = vld [vmem:[#allocation2 + $0x3a8] sm:$0xff]
    %v216 = vld [vmem:[#allocation2 + $0x3b0] sm:$0xff]
    %v217 = vld [vmem:[#allocation2 + $0x3b8] sm:$0xff]
    %v218 = vld [vmem:[#allocation2 + $0x3c0] sm:$0xff]
    %v219 = vld [vmem:[#allocation2 + $0x3c8] sm:$0xff]
    %v220 = vld [vmem:[#allocation2 + $0x3d0] sm:$0xff]
    %v221 = vld [vmem:[#allocation2 + $0x3d8] sm:$0xff]
    %v222 = vld [vmem:[#allocation2 + $0x3e0] sm:$0xff]
    %v223 = vld [vmem:[#allocation2 + $0x3e8] sm:$0xff]
    %v224 = vld [vmem:[#allocation2 + $0x3f0] sm:$0xff]
    %v225 = vld [vmem:[#allocation2 + $0x3f8] sm:$0xff]
    %v226 = vld [vmem:[#allocation6] sm:$0xf]
    %v227 = vld [vmem:[#allocation6 + $0x4] sm:$0xf]
    %v228 = vld [vmem:[#allocation6 + $0x8] sm:$0xf]
    %v229 = vld [vmem:[#allocation6 + $0xc] sm:$0xf]
    %v230 = vld [vmem:[#allocation6 + $0x10] sm:$0xf]
    %v231 = vld [vmem:[#allocation6 + $0x14] sm:$0xf]
    %v232 = vld [vmem:[#allocation6 + $0x18] sm:$0xf]
    %v233 = vld [vmem:[#allocation6 + $0x1c] sm:$0xf]
    %v234 = vld [vmem:[#allocation6 + $0x20] sm:$0xf]
    %v235 = vld [vmem:[#allocation6 + $0x24] sm:$0xf]
    %v236 = vld [vmem:[#allocation6 + $0x28] sm:$0xf]
    %v237 = vld [vmem:[#allocation6 + $0x2c] sm:$0xf]
    %v238 = vld [vmem:[#allocation6 + $0x30] sm:$0xf]
    %v239 = vld [vmem:[#allocation6 + $0x34] sm:$0xf]
    %v240 = vld [vmem:[#allocation6 + $0x38] sm:$0xf]
    %v241 = vld [vmem:[#allocation6 + $0x3c] sm:$0xf]
    %v242 = vld [vmem:[#allocation6 + $0x40] sm:$0xf]
    %v243 = vld [vmem:[#allocation6 + $0x44] sm:$0xf]
    %v244 = vld [vmem:[#allocation6 + $0x48] sm:$0xf]
    %v245 = vld [vmem:[#allocation6 + $0x4c] sm:$0xf]
    %v246 = vld [vmem:[#allocation6 + $0x50] sm:$0xf]
    %v247 = vld [vmem:[#allocation6 + $0x54] sm:$0xf]
    %v248 = vld [vmem:[#allocation6 + $0x58] sm:$0xf]
    %v249 = vld [vmem:[#allocation6 + $0x5c] sm:$0xf]
    %v250 = vld [vmem:[#allocation6 + $0x60] sm:$0xf]
    %v251 = vld [vmem:[#allocation6 + $0x64] sm:$0xf]
    %v252 = vld [vmem:[#allocation6 + $0x68] sm:$0xf]
    %v253 = vld [vmem:[#allocation6 + $0x6c] sm:$0xf]
    %v254 = vld [vmem:[#allocation6 + $0x70] sm:$0xf]
    %v255 = vld [vmem:[#allocation6 + $0x74] sm:$0xf]
    %v256 = vld [vmem:[#allocation6 + $0x78] sm:$0xf]
    %v257 = vld [vmem:[#allocation6 + $0x7c] sm:$0xf]
    %v258 = vld [vmem:[#allocation6 + $0x80] sm:$0xf]
    %v259 = vld [vmem:[#allocation6 + $0x84] sm:$0xf]
    %v260 = vld [vmem:[#allocation6 + $0x88] sm:$0xf]
    %v261 = vld [vmem:[#allocation6 + $0x8c] sm:$0xf]
    %v262 = vld [vmem:[#allocation6 + $0x90] sm:$0xf]
    %v263 = vld [vmem:[#allocation6 + $0x94] sm:$0xf]
    %v264 = vld [vmem:[#allocation6 + $0x98] sm:$0xf]
    %v265 = vld [vmem:[#allocation6 + $0x9c] sm:$0xf]
    %v266 = vld [vmem:[#allocation6 + $0xa0] sm:$0xf]
    %v267 = vld [vmem:[#allocation6 + $0xa4] sm:$0xf]
    %v268 = vld [vmem:[#allocation6 + $0xa8] sm:$0xf]
    %v269 = vld [vmem:[#allocation6 + $0xac] sm:$0xf]
    %v270 = vld [vmem:[#allocation6 + $0xb0] sm:$0xf]
    %v271 = vld [vmem:[#allocation6 + $0xb4] sm:$0xf]
    %v272 = vld [vmem:[#allocation6 + $0xb8] sm:$0xf]
    %v273 = vld [vmem:[#allocation6 + $0xbc] sm:$0xf]
    %v274 = vld [vmem:[#allocation6 + $0xc0] sm:$0xf]
    %v275 = vld [vmem:[#allocation6 + $0xc4] sm:$0xf]
    %v276 = vld [vmem:[#allocation6 + $0xc8] sm:$0xf]
    %v277 = vld [vmem:[#allocation6 + $0xcc] sm:$0xf]
    %v278 = vld [vmem:[#allocation6 + $0xd0] sm:$0xf]
    %v279 = vld [vmem:[#allocation6 + $0xd4] sm:$0xf]
    %v280 = vld [vmem:[#allocation6 + $0xd8] sm:$0xf]
    %v281 = vld [vmem:[#allocation6 + $0xdc] sm:$0xf]
    %v282 = vld [vmem:[#allocation6 + $0xe0] sm:$0xf]
    %v283 = vld [vmem:[#allocation6 + $0xe4] sm:$0xf]
    %v284 = vld [vmem:[#allocation6 + $0xe8] sm:$0xf]
    %v285 = vld [vmem:[#allocation6 + $0xec] sm:$0xf]
    %v286 = vld [vmem:[#allocation6 + $0xf0] sm:$0xf]
    %v287 = vld [vmem:[#allocation6 + $0xf4] sm:$0xf]
    %v288 = vld [vmem:[#allocation6 + $0xf8] sm:$0xf]
    %v289 = vld [vmem:[#allocation6 + $0xfc] sm:$0xf]
    %v290 = vld [vmem:[#allocation6 + $0x100] sm:$0xf]
    %v291 = vld [vmem:[#allocation6 + $0x104] sm:$0xf]
    %v292 = vld [vmem:[#allocation6 + $0x108] sm:$0xf]
    %v293 = vld [vmem:[#allocation6 + $0x10c] sm:$0xf]
    %v294 = vld [vmem:[#allocation6 + $0x110] sm:$0xf]
    %v295 = vld [vmem:[#allocation6 + $0x114] sm:$0xf]
    %v296 = vld [vmem:[#allocation6 + $0x118] sm:$0xf]
    %v297 = vld [vmem:[#allocation6 + $0x11c] sm:$0xf]
    %v298 = vld [vmem:[#allocation6 + $0x120] sm:$0xf]
    %v299 = vld [vmem:[#allocation6 + $0x124] sm:$0xf]
    %v300 = vld [vmem:[#allocation6 + $0x128] sm:$0xf]
    %v301 = vld [vmem:[#allocation6 + $0x12c] sm:$0xf]
    %v302 = vld [vmem:[#allocation6 + $0x130] sm:$0xf]
    %v303 = vld [vmem:[#allocation6 + $0x134] sm:$0xf]
    %v304 = vld [vmem:[#allocation6 + $0x138] sm:$0xf]
    %v305 = vld [vmem:[#allocation6 + $0x13c] sm:$0xf]
    %v306 = vld [vmem:[#allocation6 + $0x140] sm:$0xf]
    %v307 = vld [vmem:[#allocation6 + $0x144] sm:$0xf]
    %v308 = vld [vmem:[#allocation6 + $0x148] sm:$0xf]
    %v309 = vld [vmem:[#allocation6 + $0x14c] sm:$0xf]
    %v310 = vld [vmem:[#allocation6 + $0x150] sm:$0xf]
    %v311 = vld [vmem:[#allocation6 + $0x154] sm:$0xf]
    %v312 = vld [vmem:[#allocation6 + $0x158] sm:$0xf]
    %v313 = vld [vmem:[#allocation6 + $0x15c] sm:$0xf]
    %v314 = vld [vmem:[#allocation6 + $0x160] sm:$0xf]
    %v315 = vld [vmem:[#allocation6 + $0x164] sm:$0xf]
    %v316 = vld [vmem:[#allocation6 + $0x168] sm:$0xf]
    %v317 = vld [vmem:[#allocation6 + $0x16c] sm:$0xf]
    %v318 = vld [vmem:[#allocation6 + $0x170] sm:$0xf]
    %v319 = vld [vmem:[#allocation6 + $0x174] sm:$0xf]
    %v320 = vld [vmem:[#allocation6 + $0x178] sm:$0xf]
    %v321 = vld [vmem:[#allocation6 + $0x17c] sm:$0xf]
    %v322 = vld [vmem:[#allocation6 + $0x180] sm:$0xf]
    %v323 = vld [vmem:[#allocation6 + $0x184] sm:$0xf]
    %v324 = vld [vmem:[#allocation6 + $0x188] sm:$0xf]
    %v325 = vld [vmem:[#allocation6 + $0x18c] sm:$0xf]
    %v326 = vld [vmem:[#allocation6 + $0x190] sm:$0xf]
    %v327 = vld [vmem:[#allocation6 + $0x194] sm:$0xf]
    %v328 = vld [vmem:[#allocation6 + $0x198] sm:$0xf]
    %v329 = vld [vmem:[#allocation6 + $0x19c] sm:$0xf]
    %v330 = vld [vmem:[#allocation6 + $0x1a0] sm:$0xf]
    %v331 = vld [vmem:[#allocation6 + $0x1a4] sm:$0xf]
    %v332 = vld [vmem:[#allocation6 + $0x1a8] sm:$0xf]
    %v333 = vld [vmem:[#allocation6 + $0x1ac] sm:$0xf]
    %v334 = vld [vmem:[#allocation6 + $0x1b0] sm:$0xf]
    %v335 = vld [vmem:[#allocation6 + $0x1b4] sm:$0xf]
    %v336 = vld [vmem:[#allocation6 + $0x1b8] sm:$0xf]
    %v337 = vld [vmem:[#allocation6 + $0x1bc] sm:$0xf]
    %v338 = vld [vmem:[#allocation6 + $0x1c0] sm:$0xf]
    %v339 = vld [vmem:[#allocation6 + $0x1c4] sm:$0xf]
    %v340 = vld [vmem:[#allocation6 + $0x1c8] sm:$0xf]
    %v341 = vld [vmem:[#allocation6 + $0x1cc] sm:$0xf]
    %v342 = vld [vmem:[#allocation6 + $0x1d0] sm:$0xf]
    %v343 = vld [vmem:[#allocation6 + $0x1d4] sm:$0xf]
    %v344 = vld [vmem:[#allocation6 + $0x1d8] sm:$0xf]
    %v345 = vld [vmem:[#allocation6 + $0x1dc] sm:$0xf]
    %v346 = vld [vmem:[#allocation6 + $0x1e0] sm:$0xf]
    %v347 = vld [vmem:[#allocation6 + $0x1e4] sm:$0xf]
    %v348 = vld [vmem:[#allocation6 + $0x1e8] sm:$0xf]
    %v349 = vld [vmem:[#allocation6 + $0x1ec] sm:$0xf]
    %v350 = vld [vmem:[#allocation6 + $0x1f0] sm:$0xf]
    %v351 = vld [vmem:[#allocation6 + $0x1f4] sm:$0xf]
    %v352 = vld [vmem:[#allocation6 + $0x1f8] sm:$0xf]
    %v353 = vld [vmem:[#allocation6 + $0x1fc] sm:$0xf]
    %v354 = vld [vmem:[#allocation6 + $0x200] sm:$0xf]
    %v355 = vld [vmem:[#allocation6 + $0x204] sm:$0xf]
    %v356 = vld [vmem:[#allocation6 + $0x208] sm:$0xf]
    %v357 = vld [vmem:[#allocation6 + $0x20c] sm:$0xf]
    %v358 = vld [vmem:[#allocation6 + $0x210] sm:$0xf]
    %v359 = vld [vmem:[#allocation6 + $0x214] sm:$0xf]
    %v360 = vld [vmem:[#allocation6 + $0x218] sm:$0xf]
    %v361 = vld [vmem:[#allocation6 + $0x21c] sm:$0xf]
    %v362 = vld [vmem:[#allocation6 + $0x220] sm:$0xf]
    %v363 = vld [vmem:[#allocation6 + $0x224] sm:$0xf]
    %v364 = vld [vmem:[#allocation6 + $0x228] sm:$0xf]
    %v365 = vld [vmem:[#allocation6 + $0x22c] sm:$0xf]
    %v366 = vld [vmem:[#allocation6 + $0x230] sm:$0xf]
    %v367 = vld [vmem:[#allocation6 + $0x234] sm:$0xf]
    %v368 = vld [vmem:[#allocation6 + $0x238] sm:$0xf]
    %v369 = vld [vmem:[#allocation6 + $0x23c] sm:$0xf]
    %v370 = vld [vmem:[#allocation6 + $0x240] sm:$0xf]
    %v371 = vld [vmem:[#allocation6 + $0x244] sm:$0xf]
    %v372 = vld [vmem:[#allocation6 + $0x248] sm:$0xf]
    %v373 = vld [vmem:[#allocation6 + $0x24c] sm:$0xf]
    %v374 = vld [vmem:[#allocation6 + $0x250] sm:$0xf]
    %v375 = vld [vmem:[#allocation6 + $0x254] sm:$0xf]
    %v376 = vld [vmem:[#allocation6 + $0x258] sm:$0xf]
    %v377 = vld [vmem:[#allocation6 + $0x25c] sm:$0xf]
    %v378 = vld [vmem:[#allocation6 + $0x260] sm:$0xf]
    %v379 = vld [vmem:[#allocation6 + $0x264] sm:$0xf]
    %v380 = vld [vmem:[#allocation6 + $0x268] sm:$0xf]
    %v381 = vld [vmem:[#allocation6 + $0x26c] sm:$0xf]
    %v382 = vld [vmem:[#allocation6 + $0x270] sm:$0xf]
    %v383 = vld [vmem:[#allocation6 + $0x274] sm:$0xf]
    %v384 = vld [vmem:[#allocation6 + $0x278] sm:$0xf]
    %v385 = vld [vmem:[#allocation6 + $0x27c] sm:$0xf]
    %v386 = vld [vmem:[#allocation6 + $0x280] sm:$0xf]
    %v387 = vld [vmem:[#allocation6 + $0x284] sm:$0xf]
    %v388 = vld [vmem:[#allocation6 + $0x288] sm:$0xf]
    %v389 = vld [vmem:[#allocation6 + $0x28c] sm:$0xf]
    %v390 = vld [vmem:[#allocation6 + $0x290] sm:$0xf]
    %v391 = vld [vmem:[#allocation6 + $0x294] sm:$0xf]
    %v392 = vld [vmem:[#allocation6 + $0x298] sm:$0xf]
    %v393 = vld [vmem:[#allocation6 + $0x29c] sm:$0xf]
    %v394 = vld [vmem:[#allocation6 + $0x2a0] sm:$0xf]
    %v395 = vld [vmem:[#allocation6 + $0x2a4] sm:$0xf]
    %v396 = vld [vmem:[#allocation6 + $0x2a8] sm:$0xf]
    %v397 = vld [vmem:[#allocation6 + $0x2ac] sm:$0xf]
    %v398 = vld [vmem:[#allocation6 + $0x2b0] sm:$0xf]
    %v399 = vld [vmem:[#allocation6 + $0x2b4] sm:$0xf]
    %v400 = vld [vmem:[#allocation6 + $0x2b8] sm:$0xf]
    %v401 = vld [vmem:[#allocation6 + $0x2bc] sm:$0xf]
    %v402 = vld [vmem:[#allocation6 + $0x2c0] sm:$0xf]
    %v403 = vld [vmem:[#allocation6 + $0x2c4] sm:$0xf]
    %v404 = vld [vmem:[#allocation6 + $0x2c8] sm:$0xf]
    %v405 = vld [vmem:[#allocation6 + $0x2cc] sm:$0xf]
    %v406 = vld [vmem:[#allocation6 + $0x2d0] sm:$0xf]
    %v407 = vld [vmem:[#allocation6 + $0x2d4] sm:$0xf]
    %v408 = vld [vmem:[#allocation6 + $0x2d8] sm:$0xf]
    %v409 = vld [vmem:[#allocation6 + $0x2dc] sm:$0xf]
    %v410 = vld [vmem:[#allocation6 + $0x2e0] sm:$0xf]
    %v411 = vld [vmem:[#allocation6 + $0x2e4] sm:$0xf]
    %v412 = vld [vmem:[#allocation6 + $0x2e8] sm:$0xf]
    %v413 = vld [vmem:[#allocation6 + $0x2ec] sm:$0xf]
    %v414 = vld [vmem:[#allocation6 + $0x2f0] sm:$0xf]
    %v415 = vld [vmem:[#allocation6 + $0x2f4] sm:$0xf]
    %v416 = vld [vmem:[#allocation6 + $0x2f8] sm:$0xf]
    %v417 = vld [vmem:[#allocation6 + $0x2fc] sm:$0xf]
    %v418 = vld [vmem:[#allocation6 + $0x300] sm:$0xf]
    %v419 = vld [vmem:[#allocation6 + $0x304] sm:$0xf]
    %v420 = vld [vmem:[#allocation6 + $0x308] sm:$0xf]
    %v421 = vld [vmem:[#allocation6 + $0x30c] sm:$0xf]
    %v422 = vld [vmem:[#allocation6 + $0x310] sm:$0xf]
    %v423 = vld [vmem:[#allocation6 + $0x314] sm:$0xf]
    %v424 = vld [vmem:[#allocation6 + $0x318] sm:$0xf]
    %v425 = vld [vmem:[#allocation6 + $0x31c] sm:$0xf]
    %v426 = vld [vmem:[#allocation6 + $0x320] sm:$0xf]
    %v427 = vld [vmem:[#allocation6 + $0x324] sm:$0xf]
    %v428 = vld [vmem:[#allocation6 + $0x328] sm:$0xf]
    %v429 = vld [vmem:[#allocation6 + $0x32c] sm:$0xf]
    %v430 = vld [vmem:[#allocation6 + $0x330] sm:$0xf]
    %v431 = vld [vmem:[#allocation6 + $0x334] sm:$0xf]
    %v432 = vld [vmem:[#allocation6 + $0x338] sm:$0xf]
    %v433 = vld [vmem:[#allocation6 + $0x33c] sm:$0xf]
    %v434 = vld [vmem:[#allocation6 + $0x340] sm:$0xf]
    %v435 = vld [vmem:[#allocation6 + $0x344] sm:$0xf]
    %v436 = vld [vmem:[#allocation6 + $0x348] sm:$0xf]
    %v437 = vld [vmem:[#allocation6 + $0x34c] sm:$0xf]
    %v438 = vld [vmem:[#allocation6 + $0x350] sm:$0xf]
    %v439 = vld [vmem:[#allocation6 + $0x354] sm:$0xf]
    %v440 = vld [vmem:[#allocation6 + $0x358] sm:$0xf]
    %v441 = vld [vmem:[#allocation6 + $0x35c] sm:$0xf]
    %v442 = vld [vmem:[#allocation6 + $0x360] sm:$0xf]
    %v443 = vld [vmem:[#allocation6 + $0x364] sm:$0xf]
    %v444 = vld [vmem:[#allocation6 + $0x368] sm:$0xf]
    %v445 = vld [vmem:[#allocation6 + $0x36c] sm:$0xf]
    %v446 = vld [vmem:[#allocation6 + $0x370] sm:$0xf]
    %v447 = vld [vmem:[#allocation6 + $0x374] sm:$0xf]
    %v448 = vld [vmem:[#allocation6 + $0x378] sm:$0xf]
    %v449 = vld [vmem:[#allocation6 + $0x37c] sm:$0xf]
    %v450 = vld [vmem:[#allocation6 + $0x380] sm:$0xf]
    %v451 = vld [vmem:[#allocation6 + $0x384] sm:$0xf]
    %v452 = vld [vmem:[#allocation6 + $0x388] sm:$0xf]
    %v453 = vld [vmem:[#allocation6 + $0x38c] sm:$0xf]
    %v454 = vld [vmem:[#allocation6 + $0x390] sm:$0xf]
    %v455 = vld [vmem:[#allocation6 + $0x394] sm:$0xf]
    %v456 = vld [vmem:[#allocation6 + $0x398] sm:$0xf]
    %v457 = vld [vmem:[#allocation6 + $0x39c] sm:$0xf]
    %v458 = vld [vmem:[#allocation6 + $0x3a0] sm:$0xf]
    %v459 = vld [vmem:[#allocation6 + $0x3a4] sm:$0xf]
    %v460 = vld [vmem:[#allocation6 + $0x3a8] sm:$0xf]
    %v461 = vld [vmem:[#allocation6 + $0x3ac] sm:$0xf]
    %v462 = vld [vmem:[#allocation6 + $0x3b0] sm:$0xf]
    %v463 = vld [vmem:[#allocation6 + $0x3b4] sm:$0xf]
    %v464 = vld [vmem:[#allocation6 + $0x3b8] sm:$0xf]
    %v465 = vld [vmem:[#allocation6 + $0x3bc] sm:$0xf]
    %v466 = vld [vmem:[#allocation6 + $0x3c0] sm:$0xf]
    %v467 = vld [vmem:[#allocation6 + $0x3c4] sm:$0xf]
    %v468 = vld [vmem:[#allocation6 + $0x3c8] sm:$0xf]
    %v469 = vld [vmem:[#allocation6 + $0x3cc] sm:$0xf]
    %v470 = vld [vmem:[#allocation6 + $0x3d0] sm:$0xf]
    %v471 = vld [vmem:[#allocation6 + $0x3d4] sm:$0xf]
    %v472 = vld [vmem:[#allocation6 + $0x3d8] sm:$0xf]
    %v473 = vld [vmem:[#allocation6 + $0x3dc] sm:$0xf]
    %v474 = vld [vmem:[#allocation6 + $0x3e0] sm:$0xf]
    %v475 = vld [vmem:[#allocation6 + $0x3e4] sm:$0xf]
    %v476 = vld [vmem:[#allocation6 + $0x3e8] sm:$0xf]
    %v477 = vld [vmem:[#allocation6 + $0x3ec] sm:$0xf]
    %v478 = vld [vmem:[#allocation6 + $0x3f0] sm:$0xf]
    %v479 = vld [vmem:[#allocation6 + $0x3f4] sm:$0xf]
    %v480 = vld [vmem:[#allocation6 + $0x3f8] sm:$0xf]
    %v481 = vld [vmem:[#allocation6 + $0x3fc] sm:$0xf]
    %v482 = vld [vmem:[%s3] sm:$0x1]
    %v484 = vlaneseq
    %v485 = vshrl.u32 %v484, 7
    %v486 = vsub.s32 0, %v485
    %v487 = vrot.slane %v482, %v486
    %v617 = vunpack.c.l.b16 %v98
    %v618 = vunpack.c.h.b16 %v98
    %v619 = vunpack.c.l.b16 %v99
    %v620 = vunpack.c.h.b16 %v99
    %v621 = vunpack.c.l.b16 %v100
    %v622 = vunpack.c.h.b16 %v100
    %v623 = vunpack.c.l.b16 %v101
    %v624 = vunpack.c.h.b16 %v101
    %v625 = vunpack.c.l.b16 %v102
    %v626 = vunpack.c.h.b16 %v102
    %v627 = vunpack.c.l.b16 %v103
    %v628 = vunpack.c.h.b16 %v103
    %v629 = vunpack.c.l.b16 %v104
    %v630 = vunpack.c.h.b16 %v104
    %v631 = vunpack.c.l.b16 %v105
    %v632 = vunpack.c.h.b16 %v105
    %v633 = vunpack.c.l.b16 %v106
    %v634 = vunpack.c.h.b16 %v106
    %v635 = vunpack.c.l.b16 %v107
    %v636 = vunpack.c.h.b16 %v107
    %v637 = vunpack.c.l.b16 %v108
    %v638 = vunpack.c.h.b16 %v108
    %v639 = vunpack.c.l.b16 %v109
    %v640 = vunpack.c.h.b16 %v109
    %v641 = vunpack.c.l.b16 %v110
    %v642 = vunpack.c.h.b16 %v110
    %v643 = vunpack.c.l.b16 %v111
    %v644 = vunpack.c.h.b16 %v111
    %v645 = vunpack.c.l.b16 %v112
    %v646 = vunpack.c.h.b16 %v112
    %v647 = vunpack.c.l.b16 %v113
    %v648 = vunpack.c.h.b16 %v113
    %v649 = vunpack.c.l.b16 %v114
    %v650 = vunpack.c.h.b16 %v114
    %v651 = vunpack.c.l.b16 %v115
    %v652 = vunpack.c.h.b16 %v115
    %v653 = vunpack.c.l.b16 %v116
    %v654 = vunpack.c.h.b16 %v116
    %v655 = vunpack.c.l.b16 %v117
    %v656 = vunpack.c.h.b16 %v117
    %v657 = vunpack.c.l.b16 %v118
    %v658 = vunpack.c.h.b16 %v118
    %v659 = vunpack.c.l.b16 %v119
    %v660 = vunpack.c.h.b16 %v119
    %v661 = vunpack.c.l.b16 %v120
    %v662 = vunpack.c.h.b16 %v120
    %v663 = vunpack.c.l.b16 %v121
    %v664 = vunpack.c.h.b16 %v121
    %v665 = vunpack.c.l.b16 %v122
    %v666 = vunpack.c.h.b16 %v122
    %v667 = vunpack.c.l.b16 %v123
    %v668 = vunpack.c.h.b16 %v123
    %v669 = vunpack.c.l.b16 %v124
    %v670 = vunpack.c.h.b16 %v124
    %v671 = vunpack.c.l.b16 %v125
    %v672 = vunpack.c.h.b16 %v125
    %v673 = vunpack.c.l.b16 %v126
    %v674 = vunpack.c.h.b16 %v126
    %v675 = vunpack.c.l.b16 %v127
    %v676 = vunpack.c.h.b16 %v127
    %v677 = vunpack.c.l.b16 %v128
    %v678 = vunpack.c.h.b16 %v128
    %v679 = vunpack.c.l.b16 %v129
    %v680 = vunpack.c.h.b16 %v129
    %v681 = vunpack.c.l.b16 %v130
    %v682 = vunpack.c.h.b16 %v130
    %v683 = vunpack.c.l.b16 %v131
    %v684 = vunpack.c.h.b16 %v131
    %v685 = vunpack.c.l.b16 %v132
    %v686 = vunpack.c.h.b16 %v132
    %v687 = vunpack.c.l.b16 %v133
    %v688 = vunpack.c.h.b16 %v133
    %v689 = vunpack.c.l.b16 %v134
    %v690 = vunpack.c.h.b16 %v134
    %v691 = vunpack.c.l.b16 %v135
    %v692 = vunpack.c.h.b16 %v135
    %v693 = vunpack.c.l.b16 %v136
    %v694 = vunpack.c.h.b16 %v136
    %v695 = vunpack.c.l.b16 %v137
    %v696 = vunpack.c.h.b16 %v137
    %v697 = vunpack.c.l.b16 %v138
    %v698 = vunpack.c.h.b16 %v138
    %v699 = vunpack.c.l.b16 %v139
    %v700 = vunpack.c.h.b16 %v139
    %v701 = vunpack.c.l.b16 %v140
    %v702 = vunpack.c.h.b16 %v140
    %v703 = vunpack.c.l.b16 %v141
    %v704 = vunpack.c.h.b16 %v141
    %v705 = vunpack.c.l.b16 %v142
    %v706 = vunpack.c.h.b16 %v142
    %v707 = vunpack.c.l.b16 %v143
    %v708 = vunpack.c.h.b16 %v143
    %v709 = vunpack.c.l.b16 %v144
    %v710 = vunpack.c.h.b16 %v144
    %v711 = vunpack.c.l.b16 %v145
    %v712 = vunpack.c.h.b16 %v145
    %v713 = vunpack.c.l.b16 %v146
    %v714 = vunpack.c.h.b16 %v146
    %v715 = vunpack.c.l.b16 %v147
    %v716 = vunpack.c.h.b16 %v147
    %v717 = vunpack.c.l.b16 %v148
    %v718 = vunpack.c.h.b16 %v148
    %v719 = vunpack.c.l.b16 %v149
    %v720 = vunpack.c.h.b16 %v149
    %v721 = vunpack.c.l.b16 %v150
    %v722 = vunpack.c.h.b16 %v150
    %v723 = vunpack.c.l.b16 %v151
    %v724 = vunpack.c.h.b16 %v151
    %v725 = vunpack.c.l.b16 %v152
    %v726 = vunpack.c.h.b16 %v152
    %v727 = vunpack.c.l.b16 %v153
    %v728 = vunpack.c.h.b16 %v153
    %v729 = vunpack.c.l.b16 %v154
    %v730 = vunpack.c.h.b16 %v154
    %v731 = vunpack.c.l.b16 %v155
    %v732 = vunpack.c.h.b16 %v155
    %v733 = vunpack.c.l.b16 %v156
    %v734 = vunpack.c.h.b16 %v156
    %v735 = vunpack.c.l.b16 %v157
    %v736 = vunpack.c.h.b16 %v157
    %v737 = vunpack.c.l.b16 %v158
    %v738 = vunpack.c.h.b16 %v158
    %v739 = vunpack.c.l.b16 %v159
    %v740 = vunpack.c.h.b16 %v159
    %v741 = vunpack.c.l.b16 %v160
    %v742 = vunpack.c.h.b16 %v160
    %v743 = vunpack.c.l.b16 %v161
    %v744 = vunpack.c.h.b16 %v161
    %v745 = vunpack.c.l.b16 %v162
    %v746 = vunpack.c.h.b16 %v162
    %v747 = vunpack.c.l.b16 %v163
    %v748 = vunpack.c.h.b16 %v163
    %v749 = vunpack.c.l.b16 %v164
    %v750 = vunpack.c.h.b16 %v164
    %v751 = vunpack.c.l.b16 %v165
    %v752 = vunpack.c.h.b16 %v165
    %v753 = vunpack.c.l.b16 %v166
    %v754 = vunpack.c.h.b16 %v166
    %v755 = vunpack.c.l.b16 %v167
    %v756 = vunpack.c.h.b16 %v167
    %v757 = vunpack.c.l.b16 %v168
    %v758 = vunpack.c.h.b16 %v168
    %v759 = vunpack.c.l.b16 %v169
    %v760 = vunpack.c.h.b16 %v169
    %v761 = vunpack.c.l.b16 %v170
    %v762 = vunpack.c.h.b16 %v170
    %v763 = vunpack.c.l.b16 %v171
    %v764 = vunpack.c.h.b16 %v171
    %v765 = vunpack.c.l.b16 %v172
    %v766 = vunpack.c.h.b16 %v172
    %v767 = vunpack.c.l.b16 %v173
    %v768 = vunpack.c.h.b16 %v173
    %v769 = vunpack.c.l.b16 %v174
    %v770 = vunpack.c.h.b16 %v174
    %v771 = vunpack.c.l.b16 %v175
    %v772 = vunpack.c.h.b16 %v175
    %v773 = vunpack.c.l.b16 %v176
    %v774 = vunpack.c.h.b16 %v176
    %v775 = vunpack.c.l.b16 %v177
    %v776 = vunpack.c.h.b16 %v177
    %v777 = vunpack.c.l.b16 %v178
    %v778 = vunpack.c.h.b16 %v178
    %v779 = vunpack.c.l.b16 %v179
    %v780 = vunpack.c.h.b16 %v179
    %v781 = vunpack.c.l.b16 %v180
    %v782 = vunpack.c.h.b16 %v180
    %v783 = vunpack.c.l.b16 %v181
    %v784 = vunpack.c.h.b16 %v181
    %v785 = vunpack.c.l.b16 %v182
    %v786 = vunpack.c.h.b16 %v182
    %v787 = vunpack.c.l.b16 %v183
    %v788 = vunpack.c.h.b16 %v183
    %v789 = vunpack.c.l.b16 %v184
    %v790 = vunpack.c.h.b16 %v184
    %v791 = vunpack.c.l.b16 %v185
    %v792 = vunpack.c.h.b16 %v185
    %v793 = vunpack.c.l.b16 %v186
    %v794 = vunpack.c.h.b16 %v186
    %v795 = vunpack.c.l.b16 %v187
    %v796 = vunpack.c.h.b16 %v187
    %v797 = vunpack.c.l.b16 %v188
    %v798 = vunpack.c.h.b16 %v188
    %v799 = vunpack.c.l.b16 %v189
    %v800 = vunpack.c.h.b16 %v189
    %v801 = vunpack.c.l.b16 %v190
    %v802 = vunpack.c.h.b16 %v190
    %v803 = vunpack.c.l.b16 %v191
    %v804 = vunpack.c.h.b16 %v191
    %v805 = vunpack.c.l.b16 %v192
    %v806 = vunpack.c.h.b16 %v192
    %v807 = vunpack.c.l.b16 %v193
    %v808 = vunpack.c.h.b16 %v193
    %v809 = vunpack.c.l.b16 %v194
    %v810 = vunpack.c.h.b16 %v194
    %v811 = vunpack.c.l.b16 %v195
    %v812 = vunpack.c.h.b16 %v195
    %v813 = vunpack.c.l.b16 %v196
    %v814 = vunpack.c.h.b16 %v196
    %v815 = vunpack.c.l.b16 %v197
    %v816 = vunpack.c.h.b16 %v197
    %v817 = vunpack.c.l.b16 %v198
    %v818 = vunpack.c.h.b16 %v198
    %v819 = vunpack.c.l.b16 %v199
    %v820 = vunpack.c.h.b16 %v199
    %v821 = vunpack.c.l.b16 %v200
    %v822 = vunpack.c.h.b16 %v200
    %v823 = vunpack.c.l.b16 %v201
    %v824 = vunpack.c.h.b16 %v201
    %v825 = vunpack.c.l.b16 %v202
    %v826 = vunpack.c.h.b16 %v202
    %v827 = vunpack.c.l.b16 %v203
    %v828 = vunpack.c.h.b16 %v203
    %v829 = vunpack.c.l.b16 %v204
    %v830 = vunpack.c.h.b16 %v204
    %v831 = vunpack.c.l.b16 %v205
    %v832 = vunpack.c.h.b16 %v205
    %v833 = vunpack.c.l.b16 %v206
    %v834 = vunpack.c.h.b16 %v206
    %v835 = vunpack.c.l.b16 %v207
    %v836 = vunpack.c.h.b16 %v207
    %v837 = vunpack.c.l.b16 %v208
    %v838 = vunpack.c.h.b16 %v208
    %v839 = vunpack.c.l.b16 %v209
    %v840 = vunpack.c.h.b16 %v209
    %v841 = vunpack.c.l.b16 %v210
    %v842 = vunpack.c.h.b16 %v210
    %v843 = vunpack.c.l.b16 %v211
    %v844 = vunpack.c.h.b16 %v211
    %v845 = vunpack.c.l.b16 %v212
    %v846 = vunpack.c.h.b16 %v212
    %v847 = vunpack.c.l.b16 %v213
    %v848 = vunpack.c.h.b16 %v213
    %v849 = vunpack.c.l.b16 %v214
    %v850 = vunpack.c.h.b16 %v214
    %v851 = vunpack.c.l.b16 %v215
    %v852 = vunpack.c.h.b16 %v215
    %v853 = vunpack.c.l.b16 %v216
    %v854 = vunpack.c.h.b16 %v216
    %v855 = vunpack.c.l.b16 %v217
    %v856 = vunpack.c.h.b16 %v217
    %v857 = vunpack.c.l.b16 %v218
    %v858 = vunpack.c.h.b16 %v218
    %v859 = vunpack.c.l.b16 %v219
    %v860 = vunpack.c.h.b16 %v219
    %v861 = vunpack.c.l.b16 %v220
    %v862 = vunpack.c.h.b16 %v220
    %v863 = vunpack.c.l.b16 %v221
    %v864 = vunpack.c.h.b16 %v221
    %v865 = vunpack.c.l.b16 %v222
    %v866 = vunpack.c.h.b16 %v222
    %v867 = vunpack.c.l.b16 %v223
    %v868 = vunpack.c.h.b16 %v223
    %v869 = vunpack.c.l.b16 %v224
    %v870 = vunpack.c.h.b16 %v224
    %v871 = vunpack.c.l.b16 %v225
    %v872 = vunpack.c.h.b16 %v225
    %v873 = vpack.c.b16 %v633, %v617
    %v874 = vpack.c.b16 %v634, %v618
    %v875 = vpack.c.b16 %v635, %v619
    %v876 = vpack.c.b16 %v636, %v620
    %v877 = vpack.c.b16 %v637, %v621
    %v878 = vpack.c.b16 %v638, %v622
    %v879 = vpack.c.b16 %v639, %v623
    %v880 = vpack.c.b16 %v640, %v624
    %v881 = vpack.c.b16 %v641, %v625
    %v882 = vpack.c.b16 %v642, %v626
    %v883 = vpack.c.b16 %v643, %v627
    %v884 = vpack.c.b16 %v644, %v628
    %v885 = vpack.c.b16 %v645, %v629
    %v886 = vpack.c.b16 %v646, %v630
    %v887 = vpack.c.b16 %v647, %v631
    %v888 = vpack.c.b16 %v648, %v632
    %v889 = vpack.c.b16 %v665, %v649
    %v890 = vpack.c.b16 %v666, %v650
    %v891 = vpack.c.b16 %v667, %v651
    %v892 = vpack.c.b16 %v668, %v652
    %v893 = vpack.c.b16 %v669, %v653
    %v894 = vpack.c.b16 %v670, %v654
    %v895 = vpack.c.b16 %v671, %v655
    %v896 = vpack.c.b16 %v672, %v656
    %v897 = vpack.c.b16 %v673, %v657
    %v898 = vpack.c.b16 %v674, %v658
    %v899 = vpack.c.b16 %v675, %v659
    %v900 = vpack.c.b16 %v676, %v660
    %v901 = vpack.c.b16 %v677, %v661
    %v902 = vpack.c.b16 %v678, %v662
    %v903 = vpack.c.b16 %v679, %v663
    %v904 = vpack.c.b16 %v680, %v664
    %v905 = vpack.c.b16 %v697, %v681
    %v906 = vpack.c.b16 %v698, %v682
    %v907 = vpack.c.b16 %v699, %v683
    %v908 = vpack.c.b16 %v700, %v684
    %v909 = vpack.c.b16 %v701, %v685
    %v910 = vpack.c.b16 %v702, %v686
    %v911 = vpack.c.b16 %v703, %v687
    %v912 = vpack.c.b16 %v704, %v688
    %v913 = vpack.c.b16 %v705, %v689
    %v914 = vpack.c.b16 %v706, %v690
    %v915 = vpack.c.b16 %v707, %v691
    %v916 = vpack.c.b16 %v708, %v692
    %v917 = vpack.c.b16 %v709, %v693
    %v918 = vpack.c.b16 %v710, %v694
    %v919 = vpack.c.b16 %v711, %v695
    %v920 = vpack.c.b16 %v712, %v696
    %v921 = vpack.c.b16 %v729, %v713
    %v922 = vpack.c.b16 %v730, %v714
    %v923 = vpack.c.b16 %v731, %v715
    %v924 = vpack.c.b16 %v732, %v716
    %v925 = vpack.c.b16 %v733, %v717
    %v926 = vpack.c.b16 %v734, %v718
    %v927 = vpack.c.b16 %v735, %v719
    %v928 = vpack.c.b16 %v736, %v720
    %v929 = vpack.c.b16 %v737, %v721
    %v930 = vpack.c.b16 %v738, %v722
    %v931 = vpack.c.b16 %v739, %v723
    %v932 = vpack.c.b16 %v740, %v724
    %v933 = vpack.c.b16 %v741, %v725
    %v934 = vpack.c.b16 %v742, %v726
    %v935 = vpack.c.b16 %v743, %v727
    %v936 = vpack.c.b16 %v744, %v728
    %v937 = vpack.c.b16 %v761, %v745
    %v938 = vpack.c.b16 %v762, %v746
    %v939 = vpack.c.b16 %v763, %v747
    %v940 = vpack.c.b16 %v764, %v748
    %v941 = vpack.c.b16 %v765, %v749
    %v942 = vpack.c.b16 %v766, %v750
    %v943 = vpack.c.b16 %v767, %v751
    %v944 = vpack.c.b16 %v768, %v752
    %v945 = vpack.c.b16 %v769, %v753
    %v946 = vpack.c.b16 %v770, %v754
    %v947 = vpack.c.b16 %v771, %v755
    %v948 = vpack.c.b16 %v772, %v756
    %v949 = vpack.c.b16 %v773, %v757
    %v950 = vpack.c.b16 %v774, %v758
    %v951 = vpack.c.b16 %v775, %v759
    %v952 = vpack.c.b16 %v776, %v760
    %v953 = vpack.c.b16 %v793, %v777
    %v954 = vpack.c.b16 %v794, %v778
    %v955 = vpack.c.b16 %v795, %v779
    %v956 = vpack.c.b16 %v796, %v780
    %v957 = vpack.c.b16 %v797, %v781
    %v958 = vpack.c.b16 %v798, %v782
    %v959 = vpack.c.b16 %v799, %v783
    %v960 = vpack.c.b16 %v800, %v784
    %v961 = vpack.c.b16 %v801, %v785
    %v962 = vpack.c.b16 %v802, %v786
    %v963 = vpack.c.b16 %v803, %v787
    %v964 = vpack.c.b16 %v804, %v788
    %v965 = vpack.c.b16 %v805, %v789
    %v966 = vpack.c.b16 %v806, %v790
    %v967 = vpack.c.b16 %v807, %v791
    %v968 = vpack.c.b16 %v808, %v792
    %v969 = vpack.c.b16 %v825, %v809
    %v970 = vpack.c.b16 %v826, %v810
    %v971 = vpack.c.b16 %v827, %v811
    %v972 = vpack.c.b16 %v828, %v812
    %v973 = vpack.c.b16 %v829, %v813
    %v974 = vpack.c.b16 %v830, %v814
    %v975 = vpack.c.b16 %v831, %v815
    %v976 = vpack.c.b16 %v832, %v816
    %v977 = vpack.c.b16 %v833, %v817
    %v978 = vpack.c.b16 %v834, %v818
    %v979 = vpack.c.b16 %v835, %v819
    %v980 = vpack.c.b16 %v836, %v820
    %v981 = vpack.c.b16 %v837, %v821
    %v982 = vpack.c.b16 %v838, %v822
    %v983 = vpack.c.b16 %v839, %v823
    %v984 = vpack.c.b16 %v840, %v824
    %v985 = vpack.c.b16 %v857, %v841
    %v986 = vpack.c.b16 %v858, %v842
    %v987 = vpack.c.b16 %v859, %v843
    %v988 = vpack.c.b16 %v860, %v844
    %v989 = vpack.c.b16 %v861, %v845
    %v990 = vpack.c.b16 %v862, %v846
    %v991 = vpack.c.b16 %v863, %v847
    %v992 = vpack.c.b16 %v864, %v848
    %v993 = vpack.c.b16 %v865, %v849
    %v994 = vpack.c.b16 %v866, %v850
    %v995 = vpack.c.b16 %v867, %v851
    %v996 = vpack.c.b16 %v868, %v852
    %v997 = vpack.c.b16 %v869, %v853
    %v998 = vpack.c.b16 %v870, %v854
    %v999 = vpack.c.b16 %v871, %v855
    %v1000 = vpack.c.b16 %v872, %v856
    %v1385 = vunpack.c.l.b16 %v226
    %v1386 = vunpack.c.l.b16 %v227
    %v1387 = vunpack.c.l.b16 %v228
    %v1388 = vunpack.c.l.b16 %v229
    %v1389 = vunpack.c.l.b16 %v230
    %v1390 = vunpack.c.l.b16 %v231
    %v1391 = vunpack.c.l.b16 %v232
    %v1392 = vunpack.c.l.b16 %v233
    %v1393 = vunpack.c.l.b16 %v234
    %v1394 = vunpack.c.l.b16 %v235
    %v1395 = vunpack.c.l.b16 %v236
    %v1396 = vunpack.c.l.b16 %v237
    %v1397 = vunpack.c.l.b16 %v238
    %v1398 = vunpack.c.l.b16 %v239
    %v1399 = vunpack.c.l.b16 %v240
    %v1400 = vunpack.c.l.b16 %v241
    %v1401 = vunpack.c.l.b16 %v242
    %v1402 = vunpack.c.l.b16 %v243
    %v1403 = vunpack.c.l.b16 %v244
    %v1404 = vunpack.c.l.b16 %v245
    %v1405 = vunpack.c.l.b16 %v246
    %v1406 = vunpack.c.l.b16 %v247
    %v1407 = vunpack.c.l.b16 %v248
    %v1408 = vunpack.c.l.b16 %v249
    %v1409 = vunpack.c.l.b16 %v250
    %v1410 = vunpack.c.l.b16 %v251
    %v1411 = vunpack.c.l.b16 %v252
    %v1412 = vunpack.c.l.b16 %v253
    %v1413 = vunpack.c.l.b16 %v254
    %v1414 = vunpack.c.l.b16 %v255
    %v1415 = vunpack.c.l.b16 %v256
    %v1416 = vunpack.c.l.b16 %v257
    %v1417 = vunpack.c.l.b16 %v258
    %v1418 = vunpack.c.l.b16 %v259
    %v1419 = vunpack.c.l.b16 %v260
    %v1420 = vunpack.c.l.b16 %v261
    %v1421 = vunpack.c.l.b16 %v262
    %v1422 = vunpack.c.l.b16 %v263
    %v1423 = vunpack.c.l.b16 %v264
    %v1424 = vunpack.c.l.b16 %v265
    %v1425 = vunpack.c.l.b16 %v266
    %v1426 = vunpack.c.l.b16 %v267
    %v1427 = vunpack.c.l.b16 %v268
    %v1428 = vunpack.c.l.b16 %v269
    %v1429 = vunpack.c.l.b16 %v270
    %v1430 = vunpack.c.l.b16 %v271
    %v1431 = vunpack.c.l.b16 %v272
    %v1432 = vunpack.c.l.b16 %v273
    %v1433 = vunpack.c.l.b16 %v274
    %v1434 = vunpack.c.l.b16 %v275
    %v1435 = vunpack.c.l.b16 %v276
    %v1436 = vunpack.c.l.b16 %v277
    %v1437 = vunpack.c.l.b16 %v278
    %v1438 = vunpack.c.l.b16 %v279
    %v1439 = vunpack.c.l.b16 %v280
    %v1440 = vunpack.c.l.b16 %v281
    %v1441 = vunpack.c.l.b16 %v282
    %v1442 = vunpack.c.l.b16 %v283
    %v1443 = vunpack.c.l.b16 %v284
    %v1444 = vunpack.c.l.b16 %v285
    %v1445 = vunpack.c.l.b16 %v286
    %v1446 = vunpack.c.l.b16 %v287
    %v1447 = vunpack.c.l.b16 %v288
    %v1448 = vunpack.c.l.b16 %v289
    %v1449 = vunpack.c.l.b16 %v290
    %v1450 = vunpack.c.l.b16 %v291
    %v1451 = vunpack.c.l.b16 %v292
    %v1452 = vunpack.c.l.b16 %v293
    %v1453 = vunpack.c.l.b16 %v294
    %v1454 = vunpack.c.l.b16 %v295
    %v1455 = vunpack.c.l.b16 %v296
    %v1456 = vunpack.c.l.b16 %v297
    %v1457 = vunpack.c.l.b16 %v298
    %v1458 = vunpack.c.l.b16 %v299
    %v1459 = vunpack.c.l.b16 %v300
    %v1460 = vunpack.c.l.b16 %v301
    %v1461 = vunpack.c.l.b16 %v302
    %v1462 = vunpack.c.l.b16 %v303
    %v1463 = vunpack.c.l.b16 %v304
    %v1464 = vunpack.c.l.b16 %v305
    %v1465 = vunpack.c.l.b16 %v306
    %v1466 = vunpack.c.l.b16 %v307
    %v1467 = vunpack.c.l.b16 %v308
    %v1468 = vunpack.c.l.b16 %v309
    %v1469 = vunpack.c.l.b16 %v310
    %v1470 = vunpack.c.l.b16 %v311
    %v1471 = vunpack.c.l.b16 %v312
    %v1472 = vunpack.c.l.b16 %v313
    %v1473 = vunpack.c.l.b16 %v314
    %v1474 = vunpack.c.l.b16 %v315
    %v1475 = vunpack.c.l.b16 %v316
    %v1476 = vunpack.c.l.b16 %v317
    %v1477 = vunpack.c.l.b16 %v318
    %v1478 = vunpack.c.l.b16 %v319
    %v1479 = vunpack.c.l.b16 %v320
    %v1480 = vunpack.c.l.b16 %v321
    %v1481 = vunpack.c.l.b16 %v322
    %v1482 = vunpack.c.l.b16 %v323
    %v1483 = vunpack.c.l.b16 %v324
    %v1484 = vunpack.c.l.b16 %v325
    %v1485 = vunpack.c.l.b16 %v326
    %v1486 = vunpack.c.l.b16 %v327
    %v1487 = vunpack.c.l.b16 %v328
    %v1488 = vunpack.c.l.b16 %v329
    %v1489 = vunpack.c.l.b16 %v330
    %v1490 = vunpack.c.l.b16 %v331
    %v1491 = vunpack.c.l.b16 %v332
    %v1492 = vunpack.c.l.b16 %v333
    %v1493 = vunpack.c.l.b16 %v334
    %v1494 = vunpack.c.l.b16 %v335
    %v1495 = vunpack.c.l.b16 %v336
    %v1496 = vunpack.c.l.b16 %v337
    %v1497 = vunpack.c.l.b16 %v338
    %v1498 = vunpack.c.l.b16 %v339
    %v1499 = vunpack.c.l.b16 %v340
    %v1500 = vunpack.c.l.b16 %v341
    %v1501 = vunpack.c.l.b16 %v342
    %v1502 = vunpack.c.l.b16 %v343
    %v1503 = vunpack.c.l.b16 %v344
    %v1504 = vunpack.c.l.b16 %v345
    %v1505 = vunpack.c.l.b16 %v346
    %v1506 = vunpack.c.l.b16 %v347
    %v1507 = vunpack.c.l.b16 %v348
    %v1508 = vunpack.c.l.b16 %v349
    %v1509 = vunpack.c.l.b16 %v350
    %v1510 = vunpack.c.l.b16 %v351
    %v1511 = vunpack.c.l.b16 %v352
    %v1512 = vunpack.c.l.b16 %v353
    %v1513 = vunpack.c.l.b16 %v354
    %v1514 = vunpack.c.l.b16 %v355
    %v1515 = vunpack.c.l.b16 %v356
    %v1516 = vunpack.c.l.b16 %v357
    %v1517 = vunpack.c.l.b16 %v358
    %v1518 = vunpack.c.l.b16 %v359
    %v1519 = vunpack.c.l.b16 %v360
    %v1520 = vunpack.c.l.b16 %v361
    %v1521 = vunpack.c.l.b16 %v362
    %v1522 = vunpack.c.l.b16 %v363
    %v1523 = vunpack.c.l.b16 %v364
    %v1524 = vunpack.c.l.b16 %v365
    %v1525 = vunpack.c.l.b16 %v366
    %v1526 = vunpack.c.l.b16 %v367
    %v1527 = vunpack.c.l.b16 %v368
    %v1528 = vunpack.c.l.b16 %v369
    %v1529 = vunpack.c.l.b16 %v370
    %v1530 = vunpack.c.l.b16 %v371
    %v1531 = vunpack.c.l.b16 %v372
    %v1532 = vunpack.c.l.b16 %v373
    %v1533 = vunpack.c.l.b16 %v374
    %v1534 = vunpack.c.l.b16 %v375
    %v1535 = vunpack.c.l.b16 %v376
    %v1536 = vunpack.c.l.b16 %v377
    %v1537 = vunpack.c.l.b16 %v378
    %v1538 = vunpack.c.l.b16 %v379
    %v1539 = vunpack.c.l.b16 %v380
    %v1540 = vunpack.c.l.b16 %v381
    %v1541 = vunpack.c.l.b16 %v382
    %v1542 = vunpack.c.l.b16 %v383
    %v1543 = vunpack.c.l.b16 %v384
    %v1544 = vunpack.c.l.b16 %v385
    %v1545 = vunpack.c.l.b16 %v386
    %v1546 = vunpack.c.l.b16 %v387
    %v1547 = vunpack.c.l.b16 %v388
    %v1548 = vunpack.c.l.b16 %v389
    %v1549 = vunpack.c.l.b16 %v390
    %v1550 = vunpack.c.l.b16 %v391
    %v1551 = vunpack.c.l.b16 %v392
    %v1552 = vunpack.c.l.b16 %v393
    %v1553 = vunpack.c.l.b16 %v394
    %v1554 = vunpack.c.l.b16 %v395
    %v1555 = vunpack.c.l.b16 %v396
    %v1556 = vunpack.c.l.b16 %v397
    %v1557 = vunpack.c.l.b16 %v398
    %v1558 = vunpack.c.l.b16 %v399
    %v1559 = vunpack.c.l.b16 %v400
    %v1560 = vunpack.c.l.b16 %v401
    %v1561 = vunpack.c.l.b16 %v402
    %v1562 = vunpack.c.l.b16 %v403
    %v1563 = vunpack.c.l.b16 %v404
    %v1564 = vunpack.c.l.b16 %v405
    %v1565 = vunpack.c.l.b16 %v406
    %v1566 = vunpack.c.l.b16 %v407
    %v1567 = vunpack.c.l.b16 %v408
    %v1568 = vunpack.c.l.b16 %v409
    %v1569 = vunpack.c.l.b16 %v410
    %v1570 = vunpack.c.l.b16 %v411
    %v1571 = vunpack.c.l.b16 %v412
    %v1572 = vunpack.c.l.b16 %v413
    %v1573 = vunpack.c.l.b16 %v414
    %v1574 = vunpack.c.l.b16 %v415
    %v1575 = vunpack.c.l.b16 %v416
    %v1576 = vunpack.c.l.b16 %v417
    %v1577 = vunpack.c.l.b16 %v418
    %v1578 = vunpack.c.l.b16 %v419
    %v1579 = vunpack.c.l.b16 %v420
    %v1580 = vunpack.c.l.b16 %v421
    %v1581 = vunpack.c.l.b16 %v422
    %v1582 = vunpack.c.l.b16 %v423
    %v1583 = vunpack.c.l.b16 %v424
    %v1584 = vunpack.c.l.b16 %v425
    %v1585 = vunpack.c.l.b16 %v426
    %v1586 = vunpack.c.l.b16 %v427
    %v1587 = vunpack.c.l.b16 %v428
    %v1588 = vunpack.c.l.b16 %v429
    %v1589 = vunpack.c.l.b16 %v430
    %v1590 = vunpack.c.l.b16 %v431
    %v1591 = vunpack.c.l.b16 %v432
    %v1592 = vunpack.c.l.b16 %v433
    %v1593 = vunpack.c.l.b16 %v434
    %v1594 = vunpack.c.l.b16 %v435
    %v1595 = vunpack.c.l.b16 %v436
    %v1596 = vunpack.c.l.b16 %v437
    %v1597 = vunpack.c.l.b16 %v438
    %v1598 = vunpack.c.l.b16 %v439
    %v1599 = vunpack.c.l.b16 %v440
    %v1600 = vunpack.c.l.b16 %v441
    %v1601 = vunpack.c.l.b16 %v442
    %v1602 = vunpack.c.l.b16 %v443
    %v1603 = vunpack.c.l.b16 %v444
    %v1604 = vunpack.c.l.b16 %v445
    %v1605 = vunpack.c.l.b16 %v446
    %v1606 = vunpack.c.l.b16 %v447
    %v1607 = vunpack.c.l.b16 %v448
    %v1608 = vunpack.c.l.b16 %v449
    %v1609 = vunpack.c.l.b16 %v450
    %v1610 = vunpack.c.l.b16 %v451
    %v1611 = vunpack.c.l.b16 %v452
    %v1612 = vunpack.c.l.b16 %v453
    %v1613 = vunpack.c.l.b16 %v454
    %v1614 = vunpack.c.l.b16 %v455
    %v1615 = vunpack.c.l.b16 %v456
    %v1616 = vunpack.c.l.b16 %v457
    %v1617 = vunpack.c.l.b16 %v458
    %v1618 = vunpack.c.l.b16 %v459
    %v1619 = vunpack.c.l.b16 %v460
    %v1620 = vunpack.c.l.b16 %v461
    %v1621 = vunpack.c.l.b16 %v462
    %v1622 = vunpack.c.l.b16 %v463
    %v1623 = vunpack.c.l.b16 %v464
    %v1624 = vunpack.c.l.b16 %v465
    %v1625 = vunpack.c.l.b16 %v466
    %v1626 = vunpack.c.l.b16 %v467
    %v1627 = vunpack.c.l.b16 %v468
    %v1628 = vunpack.c.l.b16 %v469
    %v1629 = vunpack.c.l.b16 %v470
    %v1630 = vunpack.c.l.b16 %v471
    %v1631 = vunpack.c.l.b16 %v472
    %v1632 = vunpack.c.l.b16 %v473
    %v1633 = vunpack.c.l.b16 %v474
    %v1634 = vunpack.c.l.b16 %v475
    %v1635 = vunpack.c.l.b16 %v476
    %v1636 = vunpack.c.l.b16 %v477
    %v1637 = vunpack.c.l.b16 %v478
    %v1638 = vunpack.c.l.b16 %v479
    %v1639 = vunpack.c.l.b16 %v480
    %v1640 = vunpack.c.l.b16 %v481
    %v1641 = vpack.c.b16 %v1386, %v1385
    %v1642 = vpack.c.b16 %v1388, %v1387
    %v1643 = vpack.c.b16 %v1390, %v1389
    %v1644 = vpack.c.b16 %v1392, %v1391
    %v1645 = vpack.c.b16 %v1394, %v1393
    %v1646 = vpack.c.b16 %v1396, %v1395
    %v1647 = vpack.c.b16 %v1398, %v1397
    %v1648 = vpack.c.b16 %v1400, %v1399
    %v1649 = vpack.c.b16 %v1402, %v1401
    %v1650 = vpack.c.b16 %v1404, %v1403
    %v1651 = vpack.c.b16 %v1406, %v1405
    %v1652 = vpack.c.b16 %v1408, %v1407
    %v1653 = vpack.c.b16 %v1410, %v1409
    %v1654 = vpack.c.b16 %v1412, %v1411
    %v1655 = vpack.c.b16 %v1414, %v1413
    %v1656 = vpack.c.b16 %v1416, %v1415
    %v1657 = vpack.c.b16 %v1418, %v1417
    %v1658 = vpack.c.b16 %v1420, %v1419
    %v1659 = vpack.c.b16 %v1422, %v1421
    %v1660 = vpack.c.b16 %v1424, %v1423
    %v1661 = vpack.c.b16 %v1426, %v1425
    %v1662 = vpack.c.b16 %v1428, %v1427
    %v1663 = vpack.c.b16 %v1430, %v1429
    %v1664 = vpack.c.b16 %v1432, %v1431
    %v1665 = vpack.c.b16 %v1434, %v1433
    %v1666 = vpack.c.b16 %v1436, %v1435
    %v1667 = vpack.c.b16 %v1438, %v1437
    %v1668 = vpack.c.b16 %v1440, %v1439
    %v1669 = vpack.c.b16 %v1442, %v1441
    %v1670 = vpack.c.b16 %v1444, %v1443
    %v1671 = vpack.c.b16 %v1446, %v1445
    %v1672 = vpack.c.b16 %v1448, %v1447
    %v1673 = vpack.c.b16 %v1450, %v1449
    %v1674 = vpack.c.b16 %v1452, %v1451
    %v1675 = vpack.c.b16 %v1454, %v1453
    %v1676 = vpack.c.b16 %v1456, %v1455
    %v1677 = vpack.c.b16 %v1458, %v1457
    %v1678 = vpack.c.b16 %v1460, %v1459
    %v1679 = vpack.c.b16 %v1462, %v1461
    %v1680 = vpack.c.b16 %v1464, %v1463
    %v1681 = vpack.c.b16 %v1466, %v1465
    %v1682 = vpack.c.b16 %v1468, %v1467
    %v1683 = vpack.c.b16 %v1470, %v1469
    %v1684 = vpack.c.b16 %v1472, %v1471
    %v1685 = vpack.c.b16 %v1474, %v1473
    %v1686 = vpack.c.b16 %v1476, %v1475
    %v1687 = vpack.c.b16 %v1478, %v1477
    %v1688 = vpack.c.b16 %v1480, %v1479
    %v1689 = vpack.c.b16 %v1482, %v1481
    %v1690 = vpack.c.b16 %v1484, %v1483
    %v1691 = vpack.c.b16 %v1486, %v1485
    %v1692 = vpack.c.b16 %v1488, %v1487
    %v1693 = vpack.c.b16 %v1490, %v1489
    %v1694 = vpack.c.b16 %v1492, %v1491
    %v1695 = vpack.c.b16 %v1494, %v1493
    %v1696 = vpack.c.b16 %v1496, %v1495
    %v1697 = vpack.c.b16 %v1498, %v1497
    %v1698 = vpack.c.b16 %v1500, %v1499
    %v1699 = vpack.c.b16 %v1502, %v1501
    %v1700 = vpack.c.b16 %v1504, %v1503
    %v1701 = vpack.c.b16 %v1506, %v1505
    %v1702 = vpack.c.b16 %v1508, %v1507
    %v1703 = vpack.c.b16 %v1510, %v1509
    %v1704 = vpack.c.b16 %v1512, %v1511
    %v1705 = vpack.c.b16 %v1514, %v1513
    %v1706 = vpack.c.b16 %v1516, %v1515
    %v1707 = vpack.c.b16 %v1518, %v1517
    %v1708 = vpack.c.b16 %v1520, %v1519
    %v1709 = vpack.c.b16 %v1522, %v1521
    %v1710 = vpack.c.b16 %v1524, %v1523
    %v1711 = vpack.c.b16 %v1526, %v1525
    %v1712 = vpack.c.b16 %v1528, %v1527
    %v1713 = vpack.c.b16 %v1530, %v1529
    %v1714 = vpack.c.b16 %v1532, %v1531
    %v1715 = vpack.c.b16 %v1534, %v1533
    %v1716 = vpack.c.b16 %v1536, %v1535
    %v1717 = vpack.c.b16 %v1538, %v1537
    %v1718 = vpack.c.b16 %v1540, %v1539
    %v1719 = vpack.c.b16 %v1542, %v1541
    %v1720 = vpack.c.b16 %v1544, %v1543
    %v1721 = vpack.c.b16 %v1546, %v1545
    %v1722 = vpack.c.b16 %v1548, %v1547
    %v1723 = vpack.c.b16 %v1550, %v1549
    %v1724 = vpack.c.b16 %v1552, %v1551
    %v1725 = vpack.c.b16 %v1554, %v1553
    %v1726 = vpack.c.b16 %v1556, %v1555
    %v1727 = vpack.c.b16 %v1558, %v1557
    %v1728 = vpack.c.b16 %v1560, %v1559
    %v1729 = vpack.c.b16 %v1562, %v1561
    %v1730 = vpack.c.b16 %v1564, %v1563
    %v1731 = vpack.c.b16 %v1566, %v1565
    %v1732 = vpack.c.b16 %v1568, %v1567
    %v1733 = vpack.c.b16 %v1570, %v1569
    %v1734 = vpack.c.b16 %v1572, %v1571
    %v1735 = vpack.c.b16 %v1574, %v1573
    %v1736 = vpack.c.b16 %v1576, %v1575
    %v1737 = vpack.c.b16 %v1578, %v1577
    %v1738 = vpack.c.b16 %v1580, %v1579
    %v1739 = vpack.c.b16 %v1582, %v1581
    %v1740 = vpack.c.b16 %v1584, %v1583
    %v1741 = vpack.c.b16 %v1586, %v1585
    %v1742 = vpack.c.b16 %v1588, %v1587
    %v1743 = vpack.c.b16 %v1590, %v1589
    %v1744 = vpack.c.b16 %v1592, %v1591
    %v1745 = vpack.c.b16 %v1594, %v1593
    %v1746 = vpack.c.b16 %v1596, %v1595
    %v1747 = vpack.c.b16 %v1598, %v1597
    %v1748 = vpack.c.b16 %v1600, %v1599
    %v1749 = vpack.c.b16 %v1602, %v1601
    %v1750 = vpack.c.b16 %v1604, %v1603
    %v1751 = vpack.c.b16 %v1606, %v1605
    %v1752 = vpack.c.b16 %v1608, %v1607
    %v1753 = vpack.c.b16 %v1610, %v1609
    %v1754 = vpack.c.b16 %v1612, %v1611
    %v1755 = vpack.c.b16 %v1614, %v1613
    %v1756 = vpack.c.b16 %v1616, %v1615
    %v1757 = vpack.c.b16 %v1618, %v1617
    %v1758 = vpack.c.b16 %v1620, %v1619
    %v1759 = vpack.c.b16 %v1622, %v1621
    %v1760 = vpack.c.b16 %v1624, %v1623
    %v1761 = vpack.c.b16 %v1626, %v1625
    %v1762 = vpack.c.b16 %v1628, %v1627
    %v1763 = vpack.c.b16 %v1630, %v1629
    %v1764 = vpack.c.b16 %v1632, %v1631
    %v1765 = vpack.c.b16 %v1634, %v1633
    %v1766 = vpack.c.b16 %v1636, %v1635
    %v1767 = vpack.c.b16 %v1638, %v1637
    %v1768 = vpack.c.b16 %v1640, %v1639
    %1897 = vmatprep.subr.bf16.mxu0 0
    %1898 = vmatpush1.bf16.msra.mxu0 %v1641
    %1899 = vmatprep.subr.bf16.mxu0 0
    %1900 = vmatpush1.bf16.msra.mxu0 %v1642
    %1901 = vmatprep.subr.bf16.mxu0 0
    %1902 = vmatpush1.bf16.msra.mxu0 %v1643
    %1903 = vmatprep.subr.bf16.mxu0 0
    %1904 = vmatpush1.bf16.msra.mxu0 %v1644
    %1905 = vmatprep.subr.bf16.mxu0 0
    %1906 = vmatpush1.bf16.msra.mxu0 %v1645
    %1907 = vmatprep.subr.bf16.mxu0 0
    %1908 = vmatpush1.bf16.msra.mxu0 %v1646
    %1909 = vmatprep.subr.bf16.mxu0 0
    %1910 = vmatpush1.bf16.msra.mxu0 %v1647
    %1911 = vmatprep.subr.bf16.mxu0 0
    %1912 = vmatpush1.bf16.msra.mxu0 %v1648
    %1913 = vmatprep.subr.bf16.mxu0 0
    %1914 = vmatpush1.bf16.msra.mxu0 %v1649
    %1915 = vmatprep.subr.bf16.mxu0 0
    %1916 = vmatpush1.bf16.msra.mxu0 %v1650
    %1917 = vmatprep.subr.bf16.mxu0 0
    %1918 = vmatpush1.bf16.msra.mxu0 %v1651
    %1919 = vmatprep.subr.bf16.mxu0 0
    %1920 = vmatpush1.bf16.msra.mxu0 %v1652
    %1921 = vmatprep.subr.bf16.mxu0 0
    %1922 = vmatpush1.bf16.msra.mxu0 %v1653
    %1923 = vmatprep.subr.bf16.mxu0 0
    %1924 = vmatpush1.bf16.msra.mxu0 %v1654
    %1925 = vmatprep.subr.bf16.mxu0 0
    %1926 = vmatpush1.bf16.msra.mxu0 %v1655
    %1927 = vmatprep.subr.bf16.mxu0 0
    %1928 = vmatpush1.bf16.msra.mxu0 %v1656
    %1929 = vmatprep.mubr.bf16.mxu0 %v874
    %1930 = vmatmul.mubr.bf16.gmra.mrb[0].mxu0 %v873
    %v1931 = vpop.f32.mrb[0].mxu0
    %v1932 = vadd.f32 %v487, %v1931
    %v1933 = vpop.f32.mrb[0].mxu0
    %v1934 = vpop.f32.mrb[0].mxu0
    %v1935 = vadd.f32 %v487, %v1934
    %v1936 = vpop.f32.mrb[0].mxu0
    %1937 = vmatprep.mubr.bf16.mxu0 %v890
    %1938 = vmatmul.mubr.bf16.gmra.mrb[0].mxu0 %v889
    %v1939 = vpop.f32.mrb[0].mxu0
    %v1940 = vadd.f32 %v487, %v1939
    %v1941 = vpop.f32.mrb[0].mxu0
    %v1942 = vpop.f32.mrb[0].mxu0
    %v1943 = vadd.f32 %v487, %v1942
    %v1944 = vpop.f32.mrb[0].mxu0
    %1945 = vmatprep.mubr.bf16.mxu0 %v906
    %1946 = vmatmul.mubr.bf16.gmra.mrb[0].mxu0 %v905
    %v1947 = vpop.f32.mrb[0].mxu0
    %v1948 = vadd.f32 %v487, %v1947
    %v1949 = vpop.f32.mrb[0].mxu0
    %v1950 = vpop.f32.mrb[0].mxu0
    %v1951 = vadd.f32 %v487, %v1950
    %v1952 = vpop.f32.mrb[0].mxu0
    %1953 = vmatprep.mubr.bf16.mxu0 %v922
    %1954 = vmatmul.mubr.bf16.gmra.mrb[0].mxu0 %v921
    %v1955 = vpop.f32.mrb[0].mxu0
    %v1956 = vadd.f32 %v487, %v1955
    %v1957 = vpop.f32.mrb[0].mxu0
    %v1958 = vpop.f32.mrb[0].mxu0
    %v1959 = vadd.f32 %v487, %v1958
    %v1960 = vpop.f32.mrb[0].mxu0
    %1961 = vmatprep.mubr.bf16.mxu0 %v938
    %1962 = vmatmul.mubr.bf16.gmra.mrb[0].mxu0 %v937
    %v1963 = vpop.f32.mrb[0].mxu0
    %v1964 = vadd.f32 %v487, %v1963
    %v1965 = vpop.f32.mrb[0].mxu0
    %v1966 = vpop.f32.mrb[0].mxu0
    %v1967 = vadd.f32 %v487, %v1966
    %v1968 = vpop.f32.mrb[0].mxu0
    %1969 = vmatprep.mubr.bf16.mxu0 %v954
    %1970 = vmatmul.mubr.bf16.gmra.mrb[0].mxu0 %v953
    %v1971 = vpop.f32.mrb[0].mxu0
    %v1972 = vadd.f32 %v487, %v1971
    %v1973 = vpop.f32.mrb[0].mxu0
    %v1974 = vpop.f32.mrb[0].mxu0
    %v1975 = vadd.f32 %v487, %v1974
    %v1976 = vpop.f32.mrb[0].mxu0
    %1977 = vmatprep.mubr.bf16.mxu0 %v970
    %1978 = vmatmul.mubr.bf16.gmra.mrb[0].mxu0 %v969
    %v1979 = vpop.f32.mrb[0].mxu0
    %v1980 = vadd.f32 %v487, %v1979
    %v1981 = vpop.f32.mrb[0].mxu0
    %v1982 = vpop.f32.mrb[0].mxu0
    %v1983 = vadd.f32 %v487, %v1982
    %v1984 = vpop.f32.mrb[0].mxu0
    %1985 = vmatprep.mubr.bf16.mxu0 %v986
    %1986 = vmatmul.mubr.bf16.gmra.mrb[0].mxu0 %v985
    %v1987 = vpop.f32.mrb[0].mxu0
    %v1988 = vadd.f32 %v487, %v1987
    %v1989 = vpop.f32.mrb[0].mxu0
    %v1990 = vpop.f32.mrb[0].mxu0
    %v1991 = vadd.f32 %v487, %v1990
    %v1992 = vpop.f32.mrb[0].mxu0
    %1993 = vdwg.mxu0
    %1994 = vmatprep.subr.bf16.mxu0 0
    %1995 = vmatpush1.bf16.msra.mxu0 %v1657
    %1996 = vmatprep.subr.bf16.mxu0 0
    %1997 = vmatpush1.bf16.msra.mxu0 %v1658
    %1998 = vmatprep.subr.bf16.mxu0 0
    %1999 = vmatpush1.bf16.msra.mxu0 %v1659
    %2000 = vmatprep.subr.bf16.mxu0 0
    %2001 = vmatpush1.bf16.msra.mxu0 %v1660
    %2002 = vmatprep.subr.bf16.mxu0 0
    %2003 = vmatpush1.bf16.msra.mxu0 %v1661
    %2004 = vmatprep.subr.bf16.mxu0 0
    %2005 = vmatpush1.bf16.msra.mxu0 %v1662
    %2006 = vmatprep.subr.bf16.mxu0 0
    %2007 = vmatpush1.bf16.msra.mxu0 %v1663
    %2008 = vmatprep.subr.bf16.mxu0 0
    %2009 = vmatpush1.bf16.msra.mxu0 %v1664
    %2010 = vmatprep.subr.bf16.mxu0 0
    %2011 = vmatpush1.bf16.msra.mxu0 %v1665
    %2012 = vmatprep.subr.bf16.mxu0 0
    %2013 = vmatpush1.bf16.msra.mxu0 %v1666
    %2014 = vmatprep.subr.bf16.mxu0 0
    %2015 = vmatpush1.bf16.msra.mxu0 %v1667
    %2016 = vmatprep.subr.bf16.mxu0 0
    %2017 = vmatpush1.bf16.msra.mxu0 %v1668
    %2018 = vmatprep.subr.bf16.mxu0 0
    %2019 = vmatpush1.bf16.msra.mxu0 %v1669
    %2020 = vmatprep.subr.bf16.mxu0 0
    %2021 = vmatpush1.bf16.msra.mxu0 %v1670
    %2022 = vmatprep.subr.bf16.mxu0 0
    %2023 = vmatpush1.bf16.msra.mxu0 %v1671
    %2024 = vmatprep.subr.bf16.mxu0 0
    %2025 = vmatpush1.bf16.msra.mxu0 %v1672
    %2026 = vmatprep.mubr.bf16.mxu0 %v876
    %2027 = vmatmul.mubr.bf16.gmra.mrb[0].mxu0 %v875
    %v2028 = vpop.f32.mrb[0].mxu0
    %v2029 = vadd.f32 %v1932, %v2028
    %v2030 = vpop.f32.mrb[0].mxu0
    %v2031 = vpop.f32.mrb[0].mxu0
    %v2032 = vadd.f32 %v1935, %v2031
    %v2033 = vpop.f32.mrb[0].mxu0
    %2034 = vmatprep.mubr.bf16.mxu0 %v892
    %2035 = vmatmul.mubr.bf16.gmra.mrb[0].mxu0 %v891
    %v2036 = vpop.f32.mrb[0].mxu0
    %v2037 = vadd.f32 %v1940, %v2036
    %v2038 = vpop.f32.mrb[0].mxu0
    %v2039 = vpop.f32.mrb[0].mxu0
    %v2040 = vadd.f32 %v1943, %v2039
    %v2041 = vpop.f32.mrb[0].mxu0
    %2042 = vmatprep.mubr.bf16.mxu0 %v908
    %2043 = vmatmul.mubr.bf16.gmra.mrb[0].mxu0 %v907
    %v2044 = vpop.f32.mrb[0].mxu0
    %v2045 = vadd.f32 %v1948, %v2044
    %v2046 = vpop.f32.mrb[0].mxu0
    %v2047 = vpop.f32.mrb[0].mxu0
    %v2048 = vadd.f32 %v1951, %v2047
    %v2049 = vpop.f32.mrb[0].mxu0
    %2050 = vmatprep.mubr.bf16.mxu0 %v924
    %2051 = vmatmul.mubr.bf16.gmra.mrb[0].mxu0 %v923
    %v2052 = vpop.f32.mrb[0].mxu0
    %v2053 = vadd.f32 %v1956, %v2052
    %v2054 = vpop.f32.mrb[0].mxu0
    %v2055 = vpop.f32.mrb[0].mxu0
    %v2056 = vadd.f32 %v1959, %v2055
    %v2057 = vpop.f32.mrb[0].mxu0
    %2058 = vmatprep.mubr.bf16.mxu0 %v940
    %2059 = vmatmul.mubr.bf16.gmra.mrb[0].mxu0 %v939
    %v2060 = vpop.f32.mrb[0].mxu0
    %v2061 = vadd.f32 %v1964, %v2060
    %v2062 = vpop.f32.mrb[0].mxu0
    %v2063 = vpop.f32.mrb[0].mxu0
    %v2064 = vadd.f32 %v1967, %v2063
    %v2065 = vpop.f32.mrb[0].mxu0
    %2066 = vmatprep.mubr.bf16.mxu0 %v956
    %2067 = vmatmul.mubr.bf16.gmra.mrb[0].mxu0 %v955
    %v2068 = vpop.f32.mrb[0].mxu0
    %v2069 = vadd.f32 %v1972, %v2068
    %v2070 = vpop.f32.mrb[0].mxu0
    %v2071 = vpop.f32.mrb[0].mxu0
    %v2072 = vadd.f32 %v1975, %v2071
    %v2073 = vpop.f32.mrb[0].mxu0
    %2074 = vmatprep.mubr.bf16.mxu0 %v972
    %2075 = vmatmul.mubr.bf16.gmra.mrb[0].mxu0 %v971
    %v2076 = vpop.f32.mrb[0].mxu0
    %v2077 = vadd.f32 %v1980, %v2076
    %v2078 = vpop.f32.mrb[0].mxu0
    %v2079 = vpop.f32.mrb[0].mxu0
    %v2080 = vadd.f32 %v1983, %v2079
    %v2081 = vpop.f32.mrb[0].mxu0
    %2082 = vmatprep.mubr.bf16.mxu0 %v988
    %2083 = vmatmul.mubr.bf16.gmra.mrb[0].mxu0 %v987
    %v2084 = vpop.f32.mrb[0].mxu0
    %v2085 = vadd.f32 %v1988, %v2084
    %v2086 = vpop.f32.mrb[0].mxu0
    %v2087 = vpop.f32.mrb[0].mxu0
    %v2088 = vadd.f32 %v1991, %v2087
    %v2089 = vpop.f32.mrb[0].mxu0
    %2090 = vdwg.mxu0
    %2091 = vmatprep.subr.bf16.mxu0 0
    %2092 = vmatpush1.bf16.msra.mxu0 %v1673
    %2093 = vmatprep.subr.bf16.mxu0 0
    %2094 = vmatpush1.bf16.msra.mxu0 %v1674
    %2095 = vmatprep.subr.bf16.mxu0 0
    %2096 = vmatpush1.bf16.msra.mxu0 %v1675
    %2097 = vmatprep.subr.bf16.mxu0 0
    %2098 = vmatpush1.bf16.msra.mxu0 %v1676
    %2099 = vmatprep.subr.bf16.mxu0 0
    %2100 = vmatpush1.bf16.msra.mxu0 %v1677
    %2101 = vmatprep.subr.bf16.mxu0 0
    %2102 = vmatpush1.bf16.msra.mxu0 %v1678
    %2103 = vmatprep.subr.bf16.mxu0 0
    %2104 = vmatpush1.bf16.msra.mxu0 %v1679
    %2105 = vmatprep.subr.bf16.mxu0 0
    %2106 = vmatpush1.bf16.msra.mxu0 %v1680
    %2107 = vmatprep.subr.bf16.mxu0 0
    %2108 = vmatpush1.bf16.msra.mxu0 %v1681
    %2109 = vmatprep.subr.bf16.mxu0 0
    %2110 = vmatpush1.bf16.msra.mxu0 %v1682
    %2111 = vmatprep.subr.bf16.mxu0 0
    %2112 = vmatpush1.bf16.msra.mxu0 %v1683
    %2113 = vmatprep.subr.bf16.mxu0 0
    %2114 = vmatpush1.bf16.msra.mxu0 %v1684
    %2115 = vmatprep.subr.bf16.mxu0 0
    %2116 = vmatpush1.bf16.msra.mxu0 %v1685
    %2117 = vmatprep.subr.bf16.mxu0 0
    %2118 = vmatpush1.bf16.msra.mxu0 %v1686
    %2119 = vmatprep.subr.bf16.mxu0 0
    %2120 = vmatpush1.bf16.msra.mxu0 %v1687
    %2121 = vmatprep.subr.bf16.mxu0 0
    %2122 = vmatpush1.bf16.msra.mxu0 %v1688
    %2123 = vmatprep.mubr.bf16.mxu0 %v878
    %2124 = vmatmul.mubr.bf16.gmra.mrb[0].mxu0 %v877
    %v2125 = vpop.f32.mrb[0].mxu0
    %v2126 = vadd.f32 %v2029, %v2125
    %v2127 = vpop.f32.mrb[0].mxu0
    %v2128 = vpop.f32.mrb[0].mxu0
    %v2129 = vadd.f32 %v2032, %v2128
    %v2130 = vpop.f32.mrb[0].mxu0
    %2131 = vmatprep.mubr.bf16.mxu0 %v894
    %2132 = vmatmul.mubr.bf16.gmra.mrb[0].mxu0 %v893
    %v2133 = vpop.f32.mrb[0].mxu0
    %v2134 = vadd.f32 %v2037, %v2133
    %v2135 = vpop.f32.mrb[0].mxu0
    %v2136 = vpop.f32.mrb[0].mxu0
    %v2137 = vadd.f32 %v2040, %v2136
    %v2138 = vpop.f32.mrb[0].mxu0
    %2139 = vmatprep.mubr.bf16.mxu0 %v910
    %2140 = vmatmul.mubr.bf16.gmra.mrb[0].mxu0 %v909
    %v2141 = vpop.f32.mrb[0].mxu0
    %v2142 = vadd.f32 %v2045, %v2141
    %v2143 = vpop.f32.mrb[0].mxu0
    %v2144 = vpop.f32.mrb[0].mxu0
    %v2145 = vadd.f32 %v2048, %v2144
    %v2146 = vpop.f32.mrb[0].mxu0
    %2147 = vmatprep.mubr.bf16.mxu0 %v926
    %2148 = vmatmul.mubr.bf16.gmra.mrb[0].mxu0 %v925
    %v2149 = vpop.f32.mrb[0].mxu0
    %v2150 = vadd.f32 %v2053, %v2149
    %v2151 = vpop.f32.mrb[0].mxu0
    %v2152 = vpop.f32.mrb[0].mxu0
    %v2153 = vadd.f32 %v2056, %v2152
    %v2154 = vpop.f32.mrb[0].mxu0
    %2155 = vmatprep.mubr.bf16.mxu0 %v942
    %2156 = vmatmul.mubr.bf16.gmra.mrb[0].mxu0 %v941
    %v2157 = vpop.f32.mrb[0].mxu0
    %v2158 = vadd.f32 %v2061, %v2157
    %v2159 = vpop.f32.mrb[0].mxu0
    %v2160 = vpop.f32.mrb[0].mxu0
    %v2161 = vadd.f32 %v2064, %v2160
    %v2162 = vpop.f32.mrb[0].mxu0
    %2163 = vmatprep.mubr.bf16.mxu0 %v958
    %2164 = vmatmul.mubr.bf16.gmra.mrb[0].mxu0 %v957
    %v2165 = vpop.f32.mrb[0].mxu0
    %v2166 = vadd.f32 %v2069, %v2165
    %v2167 = vpop.f32.mrb[0].mxu0
    %v2168 = vpop.f32.mrb[0].mxu0
    %v2169 = vadd.f32 %v2072, %v2168
    %v2170 = vpop.f32.mrb[0].mxu0
    %2171 = vmatprep.mubr.bf16.mxu0 %v974
    %2172 = vmatmul.mubr.bf16.gmra.mrb[0].mxu0 %v973
    %v2173 = vpop.f32.mrb[0].mxu0
    %v2174 = vadd.f32 %v2077, %v2173
    %v2175 = vpop.f32.mrb[0].mxu0
    %v2176 = vpop.f32.mrb[0].mxu0
    %v2177 = vadd.f32 %v2080, %v2176
    %v2178 = vpop.f32.mrb[0].mxu0
    %2179 = vmatprep.mubr.bf16.mxu0 %v990
    %2180 = vmatmul.mubr.bf16.gmra.mrb[0].mxu0 %v989
    %v2181 = vpop.f32.mrb[0].mxu0
    %v2182 = vadd.f32 %v2085, %v2181
    %v2183 = vpop.f32.mrb[0].mxu0
    %v2184 = vpop.f32.mrb[0].mxu0
    %v2185 = vadd.f32 %v2088, %v2184
    %v2186 = vpop.f32.mrb[0].mxu0
    %2187 = vdwg.mxu0
    %2188 = vmatprep.subr.bf16.mxu0 0
    %2189 = vmatpush1.bf16.msra.mxu0 %v1689
    %2190 = vmatprep.subr.bf16.mxu0 0
    %2191 = vmatpush1.bf16.msra.mxu0 %v1690
    %2192 = vmatprep.subr.bf16.mxu0 0
    %2193 = vmatpush1.bf16.msra.mxu0 %v1691
    %2194 = vmatprep.subr.bf16.mxu0 0
    %2195 = vmatpush1.bf16.msra.mxu0 %v1692
    %2196 = vmatprep.subr.bf16.mxu0 0
    %2197 = vmatpush1.bf16.msra.mxu0 %v1693
    %2198 = vmatprep.subr.bf16.mxu0 0
    %2199 = vmatpush1.bf16.msra.mxu0 %v1694
    %2200 = vmatprep.subr.bf16.mxu0 0
    %2201 = vmatpush1.bf16.msra.mxu0 %v1695
    %2202 = vmatprep.subr.bf16.mxu0 0
    %2203 = vmatpush1.bf16.msra.mxu0 %v1696
    %2204 = vmatprep.subr.bf16.mxu0 0
    %2205 = vmatpush1.bf16.msra.mxu0 %v1697
    %2206 = vmatprep.subr.bf16.mxu0 0
    %2207 = vmatpush1.bf16.msra.mxu0 %v1698
    %2208 = vmatprep.subr.bf16.mxu0 0
    %2209 = vmatpush1.bf16.msra.mxu0 %v1699
    %2210 = vmatprep.subr.bf16.mxu0 0
    %2211 = vmatpush1.bf16.msra.mxu0 %v1700
    %2212 = vmatprep.subr.bf16.mxu0 0
    %2213 = vmatpush1.bf16.msra.mxu0 %v1701
    %2214 = vmatprep.subr.bf16.mxu0 0
    %2215 = vmatpush1.bf16.msra.mxu0 %v1702
    %2216 = vmatprep.subr.bf16.mxu0 0
    %2217 = vmatpush1.bf16.msra.mxu0 %v1703
    %2218 = vmatprep.subr.bf16.mxu0 0
    %2219 = vmatpush1.bf16.msra.mxu0 %v1704
    %2220 = vmatprep.mubr.bf16.mxu0 %v880
    %2221 = vmatmul.mubr.bf16.gmra.mrb[0].mxu0 %v879
    %v2222 = vpop.f32.mrb[0].mxu0
    %v2223 = vadd.f32 %v2126, %v2222
    %v2224 = vpop.f32.mrb[0].mxu0
    %v2225 = vpop.f32.mrb[0].mxu0
    %v2226 = vadd.f32 %v2129, %v2225
    %v2227 = vpop.f32.mrb[0].mxu0
    %2228 = vmatprep.mubr.bf16.mxu0 %v896
    %2229 = vmatmul.mubr.bf16.gmra.mrb[0].mxu0 %v895
    %v2230 = vpop.f32.mrb[0].mxu0
    %v2231 = vadd.f32 %v2134, %v2230
    %v2232 = vpop.f32.mrb[0].mxu0
    %v2233 = vpop.f32.mrb[0].mxu0
    %v2234 = vadd.f32 %v2137, %v2233
    %v2235 = vpop.f32.mrb[0].mxu0
    %2236 = vmatprep.mubr.bf16.mxu0 %v912
    %2237 = vmatmul.mubr.bf16.gmra.mrb[0].mxu0 %v911
    %v2238 = vpop.f32.mrb[0].mxu0
    %v2239 = vadd.f32 %v2142, %v2238
    %v2240 = vpop.f32.mrb[0].mxu0
    %v2241 = vpop.f32.mrb[0].mxu0
    %v2242 = vadd.f32 %v2145, %v2241
    %v2243 = vpop.f32.mrb[0].mxu0
    %2244 = vmatprep.mubr.bf16.mxu0 %v928
    %2245 = vmatmul.mubr.bf16.gmra.mrb[0].mxu0 %v927
    %v2246 = vpop.f32.mrb[0].mxu0
    %v2247 = vadd.f32 %v2150, %v2246
    %v2248 = vpop.f32.mrb[0].mxu0
    %v2249 = vpop.f32.mrb[0].mxu0
    %v2250 = vadd.f32 %v2153, %v2249
    %v2251 = vpop.f32.mrb[0].mxu0
    %2252 = vmatprep.mubr.bf16.mxu0 %v944
    %2253 = vmatmul.mubr.bf16.gmra.mrb[0].mxu0 %v943
    %v2254 = vpop.f32.mrb[0].mxu0
    %v2255 = vadd.f32 %v2158, %v2254
    %v2256 = vpop.f32.mrb[0].mxu0
    %v2257 = vpop.f32.mrb[0].mxu0
    %v2258 = vadd.f32 %v2161, %v2257
    %v2259 = vpop.f32.mrb[0].mxu0
    %2260 = vmatprep.mubr.bf16.mxu0 %v960
    %2261 = vmatmul.mubr.bf16.gmra.mrb[0].mxu0 %v959
    %v2262 = vpop.f32.mrb[0].mxu0
    %v2263 = vadd.f32 %v2166, %v2262
    %v2264 = vpop.f32.mrb[0].mxu0
    %v2265 = vpop.f32.mrb[0].mxu0
    %v2266 = vadd.f32 %v2169, %v2265
    %v2267 = vpop.f32.mrb[0].mxu0
    %2268 = vmatprep.mubr.bf16.mxu0 %v976
    %2269 = vmatmul.mubr.bf16.gmra.mrb[0].mxu0 %v975
    %v2270 = vpop.f32.mrb[0].mxu0
    %v2271 = vadd.f32 %v2174, %v2270
    %v2272 = vpop.f32.mrb[0].mxu0
    %v2273 = vpop.f32.mrb[0].mxu0
    %v2274 = vadd.f32 %v2177, %v2273
    %v2275 = vpop.f32.mrb[0].mxu0
    %2276 = vmatprep.mubr.bf16.mxu0 %v992
    %2277 = vmatmul.mubr.bf16.gmra.mrb[0].mxu0 %v991
    %v2278 = vpop.f32.mrb[0].mxu0
    %v2279 = vadd.f32 %v2182, %v2278
    %v2280 = vpop.f32.mrb[0].mxu0
    %v2281 = vpop.f32.mrb[0].mxu0
    %v2282 = vadd.f32 %v2185, %v2281
    %v2283 = vpop.f32.mrb[0].mxu0
    %2284 = vdwg.mxu0
    %2285 = vmatprep.subr.bf16.mxu0 0
    %2286 = vmatpush1.bf16.msra.mxu0 %v1705
    %2287 = vmatprep.subr.bf16.mxu0 0
    %2288 = vmatpush1.bf16.msra.mxu0 %v1706
    %2289 = vmatprep.subr.bf16.mxu0 0
    %2290 = vmatpush1.bf16.msra.mxu0 %v1707
    %2291 = vmatprep.subr.bf16.mxu0 0
    %2292 = vmatpush1.bf16.msra.mxu0 %v1708
    %2293 = vmatprep.subr.bf16.mxu0 0
    %2294 = vmatpush1.bf16.msra.mxu0 %v1709
    %2295 = vmatprep.subr.bf16.mxu0 0
    %2296 = vmatpush1.bf16.msra.mxu0 %v1710
    %2297 = vmatprep.subr.bf16.mxu0 0
    %2298 = vmatpush1.bf16.msra.mxu0 %v1711
    %2299 = vmatprep.subr.bf16.mxu0 0
    %2300 = vmatpush1.bf16.msra.mxu0 %v1712
    %2301 = vmatprep.subr.bf16.mxu0 0
    %2302 = vmatpush1.bf16.msra.mxu0 %v1713
    %2303 = vmatprep.subr.bf16.mxu0 0
    %2304 = vmatpush1.bf16.msra.mxu0 %v1714
    %2305 = vmatprep.subr.bf16.mxu0 0
    %2306 = vmatpush1.bf16.msra.mxu0 %v1715
    %2307 = vmatprep.subr.bf16.mxu0 0
    %2308 = vmatpush1.bf16.msra.mxu0 %v1716
    %2309 = vmatprep.subr.bf16.mxu0 0
    %2310 = vmatpush1.bf16.msra.mxu0 %v1717
    %2311 = vmatprep.subr.bf16.mxu0 0
    %2312 = vmatpush1.bf16.msra.mxu0 %v1718
    %2313 = vmatprep.subr.bf16.mxu0 0
    %2314 = vmatpush1.bf16.msra.mxu0 %v1719
    %2315 = vmatprep.subr.bf16.mxu0 0
    %2316 = vmatpush1.bf16.msra.mxu0 %v1720
    %2317 = vmatprep.mubr.bf16.mxu0 %v882
    %2318 = vmatmul.mubr.bf16.gmra.mrb[0].mxu0 %v881
    %v2319 = vpop.f32.mrb[0].mxu0
    %v2320 = vadd.f32 %v2223, %v2319
    %v2321 = vpop.f32.mrb[0].mxu0
    %v2322 = vpop.f32.mrb[0].mxu0
    %v2323 = vadd.f32 %v2226, %v2322
    %v2324 = vpop.f32.mrb[0].mxu0
    %2325 = vmatprep.mubr.bf16.mxu0 %v898
    %2326 = vmatmul.mubr.bf16.gmra.mrb[0].mxu0 %v897
    %v2327 = vpop.f32.mrb[0].mxu0
    %v2328 = vadd.f32 %v2231, %v2327
    %v2329 = vpop.f32.mrb[0].mxu0
    %v2330 = vpop.f32.mrb[0].mxu0
    %v2331 = vadd.f32 %v2234, %v2330
    %v2332 = vpop.f32.mrb[0].mxu0
    %2333 = vmatprep.mubr.bf16.mxu0 %v914
    %2334 = vmatmul.mubr.bf16.gmra.mrb[0].mxu0 %v913
    %v2335 = vpop.f32.mrb[0].mxu0
    %v2336 = vadd.f32 %v2239, %v2335
    %v2337 = vpop.f32.mrb[0].mxu0
    %v2338 = vpop.f32.mrb[0].mxu0
    %v2339 = vadd.f32 %v2242, %v2338
    %v2340 = vpop.f32.mrb[0].mxu0
    %2341 = vmatprep.mubr.bf16.mxu0 %v930
    %2342 = vmatmul.mubr.bf16.gmra.mrb[0].mxu0 %v929
    %v2343 = vpop.f32.mrb[0].mxu0
    %v2344 = vadd.f32 %v2247, %v2343
    %v2345 = vpop.f32.mrb[0].mxu0
    %v2346 = vpop.f32.mrb[0].mxu0
    %v2347 = vadd.f32 %v2250, %v2346
    %v2348 = vpop.f32.mrb[0].mxu0
    %2349 = vmatprep.mubr.bf16.mxu0 %v946
    %2350 = vmatmul.mubr.bf16.gmra.mrb[0].mxu0 %v945
    %v2351 = vpop.f32.mrb[0].mxu0
    %v2352 = vadd.f32 %v2255, %v2351
    %v2353 = vpop.f32.mrb[0].mxu0
    %v2354 = vpop.f32.mrb[0].mxu0
    %v2355 = vadd.f32 %v2258, %v2354
    %v2356 = vpop.f32.mrb[0].mxu0
    %2357 = vmatprep.mubr.bf16.mxu0 %v962
    %2358 = vmatmul.mubr.bf16.gmra.mrb[0].mxu0 %v961
    %v2359 = vpop.f32.mrb[0].mxu0
    %v2360 = vadd.f32 %v2263, %v2359
    %v2361 = vpop.f32.mrb[0].mxu0
    %v2362 = vpop.f32.mrb[0].mxu0
    %v2363 = vadd.f32 %v2266, %v2362
    %v2364 = vpop.f32.mrb[0].mxu0
    %2365 = vmatprep.mubr.bf16.mxu0 %v978
    %2366 = vmatmul.mubr.bf16.gmra.mrb[0].mxu0 %v977
    %v2367 = vpop.f32.mrb[0].mxu0
    %v2368 = vadd.f32 %v2271, %v2367
    %v2369 = vpop.f32.mrb[0].mxu0
    %v2370 = vpop.f32.mrb[0].mxu0
    %v2371 = vadd.f32 %v2274, %v2370
    %v2372 = vpop.f32.mrb[0].mxu0
    %2373 = vmatprep.mubr.bf16.mxu0 %v994
    %2374 = vmatmul.mubr.bf16.gmra.mrb[0].mxu0 %v993
    %v2375 = vpop.f32.mrb[0].mxu0
    %v2376 = vadd.f32 %v2279, %v2375
    %v2377 = vpop.f32.mrb[0].mxu0
    %v2378 = vpop.f32.mrb[0].mxu0
    %v2379 = vadd.f32 %v2282, %v2378
    %v2380 = vpop.f32.mrb[0].mxu0
    %2381 = vdwg.mxu0
    %2382 = vmatprep.subr.bf16.mxu0 0
    %2383 = vmatpush1.bf16.msra.mxu0 %v1721
    %2384 = vmatprep.subr.bf16.mxu0 0
    %2385 = vmatpush1.bf16.msra.mxu0 %v1722
    %2386 = vmatprep.subr.bf16.mxu0 0
    %2387 = vmatpush1.bf16.msra.mxu0 %v1723
    %2388 = vmatprep.subr.bf16.mxu0 0
    %2389 = vmatpush1.bf16.msra.mxu0 %v1724
    %2390 = vmatprep.subr.bf16.mxu0 0
    %2391 = vmatpush1.bf16.msra.mxu0 %v1725
    %2392 = vmatprep.subr.bf16.mxu0 0
    %2393 = vmatpush1.bf16.msra.mxu0 %v1726
    %2394 = vmatprep.subr.bf16.mxu0 0
    %2395 = vmatpush1.bf16.msra.mxu0 %v1727
    %2396 = vmatprep.subr.bf16.mxu0 0
    %2397 = vmatpush1.bf16.msra.mxu0 %v1728
    %2398 = vmatprep.subr.bf16.mxu0 0
    %2399 = vmatpush1.bf16.msra.mxu0 %v1729
    %2400 = vmatprep.subr.bf16.mxu0 0
    %2401 = vmatpush1.bf16.msra.mxu0 %v1730
    %2402 = vmatprep.subr.bf16.mxu0 0
    %2403 = vmatpush1.bf16.msra.mxu0 %v1731
    %2404 = vmatprep.subr.bf16.mxu0 0
    %2405 = vmatpush1.bf16.msra.mxu0 %v1732
    %2406 = vmatprep.subr.bf16.mxu0 0
    %2407 = vmatpush1.bf16.msra.mxu0 %v1733
    %2408 = vmatprep.subr.bf16.mxu0 0
    %2409 = vmatpush1.bf16.msra.mxu0 %v1734
    %2410 = vmatprep.subr.bf16.mxu0 0
    %2411 = vmatpush1.bf16.msra.mxu0 %v1735
    %2412 = vmatprep.subr.bf16.mxu0 0
    %2413 = vmatpush1.bf16.msra.mxu0 %v1736
    %2414 = vmatprep.mubr.bf16.mxu0 %v884
    %2415 = vmatmul.mubr.bf16.gmra.mrb[0].mxu0 %v883
    %v2416 = vpop.f32.mrb[0].mxu0
    %v2417 = vadd.f32 %v2320, %v2416
    %v2418 = vpop.f32.mrb[0].mxu0
    %v2419 = vpop.f32.mrb[0].mxu0
    %v2420 = vadd.f32 %v2323, %v2419
    %v2421 = vpop.f32.mrb[0].mxu0
    %2422 = vmatprep.mubr.bf16.mxu0 %v900
    %2423 = vmatmul.mubr.bf16.gmra.mrb[0].mxu0 %v899
    %v2424 = vpop.f32.mrb[0].mxu0
    %v2425 = vadd.f32 %v2328, %v2424
    %v2426 = vpop.f32.mrb[0].mxu0
    %v2427 = vpop.f32.mrb[0].mxu0
    %v2428 = vadd.f32 %v2331, %v2427
    %v2429 = vpop.f32.mrb[0].mxu0
    %2430 = vmatprep.mubr.bf16.mxu0 %v916
    %2431 = vmatmul.mubr.bf16.gmra.mrb[0].mxu0 %v915
    %v2432 = vpop.f32.mrb[0].mxu0
    %v2433 = vadd.f32 %v2336, %v2432
    %v2434 = vpop.f32.mrb[0].mxu0
    %v2435 = vpop.f32.mrb[0].mxu0
    %v2436 = vadd.f32 %v2339, %v2435
    %v2437 = vpop.f32.mrb[0].mxu0
    %2438 = vmatprep.mubr.bf16.mxu0 %v932
    %2439 = vmatmul.mubr.bf16.gmra.mrb[0].mxu0 %v931
    %v2440 = vpop.f32.mrb[0].mxu0
    %v2441 = vadd.f32 %v2344, %v2440
    %v2442 = vpop.f32.mrb[0].mxu0
    %v2443 = vpop.f32.mrb[0].mxu0
    %v2444 = vadd.f32 %v2347, %v2443
    %v2445 = vpop.f32.mrb[0].mxu0
    %2446 = vmatprep.mubr.bf16.mxu0 %v948
    %2447 = vmatmul.mubr.bf16.gmra.mrb[0].mxu0 %v947
    %v2448 = vpop.f32.mrb[0].mxu0
    %v2449 = vadd.f32 %v2352, %v2448
    %v2450 = vpop.f32.mrb[0].mxu0
    %v2451 = vpop.f32.mrb[0].mxu0
    %v2452 = vadd.f32 %v2355, %v2451
    %v2453 = vpop.f32.mrb[0].mxu0
    %2454 = vmatprep.mubr.bf16.mxu0 %v964
    %2455 = vmatmul.mubr.bf16.gmra.mrb[0].mxu0 %v963
    %v2456 = vpop.f32.mrb[0].mxu0
    %v2457 = vadd.f32 %v2360, %v2456
    %v2458 = vpop.f32.mrb[0].mxu0
    %v2459 = vpop.f32.mrb[0].mxu0
    %v2460 = vadd.f32 %v2363, %v2459
    %v2461 = vpop.f32.mrb[0].mxu0
    %2462 = vmatprep.mubr.bf16.mxu0 %v980
    %2463 = vmatmul.mubr.bf16.gmra.mrb[0].mxu0 %v979
    %v2464 = vpop.f32.mrb[0].mxu0
    %v2465 = vadd.f32 %v2368, %v2464
    %v2466 = vpop.f32.mrb[0].mxu0
    %v2467 = vpop.f32.mrb[0].mxu0
    %v2468 = vadd.f32 %v2371, %v2467
    %v2469 = vpop.f32.mrb[0].mxu0
    %2470 = vmatprep.mubr.bf16.mxu0 %v996
    %2471 = vmatmul.mubr.bf16.gmra.mrb[0].mxu0 %v995
    %v2472 = vpop.f32.mrb[0].mxu0
    %v2473 = vadd.f32 %v2376, %v2472
    %v2474 = vpop.f32.mrb[0].mxu0
    %v2475 = vpop.f32.mrb[0].mxu0
    %v2476 = vadd.f32 %v2379, %v2475
    %v2477 = vpop.f32.mrb[0].mxu0
    %2478 = vdwg.mxu0
    %2479 = vmatprep.subr.bf16.mxu0 0
    %2480 = vmatpush1.bf16.msra.mxu0 %v1737
    %2481 = vmatprep.subr.bf16.mxu0 0
    %2482 = vmatpush1.bf16.msra.mxu0 %v1738
    %2483 = vmatprep.subr.bf16.mxu0 0
    %2484 = vmatpush1.bf16.msra.mxu0 %v1739
    %2485 = vmatprep.subr.bf16.mxu0 0
    %2486 = vmatpush1.bf16.msra.mxu0 %v1740
    %2487 = vmatprep.subr.bf16.mxu0 0
    %2488 = vmatpush1.bf16.msra.mxu0 %v1741
    %2489 = vmatprep.subr.bf16.mxu0 0
    %2490 = vmatpush1.bf16.msra.mxu0 %v1742
    %2491 = vmatprep.subr.bf16.mxu0 0
    %2492 = vmatpush1.bf16.msra.mxu0 %v1743
    %2493 = vmatprep.subr.bf16.mxu0 0
    %2494 = vmatpush1.bf16.msra.mxu0 %v1744
    %2495 = vmatprep.subr.bf16.mxu0 0
    %2496 = vmatpush1.bf16.msra.mxu0 %v1745
    %2497 = vmatprep.subr.bf16.mxu0 0
    %2498 = vmatpush1.bf16.msra.mxu0 %v1746
    %2499 = vmatprep.subr.bf16.mxu0 0
    %2500 = vmatpush1.bf16.msra.mxu0 %v1747
    %2501 = vmatprep.subr.bf16.mxu0 0
    %2502 = vmatpush1.bf16.msra.mxu0 %v1748
    %2503 = vmatprep.subr.bf16.mxu0 0
    %2504 = vmatpush1.bf16.msra.mxu0 %v1749
    %2505 = vmatprep.subr.bf16.mxu0 0
    %2506 = vmatpush1.bf16.msra.mxu0 %v1750
    %2507 = vmatprep.subr.bf16.mxu0 0
    %2508 = vmatpush1.bf16.msra.mxu0 %v1751
    %2509 = vmatprep.subr.bf16.mxu0 0
    %2510 = vmatpush1.bf16.msra.mxu0 %v1752
    %2511 = vmatprep.mubr.bf16.mxu0 %v886
    %2512 = vmatmul.mubr.bf16.gmra.mrb[0].mxu0 %v885
    %v2513 = vpop.f32.mrb[0].mxu0
    %v2514 = vadd.f32 %v2417, %v2513
    %v2515 = vpop.f32.mrb[0].mxu0
    %v2516 = vpop.f32.mrb[0].mxu0
    %v2517 = vadd.f32 %v2420, %v2516
    %v2518 = vpop.f32.mrb[0].mxu0
    %2519 = vmatprep.mubr.bf16.mxu0 %v902
    %2520 = vmatmul.mubr.bf16.gmra.mrb[0].mxu0 %v901
    %v2521 = vpop.f32.mrb[0].mxu0
    %v2522 = vadd.f32 %v2425, %v2521
    %v2523 = vpop.f32.mrb[0].mxu0
    %v2524 = vpop.f32.mrb[0].mxu0
    %v2525 = vadd.f32 %v2428, %v2524
    %v2526 = vpop.f32.mrb[0].mxu0
    %2527 = vmatprep.mubr.bf16.mxu0 %v918
    %2528 = vmatmul.mubr.bf16.gmra.mrb[0].mxu0 %v917
    %v2529 = vpop.f32.mrb[0].mxu0
    %v2530 = vadd.f32 %v2433, %v2529
    %v2531 = vpop.f32.mrb[0].mxu0
    %v2532 = vpop.f32.mrb[0].mxu0
    %v2533 = vadd.f32 %v2436, %v2532
    %v2534 = vpop.f32.mrb[0].mxu0
    %2535 = vmatprep.mubr.bf16.mxu0 %v934
    %2536 = vmatmul.mubr.bf16.gmra.mrb[0].mxu0 %v933
    %v2537 = vpop.f32.mrb[0].mxu0
    %v2538 = vadd.f32 %v2441, %v2537
    %v2539 = vpop.f32.mrb[0].mxu0
    %v2540 = vpop.f32.mrb[0].mxu0
    %v2541 = vadd.f32 %v2444, %v2540
    %v2542 = vpop.f32.mrb[0].mxu0
    %2543 = vmatprep.mubr.bf16.mxu0 %v950
    %2544 = vmatmul.mubr.bf16.gmra.mrb[0].mxu0 %v949
    %v2545 = vpop.f32.mrb[0].mxu0
    %v2546 = vadd.f32 %v2449, %v2545
    %v2547 = vpop.f32.mrb[0].mxu0
    %v2548 = vpop.f32.mrb[0].mxu0
    %v2549 = vadd.f32 %v2452, %v2548
    %v2550 = vpop.f32.mrb[0].mxu0
    %2551 = vmatprep.mubr.bf16.mxu0 %v966
    %2552 = vmatmul.mubr.bf16.gmra.mrb[0].mxu0 %v965
    %v2553 = vpop.f32.mrb[0].mxu0
    %v2554 = vadd.f32 %v2457, %v2553
    %v2555 = vpop.f32.mrb[0].mxu0
    %v2556 = vpop.f32.mrb[0].mxu0
    %v2557 = vadd.f32 %v2460, %v2556
    %v2558 = vpop.f32.mrb[0].mxu0
    %2559 = vmatprep.mubr.bf16.mxu0 %v982
    %2560 = vmatmul.mubr.bf16.gmra.mrb[0].mxu0 %v981
    %v2561 = vpop.f32.mrb[0].mxu0
    %v2562 = vadd.f32 %v2465, %v2561
    %v2563 = vpop.f32.mrb[0].mxu0
    %v2564 = vpop.f32.mrb[0].mxu0
    %v2565 = vadd.f32 %v2468, %v2564
    %v2566 = vpop.f32.mrb[0].mxu0
    %2567 = vmatprep.mubr.bf16.mxu0 %v998
    %2568 = vmatmul.mubr.bf16.gmra.mrb[0].mxu0 %v997
    %v2569 = vpop.f32.mrb[0].mxu0
    %v2570 = vadd.f32 %v2473, %v2569
    %v2571 = vpop.f32.mrb[0].mxu0
    %v2572 = vpop.f32.mrb[0].mxu0
    %v2573 = vadd.f32 %v2476, %v2572
    %v2574 = vpop.f32.mrb[0].mxu0
    %2575 = vdwg.mxu0
    %2576 = vmatprep.subr.bf16.mxu0 0
    %2577 = vmatpush1.bf16.msra.mxu0 %v1753
    %2578 = vmatprep.subr.bf16.mxu0 0
    %2579 = vmatpush1.bf16.msra.mxu0 %v1754
    %2580 = vmatprep.subr.bf16.mxu0 0
    %2581 = vmatpush1.bf16.msra.mxu0 %v1755
    %2582 = vmatprep.subr.bf16.mxu0 0
    %2583 = vmatpush1.bf16.msra.mxu0 %v1756
    %2584 = vmatprep.subr.bf16.mxu0 0
    %2585 = vmatpush1.bf16.msra.mxu0 %v1757
    %2586 = vmatprep.subr.bf16.mxu0 0
    %2587 = vmatpush1.bf16.msra.mxu0 %v1758
    %2588 = vmatprep.subr.bf16.mxu0 0
    %2589 = vmatpush1.bf16.msra.mxu0 %v1759
    %2590 = vmatprep.subr.bf16.mxu0 0
    %2591 = vmatpush1.bf16.msra.mxu0 %v1760
    %2592 = vmatprep.subr.bf16.mxu0 0
    %2593 = vmatpush1.bf16.msra.mxu0 %v1761
    %2594 = vmatprep.subr.bf16.mxu0 0
    %2595 = vmatpush1.bf16.msra.mxu0 %v1762
    %2596 = vmatprep.subr.bf16.mxu0 0
    %2597 = vmatpush1.bf16.msra.mxu0 %v1763
    %2598 = vmatprep.subr.bf16.mxu0 0
    %2599 = vmatpush1.bf16.msra.mxu0 %v1764
    %2600 = vmatprep.subr.bf16.mxu0 0
    %2601 = vmatpush1.bf16.msra.mxu0 %v1765
    %2602 = vmatprep.subr.bf16.mxu0 0
    %2603 = vmatpush1.bf16.msra.mxu0 %v1766
    %2604 = vmatprep.subr.bf16.mxu0 0
    %2605 = vmatpush1.bf16.msra.mxu0 %v1767
    %2606 = vmatprep.subr.bf16.mxu0 0
    %2607 = vmatpush1.bf16.msra.mxu0 %v1768
    %2608 = vmatprep.mubr.bf16.mxu0 %v888
    %2609 = vmatmul.mubr.bf16.gmra.mrb[0].mxu0 %v887
    %v2610 = vpop.f32.mrb[0].mxu0
    %v2611 = vadd.f32 %v2514, %v2610
    %v2612 = vpop.f32.mrb[0].mxu0
    %v2613 = vpop.f32.mrb[0].mxu0
    %v2614 = vadd.f32 %v2517, %v2613
    %v2615 = vpop.f32.mrb[0].mxu0
    %2616 = vmatprep.mubr.bf16.mxu0 %v904
    %2617 = vmatmul.mubr.bf16.gmra.mrb[0].mxu0 %v903
    %v2618 = vpop.f32.mrb[0].mxu0
    %v2619 = vadd.f32 %v2522, %v2618
    %v2620 = vpop.f32.mrb[0].mxu0
    %v2621 = vpop.f32.mrb[0].mxu0
    %v2622 = vadd.f32 %v2525, %v2621
    %v2623 = vpop.f32.mrb[0].mxu0
    %2624 = vmatprep.mubr.bf16.mxu0 %v920
    %2625 = vmatmul.mubr.bf16.gmra.mrb[0].mxu0 %v919
    %v2626 = vpop.f32.mrb[0].mxu0
    %v2627 = vadd.f32 %v2530, %v2626
    %v2628 = vpop.f32.mrb[0].mxu0
    %v2629 = vpop.f32.mrb[0].mxu0
    %v2630 = vadd.f32 %v2533, %v2629
    %v2631 = vpop.f32.mrb[0].mxu0
    %2632 = vmatprep.mubr.bf16.mxu0 %v936
    %2633 = vmatmul.mubr.bf16.gmra.mrb[0].mxu0 %v935
    %v2634 = vpop.f32.mrb[0].mxu0
    %v2635 = vadd.f32 %v2538, %v2634
    %v2636 = vpop.f32.mrb[0].mxu0
    %v2637 = vpop.f32.mrb[0].mxu0
    %v2638 = vadd.f32 %v2541, %v2637
    %v2639 = vpop.f32.mrb[0].mxu0
    %2640 = vmatprep.mubr.bf16.mxu0 %v952
    %2641 = vmatmul.mubr.bf16.gmra.mrb[0].mxu0 %v951
    %v2642 = vpop.f32.mrb[0].mxu0
    %v2643 = vadd.f32 %v2546, %v2642
    %v2644 = vpop.f32.mrb[0].mxu0
    %v2645 = vpop.f32.mrb[0].mxu0
    %v2646 = vadd.f32 %v2549, %v2645
    %v2647 = vpop.f32.mrb[0].mxu0
    %2648 = vmatprep.mubr.bf16.mxu0 %v968
    %2649 = vmatmul.mubr.bf16.gmra.mrb[0].mxu0 %v967
    %v2650 = vpop.f32.mrb[0].mxu0
    %v2651 = vadd.f32 %v2554, %v2650
    %v2652 = vpop.f32.mrb[0].mxu0
    %v2653 = vpop.f32.mrb[0].mxu0
    %v2654 = vadd.f32 %v2557, %v2653
    %v2655 = vpop.f32.mrb[0].mxu0
    %2656 = vmatprep.mubr.bf16.mxu0 %v984
    %2657 = vmatmul.mubr.bf16.gmra.mrb[0].mxu0 %v983
    %v2658 = vpop.f32.mrb[0].mxu0
    %v2659 = vadd.f32 %v2562, %v2658
    %v2660 = vpop.f32.mrb[0].mxu0
    %v2661 = vpop.f32.mrb[0].mxu0
    %v2662 = vadd.f32 %v2565, %v2661
    %v2663 = vpop.f32.mrb[0].mxu0
    %2664 = vmatprep.mubr.bf16.mxu0 %v1000
    %2665 = vmatmul.mubr.bf16.gmra.mrb[0].mxu0 %v999
    %v2666 = vpop.f32.mrb[0].mxu0
    %v2667 = vadd.f32 %v2570, %v2666
    %v2668 = vpop.f32.mrb[0].mxu0
    %v2669 = vpop.f32.mrb[0].mxu0
    %v2670 = vadd.f32 %v2573, %v2669
    %v2671 = vpop.f32.mrb[0].mxu0
    %2672 = vdwg.mxu0
    %v2673 = vmax.f32 %v2611, 0.0
    %v2674 = vmax.f32 %v2614, 0.0
    %v2675 = vmax.f32 %v2619, 0.0
    %v2676 = vmax.f32 %v2622, 0.0
    %v2677 = vmax.f32 %v2627, 0.0
    %v2678 = vmax.f32 %v2630, 0.0
    %v2679 = vmax.f32 %v2635, 0.0
    %v2680 = vmax.f32 %v2638, 0.0
    %v2681 = vmax.f32 %v2643, 0.0
    %v2682 = vmax.f32 %v2646, 0.0
    %v2683 = vmax.f32 %v2651, 0.0
    %v2684 = vmax.f32 %v2654, 0.0
    %v2685 = vmax.f32 %v2659, 0.0
    %v2686 = vmax.f32 %v2662, 0.0
    %v2687 = vmax.f32 %v2667, 0.0
    %v2688 = vmax.f32 %v2670, 0.0
    %vm2689 = vcmask 1041408
    %v2690 = vsel %vm2689, %v2673, 0.0
    %v2691 = vrot.slane %v2690, 4
    %v2692 = vadd.f32 %v2690, %v2691
    %v2693 = vrot.slane %v2692, 2
    %v2694 = vadd.f32 %v2692, %v2693
    %v2695 = vrot.slane %v2694, 1
    %v2696 = vadd.f32 %v2694, %v2695
    %v2697 = vsel %vm2689, %v2681, 0.0
    %v2698 = vrot.slane %v2697, 4
    %v2699 = vadd.f32 %v2697, %v2698
    %v2700 = vrot.slane %v2699, 2
    %v2701 = vadd.f32 %v2699, %v2700
    %v2702 = vrot.slane %v2701, 1
    %v2703 = vadd.f32 %v2701, %v2702
    %v2704 = vadd.f32 %v2696, 0.0
    %v2705 = vadd.f32 %v2703, 0.0
    %v2706 = vsel %vm2689, %v2674, 0.0
    %v2707 = vrot.slane %v2706, 4
    %v2708 = vadd.f32 %v2706, %v2707
    %v2709 = vrot.slane %v2708, 2
    %v2710 = vadd.f32 %v2708, %v2709
    %v2711 = vrot.slane %v2710, 1
    %v2712 = vadd.f32 %v2710, %v2711
    %v2713 = vsel %vm2689, %v2682, 0.0
    %v2714 = vrot.slane %v2713, 4
    %v2715 = vadd.f32 %v2713, %v2714
    %v2716 = vrot.slane %v2715, 2
    %v2717 = vadd.f32 %v2715, %v2716
    %v2718 = vrot.slane %v2717, 1
    %v2719 = vadd.f32 %v2717, %v2718
    %v2720 = vadd.f32 %v2704, %v2712
    %v2721 = vadd.f32 %v2705, %v2719
    %v2722 = vmul.f32 %v2720, 0.25
    %v2723 = vmul.f32 %v2721, 0.25
    %v2724 = vpack.c.bf16 %v2722, %v2722
    %v2725 = vpack.c.bf16 %v2723, %v2723
    %v2728 = vrot.slane %v2673, 2
    %v2729 = vrot.slane %v2681, 2
    %v2732 = vsel %vm2689, %v2728, 0.0
    %v2733 = vrot.slane %v2732, 4
    %v2734 = vadd.f32 %v2732, %v2733
    %v2735 = vrot.slane %v2734, 2
    %v2736 = vadd.f32 %v2734, %v2735
    %v2737 = vrot.slane %v2736, 1
    %v2738 = vadd.f32 %v2736, %v2737
    %v2739 = vsel %vm2689, %v2729, 0.0
    %v2740 = vrot.slane %v2739, 4
    %v2741 = vadd.f32 %v2739, %v2740
    %v2742 = vrot.slane %v2741, 2
    %v2743 = vadd.f32 %v2741, %v2742
    %v2744 = vrot.slane %v2743, 1
    %v2745 = vadd.f32 %v2743, %v2744
    %v2746 = vadd.f32 %v2738, 0.0
    %v2747 = vadd.f32 %v2745, 0.0
    %v2750 = vrot.slane %v2674, 2
    %v2751 = vrot.slane %v2682, 2
    %v2754 = vsel %vm2689, %v2750, 0.0
    %v2755 = vrot.slane %v2754, 4
    %v2756 = vadd.f32 %v2754, %v2755
    %v2757 = vrot.slane %v2756, 2
    %v2758 = vadd.f32 %v2756, %v2757
    %v2759 = vrot.slane %v2758, 1
    %v2760 = vadd.f32 %v2758, %v2759
    %v2761 = vsel %vm2689, %v2751, 0.0
    %v2762 = vrot.slane %v2761, 4
    %v2763 = vadd.f32 %v2761, %v2762
    %v2764 = vrot.slane %v2763, 2
    %v2765 = vadd.f32 %v2763, %v2764
    %v2766 = vrot.slane %v2765, 1
    %v2767 = vadd.f32 %v2765, %v2766
    %v2768 = vadd.f32 %v2746, %v2760
    %v2769 = vadd.f32 %v2747, %v2767
    %v2770 = vmul.f32 %v2768, 0.25
    %v2771 = vmul.f32 %v2769, 0.25
    %v2772 = vpack.c.bf16 %v2770, %v2770
    %v2773 = vpack.c.bf16 %v2771, %v2771
    %v2774 = vrot.slane %v2673, 4
    %v2775 = vrot.slane %v2681, 4
    %v2778 = vsel %vm2689, %v2774, 0.0
    %v2779 = vrot.slane %v2778, 4
    %v2780 = vadd.f32 %v2778, %v2779
    %v2781 = vrot.slane %v2780, 2
    %v2782 = vadd.f32 %v2780, %v2781
    %v2783 = vrot.slane %v2782, 1
    %v2784 = vadd.f32 %v2782, %v2783
    %v2785 = vsel %vm2689, %v2775, 0.0
    %v2786 = vrot.slane %v2785, 4
    %v2787 = vadd.f32 %v2785, %v2786
    %v2788 = vrot.slane %v2787, 2
    %v2789 = vadd.f32 %v2787, %v2788
    %v2790 = vrot.slane %v2789, 1
    %v2791 = vadd.f32 %v2789, %v2790
    %v2792 = vadd.f32 %v2784, 0.0
    %v2793 = vadd.f32 %v2791, 0.0
    %v2794 = vrot.slane %v2674, 4
    %v2795 = vrot.slane %v2682, 4
    %v2798 = vsel %vm2689, %v2794, 0.0
    %v2799 = vrot.slane %v2798, 4
    %v2800 = vadd.f32 %v2798, %v2799
    %v2801 = vrot.slane %v2800, 2
    %v2802 = vadd.f32 %v2800, %v2801
    %v2803 = vrot.slane %v2802, 1
    %v2804 = vadd.f32 %v2802, %v2803
    %v2805 = vsel %vm2689, %v2795, 0.0
    %v2806 = vrot.slane %v2805, 4
    %v2807 = vadd.f32 %v2805, %v2806
    %v2808 = vrot.slane %v2807, 2
    %v2809 = vadd.f32 %v2807, %v2808
    %v2810 = vrot.slane %v2809, 1
    %v2811 = vadd.f32 %v2809, %v2810
    %v2812 = vadd.f32 %v2792, %v2804
    %v2813 = vadd.f32 %v2793, %v2811
    %v2814 = vmul.f32 %v2812, 0.25
    %v2815 = vmul.f32 %v2813, 0.25
    %v2816 = vpack.c.bf16 %v2814, %v2814
    %v2817 = vpack.c.bf16 %v2815, %v2815
    %v2818 = vrot.slane %v2673, 6
    %v2819 = vrot.slane %v2681, 6
    %v2822 = vsel %vm2689, %v2818, 0.0
    %v2823 = vrot.slane %v2822, 4
    %v2824 = vadd.f32 %v2822, %v2823
    %v2825 = vrot.slane %v2824, 2
    %v2826 = vadd.f32 %v2824, %v2825
    %v2827 = vrot.slane %v2826, 1
    %v2828 = vadd.f32 %v2826, %v2827
    %v2829 = vsel %vm2689, %v2819, 0.0
    %v2830 = vrot.slane %v2829, 4
    %v2831 = vadd.f32 %v2829, %v2830
    %v2832 = vrot.slane %v2831, 2
    %v2833 = vadd.f32 %v2831, %v2832
    %v2834 = vrot.slane %v2833, 1
    %v2835 = vadd.f32 %v2833, %v2834
    %v2836 = vadd.f32 %v2828, 0.0
    %v2837 = vadd.f32 %v2835, 0.0
    %v2838 = vrot.slane %v2674, 6
    %v2839 = vrot.slane %v2682, 6
    %v2842 = vsel %vm2689, %v2838, 0.0
    %v2843 = vrot.slane %v2842, 4
    %v2844 = vadd.f32 %v2842, %v2843
    %v2845 = vrot.slane %v2844, 2
    %v2846 = vadd.f32 %v2844, %v2845
    %v2847 = vrot.slane %v2846, 1
    %v2848 = vadd.f32 %v2846, %v2847
    %v2849 = vsel %vm2689, %v2839, 0.0
    %v2850 = vrot.slane %v2849, 4
    %v2851 = vadd.f32 %v2849, %v2850
    %v2852 = vrot.slane %v2851, 2
    %v2853 = vadd.f32 %v2851, %v2852
    %v2854 = vrot.slane %v2853, 1
    %v2855 = vadd.f32 %v2853, %v2854
    %v2856 = vadd.f32 %v2836, %v2848
    %v2857 = vadd.f32 %v2837, %v2855
    %v2858 = vmul.f32 %v2856, 0.25
    %v2859 = vmul.f32 %v2857, 0.25
    %v2860 = vpack.c.bf16 %v2858, %v2858
    %v2861 = vpack.c.bf16 %v2859, %v2859
    %v2862 = vsel %vm2689, %v2675, 0.0
    %v2863 = vrot.slane %v2862, 4
    %v2864 = vadd.f32 %v2862, %v2863
    %v2865 = vrot.slane %v2864, 2
    %v2866 = vadd.f32 %v2864, %v2865
    %v2867 = vrot.slane %v2866, 1
    %v2868 = vadd.f32 %v2866, %v2867
    %v2869 = vsel %vm2689, %v2683, 0.0
    %v2870 = vrot.slane %v2869, 4
    %v2871 = vadd.f32 %v2869, %v2870
    %v2872 = vrot.slane %v2871, 2
    %v2873 = vadd.f32 %v2871, %v2872
    %v2874 = vrot.slane %v2873, 1
    %v2875 = vadd.f32 %v2873, %v2874
    %v2876 = vadd.f32 %v2868, 0.0
    %v2877 = vadd.f32 %v2875, 0.0
    %v2878 = vsel %vm2689, %v2676, 0.0
    %v2879 = vrot.slane %v2878, 4
    %v2880 = vadd.f32 %v2878, %v2879
    %v2881 = vrot.slane %v2880, 2
    %v2882 = vadd.f32 %v2880, %v2881
    %v2883 = vrot.slane %v2882, 1
    %v2884 = vadd.f32 %v2882, %v2883
    %v2885 = vsel %vm2689, %v2684, 0.0
    %v2886 = vrot.slane %v2885, 4
    %v2887 = vadd.f32 %v2885, %v2886
    %v2888 = vrot.slane %v2887, 2
    %v2889 = vadd.f32 %v2887, %v2888
    %v2890 = vrot.slane %v2889, 1
    %v2891 = vadd.f32 %v2889, %v2890
    %v2892 = vadd.f32 %v2876, %v2884
    %v2893 = vadd.f32 %v2877, %v2891
    %v2894 = vmul.f32 %v2892, 0.25
    %v2895 = vmul.f32 %v2893, 0.25
    %v2896 = vpack.c.bf16 %v2894, %v2894
    %v2897 = vpack.c.bf16 %v2895, %v2895
    %v2900 = vrot.slane %v2675, 2
    %v2901 = vrot.slane %v2683, 2
    %v2904 = vsel %vm2689, %v2900, 0.0
    %v2905 = vrot.slane %v2904, 4
    %v2906 = vadd.f32 %v2904, %v2905
    %v2907 = vrot.slane %v2906, 2
    %v2908 = vadd.f32 %v2906, %v2907
    %v2909 = vrot.slane %v2908, 1
    %v2910 = vadd.f32 %v2908, %v2909
    %v2911 = vsel %vm2689, %v2901, 0.0
    %v2912 = vrot.slane %v2911, 4
    %v2913 = vadd.f32 %v2911, %v2912
    %v2914 = vrot.slane %v2913, 2
    %v2915 = vadd.f32 %v2913, %v2914
    %v2916 = vrot.slane %v2915, 1
    %v2917 = vadd.f32 %v2915, %v2916
    %v2918 = vadd.f32 %v2910, 0.0
    %v2919 = vadd.f32 %v2917, 0.0
    %v2922 = vrot.slane %v2676, 2
    %v2923 = vrot.slane %v2684, 2
    %v2926 = vsel %vm2689, %v2922, 0.0
    %v2927 = vrot.slane %v2926, 4
    %v2928 = vadd.f32 %v2926, %v2927
    %v2929 = vrot.slane %v2928, 2
    %v2930 = vadd.f32 %v2928, %v2929
    %v2931 = vrot.slane %v2930, 1
    %v2932 = vadd.f32 %v2930, %v2931
    %v2933 = vsel %vm2689, %v2923, 0.0
    %v2934 = vrot.slane %v2933, 4
    %v2935 = vadd.f32 %v2933, %v2934
    %v2936 = vrot.slane %v2935, 2
    %v2937 = vadd.f32 %v2935, %v2936
    %v2938 = vrot.slane %v2937, 1
    %v2939 = vadd.f32 %v2937, %v2938
    %v2940 = vadd.f32 %v2918, %v2932
    %v2941 = vadd.f32 %v2919, %v2939
    %v2942 = vmul.f32 %v2940, 0.25
    %v2943 = vmul.f32 %v2941, 0.25
    %v2944 = vpack.c.bf16 %v2942, %v2942
    %v2945 = vpack.c.bf16 %v2943, %v2943
    %v2946 = vrot.slane %v2675, 4
    %v2947 = vrot.slane %v2683, 4
    %v2950 = vsel %vm2689, %v2946, 0.0
    %v2951 = vrot.slane %v2950, 4
    %v2952 = vadd.f32 %v2950, %v2951
    %v2953 = vrot.slane %v2952, 2
    %v2954 = vadd.f32 %v2952, %v2953
    %v2955 = vrot.slane %v2954, 1
    %v2956 = vadd.f32 %v2954, %v2955
    %v2957 = vsel %vm2689, %v2947, 0.0
    %v2958 = vrot.slane %v2957, 4
    %v2959 = vadd.f32 %v2957, %v2958
    %v2960 = vrot.slane %v2959, 2
    %v2961 = vadd.f32 %v2959, %v2960
    %v2962 = vrot.slane %v2961, 1
    %v2963 = vadd.f32 %v2961, %v2962
    %v2964 = vadd.f32 %v2956, 0.0
    %v2965 = vadd.f32 %v2963, 0.0
    %v2966 = vrot.slane %v2676, 4
    %v2967 = vrot.slane %v2684, 4
    %v2970 = vsel %vm2689, %v2966, 0.0
    %v2971 = vrot.slane %v2970, 4
    %v2972 = vadd.f32 %v2970, %v2971
    %v2973 = vrot.slane %v2972, 2
    %v2974 = vadd.f32 %v2972, %v2973
    %v2975 = vrot.slane %v2974, 1
    %v2976 = vadd.f32 %v2974, %v2975
    %v2977 = vsel %vm2689, %v2967, 0.0
    %v2978 = vrot.slane %v2977, 4
    %v2979 = vadd.f32 %v2977, %v2978
    %v2980 = vrot.slane %v2979, 2
    %v2981 = vadd.f32 %v2979, %v2980
    %v2982 = vrot.slane %v2981, 1
    %v2983 = vadd.f32 %v2981, %v2982
    %v2984 = vadd.f32 %v2964, %v2976
    %v2985 = vadd.f32 %v2965, %v2983
    %v2986 = vmul.f32 %v2984, 0.25
    %v2987 = vmul.f32 %v2985, 0.25
    %v2988 = vpack.c.bf16 %v2986, %v2986
    %v2989 = vpack.c.bf16 %v2987, %v2987
    %v2990 = vrot.slane %v2675, 6
    %v2991 = vrot.slane %v2683, 6
    %v2994 = vsel %vm2689, %v2990, 0.0
    %v2995 = vrot.slane %v2994, 4
    %v2996 = vadd.f32 %v2994, %v2995
    %v2997 = vrot.slane %v2996, 2
    %v2998 = vadd.f32 %v2996, %v2997
    %v2999 = vrot.slane %v2998, 1
    %v3000 = vadd.f32 %v2998, %v2999
    %v3001 = vsel %vm2689, %v2991, 0.0
    %v3002 = vrot.slane %v3001, 4
    %v3003 = vadd.f32 %v3001, %v3002
    %v3004 = vrot.slane %v3003, 2
    %v3005 = vadd.f32 %v3003, %v3004
    %v3006 = vrot.slane %v3005, 1
    %v3007 = vadd.f32 %v3005, %v3006
    %v3008 = vadd.f32 %v3000, 0.0
    %v3009 = vadd.f32 %v3007, 0.0
    %v3010 = vrot.slane %v2676, 6
    %v3011 = vrot.slane %v2684, 6
    %v3014 = vsel %vm2689, %v3010, 0.0
    %v3015 = vrot.slane %v3014, 4
    %v3016 = vadd.f32 %v3014, %v3015
    %v3017 = vrot.slane %v3016, 2
    %v3018 = vadd.f32 %v3016, %v3017
    %v3019 = vrot.slane %v3018, 1
    %v3020 = vadd.f32 %v3018, %v3019
    %v3021 = vsel %vm2689, %v3011, 0.0
    %v3022 = vrot.slane %v3021, 4
    %v3023 = vadd.f32 %v3021, %v3022
    %v3024 = vrot.slane %v3023, 2
    %v3025 = vadd.f32 %v3023, %v3024
    %v3026 = vrot.slane %v3025, 1
    %v3027 = vadd.f32 %v3025, %v3026
    %v3028 = vadd.f32 %v3008, %v3020
    %v3029 = vadd.f32 %v3009, %v3027
    %v3030 = vmul.f32 %v3028, 0.25
    %v3031 = vmul.f32 %v3029, 0.25
    %v3032 = vpack.c.bf16 %v3030, %v3030
    %v3033 = vpack.c.bf16 %v3031, %v3031
    %v3034 = vsel %vm2689, %v2677, 0.0
    %v3035 = vrot.slane %v3034, 4
    %v3036 = vadd.f32 %v3034, %v3035
    %v3037 = vrot.slane %v3036, 2
    %v3038 = vadd.f32 %v3036, %v3037
    %v3039 = vrot.slane %v3038, 1
    %v3040 = vadd.f32 %v3038, %v3039
    %v3041 = vsel %vm2689, %v2685, 0.0
    %v3042 = vrot.slane %v3041, 4
    %v3043 = vadd.f32 %v3041, %v3042
    %v3044 = vrot.slane %v3043, 2
    %v3045 = vadd.f32 %v3043, %v3044
    %v3046 = vrot.slane %v3045, 1
    %v3047 = vadd.f32 %v3045, %v3046
    %v3048 = vadd.f32 %v3040, 0.0
    %v3049 = vadd.f32 %v3047, 0.0
    %v3050 = vsel %vm2689, %v2678, 0.0
    %v3051 = vrot.slane %v3050, 4
    %v3052 = vadd.f32 %v3050, %v3051
    %v3053 = vrot.slane %v3052, 2
    %v3054 = vadd.f32 %v3052, %v3053
    %v3055 = vrot.slane %v3054, 1
    %v3056 = vadd.f32 %v3054, %v3055
    %v3057 = vsel %vm2689, %v2686, 0.0
    %v3058 = vrot.slane %v3057, 4
    %v3059 = vadd.f32 %v3057, %v3058
    %v3060 = vrot.slane %v3059, 2
    %v3061 = vadd.f32 %v3059, %v3060
    %v3062 = vrot.slane %v3061, 1
    %v3063 = vadd.f32 %v3061, %v3062
    %v3064 = vadd.f32 %v3048, %v3056
    %v3065 = vadd.f32 %v3049, %v3063
    %v3066 = vmul.f32 %v3064, 0.25
    %v3067 = vmul.f32 %v3065, 0.25
    %v3068 = vpack.c.bf16 %v3066, %v3066
    %v3069 = vpack.c.bf16 %v3067, %v3067
    %v3072 = vrot.slane %v2677, 2
    %v3073 = vrot.slane %v2685, 2
    %v3076 = vsel %vm2689, %v3072, 0.0
    %v3077 = vrot.slane %v3076, 4
    %v3078 = vadd.f32 %v3076, %v3077
    %v3079 = vrot.slane %v3078, 2
    %v3080 = vadd.f32 %v3078, %v3079
    %v3081 = vrot.slane %v3080, 1
    %v3082 = vadd.f32 %v3080, %v3081
    %v3083 = vsel %vm2689, %v3073, 0.0
    %v3084 = vrot.slane %v3083, 4
    %v3085 = vadd.f32 %v3083, %v3084
    %v3086 = vrot.slane %v3085, 2
    %v3087 = vadd.f32 %v3085, %v3086
    %v3088 = vrot.slane %v3087, 1
    %v3089 = vadd.f32 %v3087, %v3088
    %v3090 = vadd.f32 %v3082, 0.0
    %v3091 = vadd.f32 %v3089, 0.0
    %v3094 = vrot.slane %v2678, 2
    %v3095 = vrot.slane %v2686, 2
    %v3098 = vsel %vm2689, %v3094, 0.0
    %v3099 = vrot.slane %v3098, 4
    %v3100 = vadd.f32 %v3098, %v3099
    %v3101 = vrot.slane %v3100, 2
    %v3102 = vadd.f32 %v3100, %v3101
    %v3103 = vrot.slane %v3102, 1
    %v3104 = vadd.f32 %v3102, %v3103
    %v3105 = vsel %vm2689, %v3095, 0.0
    %v3106 = vrot.slane %v3105, 4
    %v3107 = vadd.f32 %v3105, %v3106
    %v3108 = vrot.slane %v3107, 2
    %v3109 = vadd.f32 %v3107, %v3108
    %v3110 = vrot.slane %v3109, 1
    %v3111 = vadd.f32 %v3109, %v3110
    %v3112 = vadd.f32 %v3090, %v3104
    %v3113 = vadd.f32 %v3091, %v3111
    %v3114 = vmul.f32 %v3112, 0.25
    %v3115 = vmul.f32 %v3113, 0.25
    %v3116 = vpack.c.bf16 %v3114, %v3114
    %v3117 = vpack.c.bf16 %v3115, %v3115
    %v3118 = vrot.slane %v2677, 4
    %v3119 = vrot.slane %v2685, 4
    %v3122 = vsel %vm2689, %v3118, 0.0
    %v3123 = vrot.slane %v3122, 4
    %v3124 = vadd.f32 %v3122, %v3123
    %v3125 = vrot.slane %v3124, 2
    %v3126 = vadd.f32 %v3124, %v3125
    %v3127 = vrot.slane %v3126, 1
    %v3128 = vadd.f32 %v3126, %v3127
    %v3129 = vsel %vm2689, %v3119, 0.0
    %v3130 = vrot.slane %v3129, 4
    %v3131 = vadd.f32 %v3129, %v3130
    %v3132 = vrot.slane %v3131, 2
    %v3133 = vadd.f32 %v3131, %v3132
    %v3134 = vrot.slane %v3133, 1
    %v3135 = vadd.f32 %v3133, %v3134
    %v3136 = vadd.f32 %v3128, 0.0
    %v3137 = vadd.f32 %v3135, 0.0
    %v3138 = vrot.slane %v2678, 4
    %v3139 = vrot.slane %v2686, 4
    %v3142 = vsel %vm2689, %v3138, 0.0
    %v3143 = vrot.slane %v3142, 4
    %v3144 = vadd.f32 %v3142, %v3143
    %v3145 = vrot.slane %v3144, 2
    %v3146 = vadd.f32 %v3144, %v3145
    %v3147 = vrot.slane %v3146, 1
    %v3148 = vadd.f32 %v3146, %v3147
    %v3149 = vsel %vm2689, %v3139, 0.0
    %v3150 = vrot.slane %v3149, 4
    %v3151 = vadd.f32 %v3149, %v3150
    %v3152 = vrot.slane %v3151, 2
    %v3153 = vadd.f32 %v3151, %v3152
    %v3154 = vrot.slane %v3153, 1
    %v3155 = vadd.f32 %v3153, %v3154
    %v3156 = vadd.f32 %v3136, %v3148
    %v3157 = vadd.f32 %v3137, %v3155
    %v3158 = vmul.f32 %v3156, 0.25
    %v3159 = vmul.f32 %v3157, 0.25
    %v3160 = vpack.c.bf16 %v3158, %v3158
    %v3161 = vpack.c.bf16 %v3159, %v3159
    %v3162 = vrot.slane %v2677, 6
    %v3163 = vrot.slane %v2685, 6
    %v3166 = vsel %vm2689, %v3162, 0.0
    %v3167 = vrot.slane %v3166, 4
    %v3168 = vadd.f32 %v3166, %v3167
    %v3169 = vrot.slane %v3168, 2
    %v3170 = vadd.f32 %v3168, %v3169
    %v3171 = vrot.slane %v3170, 1
    %v3172 = vadd.f32 %v3170, %v3171
    %v3173 = vsel %vm2689, %v3163, 0.0
    %v3174 = vrot.slane %v3173, 4
    %v3175 = vadd.f32 %v3173, %v3174
    %v3176 = vrot.slane %v3175, 2
    %v3177 = vadd.f32 %v3175, %v3176
    %v3178 = vrot.slane %v3177, 1
    %v3179 = vadd.f32 %v3177, %v3178
    %v3180 = vadd.f32 %v3172, 0.0
    %v3181 = vadd.f32 %v3179, 0.0
    %v3182 = vrot.slane %v2678, 6
    %v3183 = vrot.slane %v2686, 6
    %v3186 = vsel %vm2689, %v3182, 0.0
    %v3187 = vrot.slane %v3186, 4
    %v3188 = vadd.f32 %v3186, %v3187
    %v3189 = vrot.slane %v3188, 2
    %v3190 = vadd.f32 %v3188, %v3189
    %v3191 = vrot.slane %v3190, 1
    %v3192 = vadd.f32 %v3190, %v3191
    %v3193 = vsel %vm2689, %v3183, 0.0
    %v3194 = vrot.slane %v3193, 4
    %v3195 = vadd.f32 %v3193, %v3194
    %v3196 = vrot.slane %v3195, 2
    %v3197 = vadd.f32 %v3195, %v3196
    %v3198 = vrot.slane %v3197, 1
    %v3199 = vadd.f32 %v3197, %v3198
    %v3200 = vadd.f32 %v3180, %v3192
    %v3201 = vadd.f32 %v3181, %v3199
    %v3202 = vmul.f32 %v3200, 0.25
    %v3203 = vmul.f32 %v3201, 0.25
    %v3204 = vpack.c.bf16 %v3202, %v3202
    %v3205 = vpack.c.bf16 %v3203, %v3203
    %v3206 = vsel %vm2689, %v2679, 0.0
    %v3207 = vrot.slane %v3206, 4
    %v3208 = vadd.f32 %v3206, %v3207
    %v3209 = vrot.slane %v3208, 2
    %v3210 = vadd.f32 %v3208, %v3209
    %v3211 = vrot.slane %v3210, 1
    %v3212 = vadd.f32 %v3210, %v3211
    %v3213 = vsel %vm2689, %v2687, 0.0
    %v3214 = vrot.slane %v3213, 4
    %v3215 = vadd.f32 %v3213, %v3214
    %v3216 = vrot.slane %v3215, 2
    %v3217 = vadd.f32 %v3215, %v3216
    %v3218 = vrot.slane %v3217, 1
    %v3219 = vadd.f32 %v3217, %v3218
    %v3220 = vadd.f32 %v3212, 0.0
    %v3221 = vadd.f32 %v3219, 0.0
    %v3222 = vsel %vm2689, %v2680, 0.0
    %v3223 = vrot.slane %v3222, 4
    %v3224 = vadd.f32 %v3222, %v3223
    %v3225 = vrot.slane %v3224, 2
    %v3226 = vadd.f32 %v3224, %v3225
    %v3227 = vrot.slane %v3226, 1
    %v3228 = vadd.f32 %v3226, %v3227
    %v3229 = vsel %vm2689, %v2688, 0.0
    %v3230 = vrot.slane %v3229, 4
    %v3231 = vadd.f32 %v3229, %v3230
    %v3232 = vrot.slane %v3231, 2
    %v3233 = vadd.f32 %v3231, %v3232
    %v3234 = vrot.slane %v3233, 1
    %v3235 = vadd.f32 %v3233, %v3234
    %v3236 = vadd.f32 %v3220, %v3228
    %v3237 = vadd.f32 %v3221, %v3235
    %v3238 = vmul.f32 %v3236, 0.25
    %v3239 = vmul.f32 %v3237, 0.25
    %v3240 = vpack.c.bf16 %v3238, %v3238
    %v3241 = vpack.c.bf16 %v3239, %v3239
    %v3244 = vrot.slane %v2679, 2
    %v3245 = vrot.slane %v2687, 2
    %v3248 = vsel %vm2689, %v3244, 0.0
    %v3249 = vrot.slane %v3248, 4
    %v3250 = vadd.f32 %v3248, %v3249
    %v3251 = vrot.slane %v3250, 2
    %v3252 = vadd.f32 %v3250, %v3251
    %v3253 = vrot.slane %v3252, 1
    %v3254 = vadd.f32 %v3252, %v3253
    %v3255 = vsel %vm2689, %v3245, 0.0
    %v3256 = vrot.slane %v3255, 4
    %v3257 = vadd.f32 %v3255, %v3256
    %v3258 = vrot.slane %v3257, 2
    %v3259 = vadd.f32 %v3257, %v3258
    %v3260 = vrot.slane %v3259, 1
    %v3261 = vadd.f32 %v3259, %v3260
    %v3262 = vadd.f32 %v3254, 0.0
    %v3263 = vadd.f32 %v3261, 0.0
    %v3266 = vrot.slane %v2680, 2
    %v3267 = vrot.slane %v2688, 2
    %v3270 = vsel %vm2689, %v3266, 0.0
    %v3271 = vrot.slane %v3270, 4
    %v3272 = vadd.f32 %v3270, %v3271
    %v3273 = vrot.slane %v3272, 2
    %v3274 = vadd.f32 %v3272, %v3273
    %v3275 = vrot.slane %v3274, 1
    %v3276 = vadd.f32 %v3274, %v3275
    %v3277 = vsel %vm2689, %v3267, 0.0
    %v3278 = vrot.slane %v3277, 4
    %v3279 = vadd.f32 %v3277, %v3278
    %v3280 = vrot.slane %v3279, 2
    %v3281 = vadd.f32 %v3279, %v3280
    %v3282 = vrot.slane %v3281, 1
    %v3283 = vadd.f32 %v3281, %v3282
    %v3284 = vadd.f32 %v3262, %v3276
    %v3285 = vadd.f32 %v3263, %v3283
    %v3286 = vmul.f32 %v3284, 0.25
    %v3287 = vmul.f32 %v3285, 0.25
    %v3288 = vpack.c.bf16 %v3286, %v3286
    %v3289 = vpack.c.bf16 %v3287, %v3287
    %v3290 = vrot.slane %v2679, 4
    %v3291 = vrot.slane %v2687, 4
    %v3294 = vsel %vm2689, %v3290, 0.0
    %v3295 = vrot.slane %v3294, 4
    %v3296 = vadd.f32 %v3294, %v3295
    %v3297 = vrot.slane %v3296, 2
    %v3298 = vadd.f32 %v3296, %v3297
    %v3299 = vrot.slane %v3298, 1
    %v3300 = vadd.f32 %v3298, %v3299
    %v3301 = vsel %vm2689, %v3291, 0.0
    %v3302 = vrot.slane %v3301, 4
    %v3303 = vadd.f32 %v3301, %v3302
    %v3304 = vrot.slane %v3303, 2
    %v3305 = vadd.f32 %v3303, %v3304
    %v3306 = vrot.slane %v3305, 1
    %v3307 = vadd.f32 %v3305, %v3306
    %v3308 = vadd.f32 %v3300, 0.0
    %v3309 = vadd.f32 %v3307, 0.0
    %v3310 = vrot.slane %v2680, 4
    %v3311 = vrot.slane %v2688, 4
    %v3314 = vsel %vm2689, %v3310, 0.0
    %v3315 = vrot.slane %v3314, 4
    %v3316 = vadd.f32 %v3314, %v3315
    %v3317 = vrot.slane %v3316, 2
    %v3318 = vadd.f32 %v3316, %v3317
    %v3319 = vrot.slane %v3318, 1
    %v3320 = vadd.f32 %v3318, %v3319
    %v3321 = vsel %vm2689, %v3311, 0.0
    %v3322 = vrot.slane %v3321, 4
    %v3323 = vadd.f32 %v3321, %v3322
    %v3324 = vrot.slane %v3323, 2
    %v3325 = vadd.f32 %v3323, %v3324
    %v3326 = vrot.slane %v3325, 1
    %v3327 = vadd.f32 %v3325, %v3326
    %v3328 = vadd.f32 %v3308, %v3320
    %v3329 = vadd.f32 %v3309, %v3327
    %v3330 = vmul.f32 %v3328, 0.25
    %v3331 = vmul.f32 %v3329, 0.25
    %v3332 = vpack.c.bf16 %v3330, %v3330
    %v3333 = vpack.c.bf16 %v3331, %v3331
    %v3334 = vrot.slane %v2679, 6
    %v3335 = vrot.slane %v2687, 6
    %v3338 = vsel %vm2689, %v3334, 0.0
    %v3339 = vrot.slane %v3338, 4
    %v3340 = vadd.f32 %v3338, %v3339
    %v3341 = vrot.slane %v3340, 2
    %v3342 = vadd.f32 %v3340, %v3341
    %v3343 = vrot.slane %v3342, 1
    %v3344 = vadd.f32 %v3342, %v3343
    %v3345 = vsel %vm2689, %v3335, 0.0
    %v3346 = vrot.slane %v3345, 4
    %v3347 = vadd.f32 %v3345, %v3346
    %v3348 = vrot.slane %v3347, 2
    %v3349 = vadd.f32 %v3347, %v3348
    %v3350 = vrot.slane %v3349, 1
    %v3351 = vadd.f32 %v3349, %v3350
    %v3352 = vadd.f32 %v3344, 0.0
    %v3353 = vadd.f32 %v3351, 0.0
    %v3354 = vrot.slane %v2680, 6
    %v3355 = vrot.slane %v2688, 6
    %v3358 = vsel %vm2689, %v3354, 0.0
    %v3359 = vrot.slane %v3358, 4
    %v3360 = vadd.f32 %v3358, %v3359
    %v3361 = vrot.slane %v3360, 2
    %v3362 = vadd.f32 %v3360, %v3361
    %v3363 = vrot.slane %v3362, 1
    %v3364 = vadd.f32 %v3362, %v3363
    %v3365 = vsel %vm2689, %v3355, 0.0
    %v3366 = vrot.slane %v3365, 4
    %v3367 = vadd.f32 %v3365, %v3366
    %v3368 = vrot.slane %v3367, 2
    %v3369 = vadd.f32 %v3367, %v3368
    %v3370 = vrot.slane %v3369, 1
    %v3371 = vadd.f32 %v3369, %v3370
    %v3372 = vadd.f32 %v3352, %v3364
    %v3373 = vadd.f32 %v3353, %v3371
    %v3374 = vmul.f32 %v3372, 0.25
    %v3375 = vmul.f32 %v3373, 0.25
    %v3376 = vpack.c.bf16 %v3374, %v3374
    %v3377 = vpack.c.bf16 %v3375, %v3375
    %v3380 = vunpack.c.l.b16 %v2724
    %v3381 = vunpack.c.l.b16 %v2725
    %vm3382 = vcmask 1041409
    %v3383 = vsel %vm3382, %v3381, %v3380
    %v3384 = vpack.c.b16 %v3383, %v3383
    %v3388 = vunpack.c.l.b16 %v2772
    %v3389 = vunpack.c.l.b16 %v2773
    %v3390 = vsel %vm3382, %v3389, %v3388
    %v3391 = vpack.c.b16 %v3390, %v3390
    %v3395 = vunpack.c.l.b16 %v2816
    %v3396 = vunpack.c.l.b16 %v2817
    %v3397 = vsel %vm3382, %v3396, %v3395
    %v3398 = vpack.c.b16 %v3397, %v3397
    %v3402 = vunpack.c.l.b16 %v2860
    %v3403 = vunpack.c.l.b16 %v2861
    %v3404 = vsel %vm3382, %v3403, %v3402
    %v3405 = vpack.c.b16 %v3404, %v3404
    %v3409 = vunpack.c.l.b16 %v2896
    %v3410 = vunpack.c.l.b16 %v2897
    %v3411 = vsel %vm3382, %v3410, %v3409
    %v3412 = vpack.c.b16 %v3411, %v3411
    %v3416 = vunpack.c.l.b16 %v2944
    %v3417 = vunpack.c.l.b16 %v2945
    %v3418 = vsel %vm3382, %v3417, %v3416
    %v3419 = vpack.c.b16 %v3418, %v3418
    %v3423 = vunpack.c.l.b16 %v2988
    %v3424 = vunpack.c.l.b16 %v2989
    %v3425 = vsel %vm3382, %v3424, %v3423
    %v3426 = vpack.c.b16 %v3425, %v3425
    %v3430 = vunpack.c.l.b16 %v3032
    %v3431 = vunpack.c.l.b16 %v3033
    %v3432 = vsel %vm3382, %v3431, %v3430
    %v3433 = vpack.c.b16 %v3432, %v3432
    %v3437 = vunpack.c.l.b16 %v3068
    %v3438 = vunpack.c.l.b16 %v3069
    %v3439 = vsel %vm3382, %v3438, %v3437
    %v3440 = vpack.c.b16 %v3439, %v3439
    %v3444 = vunpack.c.l.b16 %v3116
    %v3445 = vunpack.c.l.b16 %v3117
    %v3446 = vsel %vm3382, %v3445, %v3444
    %v3447 = vpack.c.b16 %v3446, %v3446
    %v3451 = vunpack.c.l.b16 %v3160
    %v3452 = vunpack.c.l.b16 %v3161
    %v3453 = vsel %vm3382, %v3452, %v3451
    %v3454 = vpack.c.b16 %v3453, %v3453
    %v3458 = vunpack.c.l.b16 %v3204
    %v3459 = vunpack.c.l.b16 %v3205
    %v3460 = vsel %vm3382, %v3459, %v3458
    %v3461 = vpack.c.b16 %v3460, %v3460
    %v3465 = vunpack.c.l.b16 %v3240
    %v3466 = vunpack.c.l.b16 %v3241
    %v3467 = vsel %vm3382, %v3466, %v3465
    %v3468 = vpack.c.b16 %v3467, %v3467
    %v3472 = vunpack.c.l.b16 %v3288
    %v3473 = vunpack.c.l.b16 %v3289
    %v3474 = vsel %vm3382, %v3473, %v3472
    %v3475 = vpack.c.b16 %v3474, %v3474
    %v3479 = vunpack.c.l.b16 %v3332
    %v3480 = vunpack.c.l.b16 %v3333
    %v3481 = vsel %vm3382, %v3480, %v3479
    %v3482 = vpack.c.b16 %v3481, %v3481
    %v3486 = vunpack.c.l.b16 %v3376
    %v3487 = vunpack.c.l.b16 %v3377
    %v3488 = vsel %vm3382, %v3487, %v3486
    %v3489 = vpack.c.b16 %v3488, %v3488
    %v3491 = vld [vmem:[#allocation7] sm:$0xf]
    %v3492 = vld [vmem:[#allocation7 + $0x4] sm:$0xf]
    %v3493 = vld [vmem:[#allocation7 + $0x8] sm:$0xf]
    %v3494 = vld [vmem:[#allocation7 + $0xc] sm:$0xf]
    %v3495 = vld [vmem:[#allocation7 + $0x10] sm:$0xf]
    %v3496 = vld [vmem:[#allocation7 + $0x14] sm:$0xf]
    %v3497 = vld [vmem:[#allocation7 + $0x18] sm:$0xf]
    %v3498 = vld [vmem:[#allocation7 + $0x1c] sm:$0xf]
    %v3499 = vld [vmem:[#allocation7 + $0x20] sm:$0xf]
    %v3500 = vld [vmem:[#allocation7 + $0x24] sm:$0xf]
    %v3501 = vld [vmem:[#allocation7 + $0x28] sm:$0xf]
    %v3502 = vld [vmem:[#allocation7 + $0x2c] sm:$0xf]
    %v3503 = vld [vmem:[#allocation7 + $0x30] sm:$0xf]
    %v3504 = vld [vmem:[#allocation7 + $0x34] sm:$0xf]
    %v3505 = vld [vmem:[#allocation7 + $0x38] sm:$0xf]
    %v3506 = vld [vmem:[#allocation7 + $0x3c] sm:$0xf]
    %v3507 = vld [vmem:[#allocation7 + $0x40] sm:$0xf]
    %v3508 = vld [vmem:[#allocation7 + $0x44] sm:$0xf]
    %v3509 = vld [vmem:[#allocation7 + $0x48] sm:$0xf]
    %v3510 = vld [vmem:[#allocation7 + $0x4c] sm:$0xf]
    %v3511 = vld [vmem:[#allocation7 + $0x50] sm:$0xf]
    %v3512 = vld [vmem:[#allocation7 + $0x54] sm:$0xf]
    %v3513 = vld [vmem:[#allocation7 + $0x58] sm:$0xf]
    %v3514 = vld [vmem:[#allocation7 + $0x5c] sm:$0xf]
    %v3515 = vld [vmem:[#allocation7 + $0x60] sm:$0xf]
    %v3516 = vld [vmem:[#allocation7 + $0x64] sm:$0xf]
    %v3517 = vld [vmem:[#allocation7 + $0x68] sm:$0xf]
    %v3518 = vld [vmem:[#allocation7 + $0x6c] sm:$0xf]
    %v3519 = vld [vmem:[#allocation7 + $0x70] sm:$0xf]
    %v3520 = vld [vmem:[#allocation7 + $0x74] sm:$0xf]
    %v3521 = vld [vmem:[#allocation7 + $0x78] sm:$0xf]
    %v3522 = vld [vmem:[#allocation7 + $0x7c] sm:$0xf]
    %v3523 = vld [vmem:[#allocation7 + $0x80] sm:$0xf]
    %v3524 = vld [vmem:[#allocation7 + $0x84] sm:$0xf]
    %v3525 = vld [vmem:[#allocation7 + $0x88] sm:$0xf]
    %v3526 = vld [vmem:[#allocation7 + $0x8c] sm:$0xf]
    %v3527 = vld [vmem:[#allocation7 + $0x90] sm:$0xf]
    %v3528 = vld [vmem:[#allocation7 + $0x94] sm:$0xf]
    %v3529 = vld [vmem:[#allocation7 + $0x98] sm:$0xf]
    %v3530 = vld [vmem:[#allocation7 + $0x9c] sm:$0xf]
    %v3531 = vld [vmem:[#allocation7 + $0xa0] sm:$0xf]
    %v3532 = vld [vmem:[#allocation7 + $0xa4] sm:$0xf]
    %v3533 = vld [vmem:[#allocation7 + $0xa8] sm:$0xf]
    %v3534 = vld [vmem:[#allocation7 + $0xac] sm:$0xf]
    %v3535 = vld [vmem:[#allocation7 + $0xb0] sm:$0xf]
    %v3536 = vld [vmem:[#allocation7 + $0xb4] sm:$0xf]
    %v3537 = vld [vmem:[#allocation7 + $0xb8] sm:$0xf]
    %v3538 = vld [vmem:[#allocation7 + $0xbc] sm:$0xf]
    %v3539 = vld [vmem:[#allocation7 + $0xc0] sm:$0xf]
    %v3540 = vld [vmem:[#allocation7 + $0xc4] sm:$0xf]
    %v3541 = vld [vmem:[#allocation7 + $0xc8] sm:$0xf]
    %v3542 = vld [vmem:[#allocation7 + $0xcc] sm:$0xf]
    %v3543 = vld [vmem:[#allocation7 + $0xd0] sm:$0xf]
    %v3544 = vld [vmem:[#allocation7 + $0xd4] sm:$0xf]
    %v3545 = vld [vmem:[#allocation7 + $0xd8] sm:$0xf]
    %v3546 = vld [vmem:[#allocation7 + $0xdc] sm:$0xf]
    %v3547 = vld [vmem:[#allocation7 + $0xe0] sm:$0xf]
    %v3548 = vld [vmem:[#allocation7 + $0xe4] sm:$0xf]
    %v3549 = vld [vmem:[#allocation7 + $0xe8] sm:$0xf]
    %v3550 = vld [vmem:[#allocation7 + $0xec] sm:$0xf]
    %v3551 = vld [vmem:[#allocation7 + $0xf0] sm:$0xf]
    %v3552 = vld [vmem:[#allocation7 + $0xf4] sm:$0xf]
    %v3553 = vld [vmem:[#allocation7 + $0xf8] sm:$0xf]
    %v3554 = vld [vmem:[#allocation7 + $0xfc] sm:$0xf]
    %v3555 = vld [vmem:[#allocation7 + $0x100] sm:$0xf]
    %v3556 = vld [vmem:[#allocation7 + $0x104] sm:$0xf]
    %v3557 = vld [vmem:[#allocation7 + $0x108] sm:$0xf]
    %v3558 = vld [vmem:[#allocation7 + $0x10c] sm:$0xf]
    %v3559 = vld [vmem:[#allocation7 + $0x110] sm:$0xf]
    %v3560 = vld [vmem:[#allocation7 + $0x114] sm:$0xf]
    %v3561 = vld [vmem:[#allocation7 + $0x118] sm:$0xf]
    %v3562 = vld [vmem:[#allocation7 + $0x11c] sm:$0xf]
    %v3563 = vld [vmem:[#allocation7 + $0x120] sm:$0xf]
    %v3564 = vld [vmem:[#allocation7 + $0x124] sm:$0xf]
    %v3565 = vld [vmem:[#allocation7 + $0x128] sm:$0xf]
    %v3566 = vld [vmem:[#allocation7 + $0x12c] sm:$0xf]
    %v3567 = vld [vmem:[#allocation7 + $0x130] sm:$0xf]
    %v3568 = vld [vmem:[#allocation7 + $0x134] sm:$0xf]
    %v3569 = vld [vmem:[#allocation7 + $0x138] sm:$0xf]
    %v3570 = vld [vmem:[#allocation7 + $0x13c] sm:$0xf]
    %v3571 = vld [vmem:[#allocation7 + $0x140] sm:$0xf]
    %v3572 = vld [vmem:[#allocation7 + $0x144] sm:$0xf]
    %v3573 = vld [vmem:[#allocation7 + $0x148] sm:$0xf]
    %v3574 = vld [vmem:[#allocation7 + $0x14c] sm:$0xf]
    %v3575 = vld [vmem:[#allocation7 + $0x150] sm:$0xf]
    %v3576 = vld [vmem:[#allocation7 + $0x154] sm:$0xf]
    %v3577 = vld [vmem:[#allocation7 + $0x158] sm:$0xf]
    %v3578 = vld [vmem:[#allocation7 + $0x15c] sm:$0xf]
    %v3579 = vld [vmem:[#allocation7 + $0x160] sm:$0xf]
    %v3580 = vld [vmem:[#allocation7 + $0x164] sm:$0xf]
    %v3581 = vld [vmem:[#allocation7 + $0x168] sm:$0xf]
    %v3582 = vld [vmem:[#allocation7 + $0x16c] sm:$0xf]
    %v3583 = vld [vmem:[#allocation7 + $0x170] sm:$0xf]
    %v3584 = vld [vmem:[#allocation7 + $0x174] sm:$0xf]
    %v3585 = vld [vmem:[#allocation7 + $0x178] sm:$0xf]
    %v3586 = vld [vmem:[#allocation7 + $0x17c] sm:$0xf]
    %v3587 = vld [vmem:[#allocation7 + $0x180] sm:$0xf]
    %v3588 = vld [vmem:[#allocation7 + $0x184] sm:$0xf]
    %v3589 = vld [vmem:[#allocation7 + $0x188] sm:$0xf]
    %v3590 = vld [vmem:[#allocation7 + $0x18c] sm:$0xf]
    %v3591 = vld [vmem:[#allocation7 + $0x190] sm:$0xf]
    %v3592 = vld [vmem:[#allocation7 + $0x194] sm:$0xf]
    %v3593 = vld [vmem:[#allocation7 + $0x198] sm:$0xf]
    %v3594 = vld [vmem:[#allocation7 + $0x19c] sm:$0xf]
    %v3595 = vld [vmem:[#allocation7 + $0x1a0] sm:$0xf]
    %v3596 = vld [vmem:[#allocation7 + $0x1a4] sm:$0xf]
    %v3597 = vld [vmem:[#allocation7 + $0x1a8] sm:$0xf]
    %v3598 = vld [vmem:[#allocation7 + $0x1ac] sm:$0xf]
    %v3599 = vld [vmem:[#allocation7 + $0x1b0] sm:$0xf]
    %v3600 = vld [vmem:[#allocation7 + $0x1b4] sm:$0xf]
    %v3601 = vld [vmem:[#allocation7 + $0x1b8] sm:$0xf]
    %v3602 = vld [vmem:[#allocation7 + $0x1bc] sm:$0xf]
    %v3603 = vld [vmem:[#allocation7 + $0x1c0] sm:$0xf]
    %v3604 = vld [vmem:[#allocation7 + $0x1c4] sm:$0xf]
    %v3605 = vld [vmem:[#allocation7 + $0x1c8] sm:$0xf]
    %v3606 = vld [vmem:[#allocation7 + $0x1cc] sm:$0xf]
    %v3607 = vld [vmem:[#allocation7 + $0x1d0] sm:$0xf]
    %v3608 = vld [vmem:[#allocation7 + $0x1d4] sm:$0xf]
    %v3609 = vld [vmem:[#allocation7 + $0x1d8] sm:$0xf]
    %v3610 = vld [vmem:[#allocation7 + $0x1dc] sm:$0xf]
    %v3611 = vld [vmem:[#allocation7 + $0x1e0] sm:$0xf]
    %v3612 = vld [vmem:[#allocation7 + $0x1e4] sm:$0xf]
    %v3613 = vld [vmem:[#allocation7 + $0x1e8] sm:$0xf]
    %v3614 = vld [vmem:[#allocation7 + $0x1ec] sm:$0xf]
    %v3615 = vld [vmem:[#allocation7 + $0x1f0] sm:$0xf]
    %v3616 = vld [vmem:[#allocation7 + $0x1f4] sm:$0xf]
    %v3617 = vld [vmem:[#allocation7 + $0x1f8] sm:$0xf]
    %v3618 = vld [vmem:[#allocation7 + $0x1fc] sm:$0xf]
    %v3619 = vld [vmem:[#allocation7 + $0x200] sm:$0xf]
    %v3620 = vld [vmem:[#allocation7 + $0x204] sm:$0xf]
    %v3621 = vld [vmem:[#allocation7 + $0x208] sm:$0xf]
    %v3622 = vld [vmem:[#allocation7 + $0x20c] sm:$0xf]
    %v3623 = vld [vmem:[#allocation7 + $0x210] sm:$0xf]
    %v3624 = vld [vmem:[#allocation7 + $0x214] sm:$0xf]
    %v3625 = vld [vmem:[#allocation7 + $0x218] sm:$0xf]
    %v3626 = vld [vmem:[#allocation7 + $0x21c] sm:$0xf]
    %v3627 = vld [vmem:[#allocation7 + $0x220] sm:$0xf]
    %v3628 = vld [vmem:[#allocation7 + $0x224] sm:$0xf]
    %v3629 = vld [vmem:[#allocation7 + $0x228] sm:$0xf]
    %v3630 = vld [vmem:[#allocation7 + $0x22c] sm:$0xf]
    %v3631 = vld [vmem:[#allocation7 + $0x230] sm:$0xf]
    %v3632 = vld [vmem:[#allocation7 + $0x234] sm:$0xf]
    %v3633 = vld [vmem:[#allocation7 + $0x238] sm:$0xf]
    %v3634 = vld [vmem:[#allocation7 + $0x23c] sm:$0xf]
    %v3635 = vld [vmem:[#allocation7 + $0x240] sm:$0xf]
    %v3636 = vld [vmem:[#allocation7 + $0x244] sm:$0xf]
    %v3637 = vld [vmem:[#allocation7 + $0x248] sm:$0xf]
    %v3638 = vld [vmem:[#allocation7 + $0x24c] sm:$0xf]
    %v3639 = vld [vmem:[#allocation7 + $0x250] sm:$0xf]
    %v3640 = vld [vmem:[#allocation7 + $0x254] sm:$0xf]
    %v3641 = vld [vmem:[#allocation7 + $0x258] sm:$0xf]
    %v3642 = vld [vmem:[#allocation7 + $0x25c] sm:$0xf]
    %v3643 = vld [vmem:[#allocation7 + $0x260] sm:$0xf]
    %v3644 = vld [vmem:[#allocation7 + $0x264] sm:$0xf]
    %v3645 = vld [vmem:[#allocation7 + $0x268] sm:$0xf]
    %v3646 = vld [vmem:[#allocation7 + $0x26c] sm:$0xf]
    %v3647 = vld [vmem:[#allocation7 + $0x270] sm:$0xf]
    %v3648 = vld [vmem:[#allocation7 + $0x274] sm:$0xf]
    %v3649 = vld [vmem:[#allocation7 + $0x278] sm:$0xf]
    %v3650 = vld [vmem:[#allocation7 + $0x27c] sm:$0xf]
    %v3651 = vld [vmem:[#allocation7 + $0x280] sm:$0xf]
    %v3652 = vld [vmem:[#allocation7 + $0x284] sm:$0xf]
    %v3653 = vld [vmem:[#allocation7 + $0x288] sm:$0xf]
    %v3654 = vld [vmem:[#allocation7 + $0x28c] sm:$0xf]
    %v3655 = vld [vmem:[#allocation7 + $0x290] sm:$0xf]
    %v3656 = vld [vmem:[#allocation7 + $0x294] sm:$0xf]
    %v3657 = vld [vmem:[#allocation7 + $0x298] sm:$0xf]
    %v3658 = vld [vmem:[#allocation7 + $0x29c] sm:$0xf]
    %v3659 = vld [vmem:[#allocation7 + $0x2a0] sm:$0xf]
    %v3660 = vld [vmem:[#allocation7 + $0x2a4] sm:$0xf]
    %v3661 = vld [vmem:[#allocation7 + $0x2a8] sm:$0xf]
    %v3662 = vld [vmem:[#allocation7 + $0x2ac] sm:$0xf]
    %v3663 = vld [vmem:[#allocation7 + $0x2b0] sm:$0xf]
    %v3664 = vld [vmem:[#allocation7 + $0x2b4] sm:$0xf]
    %v3665 = vld [vmem:[#allocation7 + $0x2b8] sm:$0xf]
    %v3666 = vld [vmem:[#allocation7 + $0x2bc] sm:$0xf]
    %v3667 = vld [vmem:[#allocation7 + $0x2c0] sm:$0xf]
    %v3668 = vld [vmem:[#allocation7 + $0x2c4] sm:$0xf]
    %v3669 = vld [vmem:[#allocation7 + $0x2c8] sm:$0xf]
    %v3670 = vld [vmem:[#allocation7 + $0x2cc] sm:$0xf]
    %v3671 = vld [vmem:[#allocation7 + $0x2d0] sm:$0xf]
    %v3672 = vld [vmem:[#allocation7 + $0x2d4] sm:$0xf]
    %v3673 = vld [vmem:[#allocation7 + $0x2d8] sm:$0xf]
    %v3674 = vld [vmem:[#allocation7 + $0x2dc] sm:$0xf]
    %v3675 = vld [vmem:[#allocation7 + $0x2e0] sm:$0xf]
    %v3676 = vld [vmem:[#allocation7 + $0x2e4] sm:$0xf]
    %v3677 = vld [vmem:[#allocation7 + $0x2e8] sm:$0xf]
    %v3678 = vld [vmem:[#allocation7 + $0x2ec] sm:$0xf]
    %v3679 = vld [vmem:[#allocation7 + $0x2f0] sm:$0xf]
    %v3680 = vld [vmem:[#allocation7 + $0x2f4] sm:$0xf]
    %v3681 = vld [vmem:[#allocation7 + $0x2f8] sm:$0xf]
    %v3682 = vld [vmem:[#allocation7 + $0x2fc] sm:$0xf]
    %v3683 = vld [vmem:[#allocation7 + $0x300] sm:$0xf]
    %v3684 = vld [vmem:[#allocation7 + $0x304] sm:$0xf]
    %v3685 = vld [vmem:[#allocation7 + $0x308] sm:$0xf]
    %v3686 = vld [vmem:[#allocation7 + $0x30c] sm:$0xf]
    %v3687 = vld [vmem:[#allocation7 + $0x310] sm:$0xf]
    %v3688 = vld [vmem:[#allocation7 + $0x314] sm:$0xf]
    %v3689 = vld [vmem:[#allocation7 + $0x318] sm:$0xf]
    %v3690 = vld [vmem:[#allocation7 + $0x31c] sm:$0xf]
    %v3691 = vld [vmem:[#allocation7 + $0x320] sm:$0xf]
    %v3692 = vld [vmem:[#allocation7 + $0x324] sm:$0xf]
    %v3693 = vld [vmem:[#allocation7 + $0x328] sm:$0xf]
    %v3694 = vld [vmem:[#allocation7 + $0x32c] sm:$0xf]
    %v3695 = vld [vmem:[#allocation7 + $0x330] sm:$0xf]
    %v3696 = vld [vmem:[#allocation7 + $0x334] sm:$0xf]
    %v3697 = vld [vmem:[#allocation7 + $0x338] sm:$0xf]
    %v3698 = vld [vmem:[#allocation7 + $0x33c] sm:$0xf]
    %v3699 = vld [vmem:[#allocation7 + $0x340] sm:$0xf]
    %v3700 = vld [vmem:[#allocation7 + $0x344] sm:$0xf]
    %v3701 = vld [vmem:[#allocation7 + $0x348] sm:$0xf]
    %v3702 = vld [vmem:[#allocation7 + $0x34c] sm:$0xf]
    %v3703 = vld [vmem:[#allocation7 + $0x350] sm:$0xf]
    %v3704 = vld [vmem:[#allocation7 + $0x354] sm:$0xf]
    %v3705 = vld [vmem:[#allocation7 + $0x358] sm:$0xf]
    %v3706 = vld [vmem:[#allocation7 + $0x35c] sm:$0xf]
    %v3707 = vld [vmem:[#allocation7 + $0x360] sm:$0xf]
    %v3708 = vld [vmem:[#allocation7 + $0x364] sm:$0xf]
    %v3709 = vld [vmem:[#allocation7 + $0x368] sm:$0xf]
    %v3710 = vld [vmem:[#allocation7 + $0x36c] sm:$0xf]
    %v3711 = vld [vmem:[#allocation7 + $0x370] sm:$0xf]
    %v3712 = vld [vmem:[#allocation7 + $0x374] sm:$0xf]
    %v3713 = vld [vmem:[#allocation7 + $0x378] sm:$0xf]
    %v3714 = vld [vmem:[#allocation7 + $0x37c] sm:$0xf]
    %v3715 = vld [vmem:[#allocation7 + $0x380] sm:$0xf]
    %v3716 = vld [vmem:[#allocation7 + $0x384] sm:$0xf]
    %v3717 = vld [vmem:[#allocation7 + $0x388] sm:$0xf]
    %v3718 = vld [vmem:[#allocation7 + $0x38c] sm:$0xf]
    %v3719 = vld [vmem:[#allocation7 + $0x390] sm:$0xf]
    %v3720 = vld [vmem:[#allocation7 + $0x394] sm:$0xf]
    %v3721 = vld [vmem:[#allocation7 + $0x398] sm:$0xf]
    %v3722 = vld [vmem:[#allocation7 + $0x39c] sm:$0xf]
    %v3723 = vld [vmem:[#allocation7 + $0x3a0] sm:$0xf]
    %v3724 = vld [vmem:[#allocation7 + $0x3a4] sm:$0xf]
    %v3725 = vld [vmem:[#allocation7 + $0x3a8] sm:$0xf]
    %v3726 = vld [vmem:[#allocation7 + $0x3ac] sm:$0xf]
    %v3727 = vld [vmem:[#allocation7 + $0x3b0] sm:$0xf]
    %v3728 = vld [vmem:[#allocation7 + $0x3b4] sm:$0xf]
    %v3729 = vld [vmem:[#allocation7 + $0x3b8] sm:$0xf]
    %v3730 = vld [vmem:[#allocation7 + $0x3bc] sm:$0xf]
    %v3731 = vld [vmem:[#allocation7 + $0x3c0] sm:$0xf]
    %v3732 = vld [vmem:[#allocation7 + $0x3c4] sm:$0xf]
    %v3733 = vld [vmem:[#allocation7 + $0x3c8] sm:$0xf]
    %v3734 = vld [vmem:[#allocation7 + $0x3cc] sm:$0xf]
    %v3735 = vld [vmem:[#allocation7 + $0x3d0] sm:$0xf]
    %v3736 = vld [vmem:[#allocation7 + $0x3d4] sm:$0xf]
    %v3737 = vld [vmem:[#allocation7 + $0x3d8] sm:$0xf]
    %v3738 = vld [vmem:[#allocation7 + $0x3dc] sm:$0xf]
    %v3739 = vld [vmem:[#allocation7 + $0x3e0] sm:$0xf]
    %v3740 = vld [vmem:[#allocation7 + $0x3e4] sm:$0xf]
    %v3741 = vld [vmem:[#allocation7 + $0x3e8] sm:$0xf]
    %v3742 = vld [vmem:[#allocation7 + $0x3ec] sm:$0xf]
    %v3743 = vld [vmem:[#allocation7 + $0x3f0] sm:$0xf]
    %v3744 = vld [vmem:[#allocation7 + $0x3f4] sm:$0xf]
    %v3745 = vld [vmem:[#allocation7 + $0x3f8] sm:$0xf]
    %v3746 = vld [vmem:[#allocation7 + $0x3fc] sm:$0xf]
    %v3747 = vld [vmem:[%s5] sm:$0x1]
    %v3749 = vlaneseq
    %v3750 = vshrl.u32 %v3749, 7
    %v3751 = vsub.s32 0, %v3750
    %v3752 = vrot.slane %v3747, %v3751
    %v4010 = vunpack.c.l.b16 %v3491
    %v4011 = vunpack.c.l.b16 %v3492
    %v4012 = vunpack.c.l.b16 %v3493
    %v4013 = vunpack.c.l.b16 %v3494
    %v4014 = vunpack.c.l.b16 %v3495
    %v4015 = vunpack.c.l.b16 %v3496
    %v4016 = vunpack.c.l.b16 %v3497
    %v4017 = vunpack.c.l.b16 %v3498
    %v4018 = vunpack.c.l.b16 %v3499
    %v4019 = vunpack.c.l.b16 %v3500
    %v4020 = vunpack.c.l.b16 %v3501
    %v4021 = vunpack.c.l.b16 %v3502
    %v4022 = vunpack.c.l.b16 %v3503
    %v4023 = vunpack.c.l.b16 %v3504
    %v4024 = vunpack.c.l.b16 %v3505
    %v4025 = vunpack.c.l.b16 %v3506
    %v4026 = vunpack.c.l.b16 %v3507
    %v4027 = vunpack.c.l.b16 %v3508
    %v4028 = vunpack.c.l.b16 %v3509
    %v4029 = vunpack.c.l.b16 %v3510
    %v4030 = vunpack.c.l.b16 %v3511
    %v4031 = vunpack.c.l.b16 %v3512
    %v4032 = vunpack.c.l.b16 %v3513
    %v4033 = vunpack.c.l.b16 %v3514
    %v4034 = vunpack.c.l.b16 %v3515
    %v4035 = vunpack.c.l.b16 %v3516
    %v4036 = vunpack.c.l.b16 %v3517
    %v4037 = vunpack.c.l.b16 %v3518
    %v4038 = vunpack.c.l.b16 %v3519
    %v4039 = vunpack.c.l.b16 %v3520
    %v4040 = vunpack.c.l.b16 %v3521
    %v4041 = vunpack.c.l.b16 %v3522
    %v4042 = vunpack.c.l.b16 %v3523
    %v4043 = vunpack.c.l.b16 %v3524
    %v4044 = vunpack.c.l.b16 %v3525
    %v4045 = vunpack.c.l.b16 %v3526
    %v4046 = vunpack.c.l.b16 %v3527
    %v4047 = vunpack.c.l.b16 %v3528
    %v4048 = vunpack.c.l.b16 %v3529
    %v4049 = vunpack.c.l.b16 %v3530
    %v4050 = vunpack.c.l.b16 %v3531
    %v4051 = vunpack.c.l.b16 %v3532
    %v4052 = vunpack.c.l.b16 %v3533
    %v4053 = vunpack.c.l.b16 %v3534
    %v4054 = vunpack.c.l.b16 %v3535
    %v4055 = vunpack.c.l.b16 %v3536
    %v4056 = vunpack.c.l.b16 %v3537
    %v4057 = vunpack.c.l.b16 %v3538
    %v4058 = vunpack.c.l.b16 %v3539
    %v4059 = vunpack.c.l.b16 %v3540
    %v4060 = vunpack.c.l.b16 %v3541
    %v4061 = vunpack.c.l.b16 %v3542
    %v4062 = vunpack.c.l.b16 %v3543
    %v4063 = vunpack.c.l.b16 %v3544
    %v4064 = vunpack.c.l.b16 %v3545
    %v4065 = vunpack.c.l.b16 %v3546
    %v4066 = vunpack.c.l.b16 %v3547
    %v4067 = vunpack.c.l.b16 %v3548
    %v4068 = vunpack.c.l.b16 %v3549
    %v4069 = vunpack.c.l.b16 %v3550
    %v4070 = vunpack.c.l.b16 %v3551
    %v4071 = vunpack.c.l.b16 %v3552
    %v4072 = vunpack.c.l.b16 %v3553
    %v4073 = vunpack.c.l.b16 %v3554
    %v4074 = vunpack.c.l.b16 %v3555
    %v4075 = vunpack.c.l.b16 %v3556
    %v4076 = vunpack.c.l.b16 %v3557
    %v4077 = vunpack.c.l.b16 %v3558
    %v4078 = vunpack.c.l.b16 %v3559
    %v4079 = vunpack.c.l.b16 %v3560
    %v4080 = vunpack.c.l.b16 %v3561
    %v4081 = vunpack.c.l.b16 %v3562
    %v4082 = vunpack.c.l.b16 %v3563
    %v4083 = vunpack.c.l.b16 %v3564
    %v4084 = vunpack.c.l.b16 %v3565
    %v4085 = vunpack.c.l.b16 %v3566
    %v4086 = vunpack.c.l.b16 %v3567
    %v4087 = vunpack.c.l.b16 %v3568
    %v4088 = vunpack.c.l.b16 %v3569
    %v4089 = vunpack.c.l.b16 %v3570
    %v4090 = vunpack.c.l.b16 %v3571
    %v4091 = vunpack.c.l.b16 %v3572
    %v4092 = vunpack.c.l.b16 %v3573
    %v4093 = vunpack.c.l.b16 %v3574
    %v4094 = vunpack.c.l.b16 %v3575
    %v4095 = vunpack.c.l.b16 %v3576
    %v4096 = vunpack.c.l.b16 %v3577
    %v4097 = vunpack.c.l.b16 %v3578
    %v4098 = vunpack.c.l.b16 %v3579
    %v4099 = vunpack.c.l.b16 %v3580
    %v4100 = vunpack.c.l.b16 %v3581
    %v4101 = vunpack.c.l.b16 %v3582
    %v4102 = vunpack.c.l.b16 %v3583
    %v4103 = vunpack.c.l.b16 %v3584
    %v4104 = vunpack.c.l.b16 %v3585
    %v4105 = vunpack.c.l.b16 %v3586
    %v4106 = vunpack.c.l.b16 %v3587
    %v4107 = vunpack.c.l.b16 %v3588
    %v4108 = vunpack.c.l.b16 %v3589
    %v4109 = vunpack.c.l.b16 %v3590
    %v4110 = vunpack.c.l.b16 %v3591
    %v4111 = vunpack.c.l.b16 %v3592
    %v4112 = vunpack.c.l.b16 %v3593
    %v4113 = vunpack.c.l.b16 %v3594
    %v4114 = vunpack.c.l.b16 %v3595
    %v4115 = vunpack.c.l.b16 %v3596
    %v4116 = vunpack.c.l.b16 %v3597
    %v4117 = vunpack.c.l.b16 %v3598
    %v4118 = vunpack.c.l.b16 %v3599
    %v4119 = vunpack.c.l.b16 %v3600
    %v4120 = vunpack.c.l.b16 %v3601
    %v4121 = vunpack.c.l.b16 %v3602
    %v4122 = vunpack.c.l.b16 %v3603
    %v4123 = vunpack.c.l.b16 %v3604
    %v4124 = vunpack.c.l.b16 %v3605
    %v4125 = vunpack.c.l.b16 %v3606
    %v4126 = vunpack.c.l.b16 %v3607
    %v4127 = vunpack.c.l.b16 %v3608
    %v4128 = vunpack.c.l.b16 %v3609
    %v4129 = vunpack.c.l.b16 %v3610
    %v4130 = vunpack.c.l.b16 %v3611
    %v4131 = vunpack.c.l.b16 %v3612
    %v4132 = vunpack.c.l.b16 %v3613
    %v4133 = vunpack.c.l.b16 %v3614
    %v4134 = vunpack.c.l.b16 %v3615
    %v4135 = vunpack.c.l.b16 %v3616
    %v4136 = vunpack.c.l.b16 %v3617
    %v4137 = vunpack.c.l.b16 %v3618
    %v4138 = vunpack.c.l.b16 %v3619
    %v4139 = vunpack.c.l.b16 %v3620
    %v4140 = vunpack.c.l.b16 %v3621
    %v4141 = vunpack.c.l.b16 %v3622
    %v4142 = vunpack.c.l.b16 %v3623
    %v4143 = vunpack.c.l.b16 %v3624
    %v4144 = vunpack.c.l.b16 %v3625
    %v4145 = vunpack.c.l.b16 %v3626
    %v4146 = vunpack.c.l.b16 %v3627
    %v4147 = vunpack.c.l.b16 %v3628
    %v4148 = vunpack.c.l.b16 %v3629
    %v4149 = vunpack.c.l.b16 %v3630
    %v4150 = vunpack.c.l.b16 %v3631
    %v4151 = vunpack.c.l.b16 %v3632
    %v4152 = vunpack.c.l.b16 %v3633
    %v4153 = vunpack.c.l.b16 %v3634
    %v4154 = vunpack.c.l.b16 %v3635
    %v4155 = vunpack.c.l.b16 %v3636
    %v4156 = vunpack.c.l.b16 %v3637
    %v4157 = vunpack.c.l.b16 %v3638
    %v4158 = vunpack.c.l.b16 %v3639
    %v4159 = vunpack.c.l.b16 %v3640
    %v4160 = vunpack.c.l.b16 %v3641
    %v4161 = vunpack.c.l.b16 %v3642
    %v4162 = vunpack.c.l.b16 %v3643
    %v4163 = vunpack.c.l.b16 %v3644
    %v4164 = vunpack.c.l.b16 %v3645
    %v4165 = vunpack.c.l.b16 %v3646
    %v4166 = vunpack.c.l.b16 %v3647
    %v4167 = vunpack.c.l.b16 %v3648
    %v4168 = vunpack.c.l.b16 %v3649
    %v4169 = vunpack.c.l.b16 %v3650
    %v4170 = vunpack.c.l.b16 %v3651
    %v4171 = vunpack.c.l.b16 %v3652
    %v4172 = vunpack.c.l.b16 %v3653
    %v4173 = vunpack.c.l.b16 %v3654
    %v4174 = vunpack.c.l.b16 %v3655
    %v4175 = vunpack.c.l.b16 %v3656
    %v4176 = vunpack.c.l.b16 %v3657
    %v4177 = vunpack.c.l.b16 %v3658
    %v4178 = vunpack.c.l.b16 %v3659
    %v4179 = vunpack.c.l.b16 %v3660
    %v4180 = vunpack.c.l.b16 %v3661
    %v4181 = vunpack.c.l.b16 %v3662
    %v4182 = vunpack.c.l.b16 %v3663
    %v4183 = vunpack.c.l.b16 %v3664
    %v4184 = vunpack.c.l.b16 %v3665
    %v4185 = vunpack.c.l.b16 %v3666
    %v4186 = vunpack.c.l.b16 %v3667
    %v4187 = vunpack.c.l.b16 %v3668
    %v4188 = vunpack.c.l.b16 %v3669
    %v4189 = vunpack.c.l.b16 %v3670
    %v4190 = vunpack.c.l.b16 %v3671
    %v4191 = vunpack.c.l.b16 %v3672
    %v4192 = vunpack.c.l.b16 %v3673
    %v4193 = vunpack.c.l.b16 %v3674
    %v4194 = vunpack.c.l.b16 %v3675
    %v4195 = vunpack.c.l.b16 %v3676
    %v4196 = vunpack.c.l.b16 %v3677
    %v4197 = vunpack.c.l.b16 %v3678
    %v4198 = vunpack.c.l.b16 %v3679
    %v4199 = vunpack.c.l.b16 %v3680
    %v4200 = vunpack.c.l.b16 %v3681
    %v4201 = vunpack.c.l.b16 %v3682
    %v4202 = vunpack.c.l.b16 %v3683
    %v4203 = vunpack.c.l.b16 %v3684
    %v4204 = vunpack.c.l.b16 %v3685
    %v4205 = vunpack.c.l.b16 %v3686
    %v4206 = vunpack.c.l.b16 %v3687
    %v4207 = vunpack.c.l.b16 %v3688
    %v4208 = vunpack.c.l.b16 %v3689
    %v4209 = vunpack.c.l.b16 %v3690
    %v4210 = vunpack.c.l.b16 %v3691
    %v4211 = vunpack.c.l.b16 %v3692
    %v4212 = vunpack.c.l.b16 %v3693
    %v4213 = vunpack.c.l.b16 %v3694
    %v4214 = vunpack.c.l.b16 %v3695
    %v4215 = vunpack.c.l.b16 %v3696
    %v4216 = vunpack.c.l.b16 %v3697
    %v4217 = vunpack.c.l.b16 %v3698
    %v4218 = vunpack.c.l.b16 %v3699
    %v4219 = vunpack.c.l.b16 %v3700
    %v4220 = vunpack.c.l.b16 %v3701
    %v4221 = vunpack.c.l.b16 %v3702
    %v4222 = vunpack.c.l.b16 %v3703
    %v4223 = vunpack.c.l.b16 %v3704
    %v4224 = vunpack.c.l.b16 %v3705
    %v4225 = vunpack.c.l.b16 %v3706
    %v4226 = vunpack.c.l.b16 %v3707
    %v4227 = vunpack.c.l.b16 %v3708
    %v4228 = vunpack.c.l.b16 %v3709
    %v4229 = vunpack.c.l.b16 %v3710
    %v4230 = vunpack.c.l.b16 %v3711
    %v4231 = vunpack.c.l.b16 %v3712
    %v4232 = vunpack.c.l.b16 %v3713
    %v4233 = vunpack.c.l.b16 %v3714
    %v4234 = vunpack.c.l.b16 %v3715
    %v4235 = vunpack.c.l.b16 %v3716
    %v4236 = vunpack.c.l.b16 %v3717
    %v4237 = vunpack.c.l.b16 %v3718
    %v4238 = vunpack.c.l.b16 %v3719
    %v4239 = vunpack.c.l.b16 %v3720
    %v4240 = vunpack.c.l.b16 %v3721
    %v4241 = vunpack.c.l.b16 %v3722
    %v4242 = vunpack.c.l.b16 %v3723
    %v4243 = vunpack.c.l.b16 %v3724
    %v4244 = vunpack.c.l.b16 %v3725
    %v4245 = vunpack.c.l.b16 %v3726
    %v4246 = vunpack.c.l.b16 %v3727
    %v4247 = vunpack.c.l.b16 %v3728
    %v4248 = vunpack.c.l.b16 %v3729
    %v4249 = vunpack.c.l.b16 %v3730
    %v4250 = vunpack.c.l.b16 %v3731
    %v4251 = vunpack.c.l.b16 %v3732
    %v4252 = vunpack.c.l.b16 %v3733
    %v4253 = vunpack.c.l.b16 %v3734
    %v4254 = vunpack.c.l.b16 %v3735
    %v4255 = vunpack.c.l.b16 %v3736
    %v4256 = vunpack.c.l.b16 %v3737
    %v4257 = vunpack.c.l.b16 %v3738
    %v4258 = vunpack.c.l.b16 %v3739
    %v4259 = vunpack.c.l.b16 %v3740
    %v4260 = vunpack.c.l.b16 %v3741
    %v4261 = vunpack.c.l.b16 %v3742
    %v4262 = vunpack.c.l.b16 %v3743
    %v4263 = vunpack.c.l.b16 %v3744
    %v4264 = vunpack.c.l.b16 %v3745
    %v4265 = vunpack.c.l.b16 %v3746
    %v4266 = vpack.c.b16 %v4011, %v4010
    %v4267 = vpack.c.b16 %v4013, %v4012
    %v4268 = vpack.c.b16 %v4015, %v4014
    %v4269 = vpack.c.b16 %v4017, %v4016
    %v4270 = vpack.c.b16 %v4019, %v4018
    %v4271 = vpack.c.b16 %v4021, %v4020
    %v4272 = vpack.c.b16 %v4023, %v4022
    %v4273 = vpack.c.b16 %v4025, %v4024
    %v4274 = vpack.c.b16 %v4027, %v4026
    %v4275 = vpack.c.b16 %v4029, %v4028
    %v4276 = vpack.c.b16 %v4031, %v4030
    %v4277 = vpack.c.b16 %v4033, %v4032
    %v4278 = vpack.c.b16 %v4035, %v4034
    %v4279 = vpack.c.b16 %v4037, %v4036
    %v4280 = vpack.c.b16 %v4039, %v4038
    %v4281 = vpack.c.b16 %v4041, %v4040
    %v4282 = vpack.c.b16 %v4043, %v4042
    %v4283 = vpack.c.b16 %v4045, %v4044
    %v4284 = vpack.c.b16 %v4047, %v4046
    %v4285 = vpack.c.b16 %v4049, %v4048
    %v4286 = vpack.c.b16 %v4051, %v4050
    %v4287 = vpack.c.b16 %v4053, %v4052
    %v4288 = vpack.c.b16 %v4055, %v4054
    %v4289 = vpack.c.b16 %v4057, %v4056
    %v4290 = vpack.c.b16 %v4059, %v4058
    %v4291 = vpack.c.b16 %v4061, %v4060
    %v4292 = vpack.c.b16 %v4063, %v4062
    %v4293 = vpack.c.b16 %v4065, %v4064
    %v4294 = vpack.c.b16 %v4067, %v4066
    %v4295 = vpack.c.b16 %v4069, %v4068
    %v4296 = vpack.c.b16 %v4071, %v4070
    %v4297 = vpack.c.b16 %v4073, %v4072
    %v4298 = vpack.c.b16 %v4075, %v4074
    %v4299 = vpack.c.b16 %v4077, %v4076
    %v4300 = vpack.c.b16 %v4079, %v4078
    %v4301 = vpack.c.b16 %v4081, %v4080
    %v4302 = vpack.c.b16 %v4083, %v4082
    %v4303 = vpack.c.b16 %v4085, %v4084
    %v4304 = vpack.c.b16 %v4087, %v4086
    %v4305 = vpack.c.b16 %v4089, %v4088
    %v4306 = vpack.c.b16 %v4091, %v4090
    %v4307 = vpack.c.b16 %v4093, %v4092
    %v4308 = vpack.c.b16 %v4095, %v4094
    %v4309 = vpack.c.b16 %v4097, %v4096
    %v4310 = vpack.c.b16 %v4099, %v4098
    %v4311 = vpack.c.b16 %v4101, %v4100
    %v4312 = vpack.c.b16 %v4103, %v4102
    %v4313 = vpack.c.b16 %v4105, %v4104
    %v4314 = vpack.c.b16 %v4107, %v4106
    %v4315 = vpack.c.b16 %v4109, %v4108
    %v4316 = vpack.c.b16 %v4111, %v4110
    %v4317 = vpack.c.b16 %v4113, %v4112
    %v4318 = vpack.c.b16 %v4115, %v4114
    %v4319 = vpack.c.b16 %v4117, %v4116
    %v4320 = vpack.c.b16 %v4119, %v4118
    %v4321 = vpack.c.b16 %v4121, %v4120
    %v4322 = vpack.c.b16 %v4123, %v4122
    %v4323 = vpack.c.b16 %v4125, %v4124
    %v4324 = vpack.c.b16 %v4127, %v4126
    %v4325 = vpack.c.b16 %v4129, %v4128
    %v4326 = vpack.c.b16 %v4131, %v4130
    %v4327 = vpack.c.b16 %v4133, %v4132
    %v4328 = vpack.c.b16 %v4135, %v4134
    %v4329 = vpack.c.b16 %v4137, %v4136
    %v4330 = vpack.c.b16 %v4139, %v4138
    %v4331 = vpack.c.b16 %v4141, %v4140
    %v4332 = vpack.c.b16 %v4143, %v4142
    %v4333 = vpack.c.b16 %v4145, %v4144
    %v4334 = vpack.c.b16 %v4147, %v4146
    %v4335 = vpack.c.b16 %v4149, %v4148
    %v4336 = vpack.c.b16 %v4151, %v4150
    %v4337 = vpack.c.b16 %v4153, %v4152
    %v4338 = vpack.c.b16 %v4155, %v4154
    %v4339 = vpack.c.b16 %v4157, %v4156
    %v4340 = vpack.c.b16 %v4159, %v4158
    %v4341 = vpack.c.b16 %v4161, %v4160
    %v4342 = vpack.c.b16 %v4163, %v4162
    %v4343 = vpack.c.b16 %v4165, %v4164
    %v4344 = vpack.c.b16 %v4167, %v4166
    %v4345 = vpack.c.b16 %v4169, %v4168
    %v4346 = vpack.c.b16 %v4171, %v4170
    %v4347 = vpack.c.b16 %v4173, %v4172
    %v4348 = vpack.c.b16 %v4175, %v4174
    %v4349 = vpack.c.b16 %v4177, %v4176
    %v4350 = vpack.c.b16 %v4179, %v4178
    %v4351 = vpack.c.b16 %v4181, %v4180
    %v4352 = vpack.c.b16 %v4183, %v4182
    %v4353 = vpack.c.b16 %v4185, %v4184
    %v4354 = vpack.c.b16 %v4187, %v4186
    %v4355 = vpack.c.b16 %v4189, %v4188
    %v4356 = vpack.c.b16 %v4191, %v4190
    %v4357 = vpack.c.b16 %v4193, %v4192
    %v4358 = vpack.c.b16 %v4195, %v4194
    %v4359 = vpack.c.b16 %v4197, %v4196
    %v4360 = vpack.c.b16 %v4199, %v4198
    %v4361 = vpack.c.b16 %v4201, %v4200
    %v4362 = vpack.c.b16 %v4203, %v4202
    %v4363 = vpack.c.b16 %v4205, %v4204
    %v4364 = vpack.c.b16 %v4207, %v4206
    %v4365 = vpack.c.b16 %v4209, %v4208
    %v4366 = vpack.c.b16 %v4211, %v4210
    %v4367 = vpack.c.b16 %v4213, %v4212
    %v4368 = vpack.c.b16 %v4215, %v4214
    %v4369 = vpack.c.b16 %v4217, %v4216
    %v4370 = vpack.c.b16 %v4219, %v4218
    %v4371 = vpack.c.b16 %v4221, %v4220
    %v4372 = vpack.c.b16 %v4223, %v4222
    %v4373 = vpack.c.b16 %v4225, %v4224
    %v4374 = vpack.c.b16 %v4227, %v4226
    %v4375 = vpack.c.b16 %v4229, %v4228
    %v4376 = vpack.c.b16 %v4231, %v4230
    %v4377 = vpack.c.b16 %v4233, %v4232
    %v4378 = vpack.c.b16 %v4235, %v4234
    %v4379 = vpack.c.b16 %v4237, %v4236
    %v4380 = vpack.c.b16 %v4239, %v4238
    %v4381 = vpack.c.b16 %v4241, %v4240
    %v4382 = vpack.c.b16 %v4243, %v4242
    %v4383 = vpack.c.b16 %v4245, %v4244
    %v4384 = vpack.c.b16 %v4247, %v4246
    %v4385 = vpack.c.b16 %v4249, %v4248
    %v4386 = vpack.c.b16 %v4251, %v4250
    %v4387 = vpack.c.b16 %v4253, %v4252
    %v4388 = vpack.c.b16 %v4255, %v4254
    %v4389 = vpack.c.b16 %v4257, %v4256
    %v4390 = vpack.c.b16 %v4259, %v4258
    %v4391 = vpack.c.b16 %v4261, %v4260
    %v4392 = vpack.c.b16 %v4263, %v4262
    %v4393 = vpack.c.b16 %v4265, %v4264
    %4522 = vmatprep.subr.bf16.mxu0 0
    %4523 = vmatpush1.bf16.msra.mxu0 %v4266
    %4524 = vmatprep.subr.bf16.mxu0 0
    %4525 = vmatpush1.bf16.msra.mxu0 %v4267
    %4526 = vmatprep.subr.bf16.mxu0 0
    %4527 = vmatpush1.bf16.msra.mxu0 %v4268
    %4528 = vmatprep.subr.bf16.mxu0 0
    %4529 = vmatpush1.bf16.msra.mxu0 %v4269
    %4530 = vmatprep.subr.bf16.mxu0 0
    %4531 = vmatpush1.bf16.msra.mxu0 %v4270
    %4532 = vmatprep.subr.bf16.mxu0 0
    %4533 = vmatpush1.bf16.msra.mxu0 %v4271
    %4534 = vmatprep.subr.bf16.mxu0 0
    %4535 = vmatpush1.bf16.msra.mxu0 %v4272
    %4536 = vmatprep.subr.bf16.mxu0 0
    %4537 = vmatpush1.bf16.msra.mxu0 %v4273
    %4538 = vmatprep.subr.bf16.mxu0 0
    %4539 = vmatpush1.bf16.msra.mxu0 %v4274
    %4540 = vmatprep.subr.bf16.mxu0 0
    %4541 = vmatpush1.bf16.msra.mxu0 %v4275
    %4542 = vmatprep.subr.bf16.mxu0 0
    %4543 = vmatpush1.bf16.msra.mxu0 %v4276
    %4544 = vmatprep.subr.bf16.mxu0 0
    %4545 = vmatpush1.bf16.msra.mxu0 %v4277
    %4546 = vmatprep.subr.bf16.mxu0 0
    %4547 = vmatpush1.bf16.msra.mxu0 %v4278
    %4548 = vmatprep.subr.bf16.mxu0 0
    %4549 = vmatpush1.bf16.msra.mxu0 %v4279
    %4550 = vmatprep.subr.bf16.mxu0 0
    %4551 = vmatpush1.bf16.msra.mxu0 %v4280
    %4552 = vmatprep.subr.bf16.mxu0 0
    %4553 = vmatpush1.bf16.msra.mxu0 %v4281
    %4554 = vmatprep.mubr.bf16.mxu0 %v3391
    %4555 = vmatmul.mubr.bf16.gmra.mrb[0].mxu0 %v3384
    %v4556 = vpop.f32.mrb[0].mxu0
    %v4557 = vadd.f32 %v3752, %v4556
    %v4558 = vpop.f32.mrb[0].mxu0
    %v4559 = vpop.f32.mrb[0].mxu0
    %v4560 = vpop.f32.mrb[0].mxu0
    %4561 = vdwg.mxu0
    %4562 = vmatprep.subr.bf16.mxu0 0
    %4563 = vmatpush1.bf16.msra.mxu0 %v4282
    %4564 = vmatprep.subr.bf16.mxu0 0
    %4565 = vmatpush1.bf16.msra.mxu0 %v4283
    %4566 = vmatprep.subr.bf16.mxu0 0
    %4567 = vmatpush1.bf16.msra.mxu0 %v4284
    %4568 = vmatprep.subr.bf16.mxu0 0
    %4569 = vmatpush1.bf16.msra.mxu0 %v4285
    %4570 = vmatprep.subr.bf16.mxu0 0
    %4571 = vmatpush1.bf16.msra.mxu0 %v4286
    %4572 = vmatprep.subr.bf16.mxu0 0
    %4573 = vmatpush1.bf16.msra.mxu0 %v4287
    %4574 = vmatprep.subr.bf16.mxu0 0
    %4575 = vmatpush1.bf16.msra.mxu0 %v4288
    %4576 = vmatprep.subr.bf16.mxu0 0
    %4577 = vmatpush1.bf16.msra.mxu0 %v4289
    %4578 = vmatprep.subr.bf16.mxu0 0
    %4579 = vmatpush1.bf16.msra.mxu0 %v4290
    %4580 = vmatprep.subr.bf16.mxu0 0
    %4581 = vmatpush1.bf16.msra.mxu0 %v4291
    %4582 = vmatprep.subr.bf16.mxu0 0
    %4583 = vmatpush1.bf16.msra.mxu0 %v4292
    %4584 = vmatprep.subr.bf16.mxu0 0
    %4585 = vmatpush1.bf16.msra.mxu0 %v4293
    %4586 = vmatprep.subr.bf16.mxu0 0
    %4587 = vmatpush1.bf16.msra.mxu0 %v4294
    %4588 = vmatprep.subr.bf16.mxu0 0
    %4589 = vmatpush1.bf16.msra.mxu0 %v4295
    %4590 = vmatprep.subr.bf16.mxu0 0
    %4591 = vmatpush1.bf16.msra.mxu0 %v4296
    %4592 = vmatprep.subr.bf16.mxu0 0
    %4593 = vmatpush1.bf16.msra.mxu0 %v4297
    %4594 = vmatprep.mubr.bf16.mxu0 %v3405
    %4595 = vmatmul.mubr.bf16.gmra.mrb[0].mxu0 %v3398
    %v4596 = vpop.f32.mrb[0].mxu0
    %v4597 = vadd.f32 %v4557, %v4596
    %v4598 = vpop.f32.mrb[0].mxu0
    %v4599 = vpop.f32.mrb[0].mxu0
    %v4600 = vpop.f32.mrb[0].mxu0
    %4601 = vdwg.mxu0
    %4602 = vmatprep.subr.bf16.mxu0 0
    %4603 = vmatpush1.bf16.msra.mxu0 %v4298
    %4604 = vmatprep.subr.bf16.mxu0 0
    %4605 = vmatpush1.bf16.msra.mxu0 %v4299
    %4606 = vmatprep.subr.bf16.mxu0 0
    %4607 = vmatpush1.bf16.msra.mxu0 %v4300
    %4608 = vmatprep.subr.bf16.mxu0 0
    %4609 = vmatpush1.bf16.msra.mxu0 %v4301
    %4610 = vmatprep.subr.bf16.mxu0 0
    %4611 = vmatpush1.bf16.msra.mxu0 %v4302
    %4612 = vmatprep.subr.bf16.mxu0 0
    %4613 = vmatpush1.bf16.msra.mxu0 %v4303
    %4614 = vmatprep.subr.bf16.mxu0 0
    %4615 = vmatpush1.bf16.msra.mxu0 %v4304
    %4616 = vmatprep.subr.bf16.mxu0 0
    %4617 = vmatpush1.bf16.msra.mxu0 %v4305
    %4618 = vmatprep.subr.bf16.mxu0 0
    %4619 = vmatpush1.bf16.msra.mxu0 %v4306
    %4620 = vmatprep.subr.bf16.mxu0 0
    %4621 = vmatpush1.bf16.msra.mxu0 %v4307
    %4622 = vmatprep.subr.bf16.mxu0 0
    %4623 = vmatpush1.bf16.msra.mxu0 %v4308
    %4624 = vmatprep.subr.bf16.mxu0 0
    %4625 = vmatpush1.bf16.msra.mxu0 %v4309
    %4626 = vmatprep.subr.bf16.mxu0 0
    %4627 = vmatpush1.bf16.msra.mxu0 %v4310
    %4628 = vmatprep.subr.bf16.mxu0 0
    %4629 = vmatpush1.bf16.msra.mxu0 %v4311
    %4630 = vmatprep.subr.bf16.mxu0 0
    %4631 = vmatpush1.bf16.msra.mxu0 %v4312
    %4632 = vmatprep.subr.bf16.mxu0 0
    %4633 = vmatpush1.bf16.msra.mxu0 %v4313
    %4634 = vmatprep.mubr.bf16.mxu0 %v3419
    %4635 = vmatmul.mubr.bf16.gmra.mrb[0].mxu0 %v3412
    %v4636 = vpop.f32.mrb[0].mxu0
    %v4637 = vadd.f32 %v4597, %v4636
    %v4638 = vpop.f32.mrb[0].mxu0
    %v4639 = vpop.f32.mrb[0].mxu0
    %v4640 = vpop.f32.mrb[0].mxu0
    %4641 = vdwg.mxu0
    %4642 = vmatprep.subr.bf16.mxu0 0
    %4643 = vmatpush1.bf16.msra.mxu0 %v4314
    %4644 = vmatprep.subr.bf16.mxu0 0
    %4645 = vmatpush1.bf16.msra.mxu0 %v4315
    %4646 = vmatprep.subr.bf16.mxu0 0
    %4647 = vmatpush1.bf16.msra.mxu0 %v4316
    %4648 = vmatprep.subr.bf16.mxu0 0
    %4649 = vmatpush1.bf16.msra.mxu0 %v4317
    %4650 = vmatprep.subr.bf16.mxu0 0
    %4651 = vmatpush1.bf16.msra.mxu0 %v4318
    %4652 = vmatprep.subr.bf16.mxu0 0
    %4653 = vmatpush1.bf16.msra.mxu0 %v4319
    %4654 = vmatprep.subr.bf16.mxu0 0
    %4655 = vmatpush1.bf16.msra.mxu0 %v4320
    %4656 = vmatprep.subr.bf16.mxu0 0
    %4657 = vmatpush1.bf16.msra.mxu0 %v4321
    %4658 = vmatprep.subr.bf16.mxu0 0
    %4659 = vmatpush1.bf16.msra.mxu0 %v4322
    %4660 = vmatprep.subr.bf16.mxu0 0
    %4661 = vmatpush1.bf16.msra.mxu0 %v4323
    %4662 = vmatprep.subr.bf16.mxu0 0
    %4663 = vmatpush1.bf16.msra.mxu0 %v4324
    %4664 = vmatprep.subr.bf16.mxu0 0
    %4665 = vmatpush1.bf16.msra.mxu0 %v4325
    %4666 = vmatprep.subr.bf16.mxu0 0
    %4667 = vmatpush1.bf16.msra.mxu0 %v4326
    %4668 = vmatprep.subr.bf16.mxu0 0
    %4669 = vmatpush1.bf16.msra.mxu0 %v4327
    %4670 = vmatprep.subr.bf16.mxu0 0
    %4671 = vmatpush1.bf16.msra.mxu0 %v4328
    %4672 = vmatprep.subr.bf16.mxu0 0
    %4673 = vmatpush1.bf16.msra.mxu0 %v4329
    %4674 = vmatprep.mubr.bf16.mxu0 %v3433
    %4675 = vmatmul.mubr.bf16.gmra.mrb[0].mxu0 %v3426
    %v4676 = vpop.f32.mrb[0].mxu0
    %v4677 = vadd.f32 %v4637, %v4676
    %v4678 = vpop.f32.mrb[0].mxu0
    %v4679 = vpop.f32.mrb[0].mxu0
    %v4680 = vpop.f32.mrb[0].mxu0
    %4681 = vdwg.mxu0
    %4682 = vmatprep.subr.bf16.mxu0 0
    %4683 = vmatpush1.bf16.msra.mxu0 %v4330
    %4684 = vmatprep.subr.bf16.mxu0 0
    %4685 = vmatpush1.bf16.msra.mxu0 %v4331
    %4686 = vmatprep.subr.bf16.mxu0 0
    %4687 = vmatpush1.bf16.msra.mxu0 %v4332
    %4688 = vmatprep.subr.bf16.mxu0 0
    %4689 = vmatpush1.bf16.msra.mxu0 %v4333
    %4690 = vmatprep.subr.bf16.mxu0 0
    %4691 = vmatpush1.bf16.msra.mxu0 %v4334
    %4692 = vmatprep.subr.bf16.mxu0 0
    %4693 = vmatpush1.bf16.msra.mxu0 %v4335
    %4694 = vmatprep.subr.bf16.mxu0 0
    %4695 = vmatpush1.bf16.msra.mxu0 %v4336
    %4696 = vmatprep.subr.bf16.mxu0 0
    %4697 = vmatpush1.bf16.msra.mxu0 %v4337
    %4698 = vmatprep.subr.bf16.mxu0 0
    %4699 = vmatpush1.bf16.msra.mxu0 %v4338
    %4700 = vmatprep.subr.bf16.mxu0 0
    %4701 = vmatpush1.bf16.msra.mxu0 %v4339
    %4702 = vmatprep.subr.bf16.mxu0 0
    %4703 = vmatpush1.bf16.msra.mxu0 %v4340
    %4704 = vmatprep.subr.bf16.mxu0 0
    %4705 = vmatpush1.bf16.msra.mxu0 %v4341
    %4706 = vmatprep.subr.bf16.mxu0 0
    %4707 = vmatpush1.bf16.msra.mxu0 %v4342
    %4708 = vmatprep.subr.bf16.mxu0 0
    %4709 = vmatpush1.bf16.msra.mxu0 %v4343
    %4710 = vmatprep.subr.bf16.mxu0 0
    %4711 = vmatpush1.bf16.msra.mxu0 %v4344
    %4712 = vmatprep.subr.bf16.mxu0 0
    %4713 = vmatpush1.bf16.msra.mxu0 %v4345
    %4714 = vmatprep.mubr.bf16.mxu0 %v3447
    %4715 = vmatmul.mubr.bf16.gmra.mrb[0].mxu0 %v3440
    %v4716 = vpop.f32.mrb[0].mxu0
    %v4717 = vadd.f32 %v4677, %v4716
    %v4718 = vpop.f32.mrb[0].mxu0
    %v4719 = vpop.f32.mrb[0].mxu0
    %v4720 = vpop.f32.mrb[0].mxu0
    %4721 = vdwg.mxu0
    %4722 = vmatprep.subr.bf16.mxu0 0
    %4723 = vmatpush1.bf16.msra.mxu0 %v4346
    %4724 = vmatprep.subr.bf16.mxu0 0
    %4725 = vmatpush1.bf16.msra.mxu0 %v4347
    %4726 = vmatprep.subr.bf16.mxu0 0
    %4727 = vmatpush1.bf16.msra.mxu0 %v4348
    %4728 = vmatprep.subr.bf16.mxu0 0
    %4729 = vmatpush1.bf16.msra.mxu0 %v4349
    %4730 = vmatprep.subr.bf16.mxu0 0
    %4731 = vmatpush1.bf16.msra.mxu0 %v4350
    %4732 = vmatprep.subr.bf16.mxu0 0
    %4733 = vmatpush1.bf16.msra.mxu0 %v4351
    %4734 = vmatprep.subr.bf16.mxu0 0
    %4735 = vmatpush1.bf16.msra.mxu0 %v4352
    %4736 = vmatprep.subr.bf16.mxu0 0
    %4737 = vmatpush1.bf16.msra.mxu0 %v4353
    %4738 = vmatprep.subr.bf16.mxu0 0
    %4739 = vmatpush1.bf16.msra.mxu0 %v4354
    %4740 = vmatprep.subr.bf16.mxu0 0
    %4741 = vmatpush1.bf16.msra.mxu0 %v4355
    %4742 = vmatprep.subr.bf16.mxu0 0
    %4743 = vmatpush1.bf16.msra.mxu0 %v4356
    %4744 = vmatprep.subr.bf16.mxu0 0
    %4745 = vmatpush1.bf16.msra.mxu0 %v4357
    %4746 = vmatprep.subr.bf16.mxu0 0
    %4747 = vmatpush1.bf16.msra.mxu0 %v4358
    %4748 = vmatprep.subr.bf16.mxu0 0
    %4749 = vmatpush1.bf16.msra.mxu0 %v4359
    %4750 = vmatprep.subr.bf16.mxu0 0
    %4751 = vmatpush1.bf16.msra.mxu0 %v4360
    %4752 = vmatprep.subr.bf16.mxu0 0
    %4753 = vmatpush1.bf16.msra.mxu0 %v4361
    %4754 = vmatprep.mubr.bf16.mxu0 %v3461
    %4755 = vmatmul.mubr.bf16.gmra.mrb[0].mxu0 %v3454
    %v4756 = vpop.f32.mrb[0].mxu0
    %v4757 = vadd.f32 %v4717, %v4756
    %v4758 = vpop.f32.mrb[0].mxu0
    %v4759 = vpop.f32.mrb[0].mxu0
    %v4760 = vpop.f32.mrb[0].mxu0
    %4761 = vdwg.mxu0
    %4762 = vmatprep.subr.bf16.mxu0 0
    %4763 = vmatpush1.bf16.msra.mxu0 %v4362
    %4764 = vmatprep.subr.bf16.mxu0 0
    %4765 = vmatpush1.bf16.msra.mxu0 %v4363
    %4766 = vmatprep.subr.bf16.mxu0 0
    %4767 = vmatpush1.bf16.msra.mxu0 %v4364
    %4768 = vmatprep.subr.bf16.mxu0 0
    %4769 = vmatpush1.bf16.msra.mxu0 %v4365
    %4770 = vmatprep.subr.bf16.mxu0 0
    %4771 = vmatpush1.bf16.msra.mxu0 %v4366
    %4772 = vmatprep.subr.bf16.mxu0 0
    %4773 = vmatpush1.bf16.msra.mxu0 %v4367
    %4774 = vmatprep.subr.bf16.mxu0 0
    %4775 = vmatpush1.bf16.msra.mxu0 %v4368
    %4776 = vmatprep.subr.bf16.mxu0 0
    %4777 = vmatpush1.bf16.msra.mxu0 %v4369
    %4778 = vmatprep.subr.bf16.mxu0 0
    %4779 = vmatpush1.bf16.msra.mxu0 %v4370
    %4780 = vmatprep.subr.bf16.mxu0 0
    %4781 = vmatpush1.bf16.msra.mxu0 %v4371
    %4782 = vmatprep.subr.bf16.mxu0 0
    %4783 = vmatpush1.bf16.msra.mxu0 %v4372
    %4784 = vmatprep.subr.bf16.mxu0 0
    %4785 = vmatpush1.bf16.msra.mxu0 %v4373
    %4786 = vmatprep.subr.bf16.mxu0 0
    %4787 = vmatpush1.bf16.msra.mxu0 %v4374
    %4788 = vmatprep.subr.bf16.mxu0 0
    %4789 = vmatpush1.bf16.msra.mxu0 %v4375
    %4790 = vmatprep.subr.bf16.mxu0 0
    %4791 = vmatpush1.bf16.msra.mxu0 %v4376
    %4792 = vmatprep.subr.bf16.mxu0 0
    %4793 = vmatpush1.bf16.msra.mxu0 %v4377
    %4794 = vmatprep.mubr.bf16.mxu0 %v3475
    %4795 = vmatmul.mubr.bf16.gmra.mrb[0].mxu0 %v3468
    %v4796 = vpop.f32.mrb[0].mxu0
    %v4797 = vadd.f32 %v4757, %v4796
    %v4798 = vpop.f32.mrb[0].mxu0
    %v4799 = vpop.f32.mrb[0].mxu0
    %v4800 = vpop.f32.mrb[0].mxu0
    %4801 = vdwg.mxu0
    %4802 = vmatprep.subr.bf16.mxu0 0
    %4803 = vmatpush1.bf16.msra.mxu0 %v4378
    %4804 = vmatprep.subr.bf16.mxu0 0
    %4805 = vmatpush1.bf16.msra.mxu0 %v4379
    %4806 = vmatprep.subr.bf16.mxu0 0
    %4807 = vmatpush1.bf16.msra.mxu0 %v4380
    %4808 = vmatprep.subr.bf16.mxu0 0
    %4809 = vmatpush1.bf16.msra.mxu0 %v4381
    %4810 = vmatprep.subr.bf16.mxu0 0
    %4811 = vmatpush1.bf16.msra.mxu0 %v4382
    %4812 = vmatprep.subr.bf16.mxu0 0
    %4813 = vmatpush1.bf16.msra.mxu0 %v4383
    %4814 = vmatprep.subr.bf16.mxu0 0
    %4815 = vmatpush1.bf16.msra.mxu0 %v4384
    %4816 = vmatprep.subr.bf16.mxu0 0
    %4817 = vmatpush1.bf16.msra.mxu0 %v4385
    %4818 = vmatprep.subr.bf16.mxu0 0
    %4819 = vmatpush1.bf16.msra.mxu0 %v4386
    %4820 = vmatprep.subr.bf16.mxu0 0
    %4821 = vmatpush1.bf16.msra.mxu0 %v4387
    %4822 = vmatprep.subr.bf16.mxu0 0
    %4823 = vmatpush1.bf16.msra.mxu0 %v4388
    %4824 = vmatprep.subr.bf16.mxu0 0
    %4825 = vmatpush1.bf16.msra.mxu0 %v4389
    %4826 = vmatprep.subr.bf16.mxu0 0
    %4827 = vmatpush1.bf16.msra.mxu0 %v4390
    %4828 = vmatprep.subr.bf16.mxu0 0
    %4829 = vmatpush1.bf16.msra.mxu0 %v4391
    %4830 = vmatprep.subr.bf16.mxu0 0
    %4831 = vmatpush1.bf16.msra.mxu0 %v4392
    %4832 = vmatprep.subr.bf16.mxu0 0
    %4833 = vmatpush1.bf16.msra.mxu0 %v4393
    %4834 = vmatprep.mubr.bf16.mxu0 %v3489
    %4835 = vmatmul.mubr.bf16.gmra.mrb[0].mxu0 %v3482
    %v4836 = vpop.f32.mrb[0].mxu0
    %v4837 = vadd.f32 %v4797, %v4836
    %v4838 = vpop.f32.mrb[0].mxu0
    %v4839 = vpop.f32.mrb[0].mxu0
    %v4840 = vpop.f32.mrb[0].mxu0
    %4841 = vdwg.mxu0
    %v4842 = vpack.c.bf16 %v4837, %v4837
    %v4843 = vld [vmem:[#allocation9] sm:$0xf]
    %v4844 = vld [vmem:[#allocation9 + $0x4] sm:$0xf]
    %v4845 = vld [vmem:[#allocation9 + $0x8] sm:$0xf]
    %v4846 = vld [vmem:[#allocation9 + $0xc] sm:$0xf]
    %v4847 = vld [vmem:[#allocation9 + $0x10] sm:$0xf]
    %v4848 = vld [vmem:[#allocation9 + $0x14] sm:$0xf]
    %v4849 = vld [vmem:[#allocation9 + $0x18] sm:$0xf]
    %v4850 = vld [vmem:[#allocation9 + $0x1c] sm:$0xf]
    %v4851 = vld [vmem:[#allocation9 + $0x20] sm:$0xf]
    %v4852 = vld [vmem:[#allocation9 + $0x24] sm:$0xf]
    %v4853 = vld [vmem:[#allocation9 + $0x28] sm:$0xf]
    %v4854 = vld [vmem:[#allocation9 + $0x2c] sm:$0xf]
    %v4855 = vld [vmem:[#allocation9 + $0x30] sm:$0xf]
    %v4856 = vld [vmem:[#allocation9 + $0x34] sm:$0xf]
    %v4857 = vld [vmem:[#allocation9 + $0x38] sm:$0xf]
    %v4858 = vld [vmem:[#allocation9 + $0x3c] sm:$0xf]
    %v4859 = vld [vmem:[%s7] sm:$0x1]
    %v4861 = vlaneseq
    %v4862 = vshrl.u32 %v4861, 7
    %v4863 = vsub.s32 0, %v4862
    %v4864 = vrot.slane %v4859, %v4863
    %v4882 = vunpack.c.l.b16 %v4843
    %v4883 = vunpack.c.l.b16 %v4844
    %v4884 = vunpack.c.l.b16 %v4845
    %v4885 = vunpack.c.l.b16 %v4846
    %v4886 = vunpack.c.l.b16 %v4847
    %v4887 = vunpack.c.l.b16 %v4848
    %v4888 = vunpack.c.l.b16 %v4849
    %v4889 = vunpack.c.l.b16 %v4850
    %v4890 = vunpack.c.l.b16 %v4851
    %v4891 = vunpack.c.l.b16 %v4852
    %v4892 = vunpack.c.l.b16 %v4853
    %v4893 = vunpack.c.l.b16 %v4854
    %v4894 = vunpack.c.l.b16 %v4855
    %v4895 = vunpack.c.l.b16 %v4856
    %v4896 = vunpack.c.l.b16 %v4857
    %v4897 = vunpack.c.l.b16 %v4858
    %v4898 = vpack.c.b16 %v4883, %v4882
    %v4899 = vpack.c.b16 %v4885, %v4884
    %v4900 = vpack.c.b16 %v4887, %v4886
    %v4901 = vpack.c.b16 %v4889, %v4888
    %v4902 = vpack.c.b16 %v4891, %v4890
    %v4903 = vpack.c.b16 %v4893, %v4892
    %v4904 = vpack.c.b16 %v4895, %v4894
    %v4905 = vpack.c.b16 %v4897, %v4896
    %4914 = vmatprep.subr.bf16.mxu0 0
    %4915 = vmatpush1.bf16.msra.mxu0 %v4898
    %4916 = vmatprep.subr.bf16.mxu0 0
    %4917 = vmatpush1.bf16.msra.mxu0 %v4899
    %4918 = vmatprep.subr.bf16.mxu0 0
    %4919 = vmatpush1.bf16.msra.mxu0 %v4900
    %4920 = vmatprep.subr.bf16.mxu0 0
    %4921 = vmatpush1.bf16.msra.mxu0 %v4901
    %4922 = vmatprep.subr.bf16.mxu0 0
    %4923 = vmatpush1.bf16.msra.mxu0 %v4902
    %4924 = vmatprep.subr.bf16.mxu0 0
    %4925 = vmatpush1.bf16.msra.mxu0 %v4903
    %4926 = vmatprep.subr.bf16.mxu0 0
    %4927 = vmatpush1.bf16.msra.mxu0 %v4904
    %4928 = vmatprep.subr.bf16.mxu0 0
    %4929 = vmatpush1.bf16.msra.mxu0 %v4905
    %4930 = vmatprep.subr.bf16.mxu0 0
    %4931 = vmatpush1.bf16.msra.mxu0 0
    %4932 = vmatprep.subr.bf16.mxu0 0
    %4933 = vmatpush1.bf16.msra.mxu0 0
    %4934 = vmatprep.subr.bf16.mxu0 0
    %4935 = vmatpush1.bf16.msra.mxu0 0
    %4936 = vmatprep.subr.bf16.mxu0 0
    %4937 = vmatpush1.bf16.msra.mxu0 0
    %4938 = vmatprep.subr.bf16.mxu0 0
    %4939 = vmatpush1.bf16.msra.mxu0 0
    %4940 = vmatprep.subr.bf16.mxu0 0
    %4941 = vmatpush1.bf16.msra.mxu0 0
    %4942 = vmatprep.subr.bf16.mxu0 0
    %4943 = vmatpush1.bf16.msra.mxu0 0
    %4944 = vmatprep.subr.bf16.mxu0 0
    %4945 = vmatpush1.bf16.msra.mxu0 0
    %4946 = vmatprep.mubr.bf16.mxu0 0
    %4947 = vmatmul.mubr.bf16.gmra.mrb[0].mxu0 %v4842
    %v4948 = vpop.f32.mrb[0].mxu0
    %v4949 = vadd.f32 %v4864, %v4948
    %v4950 = vpop.f32.mrb[0].mxu0
    %v4951 = vpop.f32.mrb[0].mxu0
    %v4952 = vpop.f32.mrb[0].mxu0
    %4953 = vdwg.mxu0
    %v4954 = vxor.u32 %v4949, 2147483648
    %v4955 = vmul.f32 %v4954, 1.442695
    %v4956 = vpow.pop %v4955
    %v4957 = vadd.f32 %v4956, 1.0
    %v4958 = vrcp.pop %v4957
    %v4959 = vmul.f32 1.0, %v4958
    %4960 = vst [vmem:[%s8] sm:$0x3] %v4959
    %v4961 = vld [vmem:[#allocation4] sm:$0xff]
    %v4962 = vld [vmem:[#allocation4 + $0x8] sm:$0xff]
    %v4963 = vld [vmem:[#allocation4 + $0x10] sm:$0xff]
    %v4964 = vld [vmem:[#allocation4 + $0x18] sm:$0xff]
    %v4965 = vld [vmem:[#allocation4 + $0x20] sm:$0xff]
    %v4966 = vld [vmem:[#allocation4 + $0x28] sm:$0xff]
    %v4967 = vld [vmem:[#allocation4 + $0x30] sm:$0xff]
    %v4968 = vld [vmem:[#allocation4 + $0x38] sm:$0xff]
    %v4969 = vld [vmem:[#allocation4 + $0x40] sm:$0xff]
    %v4970 = vld [vmem:[#allocation4 + $0x48] sm:$0xff]
    %v4971 = vld [vmem:[#allocation4 + $0x50] sm:$0xff]
    %v4972 = vld [vmem:[#allocation4 + $0x58] sm:$0xff]
    %v4973 = vld [vmem:[#allocation4 + $0x60] sm:$0xff]
    %v4974 = vld [vmem:[#allocation4 + $0x68] sm:$0xff]
    %v4975 = vld [vmem:[#allocation4 + $0x70] sm:$0xff]
    %v4976 = vld [vmem:[#allocation4 + $0x78] sm:$0xff]
    %v4977 = vld [vmem:[#allocation4 + $0x80] sm:$0xff]
    %v4978 = vld [vmem:[#allocation4 + $0x88] sm:$0xff]
    %v4979 = vld [vmem:[#allocation4 + $0x90] sm:$0xff]
    %v4980 = vld [vmem:[#allocation4 + $0x98] sm:$0xff]
    %v4981 = vld [vmem:[#allocation4 + $0xa0] sm:$0xff]
    %v4982 = vld [vmem:[#allocation4 + $0xa8] sm:$0xff]
    %v4983 = vld [vmem:[#allocation4 + $0xb0] sm:$0xff]
    %v4984 = vld [vmem:[#allocation4 + $0xb8] sm:$0xff]
    %v4985 = vld [vmem:[#allocation4 + $0xc0] sm:$0xff]
    %v4986 = vld [vmem:[#allocation4 + $0xc8] sm:$0xff]
    %v4987 = vld [vmem:[#allocation4 + $0xd0] sm:$0xff]
    %v4988 = vld [vmem:[#allocation4 + $0xd8] sm:$0xff]
    %v4989 = vld [vmem:[#allocation4 + $0xe0] sm:$0xff]
    %v4990 = vld [vmem:[#allocation4 + $0xe8] sm:$0xff]
    %v4991 = vld [vmem:[#allocation4 + $0xf0] sm:$0xff]
    %v4992 = vld [vmem:[#allocation4 + $0xf8] sm:$0xff]
    %v4993 = vld [vmem:[#allocation4 + $0x100] sm:$0xff]
    %v4994 = vld [vmem:[#allocation4 + $0x108] sm:$0xff]
    %v4995 = vld [vmem:[#allocation4 + $0x110] sm:$0xff]
    %v4996 = vld [vmem:[#allocation4 + $0x118] sm:$0xff]
    %v4997 = vld [vmem:[#allocation4 + $0x120] sm:$0xff]
    %v4998 = vld [vmem:[#allocation4 + $0x128] sm:$0xff]
    %v4999 = vld [vmem:[#allocation4 + $0x130] sm:$0xff]
    %v5000 = vld [vmem:[#allocation4 + $0x138] sm:$0xff]
    %v5001 = vld [vmem:[#allocation4 + $0x140] sm:$0xff]
    %v5002 = vld [vmem:[#allocation4 + $0x148] sm:$0xff]
    %v5003 = vld [vmem:[#allocation4 + $0x150] sm:$0xff]
    %v5004 = vld [vmem:[#allocation4 + $0x158] sm:$0xff]
    %v5005 = vld [vmem:[#allocation4 + $0x160] sm:$0xff]
    %v5006 = vld [vmem:[#allocation4 + $0x168] sm:$0xff]
    %v5007 = vld [vmem:[#allocation4 + $0x170] sm:$0xff]
    %v5008 = vld [vmem:[#allocation4 + $0x178] sm:$0xff]
    %v5009 = vld [vmem:[#allocation4 + $0x180] sm:$0xff]
    %v5010 = vld [vmem:[#allocation4 + $0x188] sm:$0xff]
    %v5011 = vld [vmem:[#allocation4 + $0x190] sm:$0xff]
    %v5012 = vld [vmem:[#allocation4 + $0x198] sm:$0xff]
    %v5013 = vld [vmem:[#allocation4 + $0x1a0] sm:$0xff]
    %v5014 = vld [vmem:[#allocation4 + $0x1a8] sm:$0xff]
    %v5015 = vld [vmem:[#allocation4 + $0x1b0] sm:$0xff]
    %v5016 = vld [vmem:[#allocation4 + $0x1b8] sm:$0xff]
    %v5017 = vld [vmem:[#allocation4 + $0x1c0] sm:$0xff]
    %v5018 = vld [vmem:[#allocation4 + $0x1c8] sm:$0xff]
    %v5019 = vld [vmem:[#allocation4 + $0x1d0] sm:$0xff]
    %v5020 = vld [vmem:[#allocation4 + $0x1d8] sm:$0xff]
    %v5021 = vld [vmem:[#allocation4 + $0x1e0] sm:$0xff]
    %v5022 = vld [vmem:[#allocation4 + $0x1e8] sm:$0xff]
    %v5023 = vld [vmem:[#allocation4 + $0x1f0] sm:$0xff]
    %v5024 = vld [vmem:[#allocation4 + $0x1f8] sm:$0xff]
    %v5025 = vld [vmem:[#allocation4 + $0x200] sm:$0xff]
    %v5026 = vld [vmem:[#allocation4 + $0x208] sm:$0xff]
    %v5027 = vld [vmem:[#allocation4 + $0x210] sm:$0xff]
    %v5028 = vld [vmem:[#allocation4 + $0x218] sm:$0xff]
    %v5029 = vld [vmem:[#allocation4 + $0x220] sm:$0xff]
    %v5030 = vld [vmem:[#allocation4 + $0x228] sm:$0xff]
    %v5031 = vld [vmem:[#allocation4 + $0x230] sm:$0xff]
    %v5032 = vld [vmem:[#allocation4 + $0x238] sm:$0xff]
    %v5033 = vld [vmem:[#allocation4 + $0x240] sm:$0xff]
    %v5034 = vld [vmem:[#allocation4 + $0x248] sm:$0xff]
    %v5035 = vld [vmem:[#allocation4 + $0x250] sm:$0xff]
    %v5036 = vld [vmem:[#allocation4 + $0x258] sm:$0xff]
    %v5037 = vld [vmem:[#allocation4 + $0x260] sm:$0xff]
    %v5038 = vld [vmem:[#allocation4 + $0x268] sm:$0xff]
    %v5039 = vld [vmem:[#allocation4 + $0x270] sm:$0xff]
    %v5040 = vld [vmem:[#allocation4 + $0x278] sm:$0xff]
    %v5041 = vld [vmem:[#allocation4 + $0x280] sm:$0xff]
    %v5042 = vld [vmem:[#allocation4 + $0x288] sm:$0xff]
    %v5043 = vld [vmem:[#allocation4 + $0x290] sm:$0xff]
    %v5044 = vld [vmem:[#allocation4 + $0x298] sm:$0xff]
    %v5045 = vld [vmem:[#allocation4 + $0x2a0] sm:$0xff]
    %v5046 = vld [vmem:[#allocation4 + $0x2a8] sm:$0xff]
    %v5047 = vld [vmem:[#allocation4 + $0x2b0] sm:$0xff]
    %v5048 = vld [vmem:[#allocation4 + $0x2b8] sm:$0xff]
    %v5049 = vld [vmem:[#allocation4 + $0x2c0] sm:$0xff]
    %v5050 = vld [vmem:[#allocation4 + $0x2c8] sm:$0xff]
    %v5051 = vld [vmem:[#allocation4 + $0x2d0] sm:$0xff]
    %v5052 = vld [vmem:[#allocation4 + $0x2d8] sm:$0xff]
    %v5053 = vld [vmem:[#allocation4 + $0x2e0] sm:$0xff]
    %v5054 = vld [vmem:[#allocation4 + $0x2e8] sm:$0xff]
    %v5055 = vld [vmem:[#allocation4 + $0x2f0] sm:$0xff]
    %v5056 = vld [vmem:[#allocation4 + $0x2f8] sm:$0xff]
    %v5057 = vld [vmem:[#allocation4 + $0x300] sm:$0xff]
    %v5058 = vld [vmem:[#allocation4 + $0x308] sm:$0xff]
    %v5059 = vld [vmem:[#allocation4 + $0x310] sm:$0xff]
    %v5060 = vld [vmem:[#allocation4 + $0x318] sm:$0xff]
    %v5061 = vld [vmem:[#allocation4 + $0x320] sm:$0xff]
    %v5062 = vld [vmem:[#allocation4 + $0x328] sm:$0xff]
    %v5063 = vld [vmem:[#allocation4 + $0x330] sm:$0xff]
    %v5064 = vld [vmem:[#allocation4 + $0x338] sm:$0xff]
    %v5065 = vld [vmem:[#allocation4 + $0x340] sm:$0xff]
    %v5066 = vld [vmem:[#allocation4 + $0x348] sm:$0xff]
    %v5067 = vld [vmem:[#allocation4 + $0x350] sm:$0xff]
    %v5068 = vld [vmem:[#allocation4 + $0x358] sm:$0xff]
    %v5069 = vld [vmem:[#allocation4 + $0x360] sm:$0xff]
    %v5070 = vld [vmem:[#allocation4 + $0x368] sm:$0xff]
    %v5071 = vld [vmem:[#allocation4 + $0x370] sm:$0xff]
    %v5072 = vld [vmem:[#allocation4 + $0x378] sm:$0xff]
    %v5073 = vld [vmem:[#allocation4 + $0x380] sm:$0xff]
    %v5074 = vld [vmem:[#allocation4 + $0x388] sm:$0xff]
    %v5075 = vld [vmem:[#allocation4 + $0x390] sm:$0xff]
    %v5076 = vld [vmem:[#allocation4 + $0x398] sm:$0xff]
    %v5077 = vld [vmem:[#allocation4 + $0x3a0] sm:$0xff]
    %v5078 = vld [vmem:[#allocation4 + $0x3a8] sm:$0xff]
    %v5079 = vld [vmem:[#allocation4 + $0x3b0] sm:$0xff]
    %v5080 = vld [vmem:[#allocation4 + $0x3b8] sm:$0xff]
    %v5081 = vld [vmem:[#allocation4 + $0x3c0] sm:$0xff]
    %v5082 = vld [vmem:[#allocation4 + $0x3c8] sm:$0xff]
    %v5083 = vld [vmem:[#allocation4 + $0x3d0] sm:$0xff]
    %v5084 = vld [vmem:[#allocation4 + $0x3d8] sm:$0xff]
    %v5085 = vld [vmem:[#allocation4 + $0x3e0] sm:$0xff]
    %v5086 = vld [vmem:[#allocation4 + $0x3e8] sm:$0xff]
    %v5087 = vld [vmem:[#allocation4 + $0x3f0] sm:$0xff]
    %v5088 = vld [vmem:[#allocation4 + $0x3f8] sm:$0xff]
    %s5089 = scalar_lea.vmem [#allocation6], 1024
    %v5090 = vld [vmem:[%s5089] sm:$0xf]
    %v5091 = vld [vmem:[%s5089 + $0x4] sm:$0xf]
    %v5092 = vld [vmem:[%s5089 + $0x8] sm:$0xf]
    %v5093 = vld [vmem:[%s5089 + $0xc] sm:$0xf]
    %v5094 = vld [vmem:[%s5089 + $0x10] sm:$0xf]
    %v5095 = vld [vmem:[%s5089 + $0x14] sm:$0xf]
    %v5096 = vld [vmem:[%s5089 + $0x18] sm:$0xf]
    %v5097 = vld [vmem:[%s5089 + $0x1c] sm:$0xf]
    %v5098 = vld [vmem:[%s5089 + $0x20] sm:$0xf]
    %v5099 = vld [vmem:[%s5089 + $0x24] sm:$0xf]
    %v5100 = vld [vmem:[%s5089 + $0x28] sm:$0xf]
    %v5101 = vld [vmem:[%s5089 + $0x2c] sm:$0xf]
    %v5102 = vld [vmem:[%s5089 + $0x30] sm:$0xf]
    %v5103 = vld [vmem:[%s5089 + $0x34] sm:$0xf]
    %v5104 = vld [vmem:[%s5089 + $0x38] sm:$0xf]
    %v5105 = vld [vmem:[%s5089 + $0x3c] sm:$0xf]
    %v5106 = vld [vmem:[%s5089 + $0x40] sm:$0xf]
    %v5107 = vld [vmem:[%s5089 + $0x44] sm:$0xf]
    %v5108 = vld [vmem:[%s5089 + $0x48] sm:$0xf]
    %v5109 = vld [vmem:[%s5089 + $0x4c] sm:$0xf]
    %v5110 = vld [vmem:[%s5089 + $0x50] sm:$0xf]
    %v5111 = vld [vmem:[%s5089 + $0x54] sm:$0xf]
    %v5112 = vld [vmem:[%s5089 + $0x58] sm:$0xf]
    %v5113 = vld [vmem:[%s5089 + $0x5c] sm:$0xf]
    %v5114 = vld [vmem:[%s5089 + $0x60] sm:$0xf]
    %v5115 = vld [vmem:[%s5089 + $0x64] sm:$0xf]
    %v5116 = vld [vmem:[%s5089 + $0x68] sm:$0xf]
    %v5117 = vld [vmem:[%s5089 + $0x6c] sm:$0xf]
    %v5118 = vld [vmem:[%s5089 + $0x70] sm:$0xf]
    %v5119 = vld [vmem:[%s5089 + $0x74] sm:$0xf]
    %v5120 = vld [vmem:[%s5089 + $0x78] sm:$0xf]
    %v5121 = vld [vmem:[%s5089 + $0x7c] sm:$0xf]
    %v5122 = vld [vmem:[%s5089 + $0x80] sm:$0xf]
    %v5123 = vld [vmem:[%s5089 + $0x84] sm:$0xf]
    %v5124 = vld [vmem:[%s5089 + $0x88] sm:$0xf]
    %v5125 = vld [vmem:[%s5089 + $0x8c] sm:$0xf]
    %v5126 = vld [vmem:[%s5089 + $0x90] sm:$0xf]
    %v5127 = vld [vmem:[%s5089 + $0x94] sm:$0xf]
    %v5128 = vld [vmem:[%s5089 + $0x98] sm:$0xf]
    %v5129 = vld [vmem:[%s5089 + $0x9c] sm:$0xf]
    %v5130 = vld [vmem:[%s5089 + $0xa0] sm:$0xf]
    %v5131 = vld [vmem:[%s5089 + $0xa4] sm:$0xf]
    %v5132 = vld [vmem:[%s5089 + $0xa8] sm:$0xf]
    %v5133 = vld [vmem:[%s5089 + $0xac] sm:$0xf]
    %v5134 = vld [vmem:[%s5089 + $0xb0] sm:$0xf]
    %v5135 = vld [vmem:[%s5089 + $0xb4] sm:$0xf]
    %v5136 = vld [vmem:[%s5089 + $0xb8] sm:$0xf]
    %v5137 = vld [vmem:[%s5089 + $0xbc] sm:$0xf]
    %v5138 = vld [vmem:[%s5089 + $0xc0] sm:$0xf]
    %v5139 = vld [vmem:[%s5089 + $0xc4] sm:$0xf]
    %v5140 = vld [vmem:[%s5089 + $0xc8] sm:$0xf]
    %v5141 = vld [vmem:[%s5089 + $0xcc] sm:$0xf]
    %v5142 = vld [vmem:[%s5089 + $0xd0] sm:$0xf]
    %v5143 = vld [vmem:[%s5089 + $0xd4] sm:$0xf]
    %v5144 = vld [vmem:[%s5089 + $0xd8] sm:$0xf]
    %v5145 = vld [vmem:[%s5089 + $0xdc] sm:$0xf]
    %v5146 = vld [vmem:[%s5089 + $0xe0] sm:$0xf]
    %v5147 = vld [vmem:[%s5089 + $0xe4] sm:$0xf]
    %v5148 = vld [vmem:[%s5089 + $0xe8] sm:$0xf]
    %v5149 = vld [vmem:[%s5089 + $0xec] sm:$0xf]
    %v5150 = vld [vmem:[%s5089 + $0xf0] sm:$0xf]
    %v5151 = vld [vmem:[%s5089 + $0xf4] sm:$0xf]
    %v5152 = vld [vmem:[%s5089 + $0xf8] sm:$0xf]
    %v5153 = vld [vmem:[%s5089 + $0xfc] sm:$0xf]
    %v5154 = vld [vmem:[%s5089 + $0x100] sm:$0xf]
    %v5155 = vld [vmem:[%s5089 + $0x104] sm:$0xf]
    %v5156 = vld [vmem:[%s5089 + $0x108] sm:$0xf]
    %v5157 = vld [vmem:[%s5089 + $0x10c] sm:$0xf]
    %v5158 = vld [vmem:[%s5089 + $0x110] sm:$0xf]
    %v5159 = vld [vmem:[%s5089 + $0x114] sm:$0xf]
    %v5160 = vld [vmem:[%s5089 + $0x118] sm:$0xf]
    %v5161 = vld [vmem:[%s5089 + $0x11c] sm:$0xf]
    %v5162 = vld [vmem:[%s5089 + $0x120] sm:$0xf]
    %v5163 = vld [vmem:[%s5089 + $0x124] sm:$0xf]
    %v5164 = vld [vmem:[%s5089 + $0x128] sm:$0xf]
    %v5165 = vld [vmem:[%s5089 + $0x12c] sm:$0xf]
    %v5166 = vld [vmem:[%s5089 + $0x130] sm:$0xf]
    %v5167 = vld [vmem:[%s5089 + $0x134] sm:$0xf]
    %v5168 = vld [vmem:[%s5089 + $0x138] sm:$0xf]
    %v5169 = vld [vmem:[%s5089 + $0x13c] sm:$0xf]
    %v5170 = vld [vmem:[%s5089 + $0x140] sm:$0xf]
    %v5171 = vld [vmem:[%s5089 + $0x144] sm:$0xf]
    %v5172 = vld [vmem:[%s5089 + $0x148] sm:$0xf]
    %v5173 = vld [vmem:[%s5089 + $0x14c] sm:$0xf]
    %v5174 = vld [vmem:[%s5089 + $0x150] sm:$0xf]
    %v5175 = vld [vmem:[%s5089 + $0x154] sm:$0xf]
    %v5176 = vld [vmem:[%s5089 + $0x158] sm:$0xf]
    %v5177 = vld [vmem:[%s5089 + $0x15c] sm:$0xf]
    %v5178 = vld [vmem:[%s5089 + $0x160] sm:$0xf]
    %v5179 = vld [vmem:[%s5089 + $0x164] sm:$0xf]
    %v5180 = vld [vmem:[%s5089 + $0x168] sm:$0xf]
    %v5181 = vld [vmem:[%s5089 + $0x16c] sm:$0xf]
    %v5182 = vld [vmem:[%s5089 + $0x170] sm:$0xf]
    %v5183 = vld [vmem:[%s5089 + $0x174] sm:$0xf]
    %v5184 = vld [vmem:[%s5089 + $0x178] sm:$0xf]
    %v5185 = vld [vmem:[%s5089 + $0x17c] sm:$0xf]
    %v5186 = vld [vmem:[%s5089 + $0x180] sm:$0xf]
    %v5187 = vld [vmem:[%s5089 + $0x184] sm:$0xf]
    %v5188 = vld [vmem:[%s5089 + $0x188] sm:$0xf]
    %v5189 = vld [vmem:[%s5089 + $0x18c] sm:$0xf]
    %v5190 = vld [vmem:[%s5089 + $0x190] sm:$0xf]
    %v5191 = vld [vmem:[%s5089 + $0x194] sm:$0xf]
    %v5192 = vld [vmem:[%s5089 + $0x198] sm:$0xf]
    %v5193 = vld [vmem:[%s5089 + $0x19c] sm:$0xf]
    %v5194 = vld [vmem:[%s5089 + $0x1a0] sm:$0xf]
    %v5195 = vld [vmem:[%s5089 + $0x1a4] sm:$0xf]
    %v5196 = vld [vmem:[%s5089 + $0x1a8] sm:$0xf]
    %v5197 = vld [vmem:[%s5089 + $0x1ac] sm:$0xf]
    %v5198 = vld [vmem:[%s5089 + $0x1b0] sm:$0xf]
    %v5199 = vld [vmem:[%s5089 + $0x1b4] sm:$0xf]
    %v5200 = vld [vmem:[%s5089 + $0x1b8] sm:$0xf]
    %v5201 = vld [vmem:[%s5089 + $0x1bc] sm:$0xf]
    %v5202 = vld [vmem:[%s5089 + $0x1c0] sm:$0xf]
    %v5203 = vld [vmem:[%s5089 + $0x1c4] sm:$0xf]
    %v5204 = vld [vmem:[%s5089 + $0x1c8] sm:$0xf]
    %v5205 = vld [vmem:[%s5089 + $0x1cc] sm:$0xf]
    %v5206 = vld [vmem:[%s5089 + $0x1d0] sm:$0xf]
    %v5207 = vld [vmem:[%s5089 + $0x1d4] sm:$0xf]
    %v5208 = vld [vmem:[%s5089 + $0x1d8] sm:$0xf]
    %v5209 = vld [vmem:[%s5089 + $0x1dc] sm:$0xf]
    %v5210 = vld [vmem:[%s5089 + $0x1e0] sm:$0xf]
    %v5211 = vld [vmem:[%s5089 + $0x1e4] sm:$0xf]
    %v5212 = vld [vmem:[%s5089 + $0x1e8] sm:$0xf]
    %v5213 = vld [vmem:[%s5089 + $0x1ec] sm:$0xf]
    %v5214 = vld [vmem:[%s5089 + $0x1f0] sm:$0xf]
    %v5215 = vld [vmem:[%s5089 + $0x1f4] sm:$0xf]
    %v5216 = vld [vmem:[%s5089 + $0x1f8] sm:$0xf]
    %v5217 = vld [vmem:[%s5089 + $0x1fc] sm:$0xf]
    %v5218 = vld [vmem:[%s5089 + $0x200] sm:$0xf]
    %v5219 = vld [vmem:[%s5089 + $0x204] sm:$0xf]
    %v5220 = vld [vmem:[%s5089 + $0x208] sm:$0xf]
    %v5221 = vld [vmem:[%s5089 + $0x20c] sm:$0xf]
    %v5222 = vld [vmem:[%s5089 + $0x210] sm:$0xf]
    %v5223 = vld [vmem:[%s5089 + $0x214] sm:$0xf]
    %v5224 = vld [vmem:[%s5089 + $0x218] sm:$0xf]
    %v5225 = vld [vmem:[%s5089 + $0x21c] sm:$0xf]
    %v5226 = vld [vmem:[%s5089 + $0x220] sm:$0xf]
    %v5227 = vld [vmem:[%s5089 + $0x224] sm:$0xf]
    %v5228 = vld [vmem:[%s5089 + $0x228] sm:$0xf]
    %v5229 = vld [vmem:[%s5089 + $0x22c] sm:$0xf]
    %v5230 = vld [vmem:[%s5089 + $0x230] sm:$0xf]
    %v5231 = vld [vmem:[%s5089 + $0x234] sm:$0xf]
    %v5232 = vld [vmem:[%s5089 + $0x238] sm:$0xf]
    %v5233 = vld [vmem:[%s5089 + $0x23c] sm:$0xf]
    %v5234 = vld [vmem:[%s5089 + $0x240] sm:$0xf]
    %v5235 = vld [vmem:[%s5089 + $0x244] sm:$0xf]
    %v5236 = vld [vmem:[%s5089 + $0x248] sm:$0xf]
    %v5237 = vld [vmem:[%s5089 + $0x24c] sm:$0xf]
    %v5238 = vld [vmem:[%s5089 + $0x250] sm:$0xf]
    %v5239 = vld [vmem:[%s5089 + $0x254] sm:$0xf]
    %v5240 = vld [vmem:[%s5089 + $0x258] sm:$0xf]
    %v5241 = vld [vmem:[%s5089 + $0x25c] sm:$0xf]
    %v5242 = vld [vmem:[%s5089 + $0x260] sm:$0xf]
    %v5243 = vld [vmem:[%s5089 + $0x264] sm:$0xf]
    %v5244 = vld [vmem:[%s5089 + $0x268] sm:$0xf]
    %v5245 = vld [vmem:[%s5089 + $0x26c] sm:$0xf]
    %v5246 = vld [vmem:[%s5089 + $0x270] sm:$0xf]
    %v5247 = vld [vmem:[%s5089 + $0x274] sm:$0xf]
    %v5248 = vld [vmem:[%s5089 + $0x278] sm:$0xf]
    %v5249 = vld [vmem:[%s5089 + $0x27c] sm:$0xf]
    %v5250 = vld [vmem:[%s5089 + $0x280] sm:$0xf]
    %v5251 = vld [vmem:[%s5089 + $0x284] sm:$0xf]
    %v5252 = vld [vmem:[%s5089 + $0x288] sm:$0xf]
    %v5253 = vld [vmem:[%s5089 + $0x28c] sm:$0xf]
    %v5254 = vld [vmem:[%s5089 + $0x290] sm:$0xf]
    %v5255 = vld [vmem:[%s5089 + $0x294] sm:$0xf]
    %v5256 = vld [vmem:[%s5089 + $0x298] sm:$0xf]
    %v5257 = vld [vmem:[%s5089 + $0x29c] sm:$0xf]
    %v5258 = vld [vmem:[%s5089 + $0x2a0] sm:$0xf]
    %v5259 = vld [vmem:[%s5089 + $0x2a4] sm:$0xf]
    %v5260 = vld [vmem:[%s5089 + $0x2a8] sm:$0xf]
    %v5261 = vld [vmem:[%s5089 + $0x2ac] sm:$0xf]
    %v5262 = vld [vmem:[%s5089 + $0x2b0] sm:$0xf]
    %v5263 = vld [vmem:[%s5089 + $0x2b4] sm:$0xf]
    %v5264 = vld [vmem:[%s5089 + $0x2b8] sm:$0xf]
    %v5265 = vld [vmem:[%s5089 + $0x2bc] sm:$0xf]
    %v5266 = vld [vmem:[%s5089 + $0x2c0] sm:$0xf]
    %v5267 = vld [vmem:[%s5089 + $0x2c4] sm:$0xf]
    %v5268 = vld [vmem:[%s5089 + $0x2c8] sm:$0xf]
    %v5269 = vld [vmem:[%s5089 + $0x2cc] sm:$0xf]
    %v5270 = vld [vmem:[%s5089 + $0x2d0] sm:$0xf]
    %v5271 = vld [vmem:[%s5089 + $0x2d4] sm:$0xf]
    %v5272 = vld [vmem:[%s5089 + $0x2d8] sm:$0xf]
    %v5273 = vld [vmem:[%s5089 + $0x2dc] sm:$0xf]
    %v5274 = vld [vmem:[%s5089 + $0x2e0] sm:$0xf]
    %v5275 = vld [vmem:[%s5089 + $0x2e4] sm:$0xf]
    %v5276 = vld [vmem:[%s5089 + $0x2e8] sm:$0xf]
    %v5277 = vld [vmem:[%s5089 + $0x2ec] sm:$0xf]
    %v5278 = vld [vmem:[%s5089 + $0x2f0] sm:$0xf]
    %v5279 = vld [vmem:[%s5089 + $0x2f4] sm:$0xf]
    %v5280 = vld [vmem:[%s5089 + $0x2f8] sm:$0xf]
    %v5281 = vld [vmem:[%s5089 + $0x2fc] sm:$0xf]
    %v5282 = vld [vmem:[%s5089 + $0x300] sm:$0xf]
    %v5283 = vld [vmem:[%s5089 + $0x304] sm:$0xf]
    %v5284 = vld [vmem:[%s5089 + $0x308] sm:$0xf]
    %v5285 = vld [vmem:[%s5089 + $0x30c] sm:$0xf]
    %v5286 = vld [vmem:[%s5089 + $0x310] sm:$0xf]
    %v5287 = vld [vmem:[%s5089 + $0x314] sm:$0xf]
    %v5288 = vld [vmem:[%s5089 + $0x318] sm:$0xf]
    %v5289 = vld [vmem:[%s5089 + $0x31c] sm:$0xf]
    %v5290 = vld [vmem:[%s5089 + $0x320] sm:$0xf]
    %v5291 = vld [vmem:[%s5089 + $0x324] sm:$0xf]
    %v5292 = vld [vmem:[%s5089 + $0x328] sm:$0xf]
    %v5293 = vld [vmem:[%s5089 + $0x32c] sm:$0xf]
    %v5294 = vld [vmem:[%s5089 + $0x330] sm:$0xf]
    %v5295 = vld [vmem:[%s5089 + $0x334] sm:$0xf]
    %v5296 = vld [vmem:[%s5089 + $0x338] sm:$0xf]
    %v5297 = vld [vmem:[%s5089 + $0x33c] sm:$0xf]
    %v5298 = vld [vmem:[%s5089 + $0x340] sm:$0xf]
    %v5299 = vld [vmem:[%s5089 + $0x344] sm:$0xf]
    %v5300 = vld [vmem:[%s5089 + $0x348] sm:$0xf]
    %v5301 = vld [vmem:[%s5089 + $0x34c] sm:$0xf]
    %v5302 = vld [vmem:[%s5089 + $0x350] sm:$0xf]
    %v5303 = vld [vmem:[%s5089 + $0x354] sm:$0xf]
    %v5304 = vld [vmem:[%s5089 + $0x358] sm:$0xf]
    %v5305 = vld [vmem:[%s5089 + $0x35c] sm:$0xf]
    %v5306 = vld [vmem:[%s5089 + $0x360] sm:$0xf]
    %v5307 = vld [vmem:[%s5089 + $0x364] sm:$0xf]
    %v5308 = vld [vmem:[%s5089 + $0x368] sm:$0xf]
    %v5309 = vld [vmem:[%s5089 + $0x36c] sm:$0xf]
    %v5310 = vld [vmem:[%s5089 + $0x370] sm:$0xf]
    %v5311 = vld [vmem:[%s5089 + $0x374] sm:$0xf]
    %v5312 = vld [vmem:[%s5089 + $0x378] sm:$0xf]
    %v5313 = vld [vmem:[%s5089 + $0x37c] sm:$0xf]
    %v5314 = vld [vmem:[%s5089 + $0x380] sm:$0xf]
    %v5315 = vld [vmem:[%s5089 + $0x384] sm:$0xf]
    %v5316 = vld [vmem:[%s5089 + $0x388] sm:$0xf]
    %v5317 = vld [vmem:[%s5089 + $0x38c] sm:$0xf]
    %v5318 = vld [vmem:[%s5089 + $0x390] sm:$0xf]
    %v5319 = vld [vmem:[%s5089 + $0x394] sm:$0xf]
    %v5320 = vld [vmem:[%s5089 + $0x398] sm:$0xf]
    %v5321 = vld [vmem:[%s5089 + $0x39c] sm:$0xf]
    %v5322 = vld [vmem:[%s5089 + $0x3a0] sm:$0xf]
    %v5323 = vld [vmem:[%s5089 + $0x3a4] sm:$0xf]
    %v5324 = vld [vmem:[%s5089 + $0x3a8] sm:$0xf]
    %v5325 = vld [vmem:[%s5089 + $0x3ac] sm:$0xf]
    %v5326 = vld [vmem:[%s5089 + $0x3b0] sm:$0xf]
    %v5327 = vld [vmem:[%s5089 + $0x3b4] sm:$0xf]
    %v5328 = vld [vmem:[%s5089 + $0x3b8] sm:$0xf]
    %v5329 = vld [vmem:[%s5089 + $0x3bc] sm:$0xf]
    %v5330 = vld [vmem:[%s5089 + $0x3c0] sm:$0xf]
    %v5331 = vld [vmem:[%s5089 + $0x3c4] sm:$0xf]
    %v5332 = vld [vmem:[%s5089 + $0x3c8] sm:$0xf]
    %v5333 = vld [vmem:[%s5089 + $0x3cc] sm:$0xf]
    %v5334 = vld [vmem:[%s5089 + $0x3d0] sm:$0xf]
    %v5335 = vld [vmem:[%s5089 + $0x3d4] sm:$0xf]
    %v5336 = vld [vmem:[%s5089 + $0x3d8] sm:$0xf]
    %v5337 = vld [vmem:[%s5089 + $0x3dc] sm:$0xf]
    %v5338 = vld [vmem:[%s5089 + $0x3e0] sm:$0xf]
    %v5339 = vld [vmem:[%s5089 + $0x3e4] sm:$0xf]
    %v5340 = vld [vmem:[%s5089 + $0x3e8] sm:$0xf]
    %v5341 = vld [vmem:[%s5089 + $0x3ec] sm:$0xf]
    %v5342 = vld [vmem:[%s5089 + $0x3f0] sm:$0xf]
    %v5343 = vld [vmem:[%s5089 + $0x3f4] sm:$0xf]
    %v5344 = vld [vmem:[%s5089 + $0x3f8] sm:$0xf]
    %v5345 = vld [vmem:[%s5089 + $0x3fc] sm:$0xf]
    %s5346 = scalar_lea.vmem %s3, 1
    %v5347 = vld [vmem:[%s5346] sm:$0x1]
    %v5349 = vlaneseq
    %v5350 = vshrl.u32 %v5349, 7
    %v5351 = vsub.s32 0, %v5350
    %v5352 = vrot.slane %v5347, %v5351
    %v5482 = vunpack.c.l.b16 %v4961
    %v5483 = vunpack.c.h.b16 %v4961
    %v5484 = vunpack.c.l.b16 %v4962
    %v5485 = vunpack.c.h.b16 %v4962
    %v5486 = vunpack.c.l.b16 %v4963
    %v5487 = vunpack.c.h.b16 %v4963
    %v5488 = vunpack.c.l.b16 %v4964
    %v5489 = vunpack.c.h.b16 %v4964
    %v5490 = vunpack.c.l.b16 %v4965
    %v5491 = vunpack.c.h.b16 %v4965
    %v5492 = vunpack.c.l.b16 %v4966
    %v5493 = vunpack.c.h.b16 %v4966
    %v5494 = vunpack.c.l.b16 %v4967
    %v5495 = vunpack.c.h.b16 %v4967
    %v5496 = vunpack.c.l.b16 %v4968
    %v5497 = vunpack.c.h.b16 %v4968
    %v5498 = vunpack.c.l.b16 %v4969
    %v5499 = vunpack.c.h.b16 %v4969
    %v5500 = vunpack.c.l.b16 %v4970
    %v5501 = vunpack.c.h.b16 %v4970
    %v5502 = vunpack.c.l.b16 %v4971
    %v5503 = vunpack.c.h.b16 %v4971
    %v5504 = vunpack.c.l.b16 %v4972
    %v5505 = vunpack.c.h.b16 %v4972
    %v5506 = vunpack.c.l.b16 %v4973
    %v5507 = vunpack.c.h.b16 %v4973
    %v5508 = vunpack.c.l.b16 %v4974
    %v5509 = vunpack.c.h.b16 %v4974
    %v5510 = vunpack.c.l.b16 %v4975
    %v5511 = vunpack.c.h.b16 %v4975
    %v5512 = vunpack.c.l.b16 %v4976
    %v5513 = vunpack.c.h.b16 %v4976
    %v5514 = vunpack.c.l.b16 %v4977
    %v5515 = vunpack.c.h.b16 %v4977
    %v5516 = vunpack.c.l.b16 %v4978
    %v5517 = vunpack.c.h.b16 %v4978
    %v5518 = vunpack.c.l.b16 %v4979
    %v5519 = vunpack.c.h.b16 %v4979
    %v5520 = vunpack.c.l.b16 %v4980
    %v5521 = vunpack.c.h.b16 %v4980
    %v5522 = vunpack.c.l.b16 %v4981
    %v5523 = vunpack.c.h.b16 %v4981
    %v5524 = vunpack.c.l.b16 %v4982
    %v5525 = vunpack.c.h.b16 %v4982
    %v5526 = vunpack.c.l.b16 %v4983
    %v5527 = vunpack.c.h.b16 %v4983
    %v5528 = vunpack.c.l.b16 %v4984
    %v5529 = vunpack.c.h.b16 %v4984
    %v5530 = vunpack.c.l.b16 %v4985
    %v5531 = vunpack.c.h.b16 %v4985
    %v5532 = vunpack.c.l.b16 %v4986
    %v5533 = vunpack.c.h.b16 %v4986
    %v5534 = vunpack.c.l.b16 %v4987
    %v5535 = vunpack.c.h.b16 %v4987
    %v5536 = vunpack.c.l.b16 %v4988
    %v5537 = vunpack.c.h.b16 %v4988
    %v5538 = vunpack.c.l.b16 %v4989
    %v5539 = vunpack.c.h.b16 %v4989
    %v5540 = vunpack.c.l.b16 %v4990
    %v5541 = vunpack.c.h.b16 %v4990
    %v5542 = vunpack.c.l.b16 %v4991
    %v5543 = vunpack.c.h.b16 %v4991
    %v5544 = vunpack.c.l.b16 %v4992
    %v5545 = vunpack.c.h.b16 %v4992
    %v5546 = vunpack.c.l.b16 %v4993
    %v5547 = vunpack.c.h.b16 %v4993
    %v5548 = vunpack.c.l.b16 %v4994
    %v5549 = vunpack.c.h.b16 %v4994
    %v5550 = vunpack.c.l.b16 %v4995
    %v5551 = vunpack.c.h.b16 %v4995
    %v5552 = vunpack.c.l.b16 %v4996
    %v5553 = vunpack.c.h.b16 %v4996
    %v5554 = vunpack.c.l.b16 %v4997
    %v5555 = vunpack.c.h.b16 %v4997
    %v5556 = vunpack.c.l.b16 %v4998
    %v5557 = vunpack.c.h.b16 %v4998
    %v5558 = vunpack.c.l.b16 %v4999
    %v5559 = vunpack.c.h.b16 %v4999
    %v5560 = vunpack.c.l.b16 %v5000
    %v5561 = vunpack.c.h.b16 %v5000
    %v5562 = vunpack.c.l.b16 %v5001
    %v5563 = vunpack.c.h.b16 %v5001
    %v5564 = vunpack.c.l.b16 %v5002
    %v5565 = vunpack.c.h.b16 %v5002
    %v5566 = vunpack.c.l.b16 %v5003
    %v5567 = vunpack.c.h.b16 %v5003
    %v5568 = vunpack.c.l.b16 %v5004
    %v5569 = vunpack.c.h.b16 %v5004
    %v5570 = vunpack.c.l.b16 %v5005
    %v5571 = vunpack.c.h.b16 %v5005
    %v5572 = vunpack.c.l.b16 %v5006
    %v5573 = vunpack.c.h.b16 %v5006
    %v5574 = vunpack.c.l.b16 %v5007
    %v5575 = vunpack.c.h.b16 %v5007
    %v5576 = vunpack.c.l.b16 %v5008
    %v5577 = vunpack.c.h.b16 %v5008
    %v5578 = vunpack.c.l.b16 %v5009
    %v5579 = vunpack.c.h.b16 %v5009
    %v5580 = vunpack.c.l.b16 %v5010
    %v5581 = vunpack.c.h.b16 %v5010
    %v5582 = vunpack.c.l.b16 %v5011
    %v5583 = vunpack.c.h.b16 %v5011
    %v5584 = vunpack.c.l.b16 %v5012
    %v5585 = vunpack.c.h.b16 %v5012
    %v5586 = vunpack.c.l.b16 %v5013
    %v5587 = vunpack.c.h.b16 %v5013
    %v5588 = vunpack.c.l.b16 %v5014
    %v5589 = vunpack.c.h.b16 %v5014
    %v5590 = vunpack.c.l.b16 %v5015
    %v5591 = vunpack.c.h.b16 %v5015
    %v5592 = vunpack.c.l.b16 %v5016
    %v5593 = vunpack.c.h.b16 %v5016
    %v5594 = vunpack.c.l.b16 %v5017
    %v5595 = vunpack.c.h.b16 %v5017
    %v5596 = vunpack.c.l.b16 %v5018
    %v5597 = vunpack.c.h.b16 %v5018
    %v5598 = vunpack.c.l.b16 %v5019
    %v5599 = vunpack.c.h.b16 %v5019
    %v5600 = vunpack.c.l.b16 %v5020
    %v5601 = vunpack.c.h.b16 %v5020
    %v5602 = vunpack.c.l.b16 %v5021
    %v5603 = vunpack.c.h.b16 %v5021
    %v5604 = vunpack.c.l.b16 %v5022
    %v5605 = vunpack.c.h.b16 %v5022
    %v5606 = vunpack.c.l.b16 %v5023
    %v5607 = vunpack.c.h.b16 %v5023
    %v5608 = vunpack.c.l.b16 %v5024
    %v5609 = vunpack.c.h.b16 %v5024
    %v5610 = vunpack.c.l.b16 %v5025
    %v5611 = vunpack.c.h.b16 %v5025
    %v5612 = vunpack.c.l.b16 %v5026
    %v5613 = vunpack.c.h.b16 %v5026
    %v5614 = vunpack.c.l.b16 %v5027
    %v5615 = vunpack.c.h.b16 %v5027
    %v5616 = vunpack.c.l.b16 %v5028
    %v5617 = vunpack.c.h.b16 %v5028
    %v5618 = vunpack.c.l.b16 %v5029
    %v5619 = vunpack.c.h.b16 %v5029
    %v5620 = vunpack.c.l.b16 %v5030
    %v5621 = vunpack.c.h.b16 %v5030
    %v5622 = vunpack.c.l.b16 %v5031
    %v5623 = vunpack.c.h.b16 %v5031
    %v5624 = vunpack.c.l.b16 %v5032
    %v5625 = vunpack.c.h.b16 %v5032
    %v5626 = vunpack.c.l.b16 %v5033
    %v5627 = vunpack.c.h.b16 %v5033
    %v5628 = vunpack.c.l.b16 %v5034
    %v5629 = vunpack.c.h.b16 %v5034
    %v5630 = vunpack.c.l.b16 %v5035
    %v5631 = vunpack.c.h.b16 %v5035
    %v5632 = vunpack.c.l.b16 %v5036
    %v5633 = vunpack.c.h.b16 %v5036
    %v5634 = vunpack.c.l.b16 %v5037
    %v5635 = vunpack.c.h.b16 %v5037
    %v5636 = vunpack.c.l.b16 %v5038
    %v5637 = vunpack.c.h.b16 %v5038
    %v5638 = vunpack.c.l.b16 %v5039
    %v5639 = vunpack.c.h.b16 %v5039
    %v5640 = vunpack.c.l.b16 %v5040
    %v5641 = vunpack.c.h.b16 %v5040
    %v5642 = vunpack.c.l.b16 %v5041
    %v5643 = vunpack.c.h.b16 %v5041
    %v5644 = vunpack.c.l.b16 %v5042
    %v5645 = vunpack.c.h.b16 %v5042
    %v5646 = vunpack.c.l.b16 %v5043
    %v5647 = vunpack.c.h.b16 %v5043
    %v5648 = vunpack.c.l.b16 %v5044
    %v5649 = vunpack.c.h.b16 %v5044
    %v5650 = vunpack.c.l.b16 %v5045
    %v5651 = vunpack.c.h.b16 %v5045
    %v5652 = vunpack.c.l.b16 %v5046
    %v5653 = vunpack.c.h.b16 %v5046
    %v5654 = vunpack.c.l.b16 %v5047
    %v5655 = vunpack.c.h.b16 %v5047
    %v5656 = vunpack.c.l.b16 %v5048
    %v5657 = vunpack.c.h.b16 %v5048
    %v5658 = vunpack.c.l.b16 %v5049
    %v5659 = vunpack.c.h.b16 %v5049
    %v5660 = vunpack.c.l.b16 %v5050
    %v5661 = vunpack.c.h.b16 %v5050
    %v5662 = vunpack.c.l.b16 %v5051
    %v5663 = vunpack.c.h.b16 %v5051
    %v5664 = vunpack.c.l.b16 %v5052
    %v5665 = vunpack.c.h.b16 %v5052
    %v5666 = vunpack.c.l.b16 %v5053
    %v5667 = vunpack.c.h.b16 %v5053
    %v5668 = vunpack.c.l.b16 %v5054
    %v5669 = vunpack.c.h.b16 %v5054
    %v5670 = vunpack.c.l.b16 %v5055
    %v5671 = vunpack.c.h.b16 %v5055
    %v5672 = vunpack.c.l.b16 %v5056
    %v5673 = vunpack.c.h.b16 %v5056
    %v5674 = vunpack.c.l.b16 %v5057
    %v5675 = vunpack.c.h.b16 %v5057
    %v5676 = vunpack.c.l.b16 %v5058
    %v5677 = vunpack.c.h.b16 %v5058
    %v5678 = vunpack.c.l.b16 %v5059
    %v5679 = vunpack.c.h.b16 %v5059
    %v5680 = vunpack.c.l.b16 %v5060
    %v5681 = vunpack.c.h.b16 %v5060
    %v5682 = vunpack.c.l.b16 %v5061
    %v5683 = vunpack.c.h.b16 %v5061
    %v5684 = vunpack.c.l.b16 %v5062
    %v5685 = vunpack.c.h.b16 %v5062
    %v5686 = vunpack.c.l.b16 %v5063
    %v5687 = vunpack.c.h.b16 %v5063
    %v5688 = vunpack.c.l.b16 %v5064
    %v5689 = vunpack.c.h.b16 %v5064
    %v5690 = vunpack.c.l.b16 %v5065
    %v5691 = vunpack.c.h.b16 %v5065
    %v5692 = vunpack.c.l.b16 %v5066
    %v5693 = vunpack.c.h.b16 %v5066
    %v5694 = vunpack.c.l.b16 %v5067
    %v5695 = vunpack.c.h.b16 %v5067
    %v5696 = vunpack.c.l.b16 %v5068
    %v5697 = vunpack.c.h.b16 %v5068
    %v5698 = vunpack.c.l.b16 %v5069
    %v5699 = vunpack.c.h.b16 %v5069
    %v5700 = vunpack.c.l.b16 %v5070
    %v5701 = vunpack.c.h.b16 %v5070
    %v5702 = vunpack.c.l.b16 %v5071
    %v5703 = vunpack.c.h.b16 %v5071
    %v5704 = vunpack.c.l.b16 %v5072
    %v5705 = vunpack.c.h.b16 %v5072
    %v5706 = vunpack.c.l.b16 %v5073
    %v5707 = vunpack.c.h.b16 %v5073
    %v5708 = vunpack.c.l.b16 %v5074
    %v5709 = vunpack.c.h.b16 %v5074
    %v5710 = vunpack.c.l.b16 %v5075
    %v5711 = vunpack.c.h.b16 %v5075
    %v5712 = vunpack.c.l.b16 %v5076
    %v5713 = vunpack.c.h.b16 %v5076
    %v5714 = vunpack.c.l.b16 %v5077
    %v5715 = vunpack.c.h.b16 %v5077
    %v5716 = vunpack.c.l.b16 %v5078
    %v5717 = vunpack.c.h.b16 %v5078
    %v5718 = vunpack.c.l.b16 %v5079
    %v5719 = vunpack.c.h.b16 %v5079
    %v5720 = vunpack.c.l.b16 %v5080
    %v5721 = vunpack.c.h.b16 %v5080
    %v5722 = vunpack.c.l.b16 %v5081
    %v5723 = vunpack.c.h.b16 %v5081
    %v5724 = vunpack.c.l.b16 %v5082
    %v5725 = vunpack.c.h.b16 %v5082
    %v5726 = vunpack.c.l.b16 %v5083
    %v5727 = vunpack.c.h.b16 %v5083
    %v5728 = vunpack.c.l.b16 %v5084
    %v5729 = vunpack.c.h.b16 %v5084
    %v5730 = vunpack.c.l.b16 %v5085
    %v5731 = vunpack.c.h.b16 %v5085
    %v5732 = vunpack.c.l.b16 %v5086
    %v5733 = vunpack.c.h.b16 %v5086
    %v5734 = vunpack.c.l.b16 %v5087
    %v5735 = vunpack.c.h.b16 %v5087
    %v5736 = vunpack.c.l.b16 %v5088
    %v5737 = vunpack.c.h.b16 %v5088
    %v5738 = vpack.c.b16 %v5498, %v5482
    %v5739 = vpack.c.b16 %v5499, %v5483
    %v5740 = vpack.c.b16 %v5500, %v5484
    %v5741 = vpack.c.b16 %v5501, %v5485
    %v5742 = vpack.c.b16 %v5502, %v5486
    %v5743 = vpack.c.b16 %v5503, %v5487
    %v5744 = vpack.c.b16 %v5504, %v5488
    %v5745 = vpack.c.b16 %v5505, %v5489
    %v5746 = vpack.c.b16 %v5506, %v5490
    %v5747 = vpack.c.b16 %v5507, %v5491
    %v5748 = vpack.c.b16 %v5508, %v5492
    %v5749 = vpack.c.b16 %v5509, %v5493
    %v5750 = vpack.c.b16 %v5510, %v5494
    %v5751 = vpack.c.b16 %v5511, %v5495
    %v5752 = vpack.c.b16 %v5512, %v5496
    %v5753 = vpack.c.b16 %v5513, %v5497
    %v5754 = vpack.c.b16 %v5530, %v5514
    %v5755 = vpack.c.b16 %v5531, %v5515
    %v5756 = vpack.c.b16 %v5532, %v5516
    %v5757 = vpack.c.b16 %v5533, %v5517
    %v5758 = vpack.c.b16 %v5534, %v5518
    %v5759 = vpack.c.b16 %v5535, %v5519
    %v5760 = vpack.c.b16 %v5536, %v5520
    %v5761 = vpack.c.b16 %v5537, %v5521
    %v5762 = vpack.c.b16 %v5538, %v5522
    %v5763 = vpack.c.b16 %v5539, %v5523
    %v5764 = vpack.c.b16 %v5540, %v5524
    %v5765 = vpack.c.b16 %v5541, %v5525
    %v5766 = vpack.c.b16 %v5542, %v5526
    %v5767 = vpack.c.b16 %v5543, %v5527
    %v5768 = vpack.c.b16 %v5544, %v5528
    %v5769 = vpack.c.b16 %v5545, %v5529
    %v5770 = vpack.c.b16 %v5562, %v5546
    %v5771 = vpack.c.b16 %v5563, %v5547
    %v5772 = vpack.c.b16 %v5564, %v5548
    %v5773 = vpack.c.b16 %v5565, %v5549
    %v5774 = vpack.c.b16 %v5566, %v5550
    %v5775 = vpack.c.b16 %v5567, %v5551
    %v5776 = vpack.c.b16 %v5568, %v5552
    %v5777 = vpack.c.b16 %v5569, %v5553
    %v5778 = vpack.c.b16 %v5570, %v5554
    %v5779 = vpack.c.b16 %v5571, %v5555
    %v5780 = vpack.c.b16 %v5572, %v5556
    %v5781 = vpack.c.b16 %v5573, %v5557
    %v5782 = vpack.c.b16 %v5574, %v5558
    %v5783 = vpack.c.b16 %v5575, %v5559
    %v5784 = vpack.c.b16 %v5576, %v5560
    %v5785 = vpack.c.b16 %v5577, %v5561
    %v5786 = vpack.c.b16 %v5594, %v5578
    %v5787 = vpack.c.b16 %v5595, %v5579
    %v5788 = vpack.c.b16 %v5596, %v5580
    %v5789 = vpack.c.b16 %v5597, %v5581
    %v5790 = vpack.c.b16 %v5598, %v5582
    %v5791 = vpack.c.b16 %v5599, %v5583
    %v5792 = vpack.c.b16 %v5600, %v5584
    %v5793 = vpack.c.b16 %v5601, %v5585
    %v5794 = vpack.c.b16 %v5602, %v5586
    %v5795 = vpack.c.b16 %v5603, %v5587
    %v5796 = vpack.c.b16 %v5604, %v5588
    %v5797 = vpack.c.b16 %v5605, %v5589
    %v5798 = vpack.c.b16 %v5606, %v5590
    %v5799 = vpack.c.b16 %v5607, %v5591
    %v5800 = vpack.c.b16 %v5608, %v5592
    %v5801 = vpack.c.b16 %v5609, %v5593
    %v5802 = vpack.c.b16 %v5626, %v5610
    %v5803 = vpack.c.b16 %v5627, %v5611
    %v5804 = vpack.c.b16 %v5628, %v5612
    %v5805 = vpack.c.b16 %v5629, %v5613
    %v5806 = vpack.c.b16 %v5630, %v5614
    %v5807 = vpack.c.b16 %v5631, %v5615
    %v5808 = vpack.c.b16 %v5632, %v5616
    %v5809 = vpack.c.b16 %v5633, %v5617
    %v5810 = vpack.c.b16 %v5634, %v5618
    %v5811 = vpack.c.b16 %v5635, %v5619
    %v5812 = vpack.c.b16 %v5636, %v5620
    %v5813 = vpack.c.b16 %v5637, %v5621
    %v5814 = vpack.c.b16 %v5638, %v5622
    %v5815 = vpack.c.b16 %v5639, %v5623
    %v5816 = vpack.c.b16 %v5640, %v5624
    %v5817 = vpack.c.b16 %v5641, %v5625
    %v5818 = vpack.c.b16 %v5658, %v5642
    %v5819 = vpack.c.b16 %v5659, %v5643
    %v5820 = vpack.c.b16 %v5660, %v5644
    %v5821 = vpack.c.b16 %v5661, %v5645
    %v5822 = vpack.c.b16 %v5662, %v5646
    %v5823 = vpack.c.b16 %v5663, %v5647
    %v5824 = vpack.c.b16 %v5664, %v5648
    %v5825 = vpack.c.b16 %v5665, %v5649
    %v5826 = vpack.c.b16 %v5666, %v5650
    %v5827 = vpack.c.b16 %v5667, %v5651
    %v5828 = vpack.c.b16 %v5668, %v5652
    %v5829 = vpack.c.b16 %v5669, %v5653
    %v5830 = vpack.c.b16 %v5670, %v5654
    %v5831 = vpack.c.b16 %v5671, %v5655
    %v5832 = vpack.c.b16 %v5672, %v5656
    %v5833 = vpack.c.b16 %v5673, %v5657
    %v5834 = vpack.c.b16 %v5690, %v5674
    %v5835 = vpack.c.b16 %v5691, %v5675
    %v5836 = vpack.c.b16 %v5692, %v5676
    %v5837 = vpack.c.b16 %v5693, %v5677
    %v5838 = vpack.c.b16 %v5694, %v5678
    %v5839 = vpack.c.b16 %v5695, %v5679
    %v5840 = vpack.c.b16 %v5696, %v5680
    %v5841 = vpack.c.b16 %v5697, %v5681
    %v5842 = vpack.c.b16 %v5698, %v5682
    %v5843 = vpack.c.b16 %v5699, %v5683
    %v5844 = vpack.c.b16 %v5700, %v5684
    %v5845 = vpack.c.b16 %v5701, %v5685
    %v5846 = vpack.c.b16 %v5702, %v5686
    %v5847 = vpack.c.b16 %v5703, %v5687
    %v5848 = vpack.c.b16 %v5704, %v5688
    %v5849 = vpack.c.b16 %v5705, %v5689
    %v5850 = vpack.c.b16 %v5722, %v5706
    %v5851 = vpack.c.b16 %v5723, %v5707
    %v5852 = vpack.c.b16 %v5724, %v5708
    %v5853 = vpack.c.b16 %v5725, %v5709
    %v5854 = vpack.c.b16 %v5726, %v5710
    %v5855 = vpack.c.b16 %v5727, %v5711
    %v5856 = vpack.c.b16 %v5728, %v5712
    %v5857 = vpack.c.b16 %v5729, %v5713
    %v5858 = vpack.c.b16 %v5730, %v5714
    %v5859 = vpack.c.b16 %v5731, %v5715
    %v5860 = vpack.c.b16 %v5732, %v5716
    %v5861 = vpack.c.b16 %v5733, %v5717
    %v5862 = vpack.c.b16 %v5734, %v5718
    %v5863 = vpack.c.b16 %v5735, %v5719
    %v5864 = vpack.c.b16 %v5736, %v5720
    %v5865 = vpack.c.b16 %v5737, %v5721
    %v6250 = vunpack.c.l.b16 %v5090
    %v6251 = vunpack.c.l.b16 %v5091
    %v6252 = vunpack.c.l.b16 %v5092
    %v6253 = vunpack.c.l.b16 %v5093
    %v6254 = vunpack.c.l.b16 %v5094
    %v6255 = vunpack.c.l.b16 %v5095
    %v6256 = vunpack.c.l.b16 %v5096
    %v6257 = vunpack.c.l.b16 %v5097
    %v6258 = vunpack.c.l.b16 %v5098
    %v6259 = vunpack.c.l.b16 %v5099
    %v6260 = vunpack.c.l.b16 %v5100
    %v6261 = vunpack.c.l.b16 %v5101
    %v6262 = vunpack.c.l.b16 %v5102
    %v6263 = vunpack.c.l.b16 %v5103
    %v6264 = vunpack.c.l.b16 %v5104
    %v6265 = vunpack.c.l.b16 %v5105
    %v6266 = vunpack.c.l.b16 %v5106
    %v6267 = vunpack.c.l.b16 %v5107
    %v6268 = vunpack.c.l.b16 %v5108
    %v6269 = vunpack.c.l.b16 %v5109
    %v6270 = vunpack.c.l.b16 %v5110
    %v6271 = vunpack.c.l.b16 %v5111
    %v6272 = vunpack.c.l.b16 %v5112
    %v6273 = vunpack.c.l.b16 %v5113
    %v6274 = vunpack.c.l.b16 %v5114
    %v6275 = vunpack.c.l.b16 %v5115
    %v6276 = vunpack.c.l.b16 %v5116
    %v6277 = vunpack.c.l.b16 %v5117
    %v6278 = vunpack.c.l.b16 %v5118
    %v6279 = vunpack.c.l.b16 %v5119
    %v6280 = vunpack.c.l.b16 %v5120
    %v6281 = vunpack.c.l.b16 %v5121
    %v6282 = vunpack.c.l.b16 %v5122
    %v6283 = vunpack.c.l.b16 %v5123
    %v6284 = vunpack.c.l.b16 %v5124
    %v6285 = vunpack.c.l.b16 %v5125
    %v6286 = vunpack.c.l.b16 %v5126
    %v6287 = vunpack.c.l.b16 %v5127
    %v6288 = vunpack.c.l.b16 %v5128
    %v6289 = vunpack.c.l.b16 %v5129
    %v6290 = vunpack.c.l.b16 %v5130
    %v6291 = vunpack.c.l.b16 %v5131
    %v6292 = vunpack.c.l.b16 %v5132
    %v6293 = vunpack.c.l.b16 %v5133
    %v6294 = vunpack.c.l.b16 %v5134
    %v6295 = vunpack.c.l.b16 %v5135
    %v6296 = vunpack.c.l.b16 %v5136
    %v6297 = vunpack.c.l.b16 %v5137
    %v6298 = vunpack.c.l.b16 %v5138
    %v6299 = vunpack.c.l.b16 %v5139
    %v6300 = vunpack.c.l.b16 %v5140
    %v6301 = vunpack.c.l.b16 %v5141
    %v6302 = vunpack.c.l.b16 %v5142
    %v6303 = vunpack.c.l.b16 %v5143
    %v6304 = vunpack.c.l.b16 %v5144
    %v6305 = vunpack.c.l.b16 %v5145
    %v6306 = vunpack.c.l.b16 %v5146
    %v6307 = vunpack.c.l.b16 %v5147
    %v6308 = vunpack.c.l.b16 %v5148
    %v6309 = vunpack.c.l.b16 %v5149
    %v6310 = vunpack.c.l.b16 %v5150
    %v6311 = vunpack.c.l.b16 %v5151
    %v6312 = vunpack.c.l.b16 %v5152
    %v6313 = vunpack.c.l.b16 %v5153
    %v6314 = vunpack.c.l.b16 %v5154
    %v6315 = vunpack.c.l.b16 %v5155
    %v6316 = vunpack.c.l.b16 %v5156
    %v6317 = vunpack.c.l.b16 %v5157
    %v6318 = vunpack.c.l.b16 %v5158
    %v6319 = vunpack.c.l.b16 %v5159
    %v6320 = vunpack.c.l.b16 %v5160
    %v6321 = vunpack.c.l.b16 %v5161
    %v6322 = vunpack.c.l.b16 %v5162
    %v6323 = vunpack.c.l.b16 %v5163
    %v6324 = vunpack.c.l.b16 %v5164
    %v6325 = vunpack.c.l.b16 %v5165
    %v6326 = vunpack.c.l.b16 %v5166
    %v6327 = vunpack.c.l.b16 %v5167
    %v6328 = vunpack.c.l.b16 %v5168
    %v6329 = vunpack.c.l.b16 %v5169
    %v6330 = vunpack.c.l.b16 %v5170
    %v6331 = vunpack.c.l.b16 %v5171
    %v6332 = vunpack.c.l.b16 %v5172
    %v6333 = vunpack.c.l.b16 %v5173
    %v6334 = vunpack.c.l.b16 %v5174
    %v6335 = vunpack.c.l.b16 %v5175
    %v6336 = vunpack.c.l.b16 %v5176
    %v6337 = vunpack.c.l.b16 %v5177
    %v6338 = vunpack.c.l.b16 %v5178
    %v6339 = vunpack.c.l.b16 %v5179
    %v6340 = vunpack.c.l.b16 %v5180
    %v6341 = vunpack.c.l.b16 %v5181
    %v6342 = vunpack.c.l.b16 %v5182
    %v6343 = vunpack.c.l.b16 %v5183
    %v6344 = vunpack.c.l.b16 %v5184
    %v6345 = vunpack.c.l.b16 %v5185
    %v6346 = vunpack.c.l.b16 %v5186
    %v6347 = vunpack.c.l.b16 %v5187
    %v6348 = vunpack.c.l.b16 %v5188
    %v6349 = vunpack.c.l.b16 %v5189
    %v6350 = vunpack.c.l.b16 %v5190
    %v6351 = vunpack.c.l.b16 %v5191
    %v6352 = vunpack.c.l.b16 %v5192
    %v6353 = vunpack.c.l.b16 %v5193
    %v6354 = vunpack.c.l.b16 %v5194
    %v6355 = vunpack.c.l.b16 %v5195
    %v6356 = vunpack.c.l.b16 %v5196
    %v6357 = vunpack.c.l.b16 %v5197
    %v6358 = vunpack.c.l.b16 %v5198
    %v6359 = vunpack.c.l.b16 %v5199
    %v6360 = vunpack.c.l.b16 %v5200
    %v6361 = vunpack.c.l.b16 %v5201
    %v6362 = vunpack.c.l.b16 %v5202
    %v6363 = vunpack.c.l.b16 %v5203
    %v6364 = vunpack.c.l.b16 %v5204
    %v6365 = vunpack.c.l.b16 %v5205
    %v6366 = vunpack.c.l.b16 %v5206
    %v6367 = vunpack.c.l.b16 %v5207
    %v6368 = vunpack.c.l.b16 %v5208
    %v6369 = vunpack.c.l.b16 %v5209
    %v6370 = vunpack.c.l.b16 %v5210
    %v6371 = vunpack.c.l.b16 %v5211
    %v6372 = vunpack.c.l.b16 %v5212
    %v6373 = vunpack.c.l.b16 %v5213
    %v6374 = vunpack.c.l.b16 %v5214
    %v6375 = vunpack.c.l.b16 %v5215
    %v6376 = vunpack.c.l.b16 %v5216
    %v6377 = vunpack.c.l.b16 %v5217
    %v6378 = vunpack.c.l.b16 %v5218
    %v6379 = vunpack.c.l.b16 %v5219
    %v6380 = vunpack.c.l.b16 %v5220
    %v6381 = vunpack.c.l.b16 %v5221
    %v6382 = vunpack.c.l.b16 %v5222
    %v6383 = vunpack.c.l.b16 %v5223
    %v6384 = vunpack.c.l.b16 %v5224
    %v6385 = vunpack.c.l.b16 %v5225
    %v6386 = vunpack.c.l.b16 %v5226
    %v6387 = vunpack.c.l.b16 %v5227
    %v6388 = vunpack.c.l.b16 %v5228
    %v6389 = vunpack.c.l.b16 %v5229
    %v6390 = vunpack.c.l.b16 %v5230
    %v6391 = vunpack.c.l.b16 %v5231
    %v6392 = vunpack.c.l.b16 %v5232
    %v6393 = vunpack.c.l.b16 %v5233
    %v6394 = vunpack.c.l.b16 %v5234
    %v6395 = vunpack.c.l.b16 %v5235
    %v6396 = vunpack.c.l.b16 %v5236
    %v6397 = vunpack.c.l.b16 %v5237
    %v6398 = vunpack.c.l.b16 %v5238
    %v6399 = vunpack.c.l.b16 %v5239
    %v6400 = vunpack.c.l.b16 %v5240
    %v6401 = vunpack.c.l.b16 %v5241
    %v6402 = vunpack.c.l.b16 %v5242
    %v6403 = vunpack.c.l.b16 %v5243
    %v6404 = vunpack.c.l.b16 %v5244
    %v6405 = vunpack.c.l.b16 %v5245
    %v6406 = vunpack.c.l.b16 %v5246
    %v6407 = vunpack.c.l.b16 %v5247
    %v6408 = vunpack.c.l.b16 %v5248
    %v6409 = vunpack.c.l.b16 %v5249
    %v6410 = vunpack.c.l.b16 %v5250
    %v6411 = vunpack.c.l.b16 %v5251
    %v6412 = vunpack.c.l.b16 %v5252
    %v6413 = vunpack.c.l.b16 %v5253
    %v6414 = vunpack.c.l.b16 %v5254
    %v6415 = vunpack.c.l.b16 %v5255
    %v6416 = vunpack.c.l.b16 %v5256
    %v6417 = vunpack.c.l.b16 %v5257
    %v6418 = vunpack.c.l.b16 %v5258
    %v6419 = vunpack.c.l.b16 %v5259
    %v6420 = vunpack.c.l.b16 %v5260
    %v6421 = vunpack.c.l.b16 %v5261
    %v6422 = vunpack.c.l.b16 %v5262
    %v6423 = vunpack.c.l.b16 %v5263
    %v6424 = vunpack.c.l.b16 %v5264
    %v6425 = vunpack.c.l.b16 %v5265
    %v6426 = vunpack.c.l.b16 %v5266
    %v6427 = vunpack.c.l.b16 %v5267
    %v6428 = vunpack.c.l.b16 %v5268
    %v6429 = vunpack.c.l.b16 %v5269
    %v6430 = vunpack.c.l.b16 %v5270
    %v6431 = vunpack.c.l.b16 %v5271
    %v6432 = vunpack.c.l.b16 %v5272
    %v6433 = vunpack.c.l.b16 %v5273
    %v6434 = vunpack.c.l.b16 %v5274
    %v6435 = vunpack.c.l.b16 %v5275
    %v6436 = vunpack.c.l.b16 %v5276
    %v6437 = vunpack.c.l.b16 %v5277
    %v6438 = vunpack.c.l.b16 %v5278
    %v6439 = vunpack.c.l.b16 %v5279
    %v6440 = vunpack.c.l.b16 %v5280
    %v6441 = vunpack.c.l.b16 %v5281
    %v6442 = vunpack.c.l.b16 %v5282
    %v6443 = vunpack.c.l.b16 %v5283
    %v6444 = vunpack.c.l.b16 %v5284
    %v6445 = vunpack.c.l.b16 %v5285
    %v6446 = vunpack.c.l.b16 %v5286
    %v6447 = vunpack.c.l.b16 %v5287
    %v6448 = vunpack.c.l.b16 %v5288
    %v6449 = vunpack.c.l.b16 %v5289
    %v6450 = vunpack.c.l.b16 %v5290
    %v6451 = vunpack.c.l.b16 %v5291
    %v6452 = vunpack.c.l.b16 %v5292
    %v6453 = vunpack.c.l.b16 %v5293
    %v6454 = vunpack.c.l.b16 %v5294
    %v6455 = vunpack.c.l.b16 %v5295
    %v6456 = vunpack.c.l.b16 %v5296
    %v6457 = vunpack.c.l.b16 %v5297
    %v6458 = vunpack.c.l.b16 %v5298
    %v6459 = vunpack.c.l.b16 %v5299
    %v6460 = vunpack.c.l.b16 %v5300
    %v6461 = vunpack.c.l.b16 %v5301
    %v6462 = vunpack.c.l.b16 %v5302
    %v6463 = vunpack.c.l.b16 %v5303
    %v6464 = vunpack.c.l.b16 %v5304
    %v6465 = vunpack.c.l.b16 %v5305
    %v6466 = vunpack.c.l.b16 %v5306
    %v6467 = vunpack.c.l.b16 %v5307
    %v6468 = vunpack.c.l.b16 %v5308
    %v6469 = vunpack.c.l.b16 %v5309
    %v6470 = vunpack.c.l.b16 %v5310
    %v6471 = vunpack.c.l.b16 %v5311
    %v6472 = vunpack.c.l.b16 %v5312
    %v6473 = vunpack.c.l.b16 %v5313
    %v6474 = vunpack.c.l.b16 %v5314
    %v6475 = vunpack.c.l.b16 %v5315
    %v6476 = vunpack.c.l.b16 %v5316
    %v6477 = vunpack.c.l.b16 %v5317
    %v6478 = vunpack.c.l.b16 %v5318
    %v6479 = vunpack.c.l.b16 %v5319
    %v6480 = vunpack.c.l.b16 %v5320
    %v6481 = vunpack.c.l.b16 %v5321
    %v6482 = vunpack.c.l.b16 %v5322
    %v6483 = vunpack.c.l.b16 %v5323
    %v6484 = vunpack.c.l.b16 %v5324
    %v6485 = vunpack.c.l.b16 %v5325
    %v6486 = vunpack.c.l.b16 %v5326
    %v6487 = vunpack.c.l.b16 %v5327
    %v6488 = vunpack.c.l.b16 %v5328
    %v6489 = vunpack.c.l.b16 %v5329
    %v6490 = vunpack.c.l.b16 %v5330
    %v6491 = vunpack.c.l.b16 %v5331
    %v6492 = vunpack.c.l.b16 %v5332
    %v6493 = vunpack.c.l.b16 %v5333
    %v6494 = vunpack.c.l.b16 %v5334
    %v6495 = vunpack.c.l.b16 %v5335
    %v6496 = vunpack.c.l.b16 %v5336
    %v6497 = vunpack.c.l.b16 %v5337
    %v6498 = vunpack.c.l.b16 %v5338
    %v6499 = vunpack.c.l.b16 %v5339
    %v6500 = vunpack.c.l.b16 %v5340
    %v6501 = vunpack.c.l.b16 %v5341
    %v6502 = vunpack.c.l.b16 %v5342
    %v6503 = vunpack.c.l.b16 %v5343
    %v6504 = vunpack.c.l.b16 %v5344
    %v6505 = vunpack.c.l.b16 %v5345
    %v6506 = vpack.c.b16 %v6251, %v6250
    %v6507 = vpack.c.b16 %v6253, %v6252
    %v6508 = vpack.c.b16 %v6255, %v6254
    %v6509 = vpack.c.b16 %v6257, %v6256
    %v6510 = vpack.c.b16 %v6259, %v6258
    %v6511 = vpack.c.b16 %v6261, %v6260
    %v6512 = vpack.c.b16 %v6263, %v6262
    %v6513 = vpack.c.b16 %v6265, %v6264
    %v6514 = vpack.c.b16 %v6267, %v6266
    %v6515 = vpack.c.b16 %v6269, %v6268
    %v6516 = vpack.c.b16 %v6271, %v6270
    %v6517 = vpack.c.b16 %v6273, %v6272
    %v6518 = vpack.c.b16 %v6275, %v6274
    %v6519 = vpack.c.b16 %v6277, %v6276
    %v6520 = vpack.c.b16 %v6279, %v6278
    %v6521 = vpack.c.b16 %v6281, %v6280
    %v6522 = vpack.c.b16 %v6283, %v6282
    %v6523 = vpack.c.b16 %v6285, %v6284
    %v6524 = vpack.c.b16 %v6287, %v6286
    %v6525 = vpack.c.b16 %v6289, %v6288
    %v6526 = vpack.c.b16 %v6291, %v6290
    %v6527 = vpack.c.b16 %v6293, %v6292
    %v6528 = vpack.c.b16 %v6295, %v6294
    %v6529 = vpack.c.b16 %v6297, %v6296
    %v6530 = vpack.c.b16 %v6299, %v6298
    %v6531 = vpack.c.b16 %v6301, %v6300
    %v6532 = vpack.c.b16 %v6303, %v6302
    %v6533 = vpack.c.b16 %v6305, %v6304
    %v6534 = vpack.c.b16 %v6307, %v6306
    %v6535 = vpack.c.b16 %v6309, %v6308
    %v6536 = vpack.c.b16 %v6311, %v6310
    %v6537 = vpack.c.b16 %v6313, %v6312
    %v6538 = vpack.c.b16 %v6315, %v6314
    %v6539 = vpack.c.b16 %v6317, %v6316
    %v6540 = vpack.c.b16 %v6319, %v6318
    %v6541 = vpack.c.b16 %v6321, %v6320
    %v6542 = vpack.c.b16 %v6323, %v6322
    %v6543 = vpack.c.b16 %v6325, %v6324
    %v6544 = vpack.c.b16 %v6327, %v6326
    %v6545 = vpack.c.b16 %v6329, %v6328
    %v6546 = vpack.c.b16 %v6331, %v6330
    %v6547 = vpack.c.b16 %v6333, %v6332
    %v6548 = vpack.c.b16 %v6335, %v6334
    %v6549 = vpack.c.b16 %v6337, %v6336
    %v6550 = vpack.c.b16 %v6339, %v6338
    %v6551 = vpack.c.b16 %v6341, %v6340
    %v6552 = vpack.c.b16 %v6343, %v6342
    %v6553 = vpack.c.b16 %v6345, %v6344
    %v6554 = vpack.c.b16 %v6347, %v6346
    %v6555 = vpack.c.b16 %v6349, %v6348
    %v6556 = vpack.c.b16 %v6351, %v6350
    %v6557 = vpack.c.b16 %v6353, %v6352
    %v6558 = vpack.c.b16 %v6355, %v6354
    %v6559 = vpack.c.b16 %v6357, %v6356
    %v6560 = vpack.c.b16 %v6359, %v6358
    %v6561 = vpack.c.b16 %v6361, %v6360
    %v6562 = vpack.c.b16 %v6363, %v6362
    %v6563 = vpack.c.b16 %v6365, %v6364
    %v6564 = vpack.c.b16 %v6367, %v6366
    %v6565 = vpack.c.b16 %v6369, %v6368
    %v6566 = vpack.c.b16 %v6371, %v6370
    %v6567 = vpack.c.b16 %v6373, %v6372
    %v6568 = vpack.c.b16 %v6375, %v6374
    %v6569 = vpack.c.b16 %v6377, %v6376
    %v6570 = vpack.c.b16 %v6379, %v6378
    %v6571 = vpack.c.b16 %v6381, %v6380
    %v6572 = vpack.c.b16 %v6383, %v6382
    %v6573 = vpack.c.b16 %v6385, %v6384
    %v6574 = vpack.c.b16 %v6387, %v6386
    %v6575 = vpack.c.b16 %v6389, %v6388
    %v6576 = vpack.c.b16 %v6391, %v6390
    %v6577 = vpack.c.b16 %v6393, %v6392
    %v6578 = vpack.c.b16 %v6395, %v6394
    %v6579 = vpack.c.b16 %v6397, %v6396
    %v6580 = vpack.c.b16 %v6399, %v6398
    %v6581 = vpack.c.b16 %v6401, %v6400
    %v6582 = vpack.c.b16 %v6403, %v6402
    %v6583 = vpack.c.b16 %v6405, %v6404
    %v6584 = vpack.c.b16 %v6407, %v6406
    %v6585 = vpack.c.b16 %v6409, %v6408
    %v6586 = vpack.c.b16 %v6411, %v6410
    %v6587 = vpack.c.b16 %v6413, %v6412
    %v6588 = vpack.c.b16 %v6415, %v6414
    %v6589 = vpack.c.b16 %v6417, %v6416
    %v6590 = vpack.c.b16 %v6419, %v6418
    %v6591 = vpack.c.b16 %v6421, %v6420
    %v6592 = vpack.c.b16 %v6423, %v6422
    %v6593 = vpack.c.b16 %v6425, %v6424
    %v6594 = vpack.c.b16 %v6427, %v6426
    %v6595 = vpack.c.b16 %v6429, %v6428
    %v6596 = vpack.c.b16 %v6431, %v6430
    %v6597 = vpack.c.b16 %v6433, %v6432
    %v6598 = vpack.c.b16 %v6435, %v6434
    %v6599 = vpack.c.b16 %v6437, %v6436
    %v6600 = vpack.c.b16 %v6439, %v6438
    %v6601 = vpack.c.b16 %v6441, %v6440
    %v6602 = vpack.c.b16 %v6443, %v6442
    %v6603 = vpack.c.b16 %v6445, %v6444
    %v6604 = vpack.c.b16 %v6447, %v6446
    %v6605 = vpack.c.b16 %v6449, %v6448
    %v6606 = vpack.c.b16 %v6451, %v6450
    %v6607 = vpack.c.b16 %v6453, %v6452
    %v6608 = vpack.c.b16 %v6455, %v6454
    %v6609 = vpack.c.b16 %v6457, %v6456
    %v6610 = vpack.c.b16 %v6459, %v6458
    %v6611 = vpack.c.b16 %v6461, %v6460
    %v6612 = vpack.c.b16 %v6463, %v6462
    %v6613 = vpack.c.b16 %v6465, %v6464
    %v6614 = vpack.c.b16 %v6467, %v6466
    %v6615 = vpack.c.b16 %v6469, %v6468
    %v6616 = vpack.c.b16 %v6471, %v6470
    %v6617 = vpack.c.b16 %v6473, %v6472
    %v6618 = vpack.c.b16 %v6475, %v6474
    %v6619 = vpack.c.b16 %v6477, %v6476
    %v6620 = vpack.c.b16 %v6479, %v6478
    %v6621 = vpack.c.b16 %v6481, %v6480
    %v6622 = vpack.c.b16 %v6483, %v6482
    %v6623 = vpack.c.b16 %v6485, %v6484
    %v6624 = vpack.c.b16 %v6487, %v6486
    %v6625 = vpack.c.b16 %v6489, %v6488
    %v6626 = vpack.c.b16 %v6491, %v6490
    %v6627 = vpack.c.b16 %v6493, %v6492
    %v6628 = vpack.c.b16 %v6495, %v6494
    %v6629 = vpack.c.b16 %v6497, %v6496
    %v6630 = vpack.c.b16 %v6499, %v6498
    %v6631 = vpack.c.b16 %v6501, %v6500
    %v6632 = vpack.c.b16 %v6503, %v6502
    %v6633 = vpack.c.b16 %v6505, %v6504
    %6762 = vmatprep.subr.bf16.mxu0 0
    %6763 = vmatpush1.bf16.msra.mxu0 %v6506
    %6764 = vmatprep.subr.bf16.mxu0 0
    %6765 = vmatpush1.bf16.msra.mxu0 %v6507
    %6766 = vmatprep.subr.bf16.mxu0 0
    %6767 = vmatpush1.bf16.msra.mxu0 %v6508
    %6768 = vmatprep.subr.bf16.mxu0 0
    %6769 = vmatpush1.bf16.msra.mxu0 %v6509
    %6770 = vmatprep.subr.bf16.mxu0 0
    %6771 = vmatpush1.bf16.msra.mxu0 %v6510
    %6772 = vmatprep.subr.bf16.mxu0 0
    %6773 = vmatpush1.bf16.msra.mxu0 %v6511
    %6774 = vmatprep.subr.bf16.mxu0 0
    %6775 = vmatpush1.bf16.msra.mxu0 %v6512
    %6776 = vmatprep.subr.bf16.mxu0 0
    %6777 = vmatpush1.bf16.msra.mxu0 %v6513
    %6778 = vmatprep.subr.bf16.mxu0 0
    %6779 = vmatpush1.bf16.msra.mxu0 %v6514
    %6780 = vmatprep.subr.bf16.mxu0 0
    %6781 = vmatpush1.bf16.msra.mxu0 %v6515
    %6782 = vmatprep.subr.bf16.mxu0 0
    %6783 = vmatpush1.bf16.msra.mxu0 %v6516
    %6784 = vmatprep.subr.bf16.mxu0 0
    %6785 = vmatpush1.bf16.msra.mxu0 %v6517
    %6786 = vmatprep.subr.bf16.mxu0 0
    %6787 = vmatpush1.bf16.msra.mxu0 %v6518
    %6788 = vmatprep.subr.bf16.mxu0 0
    %6789 = vmatpush1.bf16.msra.mxu0 %v6519
    %6790 = vmatprep.subr.bf16.mxu0 0
    %6791 = vmatpush1.bf16.msra.mxu0 %v6520
    %6792 = vmatprep.subr.bf16.mxu0 0
    %6793 = vmatpush1.bf16.msra.mxu0 %v6521
    %6794 = vmatprep.mubr.bf16.mxu0 %v5739
    %6795 = vmatmul.mubr.bf16.gmra.mrb[0].mxu0 %v5738
    %v6796 = vpop.f32.mrb[0].mxu0
    %v6797 = vadd.f32 %v5352, %v6796
    %v6798 = vpop.f32.mrb[0].mxu0
    %v6799 = vpop.f32.mrb[0].mxu0
    %v6800 = vadd.f32 %v5352, %v6799
    %v6801 = vpop.f32.mrb[0].mxu0
    %6802 = vmatprep.mubr.bf16.mxu0 %v5755
    %6803 = vmatmul.mubr.bf16.gmra.mrb[0].mxu0 %v5754
    %v6804 = vpop.f32.mrb[0].mxu0
    %v6805 = vadd.f32 %v5352, %v6804
    %v6806 = vpop.f32.mrb[0].mxu0
    %v6807 = vpop.f32.mrb[0].mxu0
    %v6808 = vadd.f32 %v5352, %v6807
    %v6809 = vpop.f32.mrb[0].mxu0
    %6810 = vmatprep.mubr.bf16.mxu0 %v5771
    %6811 = vmatmul.mubr.bf16.gmra.mrb[0].mxu0 %v5770
    %v6812 = vpop.f32.mrb[0].mxu0
    %v6813 = vadd.f32 %v5352, %v6812
    %v6814 = vpop.f32.mrb[0].mxu0
    %v6815 = vpop.f32.mrb[0].mxu0
    %v6816 = vadd.f32 %v5352, %v6815
    %v6817 = vpop.f32.mrb[0].mxu0
    %6818 = vmatprep.mubr.bf16.mxu0 %v5787
    %6819 = vmatmul.mubr.bf16.gmra.mrb[0].mxu0 %v5786
    %v6820 = vpop.f32.mrb[0].mxu0
    %v6821 = vadd.f32 %v5352, %v6820
    %v6822 = vpop.f32.mrb[0].mxu0
    %v6823 = vpop.f32.mrb[0].mxu0
    %v6824 = vadd.f32 %v5352, %v6823
    %v6825 = vpop.f32.mrb[0].mxu0
    %6826 = vmatprep.mubr.bf16.mxu0 %v5803
    %6827 = vmatmul.mubr.bf16.gmra.mrb[0].mxu0 %v5802
    %v6828 = vpop.f32.mrb[0].mxu0
    %v6829 = vadd.f32 %v5352, %v6828
    %v6830 = vpop.f32.mrb[0].mxu0
    %v6831 = vpop.f32.mrb[0].mxu0
    %v6832 = vadd.f32 %v5352, %v6831
    %v6833 = vpop.f32.mrb[0].mxu0
    %6834 = vmatprep.mubr.bf16.mxu0 %v5819
    %6835 = vmatmul.mubr.bf16.gmra.mrb[0].mxu0 %v5818
    %v6836 = vpop.f32.mrb[0].mxu0
    %v6837 = vadd.f32 %v5352, %v6836
    %v6838 = vpop.f32.mrb[0].mxu0
    %v6839 = vpop.f32.mrb[0].mxu0
    %v6840 = vadd.f32 %v5352, %v6839
    %v6841 = vpop.f32.mrb[0].mxu0
    %6842 = vmatprep.mubr.bf16.mxu0 %v5835
    %6843 = vmatmul.mubr.bf16.gmra.mrb[0].mxu0 %v5834
    %v6844 = vpop.f32.mrb[0].mxu0
    %v6845 = vadd.f32 %v5352, %v6844
    %v6846 = vpop.f32.mrb[0].mxu0
    %v6847 = vpop.f32.mrb[0].mxu0
    %v6848 = vadd.f32 %v5352, %v6847
    %v6849 = vpop.f32.mrb[0].mxu0
    %6850 = vmatprep.mubr.bf16.mxu0 %v5851
    %6851 = vmatmul.mubr.bf16.gmra.mrb[0].mxu0 %v5850
    %v6852 = vpop.f32.mrb[0].mxu0
    %v6853 = vadd.f32 %v5352, %v6852
    %v6854 = vpop.f32.mrb[0].mxu0
    %v6855 = vpop.f32.mrb[0].mxu0
    %v6856 = vadd.f32 %v5352, %v6855
    %v6857 = vpop.f32.mrb[0].mxu0
    %6858 = vdwg.mxu0
    %6859 = vmatprep.subr.bf16.mxu0 0
    %6860 = vmatpush1.bf16.msra.mxu0 %v6522
    %6861 = vmatprep.subr.bf16.mxu0 0
    %6862 = vmatpush1.bf16.msra.mxu0 %v6523
    %6863 = vmatprep.subr.bf16.mxu0 0
    %6864 = vmatpush1.bf16.msra.mxu0 %v6524
    %6865 = vmatprep.subr.bf16.mxu0 0
    %6866 = vmatpush1.bf16.msra.mxu0 %v6525
    %6867 = vmatprep.subr.bf16.mxu0 0
    %6868 = vmatpush1.bf16.msra.mxu0 %v6526
    %6869 = vmatprep.subr.bf16.mxu0 0
    %6870 = vmatpush1.bf16.msra.mxu0 %v6527
    %6871 = vmatprep.subr.bf16.mxu0 0
    %6872 = vmatpush1.bf16.msra.mxu0 %v6528
    %6873 = vmatprep.subr.bf16.mxu0 0
    %6874 = vmatpush1.bf16.msra.mxu0 %v6529
    %6875 = vmatprep.subr.bf16.mxu0 0
    %6876 = vmatpush1.bf16.msra.mxu0 %v6530
    %6877 = vmatprep.subr.bf16.mxu0 0
    %6878 = vmatpush1.bf16.msra.mxu0 %v6531
    %6879 = vmatprep.subr.bf16.mxu0 0
    %6880 = vmatpush1.bf16.msra.mxu0 %v6532
    %6881 = vmatprep.subr.bf16.mxu0 0
    %6882 = vmatpush1.bf16.msra.mxu0 %v6533
    %6883 = vmatprep.subr.bf16.mxu0 0
    %6884 = vmatpush1.bf16.msra.mxu0 %v6534
    %6885 = vmatprep.subr.bf16.mxu0 0
    %6886 = vmatpush1.bf16.msra.mxu0 %v6535
    %6887 = vmatprep.subr.bf16.mxu0 0
    %6888 = vmatpush1.bf16.msra.mxu0 %v6536
    %6889 = vmatprep.subr.bf16.mxu0 0
    %6890 = vmatpush1.bf16.msra.mxu0 %v6537
    %6891 = vmatprep.mubr.bf16.mxu0 %v5741
    %6892 = vmatmul.mubr.bf16.gmra.mrb[0].mxu0 %v5740
    %v6893 = vpop.f32.mrb[0].mxu0
    %v6894 = vadd.f32 %v6797, %v6893
    %v6895 = vpop.f32.mrb[0].mxu0
    %v6896 = vpop.f32.mrb[0].mxu0
    %v6897 = vadd.f32 %v6800, %v6896
    %v6898 = vpop.f32.mrb[0].mxu0
    %6899 = vmatprep.mubr.bf16.mxu0 %v5757
    %6900 = vmatmul.mubr.bf16.gmra.mrb[0].mxu0 %v5756
    %v6901 = vpop.f32.mrb[0].mxu0
    %v6902 = vadd.f32 %v6805, %v6901
    %v6903 = vpop.f32.mrb[0].mxu0
    %v6904 = vpop.f32.mrb[0].mxu0
    %v6905 = vadd.f32 %v6808, %v6904
    %v6906 = vpop.f32.mrb[0].mxu0
    %6907 = vmatprep.mubr.bf16.mxu0 %v5773
    %6908 = vmatmul.mubr.bf16.gmra.mrb[0].mxu0 %v5772
    %v6909 = vpop.f32.mrb[0].mxu0
    %v6910 = vadd.f32 %v6813, %v6909
    %v6911 = vpop.f32.mrb[0].mxu0
    %v6912 = vpop.f32.mrb[0].mxu0
    %v6913 = vadd.f32 %v6816, %v6912
    %v6914 = vpop.f32.mrb[0].mxu0
    %6915 = vmatprep.mubr.bf16.mxu0 %v5789
    %6916 = vmatmul.mubr.bf16.gmra.mrb[0].mxu0 %v5788
    %v6917 = vpop.f32.mrb[0].mxu0
    %v6918 = vadd.f32 %v6821, %v6917
    %v6919 = vpop.f32.mrb[0].mxu0
    %v6920 = vpop.f32.mrb[0].mxu0
    %v6921 = vadd.f32 %v6824, %v6920
    %v6922 = vpop.f32.mrb[0].mxu0
    %6923 = vmatprep.mubr.bf16.mxu0 %v5805
    %6924 = vmatmul.mubr.bf16.gmra.mrb[0].mxu0 %v5804
    %v6925 = vpop.f32.mrb[0].mxu0
    %v6926 = vadd.f32 %v6829, %v6925
    %v6927 = vpop.f32.mrb[0].mxu0
    %v6928 = vpop.f32.mrb[0].mxu0
    %v6929 = vadd.f32 %v6832, %v6928
    %v6930 = vpop.f32.mrb[0].mxu0
    %6931 = vmatprep.mubr.bf16.mxu0 %v5821
    %6932 = vmatmul.mubr.bf16.gmra.mrb[0].mxu0 %v5820
    %v6933 = vpop.f32.mrb[0].mxu0
    %v6934 = vadd.f32 %v6837, %v6933
    %v6935 = vpop.f32.mrb[0].mxu0
    %v6936 = vpop.f32.mrb[0].mxu0
    %v6937 = vadd.f32 %v6840, %v6936
    %v6938 = vpop.f32.mrb[0].mxu0
    %6939 = vmatprep.mubr.bf16.mxu0 %v5837
    %6940 = vmatmul.mubr.bf16.gmra.mrb[0].mxu0 %v5836
    %v6941 = vpop.f32.mrb[0].mxu0
    %v6942 = vadd.f32 %v6845, %v6941
    %v6943 = vpop.f32.mrb[0].mxu0
    %v6944 = vpop.f32.mrb[0].mxu0
    %v6945 = vadd.f32 %v6848, %v6944
    %v6946 = vpop.f32.mrb[0].mxu0
    %6947 = vmatprep.mubr.bf16.mxu0 %v5853
    %6948 = vmatmul.mubr.bf16.gmra.mrb[0].mxu0 %v5852
    %v6949 = vpop.f32.mrb[0].mxu0
    %v6950 = vadd.f32 %v6853, %v6949
    %v6951 = vpop.f32.mrb[0].mxu0
    %v6952 = vpop.f32.mrb[0].mxu0
    %v6953 = vadd.f32 %v6856, %v6952
    %v6954 = vpop.f32.mrb[0].mxu0
    %6955 = vdwg.mxu0
    %6956 = vmatprep.subr.bf16.mxu0 0
    %6957 = vmatpush1.bf16.msra.mxu0 %v6538
    %6958 = vmatprep.subr.bf16.mxu0 0
    %6959 = vmatpush1.bf16.msra.mxu0 %v6539
    %6960 = vmatprep.subr.bf16.mxu0 0
    %6961 = vmatpush1.bf16.msra.mxu0 %v6540
    %6962 = vmatprep.subr.bf16.mxu0 0
    %6963 = vmatpush1.bf16.msra.mxu0 %v6541
    %6964 = vmatprep.subr.bf16.mxu0 0
    %6965 = vmatpush1.bf16.msra.mxu0 %v6542
    %6966 = vmatprep.subr.bf16.mxu0 0
    %6967 = vmatpush1.bf16.msra.mxu0 %v6543
    %6968 = vmatprep.subr.bf16.mxu0 0
    %6969 = vmatpush1.bf16.msra.mxu0 %v6544
    %6970 = vmatprep.subr.bf16.mxu0 0
    %6971 = vmatpush1.bf16.msra.mxu0 %v6545
    %6972 = vmatprep.subr.bf16.mxu0 0
    %6973 = vmatpush1.bf16.msra.mxu0 %v6546
    %6974 = vmatprep.subr.bf16.mxu0 0
    %6975 = vmatpush1.bf16.msra.mxu0 %v6547
    %6976 = vmatprep.subr.bf16.mxu0 0
    %6977 = vmatpush1.bf16.msra.mxu0 %v6548
    %6978 = vmatprep.subr.bf16.mxu0 0
    %6979 = vmatpush1.bf16.msra.mxu0 %v6549
    %6980 = vmatprep.subr.bf16.mxu0 0
    %6981 = vmatpush1.bf16.msra.mxu0 %v6550
    %6982 = vmatprep.subr.bf16.mxu0 0
    %6983 = vmatpush1.bf16.msra.mxu0 %v6551
    %6984 = vmatprep.subr.bf16.mxu0 0
    %6985 = vmatpush1.bf16.msra.mxu0 %v6552
    %6986 = vmatprep.subr.bf16.mxu0 0
    %6987 = vmatpush1.bf16.msra.mxu0 %v6553
    %6988 = vmatprep.mubr.bf16.mxu0 %v5743
    %6989 = vmatmul.mubr.bf16.gmra.mrb[0].mxu0 %v5742
    %v6990 = vpop.f32.mrb[0].mxu0
    %v6991 = vadd.f32 %v6894, %v6990
    %v6992 = vpop.f32.mrb[0].mxu0
    %v6993 = vpop.f32.mrb[0].mxu0
    %v6994 = vadd.f32 %v6897, %v6993
    %v6995 = vpop.f32.mrb[0].mxu0
    %6996 = vmatprep.mubr.bf16.mxu0 %v5759
    %6997 = vmatmul.mubr.bf16.gmra.mrb[0].mxu0 %v5758
    %v6998 = vpop.f32.mrb[0].mxu0
    %v6999 = vadd.f32 %v6902, %v6998
    %v7000 = vpop.f32.mrb[0].mxu0
    %v7001 = vpop.f32.mrb[0].mxu0
    %v7002 = vadd.f32 %v6905, %v7001
    %v7003 = vpop.f32.mrb[0].mxu0
    %7004 = vmatprep.mubr.bf16.mxu0 %v5775
    %7005 = vmatmul.mubr.bf16.gmra.mrb[0].mxu0 %v5774
    %v7006 = vpop.f32.mrb[0].mxu0
    %v7007 = vadd.f32 %v6910, %v7006
    %v7008 = vpop.f32.mrb[0].mxu0
    %v7009 = vpop.f32.mrb[0].mxu0
    %v7010 = vadd.f32 %v6913, %v7009
    %v7011 = vpop.f32.mrb[0].mxu0
    %7012 = vmatprep.mubr.bf16.mxu0 %v5791
    %7013 = vmatmul.mubr.bf16.gmra.mrb[0].mxu0 %v5790
    %v7014 = vpop.f32.mrb[0].mxu0
    %v7015 = vadd.f32 %v6918, %v7014
    %v7016 = vpop.f32.mrb[0].mxu0
    %v7017 = vpop.f32.mrb[0].mxu0
    %v7018 = vadd.f32 %v6921, %v7017
    %v7019 = vpop.f32.mrb[0].mxu0
    %7020 = vmatprep.mubr.bf16.mxu0 %v5807
    %7021 = vmatmul.mubr.bf16.gmra.mrb[0].mxu0 %v5806
    %v7022 = vpop.f32.mrb[0].mxu0
    %v7023 = vadd.f32 %v6926, %v7022
    %v7024 = vpop.f32.mrb[0].mxu0
    %v7025 = vpop.f32.mrb[0].mxu0
    %v7026 = vadd.f32 %v6929, %v7025
    %v7027 = vpop.f32.mrb[0].mxu0
    %7028 = vmatprep.mubr.bf16.mxu0 %v5823
    %7029 = vmatmul.mubr.bf16.gmra.mrb[0].mxu0 %v5822
    %v7030 = vpop.f32.mrb[0].mxu0
    %v7031 = vadd.f32 %v6934, %v7030
    %v7032 = vpop.f32.mrb[0].mxu0
    %v7033 = vpop.f32.mrb[0].mxu0
    %v7034 = vadd.f32 %v6937, %v7033
    %v7035 = vpop.f32.mrb[0].mxu0
    %7036 = vmatprep.mubr.bf16.mxu0 %v5839
    %7037 = vmatmul.mubr.bf16.gmra.mrb[0].mxu0 %v5838
    %v7038 = vpop.f32.mrb[0].mxu0
    %v7039 = vadd.f32 %v6942, %v7038
    %v7040 = vpop.f32.mrb[0].mxu0
    %v7041 = vpop.f32.mrb[0].mxu0
    %v7042 = vadd.f32 %v6945, %v7041
    %v7043 = vpop.f32.mrb[0].mxu0
    %7044 = vmatprep.mubr.bf16.mxu0 %v5855
    %7045 = vmatmul.mubr.bf16.gmra.mrb[0].mxu0 %v5854
    %v7046 = vpop.f32.mrb[0].mxu0
    %v7047 = vadd.f32 %v6950, %v7046
    %v7048 = vpop.f32.mrb[0].mxu0
    %v7049 = vpop.f32.mrb[0].mxu0
    %v7050 = vadd.f32 %v6953, %v7049
    %v7051 = vpop.f32.mrb[0].mxu0
    %7052 = vdwg.mxu0
    %7053 = vmatprep.subr.bf16.mxu0 0
    %7054 = vmatpush1.bf16.msra.mxu0 %v6554
    %7055 = vmatprep.subr.bf16.mxu0 0
    %7056 = vmatpush1.bf16.msra.mxu0 %v6555
    %7057 = vmatprep.subr.bf16.mxu0 0
    %7058 = vmatpush1.bf16.msra.mxu0 %v6556
    %7059 = vmatprep.subr.bf16.mxu0 0
    %7060 = vmatpush1.bf16.msra.mxu0 %v6557
    %7061 = vmatprep.subr.bf16.mxu0 0
    %7062 = vmatpush1.bf16.msra.mxu0 %v6558
    %7063 = vmatprep.subr.bf16.mxu0 0
    %7064 = vmatpush1.bf16.msra.mxu0 %v6559
    %7065 = vmatprep.subr.bf16.mxu0 0
    %7066 = vmatpush1.bf16.msra.mxu0 %v6560
    %7067 = vmatprep.subr.bf16.mxu0 0
    %7068 = vmatpush1.bf16.msra.mxu0 %v6561
    %7069 = vmatprep.subr.bf16.mxu0 0
    %7070 = vmatpush1.bf16.msra.mxu0 %v6562
    %7071 = vmatprep.subr.bf16.mxu0 0
    %7072 = vmatpush1.bf16.msra.mxu0 %v6563
    %7073 = vmatprep.subr.bf16.mxu0 0
    %7074 = vmatpush1.bf16.msra.mxu0 %v6564
    %7075 = vmatprep.subr.bf16.mxu0 0
    %7076 = vmatpush1.bf16.msra.mxu0 %v6565
    %7077 = vmatprep.subr.bf16.mxu0 0
    %7078 = vmatpush1.bf16.msra.mxu0 %v6566
    %7079 = vmatprep.subr.bf16.mxu0 0
    %7080 = vmatpush1.bf16.msra.mxu0 %v6567
    %7081 = vmatprep.subr.bf16.mxu0 0
    %7082 = vmatpush1.bf16.msra.mxu0 %v6568
    %7083 = vmatprep.subr.bf16.mxu0 0
    %7084 = vmatpush1.bf16.msra.mxu0 %v6569
    %7085 = vmatprep.mubr.bf16.mxu0 %v5745
    %7086 = vmatmul.mubr.bf16.gmra.mrb[0].mxu0 %v5744
    %v7087 = vpop.f32.mrb[0].mxu0
    %v7088 = vadd.f32 %v6991, %v7087
    %v7089 = vpop.f32.mrb[0].mxu0
    %v7090 = vpop.f32.mrb[0].mxu0
    %v7091 = vadd.f32 %v6994, %v7090
    %v7092 = vpop.f32.mrb[0].mxu0
    %7093 = vmatprep.mubr.bf16.mxu0 %v5761
    %7094 = vmatmul.mubr.bf16.gmra.mrb[0].mxu0 %v5760
    %v7095 = vpop.f32.mrb[0].mxu0
    %v7096 = vadd.f32 %v6999, %v7095
    %v7097 = vpop.f32.mrb[0].mxu0
    %v7098 = vpop.f32.mrb[0].mxu0
    %v7099 = vadd.f32 %v7002, %v7098
    %v7100 = vpop.f32.mrb[0].mxu0
    %7101 = vmatprep.mubr.bf16.mxu0 %v5777
    %7102 = vmatmul.mubr.bf16.gmra.mrb[0].mxu0 %v5776
    %v7103 = vpop.f32.mrb[0].mxu0
    %v7104 = vadd.f32 %v7007, %v7103
    %v7105 = vpop.f32.mrb[0].mxu0
    %v7106 = vpop.f32.mrb[0].mxu0
    %v7107 = vadd.f32 %v7010, %v7106
    %v7108 = vpop.f32.mrb[0].mxu0
    %7109 = vmatprep.mubr.bf16.mxu0 %v5793
    %7110 = vmatmul.mubr.bf16.gmra.mrb[0].mxu0 %v5792
    %v7111 = vpop.f32.mrb[0].mxu0
    %v7112 = vadd.f32 %v7015, %v7111
    %v7113 = vpop.f32.mrb[0].mxu0
    %v7114 = vpop.f32.mrb[0].mxu0
    %v7115 = vadd.f32 %v7018, %v7114
    %v7116 = vpop.f32.mrb[0].mxu0
    %7117 = vmatprep.mubr.bf16.mxu0 %v5809
    %7118 = vmatmul.mubr.bf16.gmra.mrb[0].mxu0 %v5808
    %v7119 = vpop.f32.mrb[0].mxu0
    %v7120 = vadd.f32 %v7023, %v7119
    %v7121 = vpop.f32.mrb[0].mxu0
    %v7122 = vpop.f32.mrb[0].mxu0
    %v7123 = vadd.f32 %v7026, %v7122
    %v7124 = vpop.f32.mrb[0].mxu0
    %7125 = vmatprep.mubr.bf16.mxu0 %v5825
    %7126 = vmatmul.mubr.bf16.gmra.mrb[0].mxu0 %v5824
    %v7127 = vpop.f32.mrb[0].mxu0
    %v7128 = vadd.f32 %v7031, %v7127
    %v7129 = vpop.f32.mrb[0].mxu0
    %v7130 = vpop.f32.mrb[0].mxu0
    %v7131 = vadd.f32 %v7034, %v7130
    %v7132 = vpop.f32.mrb[0].mxu0
    %7133 = vmatprep.mubr.bf16.mxu0 %v5841
    %7134 = vmatmul.mubr.bf16.gmra.mrb[0].mxu0 %v5840
    %v7135 = vpop.f32.mrb[0].mxu0
    %v7136 = vadd.f32 %v7039, %v7135
    %v7137 = vpop.f32.mrb[0].mxu0
    %v7138 = vpop.f32.mrb[0].mxu0
    %v7139 = vadd.f32 %v7042, %v7138
    %v7140 = vpop.f32.mrb[0].mxu0
    %7141 = vmatprep.mubr.bf16.mxu0 %v5857
    %7142 = vmatmul.mubr.bf16.gmra.mrb[0].mxu0 %v5856
    %v7143 = vpop.f32.mrb[0].mxu0
    %v7144 = vadd.f32 %v7047, %v7143
    %v7145 = vpop.f32.mrb[0].mxu0
    %v7146 = vpop.f32.mrb[0].mxu0
    %v7147 = vadd.f32 %v7050, %v7146
    %v7148 = vpop.f32.mrb[0].mxu0
    %7149 = vdwg.mxu0
    %7150 = vmatprep.subr.bf16.mxu0 0
    %7151 = vmatpush1.bf16.msra.mxu0 %v6570
    %7152 = vmatprep.subr.bf16.mxu0 0
    %7153 = vmatpush1.bf16.msra.mxu0 %v6571
    %7154 = vmatprep.subr.bf16.mxu0 0
    %7155 = vmatpush1.bf16.msra.mxu0 %v6572
    %7156 = vmatprep.subr.bf16.mxu0 0
    %7157 = vmatpush1.bf16.msra.mxu0 %v6573
    %7158 = vmatprep.subr.bf16.mxu0 0
    %7159 = vmatpush1.bf16.msra.mxu0 %v6574
    %7160 = vmatprep.subr.bf16.mxu0 0
    %7161 = vmatpush1.bf16.msra.mxu0 %v6575
    %7162 = vmatprep.subr.bf16.mxu0 0
    %7163 = vmatpush1.bf16.msra.mxu0 %v6576
    %7164 = vmatprep.subr.bf16.mxu0 0
    %7165 = vmatpush1.bf16.msra.mxu0 %v6577
    %7166 = vmatprep.subr.bf16.mxu0 0
    %7167 = vmatpush1.bf16.msra.mxu0 %v6578
    %7168 = vmatprep.subr.bf16.mxu0 0
    %7169 = vmatpush1.bf16.msra.mxu0 %v6579
    %7170 = vmatprep.subr.bf16.mxu0 0
    %7171 = vmatpush1.bf16.msra.mxu0 %v6580
    %7172 = vmatprep.subr.bf16.mxu0 0
    %7173 = vmatpush1.bf16.msra.mxu0 %v6581
    %7174 = vmatprep.subr.bf16.mxu0 0
    %7175 = vmatpush1.bf16.msra.mxu0 %v6582
    %7176 = vmatprep.subr.bf16.mxu0 0
    %7177 = vmatpush1.bf16.msra.mxu0 %v6583
    %7178 = vmatprep.subr.bf16.mxu0 0
    %7179 = vmatpush1.bf16.msra.mxu0 %v6584
    %7180 = vmatprep.subr.bf16.mxu0 0
    %7181 = vmatpush1.bf16.msra.mxu0 %v6585
    %7182 = vmatprep.mubr.bf16.mxu0 %v5747
    %7183 = vmatmul.mubr.bf16.gmra.mrb[0].mxu0 %v5746
    %v7184 = vpop.f32.mrb[0].mxu0
    %v7185 = vadd.f32 %v7088, %v7184
    %v7186 = vpop.f32.mrb[0].mxu0
    %v7187 = vpop.f32.mrb[0].mxu0
    %v7188 = vadd.f32 %v7091, %v7187
    %v7189 = vpop.f32.mrb[0].mxu0
    %7190 = vmatprep.mubr.bf16.mxu0 %v5763
    %7191 = vmatmul.mubr.bf16.gmra.mrb[0].mxu0 %v5762
    %v7192 = vpop.f32.mrb[0].mxu0
    %v7193 = vadd.f32 %v7096, %v7192
    %v7194 = vpop.f32.mrb[0].mxu0
    %v7195 = vpop.f32.mrb[0].mxu0
    %v7196 = vadd.f32 %v7099, %v7195
    %v7197 = vpop.f32.mrb[0].mxu0
    %7198 = vmatprep.mubr.bf16.mxu0 %v5779
    %7199 = vmatmul.mubr.bf16.gmra.mrb[0].mxu0 %v5778
    %v7200 = vpop.f32.mrb[0].mxu0
    %v7201 = vadd.f32 %v7104, %v7200
    %v7202 = vpop.f32.mrb[0].mxu0
    %v7203 = vpop.f32.mrb[0].mxu0
    %v7204 = vadd.f32 %v7107, %v7203
    %v7205 = vpop.f32.mrb[0].mxu0
    %7206 = vmatprep.mubr.bf16.mxu0 %v5795
    %7207 = vmatmul.mubr.bf16.gmra.mrb[0].mxu0 %v5794
    %v7208 = vpop.f32.mrb[0].mxu0
    %v7209 = vadd.f32 %v7112, %v7208
    %v7210 = vpop.f32.mrb[0].mxu0
    %v7211 = vpop.f32.mrb[0].mxu0
    %v7212 = vadd.f32 %v7115, %v7211
    %v7213 = vpop.f32.mrb[0].mxu0
    %7214 = vmatprep.mubr.bf16.mxu0 %v5811
    %7215 = vmatmul.mubr.bf16.gmra.mrb[0].mxu0 %v5810
    %v7216 = vpop.f32.mrb[0].mxu0
    %v7217 = vadd.f32 %v7120, %v7216
    %v7218 = vpop.f32.mrb[0].mxu0
    %v7219 = vpop.f32.mrb[0].mxu0
    %v7220 = vadd.f32 %v7123, %v7219
    %v7221 = vpop.f32.mrb[0].mxu0
    %7222 = vmatprep.mubr.bf16.mxu0 %v5827
    %7223 = vmatmul.mubr.bf16.gmra.mrb[0].mxu0 %v5826
    %v7224 = vpop.f32.mrb[0].mxu0
    %v7225 = vadd.f32 %v7128, %v7224
    %v7226 = vpop.f32.mrb[0].mxu0
    %v7227 = vpop.f32.mrb[0].mxu0
    %v7228 = vadd.f32 %v7131, %v7227
    %v7229 = vpop.f32.mrb[0].mxu0
    %7230 = vmatprep.mubr.bf16.mxu0 %v5843
    %7231 = vmatmul.mubr.bf16.gmra.mrb[0].mxu0 %v5842
    %v7232 = vpop.f32.mrb[0].mxu0
    %v7233 = vadd.f32 %v7136, %v7232
    %v7234 = vpop.f32.mrb[0].mxu0
    %v7235 = vpop.f32.mrb[0].mxu0
    %v7236 = vadd.f32 %v7139, %v7235
    %v7237 = vpop.f32.mrb[0].mxu0
    %7238 = vmatprep.mubr.bf16.mxu0 %v5859
    %7239 = vmatmul.mubr.bf16.gmra.mrb[0].mxu0 %v5858
    %v7240 = vpop.f32.mrb[0].mxu0
    %v7241 = vadd.f32 %v7144, %v7240
    %v7242 = vpop.f32.mrb[0].mxu0
    %v7243 = vpop.f32.mrb[0].mxu0
    %v7244 = vadd.f32 %v7147, %v7243
    %v7245 = vpop.f32.mrb[0].mxu0
    %7246 = vdwg.mxu0
    %7247 = vmatprep.subr.bf16.mxu0 0
    %7248 = vmatpush1.bf16.msra.mxu0 %v6586
    %7249 = vmatprep.subr.bf16.mxu0 0
    %7250 = vmatpush1.bf16.msra.mxu0 %v6587
    %7251 = vmatprep.subr.bf16.mxu0 0
    %7252 = vmatpush1.bf16.msra.mxu0 %v6588
    %7253 = vmatprep.subr.bf16.mxu0 0
    %7254 = vmatpush1.bf16.msra.mxu0 %v6589
    %7255 = vmatprep.subr.bf16.mxu0 0
    %7256 = vmatpush1.bf16.msra.mxu0 %v6590
    %7257 = vmatprep.subr.bf16.mxu0 0
    %7258 = vmatpush1.bf16.msra.mxu0 %v6591
    %7259 = vmatprep.subr.bf16.mxu0 0
    %7260 = vmatpush1.bf16.msra.mxu0 %v6592
    %7261 = vmatprep.subr.bf16.mxu0 0
    %7262 = vmatpush1.bf16.msra.mxu0 %v6593
    %7263 = vmatprep.subr.bf16.mxu0 0
    %7264 = vmatpush1.bf16.msra.mxu0 %v6594
    %7265 = vmatprep.subr.bf16.mxu0 0
    %7266 = vmatpush1.bf16.msra.mxu0 %v6595
    %7267 = vmatprep.subr.bf16.mxu0 0
    %7268 = vmatpush1.bf16.msra.mxu0 %v6596
    %7269 = vmatprep.subr.bf16.mxu0 0
    %7270 = vmatpush1.bf16.msra.mxu0 %v6597
    %7271 = vmatprep.subr.bf16.mxu0 0
    %7272 = vmatpush1.bf16.msra.mxu0 %v6598
    %7273 = vmatprep.subr.bf16.mxu0 0
    %7274 = vmatpush1.bf16.msra.mxu0 %v6599
    %7275 = vmatprep.subr.bf16.mxu0 0
    %7276 = vmatpush1.bf16.msra.mxu0 %v6600
    %7277 = vmatprep.subr.bf16.mxu0 0
    %7278 = vmatpush1.bf16.msra.mxu0 %v6601
    %7279 = vmatprep.mubr.bf16.mxu0 %v5749
    %7280 = vmatmul.mubr.bf16.gmra.mrb[0].mxu0 %v5748
    %v7281 = vpop.f32.mrb[0].mxu0
    %v7282 = vadd.f32 %v7185, %v7281
    %v7283 = vpop.f32.mrb[0].mxu0
    %v7284 = vpop.f32.mrb[0].mxu0
    %v7285 = vadd.f32 %v7188, %v7284
    %v7286 = vpop.f32.mrb[0].mxu0
    %7287 = vmatprep.mubr.bf16.mxu0 %v5765
    %7288 = vmatmul.mubr.bf16.gmra.mrb[0].mxu0 %v5764
    %v7289 = vpop.f32.mrb[0].mxu0
    %v7290 = vadd.f32 %v7193, %v7289
    %v7291 = vpop.f32.mrb[0].mxu0
    %v7292 = vpop.f32.mrb[0].mxu0
    %v7293 = vadd.f32 %v7196, %v7292
    %v7294 = vpop.f32.mrb[0].mxu0
    %7295 = vmatprep.mubr.bf16.mxu0 %v5781
    %7296 = vmatmul.mubr.bf16.gmra.mrb[0].mxu0 %v5780
    %v7297 = vpop.f32.mrb[0].mxu0
    %v7298 = vadd.f32 %v7201, %v7297
    %v7299 = vpop.f32.mrb[0].mxu0
    %v7300 = vpop.f32.mrb[0].mxu0
    %v7301 = vadd.f32 %v7204, %v7300
    %v7302 = vpop.f32.mrb[0].mxu0
    %7303 = vmatprep.mubr.bf16.mxu0 %v5797
    %7304 = vmatmul.mubr.bf16.gmra.mrb[0].mxu0 %v5796
    %v7305 = vpop.f32.mrb[0].mxu0
    %v7306 = vadd.f32 %v7209, %v7305
    %v7307 = vpop.f32.mrb[0].mxu0
    %v7308 = vpop.f32.mrb[0].mxu0
    %v7309 = vadd.f32 %v7212, %v7308
    %v7310 = vpop.f32.mrb[0].mxu0
    %7311 = vmatprep.mubr.bf16.mxu0 %v5813
    %7312 = vmatmul.mubr.bf16.gmra.mrb[0].mxu0 %v5812
    %v7313 = vpop.f32.mrb[0].mxu0
    %v7314 = vadd.f32 %v7217, %v7313
    %v7315 = vpop.f32.mrb[0].mxu0
    %v7316 = vpop.f32.mrb[0].mxu0
    %v7317 = vadd.f32 %v7220, %v7316
    %v7318 = vpop.f32.mrb[0].mxu0
    %7319 = vmatprep.mubr.bf16.mxu0 %v5829
    %7320 = vmatmul.mubr.bf16.gmra.mrb[0].mxu0 %v5828
    %v7321 = vpop.f32.mrb[0].mxu0
    %v7322 = vadd.f32 %v7225, %v7321
    %v7323 = vpop.f32.mrb[0].mxu0
    %v7324 = vpop.f32.mrb[0].mxu0
    %v7325 = vadd.f32 %v7228, %v7324
    %v7326 = vpop.f32.mrb[0].mxu0
    %7327 = vmatprep.mubr.bf16.mxu0 %v5845
    %7328 = vmatmul.mubr.bf16.gmra.mrb[0].mxu0 %v5844
    %v7329 = vpop.f32.mrb[0].mxu0
    %v7330 = vadd.f32 %v7233, %v7329
    %v7331 = vpop.f32.mrb[0].mxu0
    %v7332 = vpop.f32.mrb[0].mxu0
    %v7333 = vadd.f32 %v7236, %v7332
    %v7334 = vpop.f32.mrb[0].mxu0
    %7335 = vmatprep.mubr.bf16.mxu0 %v5861
    %7336 = vmatmul.mubr.bf16.gmra.mrb[0].mxu0 %v5860
    %v7337 = vpop.f32.mrb[0].mxu0
    %v7338 = vadd.f32 %v7241, %v7337
    %v7339 = vpop.f32.mrb[0].mxu0
    %v7340 = vpop.f32.mrb[0].mxu0
    %v7341 = vadd.f32 %v7244, %v7340
    %v7342 = vpop.f32.mrb[0].mxu0
    %7343 = vdwg.mxu0
    %7344 = vmatprep.subr.bf16.mxu0 0
    %7345 = vmatpush1.bf16.msra.mxu0 %v6602
    %7346 = vmatprep.subr.bf16.mxu0 0
    %7347 = vmatpush1.bf16.msra.mxu0 %v6603
    %7348 = vmatprep.subr.bf16.mxu0 0
    %7349 = vmatpush1.bf16.msra.mxu0 %v6604
    %7350 = vmatprep.subr.bf16.mxu0 0
    %7351 = vmatpush1.bf16.msra.mxu0 %v6605
    %7352 = vmatprep.subr.bf16.mxu0 0
    %7353 = vmatpush1.bf16.msra.mxu0 %v6606
    %7354 = vmatprep.subr.bf16.mxu0 0
    %7355 = vmatpush1.bf16.msra.mxu0 %v6607
    %7356 = vmatprep.subr.bf16.mxu0 0
    %7357 = vmatpush1.bf16.msra.mxu0 %v6608
    %7358 = vmatprep.subr.bf16.mxu0 0
    %7359 = vmatpush1.bf16.msra.mxu0 %v6609
    %7360 = vmatprep.subr.bf16.mxu0 0
    %7361 = vmatpush1.bf16.msra.mxu0 %v6610
    %7362 = vmatprep.subr.bf16.mxu0 0
    %7363 = vmatpush1.bf16.msra.mxu0 %v6611
    %7364 = vmatprep.subr.bf16.mxu0 0
    %7365 = vmatpush1.bf16.msra.mxu0 %v6612
    %7366 = vmatprep.subr.bf16.mxu0 0
    %7367 = vmatpush1.bf16.msra.mxu0 %v6613
    %7368 = vmatprep.subr.bf16.mxu0 0
    %7369 = vmatpush1.bf16.msra.mxu0 %v6614
    %7370 = vmatprep.subr.bf16.mxu0 0
    %7371 = vmatpush1.bf16.msra.mxu0 %v6615
    %7372 = vmatprep.subr.bf16.mxu0 0
    %7373 = vmatpush1.bf16.msra.mxu0 %v6616
    %7374 = vmatprep.subr.bf16.mxu0 0
    %7375 = vmatpush1.bf16.msra.mxu0 %v6617
    %7376 = vmatprep.mubr.bf16.mxu0 %v5751
    %7377 = vmatmul.mubr.bf16.gmra.mrb[0].mxu0 %v5750
    %v7378 = vpop.f32.mrb[0].mxu0
    %v7379 = vadd.f32 %v7282, %v7378
    %v7380 = vpop.f32.mrb[0].mxu0
    %v7381 = vpop.f32.mrb[0].mxu0
    %v7382 = vadd.f32 %v7285, %v7381
    %v7383 = vpop.f32.mrb[0].mxu0
    %7384 = vmatprep.mubr.bf16.mxu0 %v5767
    %7385 = vmatmul.mubr.bf16.gmra.mrb[0].mxu0 %v5766
    %v7386 = vpop.f32.mrb[0].mxu0
    %v7387 = vadd.f32 %v7290, %v7386
    %v7388 = vpop.f32.mrb[0].mxu0
    %v7389 = vpop.f32.mrb[0].mxu0
    %v7390 = vadd.f32 %v7293, %v7389
    %v7391 = vpop.f32.mrb[0].mxu0
    %7392 = vmatprep.mubr.bf16.mxu0 %v5783
    %7393 = vmatmul.mubr.bf16.gmra.mrb[0].mxu0 %v5782
    %v7394 = vpop.f32.mrb[0].mxu0
    %v7395 = vadd.f32 %v7298, %v7394
    %v7396 = vpop.f32.mrb[0].mxu0
    %v7397 = vpop.f32.mrb[0].mxu0
    %v7398 = vadd.f32 %v7301, %v7397
    %v7399 = vpop.f32.mrb[0].mxu0
    %7400 = vmatprep.mubr.bf16.mxu0 %v5799
    %7401 = vmatmul.mubr.bf16.gmra.mrb[0].mxu0 %v5798
    %v7402 = vpop.f32.mrb[0].mxu0
    %v7403 = vadd.f32 %v7306, %v7402
    %v7404 = vpop.f32.mrb[0].mxu0
    %v7405 = vpop.f32.mrb[0].mxu0
    %v7406 = vadd.f32 %v7309, %v7405
    %v7407 = vpop.f32.mrb[0].mxu0
    %7408 = vmatprep.mubr.bf16.mxu0 %v5815
    %7409 = vmatmul.mubr.bf16.gmra.mrb[0].mxu0 %v5814
    %v7410 = vpop.f32.mrb[0].mxu0
    %v7411 = vadd.f32 %v7314, %v7410
    %v7412 = vpop.f32.mrb[0].mxu0
    %v7413 = vpop.f32.mrb[0].mxu0
    %v7414 = vadd.f32 %v7317, %v7413
    %v7415 = vpop.f32.mrb[0].mxu0
    %7416 = vmatprep.mubr.bf16.mxu0 %v5831
    %7417 = vmatmul.mubr.bf16.gmra.mrb[0].mxu0 %v5830
    %v7418 = vpop.f32.mrb[0].mxu0
    %v7419 = vadd.f32 %v7322, %v7418
    %v7420 = vpop.f32.mrb[0].mxu0
    %v7421 = vpop.f32.mrb[0].mxu0
    %v7422 = vadd.f32 %v7325, %v7421
    %v7423 = vpop.f32.mrb[0].mxu0
    %7424 = vmatprep.mubr.bf16.mxu0 %v5847
    %7425 = vmatmul.mubr.bf16.gmra.mrb[0].mxu0 %v5846
    %v7426 = vpop.f32.mrb[0].mxu0
    %v7427 = vadd.f32 %v7330, %v7426
    %v7428 = vpop.f32.mrb[0].mxu0
    %v7429 = vpop.f32.mrb[0].mxu0
    %v7430 = vadd.f32 %v7333, %v7429
    %v7431 = vpop.f32.mrb[0].mxu0
    %7432 = vmatprep.mubr.bf16.mxu0 %v5863
    %7433 = vmatmul.mubr.bf16.gmra.mrb[0].mxu0 %v5862
    %v7434 = vpop.f32.mrb[0].mxu0
    %v7435 = vadd.f32 %v7338, %v7434
    %v7436 = vpop.f32.mrb[0].mxu0
    %v7437 = vpop.f32.mrb[0].mxu0
    %v7438 = vadd.f32 %v7341, %v7437
    %v7439 = vpop.f32.mrb[0].mxu0
    %7440 = vdwg.mxu0
    %7441 = vmatprep.subr.bf16.mxu0 0
    %7442 = vmatpush1.bf16.msra.mxu0 %v6618
    %7443 = vmatprep.subr.bf16.mxu0 0
    %7444 = vmatpush1.bf16.msra.mxu0 %v6619
    %7445 = vmatprep.subr.bf16.mxu0 0
    %7446 = vmatpush1.bf16.msra.mxu0 %v6620
    %7447 = vmatprep.subr.bf16.mxu0 0
    %7448 = vmatpush1.bf16.msra.mxu0 %v6621
    %7449 = vmatprep.subr.bf16.mxu0 0
    %7450 = vmatpush1.bf16.msra.mxu0 %v6622
    %7451 = vmatprep.subr.bf16.mxu0 0
    %7452 = vmatpush1.bf16.msra.mxu0 %v6623
    %7453 = vmatprep.subr.bf16.mxu0 0
    %7454 = vmatpush1.bf16.msra.mxu0 %v6624
    %7455 = vmatprep.subr.bf16.mxu0 0
    %7456 = vmatpush1.bf16.msra.mxu0 %v6625
    %7457 = vmatprep.subr.bf16.mxu0 0
    %7458 = vmatpush1.bf16.msra.mxu0 %v6626
    %7459 = vmatprep.subr.bf16.mxu0 0
    %7460 = vmatpush1.bf16.msra.mxu0 %v6627
    %7461 = vmatprep.subr.bf16.mxu0 0
    %7462 = vmatpush1.bf16.msra.mxu0 %v6628
    %7463 = vmatprep.subr.bf16.mxu0 0
    %7464 = vmatpush1.bf16.msra.mxu0 %v6629
    %7465 = vmatprep.subr.bf16.mxu0 0
    %7466 = vmatpush1.bf16.msra.mxu0 %v6630
    %7467 = vmatprep.subr.bf16.mxu0 0
    %7468 = vmatpush1.bf16.msra.mxu0 %v6631
    %7469 = vmatprep.subr.bf16.mxu0 0
    %7470 = vmatpush1.bf16.msra.mxu0 %v6632
    %7471 = vmatprep.subr.bf16.mxu0 0
    %7472 = vmatpush1.bf16.msra.mxu0 %v6633
    %7473 = vmatprep.mubr.bf16.mxu0 %v5753
    %7474 = vmatmul.mubr.bf16.gmra.mrb[0].mxu0 %v5752
    %v7475 = vpop.f32.mrb[0].mxu0
    %v7476 = vadd.f32 %v7379, %v7475
    %v7477 = vpop.f32.mrb[0].mxu0
    %v7478 = vpop.f32.mrb[0].mxu0
    %v7479 = vadd.f32 %v7382, %v7478
    %v7480 = vpop.f32.mrb[0].mxu0
    %7481 = vmatprep.mubr.bf16.mxu0 %v5769
    %7482 = vmatmul.mubr.bf16.gmra.mrb[0].mxu0 %v5768
    %v7483 = vpop.f32.mrb[0].mxu0
    %v7484 = vadd.f32 %v7387, %v7483
    %v7485 = vpop.f32.mrb[0].mxu0
    %v7486 = vpop.f32.mrb[0].mxu0
    %v7487 = vadd.f32 %v7390, %v7486
    %v7488 = vpop.f32.mrb[0].mxu0
    %7489 = vmatprep.mubr.bf16.mxu0 %v5785
    %7490 = vmatmul.mubr.bf16.gmra.mrb[0].mxu0 %v5784
    %v7491 = vpop.f32.mrb[0].mxu0
    %v7492 = vadd.f32 %v7395, %v7491
    %v7493 = vpop.f32.mrb[0].mxu0
    %v7494 = vpop.f32.mrb[0].mxu0
    %v7495 = vadd.f32 %v7398, %v7494
    %v7496 = vpop.f32.mrb[0].mxu0
    %7497 = vmatprep.mubr.bf16.mxu0 %v5801
    %7498 = vmatmul.mubr.bf16.gmra.mrb[0].mxu0 %v5800
    %v7499 = vpop.f32.mrb[0].mxu0
    %v7500 = vadd.f32 %v7403, %v7499
    %v7501 = vpop.f32.mrb[0].mxu0
    %v7502 = vpop.f32.mrb[0].mxu0
    %v7503 = vadd.f32 %v7406, %v7502
    %v7504 = vpop.f32.mrb[0].mxu0
    %7505 = vmatprep.mubr.bf16.mxu0 %v5817
    %7506 = vmatmul.mubr.bf16.gmra.mrb[0].mxu0 %v5816
    %v7507 = vpop.f32.mrb[0].mxu0
    %v7508 = vadd.f32 %v7411, %v7507
    %v7509 = vpop.f32.mrb[0].mxu0
    %v7510 = vpop.f32.mrb[0].mxu0
    %v7511 = vadd.f32 %v7414, %v7510
    %v7512 = vpop.f32.mrb[0].mxu0
    %7513 = vmatprep.mubr.bf16.mxu0 %v5833
    %7514 = vmatmul.mubr.bf16.gmra.mrb[0].mxu0 %v5832
    %v7515 = vpop.f32.mrb[0].mxu0
    %v7516 = vadd.f32 %v7419, %v7515
    %v7517 = vpop.f32.mrb[0].mxu0
    %v7518 = vpop.f32.mrb[0].mxu0
    %v7519 = vadd.f32 %v7422, %v7518
    %v7520 = vpop.f32.mrb[0].mxu0
    %7521 = vmatprep.mubr.bf16.mxu0 %v5849
    %7522 = vmatmul.mubr.bf16.gmra.mrb[0].mxu0 %v5848
    %v7523 = vpop.f32.mrb[0].mxu0
    %v7524 = vadd.f32 %v7427, %v7523
    %v7525 = vpop.f32.mrb[0].mxu0
    %v7526 = vpop.f32.mrb[0].mxu0
    %v7527 = vadd.f32 %v7430, %v7526
    %v7528 = vpop.f32.mrb[0].mxu0
    %7529 = vmatprep.mubr.bf16.mxu0 %v5865
    %7530 = vmatmul.mubr.bf16.gmra.mrb[0].mxu0 %v5864
    %v7531 = vpop.f32.mrb[0].mxu0
    %v7532 = vadd.f32 %v7435, %v7531
    %v7533 = vpop.f32.mrb[0].mxu0
    %v7534 = vpop.f32.mrb[0].mxu0
    %v7535 = vadd.f32 %v7438, %v7534
    %v7536 = vpop.f32.mrb[0].mxu0
    %7537 = vdwg.mxu0
    %v7538 = vmax.f32 %v7476, 0.0
    %v7539 = vmax.f32 %v7479, 0.0
    %v7540 = vmax.f32 %v7484, 0.0
    %v7541 = vmax.f32 %v7487, 0.0
    %v7542 = vmax.f32 %v7492, 0.0
    %v7543 = vmax.f32 %v7495, 0.0
    %v7544 = vmax.f32 %v7500, 0.0
    %v7545 = vmax.f32 %v7503, 0.0
    %v7546 = vmax.f32 %v7508, 0.0
    %v7547 = vmax.f32 %v7511, 0.0
    %v7548 = vmax.f32 %v7516, 0.0
    %v7549 = vmax.f32 %v7519, 0.0
    %v7550 = vmax.f32 %v7524, 0.0
    %v7551 = vmax.f32 %v7527, 0.0
    %v7552 = vmax.f32 %v7532, 0.0
    %v7553 = vmax.f32 %v7535, 0.0
    %v7554 = vsel %vm2689, %v7538, 0.0
    %v7555 = vrot.slane %v7554, 4
    %v7556 = vadd.f32 %v7554, %v7555
    %v7557 = vrot.slane %v7556, 2
    %v7558 = vadd.f32 %v7556, %v7557
    %v7559 = vrot.slane %v7558, 1
    %v7560 = vadd.f32 %v7558, %v7559
    %v7561 = vsel %vm2689, %v7546, 0.0
    %v7562 = vrot.slane %v7561, 4
    %v7563 = vadd.f32 %v7561, %v7562
    %v7564 = vrot.slane %v7563, 2
    %v7565 = vadd.f32 %v7563, %v7564
    %v7566 = vrot.slane %v7565, 1
    %v7567 = vadd.f32 %v7565, %v7566
    %v7568 = vadd.f32 %v7560, 0.0
    %v7569 = vadd.f32 %v7567, 0.0
    %v7570 = vsel %vm2689, %v7539, 0.0
    %v7571 = vrot.slane %v7570, 4
    %v7572 = vadd.f32 %v7570, %v7571
    %v7573 = vrot.slane %v7572, 2
    %v7574 = vadd.f32 %v7572, %v7573
    %v7575 = vrot.slane %v7574, 1
    %v7576 = vadd.f32 %v7574, %v7575
    %v7577 = vsel %vm2689, %v7547, 0.0
    %v7578 = vrot.slane %v7577, 4
    %v7579 = vadd.f32 %v7577, %v7578
    %v7580 = vrot.slane %v7579, 2
    %v7581 = vadd.f32 %v7579, %v7580
    %v7582 = vrot.slane %v7581, 1
    %v7583 = vadd.f32 %v7581, %v7582
    %v7584 = vadd.f32 %v7568, %v7576
    %v7585 = vadd.f32 %v7569, %v7583
    %v7586 = vmul.f32 %v7584, 0.25
    %v7587 = vmul.f32 %v7585, 0.25
    %v7588 = vpack.c.bf16 %v7586, %v7586
    %v7589 = vpack.c.bf16 %v7587, %v7587
    %v7592 = vrot.slane %v7538, 2
    %v7593 = vrot.slane %v7546, 2
    %v7596 = vsel %vm2689, %v7592, 0.0
    %v7597 = vrot.slane %v7596, 4
    %v7598 = vadd.f32 %v7596, %v7597
    %v7599 = vrot.slane %v7598, 2
    %v7600 = vadd.f32 %v7598, %v7599
    %v7601 = vrot.slane %v7600, 1
    %v7602 = vadd.f32 %v7600, %v7601
    %v7603 = vsel %vm2689, %v7593, 0.0
    %v7604 = vrot.slane %v7603, 4
    %v7605 = vadd.f32 %v7603, %v7604
    %v7606 = vrot.slane %v7605, 2
    %v7607 = vadd.f32 %v7605, %v7606
    %v7608 = vrot.slane %v7607, 1
    %v7609 = vadd.f32 %v7607, %v7608
    %v7610 = vadd.f32 %v7602, 0.0
    %v7611 = vadd.f32 %v7609, 0.0
    %v7614 = vrot.slane %v7539, 2
    %v7615 = vrot.slane %v7547, 2
    %v7618 = vsel %vm2689, %v7614, 0.0
    %v7619 = vrot.slane %v7618, 4
    %v7620 = vadd.f32 %v7618, %v7619
    %v7621 = vrot.slane %v7620, 2
    %v7622 = vadd.f32 %v7620, %v7621
    %v7623 = vrot.slane %v7622, 1
    %v7624 = vadd.f32 %v7622, %v7623
    %v7625 = vsel %vm2689, %v7615, 0.0
    %v7626 = vrot.slane %v7625, 4
    %v7627 = vadd.f32 %v7625, %v7626
    %v7628 = vrot.slane %v7627, 2
    %v7629 = vadd.f32 %v7627, %v7628
    %v7630 = vrot.slane %v7629, 1
    %v7631 = vadd.f32 %v7629, %v7630
    %v7632 = vadd.f32 %v7610, %v7624
    %v7633 = vadd.f32 %v7611, %v7631
    %v7634 = vmul.f32 %v7632, 0.25
    %v7635 = vmul.f32 %v7633, 0.25
    %v7636 = vpack.c.bf16 %v7634, %v7634
    %v7637 = vpack.c.bf16 %v7635, %v7635
    %v7638 = vrot.slane %v7538, 4
    %v7639 = vrot.slane %v7546, 4
    %v7642 = vsel %vm2689, %v7638, 0.0
    %v7643 = vrot.slane %v7642, 4
    %v7644 = vadd.f32 %v7642, %v7643
    %v7645 = vrot.slane %v7644, 2
    %v7646 = vadd.f32 %v7644, %v7645
    %v7647 = vrot.slane %v7646, 1
    %v7648 = vadd.f32 %v7646, %v7647
    %v7649 = vsel %vm2689, %v7639, 0.0
    %v7650 = vrot.slane %v7649, 4
    %v7651 = vadd.f32 %v7649, %v7650
    %v7652 = vrot.slane %v7651, 2
    %v7653 = vadd.f32 %v7651, %v7652
    %v7654 = vrot.slane %v7653, 1
    %v7655 = vadd.f32 %v7653, %v7654
    %v7656 = vadd.f32 %v7648, 0.0
    %v7657 = vadd.f32 %v7655, 0.0
    %v7658 = vrot.slane %v7539, 4
    %v7659 = vrot.slane %v7547, 4
    %v7662 = vsel %vm2689, %v7658, 0.0
    %v7663 = vrot.slane %v7662, 4
    %v7664 = vadd.f32 %v7662, %v7663
    %v7665 = vrot.slane %v7664, 2
    %v7666 = vadd.f32 %v7664, %v7665
    %v7667 = vrot.slane %v7666, 1
    %v7668 = vadd.f32 %v7666, %v7667
    %v7669 = vsel %vm2689, %v7659, 0.0
    %v7670 = vrot.slane %v7669, 4
    %v7671 = vadd.f32 %v7669, %v7670
    %v7672 = vrot.slane %v7671, 2
    %v7673 = vadd.f32 %v7671, %v7672
    %v7674 = vrot.slane %v7673, 1
    %v7675 = vadd.f32 %v7673, %v7674
    %v7676 = vadd.f32 %v7656, %v7668
    %v7677 = vadd.f32 %v7657, %v7675
    %v7678 = vmul.f32 %v7676, 0.25
    %v7679 = vmul.f32 %v7677, 0.25
    %v7680 = vpack.c.bf16 %v7678, %v7678
    %v7681 = vpack.c.bf16 %v7679, %v7679
    %v7682 = vrot.slane %v7538, 6
    %v7683 = vrot.slane %v7546, 6
    %v7686 = vsel %vm2689, %v7682, 0.0
    %v7687 = vrot.slane %v7686, 4
    %v7688 = vadd.f32 %v7686, %v7687
    %v7689 = vrot.slane %v7688, 2
    %v7690 = vadd.f32 %v7688, %v7689
    %v7691 = vrot.slane %v7690, 1
    %v7692 = vadd.f32 %v7690, %v7691
    %v7693 = vsel %vm2689, %v7683, 0.0
    %v7694 = vrot.slane %v7693, 4
    %v7695 = vadd.f32 %v7693, %v7694
    %v7696 = vrot.slane %v7695, 2
    %v7697 = vadd.f32 %v7695, %v7696
    %v7698 = vrot.slane %v7697, 1
    %v7699 = vadd.f32 %v7697, %v7698
    %v7700 = vadd.f32 %v7692, 0.0
    %v7701 = vadd.f32 %v7699, 0.0
    %v7702 = vrot.slane %v7539, 6
    %v7703 = vrot.slane %v7547, 6
    %v7706 = vsel %vm2689, %v7702, 0.0
    %v7707 = vrot.slane %v7706, 4
    %v7708 = vadd.f32 %v7706, %v7707
    %v7709 = vrot.slane %v7708, 2
    %v7710 = vadd.f32 %v7708, %v7709
    %v7711 = vrot.slane %v7710, 1
    %v7712 = vadd.f32 %v7710, %v7711
    %v7713 = vsel %vm2689, %v7703, 0.0
    %v7714 = vrot.slane %v7713, 4
    %v7715 = vadd.f32 %v7713, %v7714
    %v7716 = vrot.slane %v7715, 2
    %v7717 = vadd.f32 %v7715, %v7716
    %v7718 = vrot.slane %v7717, 1
    %v7719 = vadd.f32 %v7717, %v7718
    %v7720 = vadd.f32 %v7700, %v7712
    %v7721 = vadd.f32 %v7701, %v7719
    %v7722 = vmul.f32 %v7720, 0.25
    %v7723 = vmul.f32 %v7721, 0.25
    %v7724 = vpack.c.bf16 %v7722, %v7722
    %v7725 = vpack.c.bf16 %v7723, %v7723
    %v7726 = vsel %vm2689, %v7540, 0.0
    %v7727 = vrot.slane %v7726, 4
    %v7728 = vadd.f32 %v7726, %v7727
    %v7729 = vrot.slane %v7728, 2
    %v7730 = vadd.f32 %v7728, %v7729
    %v7731 = vrot.slane %v7730, 1
    %v7732 = vadd.f32 %v7730, %v7731
    %v7733 = vsel %vm2689, %v7548, 0.0
    %v7734 = vrot.slane %v7733, 4
    %v7735 = vadd.f32 %v7733, %v7734
    %v7736 = vrot.slane %v7735, 2
    %v7737 = vadd.f32 %v7735, %v7736
    %v7738 = vrot.slane %v7737, 1
    %v7739 = vadd.f32 %v7737, %v7738
    %v7740 = vadd.f32 %v7732, 0.0
    %v7741 = vadd.f32 %v7739, 0.0
    %v7742 = vsel %vm2689, %v7541, 0.0
    %v7743 = vrot.slane %v7742, 4
    %v7744 = vadd.f32 %v7742, %v7743
    %v7745 = vrot.slane %v7744, 2
    %v7746 = vadd.f32 %v7744, %v7745
    %v7747 = vrot.slane %v7746, 1
    %v7748 = vadd.f32 %v7746, %v7747
    %v7749 = vsel %vm2689, %v7549, 0.0
    %v7750 = vrot.slane %v7749, 4
    %v7751 = vadd.f32 %v7749, %v7750
    %v7752 = vrot.slane %v7751, 2
    %v7753 = vadd.f32 %v7751, %v7752
    %v7754 = vrot.slane %v7753, 1
    %v7755 = vadd.f32 %v7753, %v7754
    %v7756 = vadd.f32 %v7740, %v7748
    %v7757 = vadd.f32 %v7741, %v7755
    %v7758 = vmul.f32 %v7756, 0.25
    %v7759 = vmul.f32 %v7757, 0.25
    %v7760 = vpack.c.bf16 %v7758, %v7758
    %v7761 = vpack.c.bf16 %v7759, %v7759
    %v7764 = vrot.slane %v7540, 2
    %v7765 = vrot.slane %v7548, 2
    %v7768 = vsel %vm2689, %v7764, 0.0
    %v7769 = vrot.slane %v7768, 4
    %v7770 = vadd.f32 %v7768, %v7769
    %v7771 = vrot.slane %v7770, 2
    %v7772 = vadd.f32 %v7770, %v7771
    %v7773 = vrot.slane %v7772, 1
    %v7774 = vadd.f32 %v7772, %v7773
    %v7775 = vsel %vm2689, %v7765, 0.0
    %v7776 = vrot.slane %v7775, 4
    %v7777 = vadd.f32 %v7775, %v7776
    %v7778 = vrot.slane %v7777, 2
    %v7779 = vadd.f32 %v7777, %v7778
    %v7780 = vrot.slane %v7779, 1
    %v7781 = vadd.f32 %v7779, %v7780
    %v7782 = vadd.f32 %v7774, 0.0
    %v7783 = vadd.f32 %v7781, 0.0
    %v7786 = vrot.slane %v7541, 2
    %v7787 = vrot.slane %v7549, 2
    %v7790 = vsel %vm2689, %v7786, 0.0
    %v7791 = vrot.slane %v7790, 4
    %v7792 = vadd.f32 %v7790, %v7791
    %v7793 = vrot.slane %v7792, 2
    %v7794 = vadd.f32 %v7792, %v7793
    %v7795 = vrot.slane %v7794, 1
    %v7796 = vadd.f32 %v7794, %v7795
    %v7797 = vsel %vm2689, %v7787, 0.0
    %v7798 = vrot.slane %v7797, 4
    %v7799 = vadd.f32 %v7797, %v7798
    %v7800 = vrot.slane %v7799, 2
    %v7801 = vadd.f32 %v7799, %v7800
    %v7802 = vrot.slane %v7801, 1
    %v7803 = vadd.f32 %v7801, %v7802
    %v7804 = vadd.f32 %v7782, %v7796
    %v7805 = vadd.f32 %v7783, %v7803
    %v7806 = vmul.f32 %v7804, 0.25
    %v7807 = vmul.f32 %v7805, 0.25
    %v7808 = vpack.c.bf16 %v7806, %v7806
    %v7809 = vpack.c.bf16 %v7807, %v7807
    %v7810 = vrot.slane %v7540, 4
    %v7811 = vrot.slane %v7548, 4
    %v7814 = vsel %vm2689, %v7810, 0.0
    %v7815 = vrot.slane %v7814, 4
    %v7816 = vadd.f32 %v7814, %v7815
    %v7817 = vrot.slane %v7816, 2
    %v7818 = vadd.f32 %v7816, %v7817
    %v7819 = vrot.slane %v7818, 1
    %v7820 = vadd.f32 %v7818, %v7819
    %v7821 = vsel %vm2689, %v7811, 0.0
    %v7822 = vrot.slane %v7821, 4
    %v7823 = vadd.f32 %v7821, %v7822
    %v7824 = vrot.slane %v7823, 2
    %v7825 = vadd.f32 %v7823, %v7824
    %v7826 = vrot.slane %v7825, 1
    %v7827 = vadd.f32 %v7825, %v7826
    %v7828 = vadd.f32 %v7820, 0.0
    %v7829 = vadd.f32 %v7827, 0.0
    %v7830 = vrot.slane %v7541, 4
    %v7831 = vrot.slane %v7549, 4
    %v7834 = vsel %vm2689, %v7830, 0.0
    %v7835 = vrot.slane %v7834, 4
    %v7836 = vadd.f32 %v7834, %v7835
    %v7837 = vrot.slane %v7836, 2
    %v7838 = vadd.f32 %v7836, %v7837
    %v7839 = vrot.slane %v7838, 1
    %v7840 = vadd.f32 %v7838, %v7839
    %v7841 = vsel %vm2689, %v7831, 0.0
    %v7842 = vrot.slane %v7841, 4
    %v7843 = vadd.f32 %v7841, %v7842
    %v7844 = vrot.slane %v7843, 2
    %v7845 = vadd.f32 %v7843, %v7844
    %v7846 = vrot.slane %v7845, 1
    %v7847 = vadd.f32 %v7845, %v7846
    %v7848 = vadd.f32 %v7828, %v7840
    %v7849 = vadd.f32 %v7829, %v7847
    %v7850 = vmul.f32 %v7848, 0.25
    %v7851 = vmul.f32 %v7849, 0.25
    %v7852 = vpack.c.bf16 %v7850, %v7850
    %v7853 = vpack.c.bf16 %v7851, %v7851
    %v7854 = vrot.slane %v7540, 6
    %v7855 = vrot.slane %v7548, 6
    %v7858 = vsel %vm2689, %v7854, 0.0
    %v7859 = vrot.slane %v7858, 4
    %v7860 = vadd.f32 %v7858, %v7859
    %v7861 = vrot.slane %v7860, 2
    %v7862 = vadd.f32 %v7860, %v7861
    %v7863 = vrot.slane %v7862, 1
    %v7864 = vadd.f32 %v7862, %v7863
    %v7865 = vsel %vm2689, %v7855, 0.0
    %v7866 = vrot.slane %v7865, 4
    %v7867 = vadd.f32 %v7865, %v7866
    %v7868 = vrot.slane %v7867, 2
    %v7869 = vadd.f32 %v7867, %v7868
    %v7870 = vrot.slane %v7869, 1
    %v7871 = vadd.f32 %v7869, %v7870
    %v7872 = vadd.f32 %v7864, 0.0
    %v7873 = vadd.f32 %v7871, 0.0
    %v7874 = vrot.slane %v7541, 6
    %v7875 = vrot.slane %v7549, 6
    %v7878 = vsel %vm2689, %v7874, 0.0
    %v7879 = vrot.slane %v7878, 4
    %v7880 = vadd.f32 %v7878, %v7879
    %v7881 = vrot.slane %v7880, 2
    %v7882 = vadd.f32 %v7880, %v7881
    %v7883 = vrot.slane %v7882, 1
    %v7884 = vadd.f32 %v7882, %v7883
    %v7885 = vsel %vm2689, %v7875, 0.0
    %v7886 = vrot.slane %v7885, 4
    %v7887 = vadd.f32 %v7885, %v7886
    %v7888 = vrot.slane %v7887, 2
    %v7889 = vadd.f32 %v7887, %v7888
    %v7890 = vrot.slane %v7889, 1
    %v7891 = vadd.f32 %v7889, %v7890
    %v7892 = vadd.f32 %v7872, %v7884
    %v7893 = vadd.f32 %v7873, %v7891
    %v7894 = vmul.f32 %v7892, 0.25
    %v7895 = vmul.f32 %v7893, 0.25
    %v7896 = vpack.c.bf16 %v7894, %v7894
    %v7897 = vpack.c.bf16 %v7895, %v7895
    %v7898 = vsel %vm2689, %v7542, 0.0
    %v7899 = vrot.slane %v7898, 4
    %v7900 = vadd.f32 %v7898, %v7899
    %v7901 = vrot.slane %v7900, 2
    %v7902 = vadd.f32 %v7900, %v7901
    %v7903 = vrot.slane %v7902, 1
    %v7904 = vadd.f32 %v7902, %v7903
    %v7905 = vsel %vm2689, %v7550, 0.0
    %v7906 = vrot.slane %v7905, 4
    %v7907 = vadd.f32 %v7905, %v7906
    %v7908 = vrot.slane %v7907, 2
    %v7909 = vadd.f32 %v7907, %v7908
    %v7910 = vrot.slane %v7909, 1
    %v7911 = vadd.f32 %v7909, %v7910
    %v7912 = vadd.f32 %v7904, 0.0
    %v7913 = vadd.f32 %v7911, 0.0
    %v7914 = vsel %vm2689, %v7543, 0.0
    %v7915 = vrot.slane %v7914, 4
    %v7916 = vadd.f32 %v7914, %v7915
    %v7917 = vrot.slane %v7916, 2
    %v7918 = vadd.f32 %v7916, %v7917
    %v7919 = vrot.slane %v7918, 1
    %v7920 = vadd.f32 %v7918, %v7919
    %v7921 = vsel %vm2689, %v7551, 0.0
    %v7922 = vrot.slane %v7921, 4
    %v7923 = vadd.f32 %v7921, %v7922
    %v7924 = vrot.slane %v7923, 2
    %v7925 = vadd.f32 %v7923, %v7924
    %v7926 = vrot.slane %v7925, 1
    %v7927 = vadd.f32 %v7925, %v7926
    %v7928 = vadd.f32 %v7912, %v7920
    %v7929 = vadd.f32 %v7913, %v7927
    %v7930 = vmul.f32 %v7928, 0.25
    %v7931 = vmul.f32 %v7929, 0.25
    %v7932 = vpack.c.bf16 %v7930, %v7930
    %v7933 = vpack.c.bf16 %v7931, %v7931
    %v7936 = vrot.slane %v7542, 2
    %v7937 = vrot.slane %v7550, 2
    %v7940 = vsel %vm2689, %v7936, 0.0
    %v7941 = vrot.slane %v7940, 4
    %v7942 = vadd.f32 %v7940, %v7941
    %v7943 = vrot.slane %v7942, 2
    %v7944 = vadd.f32 %v7942, %v7943
    %v7945 = vrot.slane %v7944, 1
    %v7946 = vadd.f32 %v7944, %v7945
    %v7947 = vsel %vm2689, %v7937, 0.0
    %v7948 = vrot.slane %v7947, 4
    %v7949 = vadd.f32 %v7947, %v7948
    %v7950 = vrot.slane %v7949, 2
    %v7951 = vadd.f32 %v7949, %v7950
    %v7952 = vrot.slane %v7951, 1
    %v7953 = vadd.f32 %v7951, %v7952
    %v7954 = vadd.f32 %v7946, 0.0
    %v7955 = vadd.f32 %v7953, 0.0
    %v7958 = vrot.slane %v7543, 2
    %v7959 = vrot.slane %v7551, 2
    %v7962 = vsel %vm2689, %v7958, 0.0
    %v7963 = vrot.slane %v7962, 4
    %v7964 = vadd.f32 %v7962, %v7963
    %v7965 = vrot.slane %v7964, 2
    %v7966 = vadd.f32 %v7964, %v7965
    %v7967 = vrot.slane %v7966, 1
    %v7968 = vadd.f32 %v7966, %v7967
    %v7969 = vsel %vm2689, %v7959, 0.0
    %v7970 = vrot.slane %v7969, 4
    %v7971 = vadd.f32 %v7969, %v7970
    %v7972 = vrot.slane %v7971, 2
    %v7973 = vadd.f32 %v7971, %v7972
    %v7974 = vrot.slane %v7973, 1
    %v7975 = vadd.f32 %v7973, %v7974
    %v7976 = vadd.f32 %v7954, %v7968
    %v7977 = vadd.f32 %v7955, %v7975
    %v7978 = vmul.f32 %v7976, 0.25
    %v7979 = vmul.f32 %v7977, 0.25
    %v7980 = vpack.c.bf16 %v7978, %v7978
    %v7981 = vpack.c.bf16 %v7979, %v7979
    %v7982 = vrot.slane %v7542, 4
    %v7983 = vrot.slane %v7550, 4
    %v7986 = vsel %vm2689, %v7982, 0.0
    %v7987 = vrot.slane %v7986, 4
    %v7988 = vadd.f32 %v7986, %v7987
    %v7989 = vrot.slane %v7988, 2
    %v7990 = vadd.f32 %v7988, %v7989
    %v7991 = vrot.slane %v7990, 1
    %v7992 = vadd.f32 %v7990, %v7991
    %v7993 = vsel %vm2689, %v7983, 0.0
    %v7994 = vrot.slane %v7993, 4
    %v7995 = vadd.f32 %v7993, %v7994
    %v7996 = vrot.slane %v7995, 2
    %v7997 = vadd.f32 %v7995, %v7996
    %v7998 = vrot.slane %v7997, 1
    %v7999 = vadd.f32 %v7997, %v7998
    %v8000 = vadd.f32 %v7992, 0.0
    %v8001 = vadd.f32 %v7999, 0.0
    %v8002 = vrot.slane %v7543, 4
    %v8003 = vrot.slane %v7551, 4
    %v8006 = vsel %vm2689, %v8002, 0.0
    %v8007 = vrot.slane %v8006, 4
    %v8008 = vadd.f32 %v8006, %v8007
    %v8009 = vrot.slane %v8008, 2
    %v8010 = vadd.f32 %v8008, %v8009
    %v8011 = vrot.slane %v8010, 1
    %v8012 = vadd.f32 %v8010, %v8011
    %v8013 = vsel %vm2689, %v8003, 0.0
    %v8014 = vrot.slane %v8013, 4
    %v8015 = vadd.f32 %v8013, %v8014
    %v8016 = vrot.slane %v8015, 2
    %v8017 = vadd.f32 %v8015, %v8016
    %v8018 = vrot.slane %v8017, 1
    %v8019 = vadd.f32 %v8017, %v8018
    %v8020 = vadd.f32 %v8000, %v8012
    %v8021 = vadd.f32 %v8001, %v8019
    %v8022 = vmul.f32 %v8020, 0.25
    %v8023 = vmul.f32 %v8021, 0.25
    %v8024 = vpack.c.bf16 %v8022, %v8022
    %v8025 = vpack.c.bf16 %v8023, %v8023
    %v8026 = vrot.slane %v7542, 6
    %v8027 = vrot.slane %v7550, 6
    %v8030 = vsel %vm2689, %v8026, 0.0
    %v8031 = vrot.slane %v8030, 4
    %v8032 = vadd.f32 %v8030, %v8031
    %v8033 = vrot.slane %v8032, 2
    %v8034 = vadd.f32 %v8032, %v8033
    %v8035 = vrot.slane %v8034, 1
    %v8036 = vadd.f32 %v8034, %v8035
    %v8037 = vsel %vm2689, %v8027, 0.0
    %v8038 = vrot.slane %v8037, 4
    %v8039 = vadd.f32 %v8037, %v8038
    %v8040 = vrot.slane %v8039, 2
    %v8041 = vadd.f32 %v8039, %v8040
    %v8042 = vrot.slane %v8041, 1
    %v8043 = vadd.f32 %v8041, %v8042
    %v8044 = vadd.f32 %v8036, 0.0
    %v8045 = vadd.f32 %v8043, 0.0
    %v8046 = vrot.slane %v7543, 6
    %v8047 = vrot.slane %v7551, 6
    %v8050 = vsel %vm2689, %v8046, 0.0
    %v8051 = vrot.slane %v8050, 4
    %v8052 = vadd.f32 %v8050, %v8051
    %v8053 = vrot.slane %v8052, 2
    %v8054 = vadd.f32 %v8052, %v8053
    %v8055 = vrot.slane %v8054, 1
    %v8056 = vadd.f32 %v8054, %v8055
    %v8057 = vsel %vm2689, %v8047, 0.0
    %v8058 = vrot.slane %v8057, 4
    %v8059 = vadd.f32 %v8057, %v8058
    %v8060 = vrot.slane %v8059, 2
    %v8061 = vadd.f32 %v8059, %v8060
    %v8062 = vrot.slane %v8061, 1
    %v8063 = vadd.f32 %v8061, %v8062
    %v8064 = vadd.f32 %v8044, %v8056
    %v8065 = vadd.f32 %v8045, %v8063
    %v8066 = vmul.f32 %v8064, 0.25
    %v8067 = vmul.f32 %v8065, 0.25
    %v8068 = vpack.c.bf16 %v8066, %v8066
    %v8069 = vpack.c.bf16 %v8067, %v8067
    %v8070 = vsel %vm2689, %v7544, 0.0
    %v8071 = vrot.slane %v8070, 4
    %v8072 = vadd.f32 %v8070, %v8071
    %v8073 = vrot.slane %v8072, 2
    %v8074 = vadd.f32 %v8072, %v8073
    %v8075 = vrot.slane %v8074, 1
    %v8076 = vadd.f32 %v8074, %v8075
    %v8077 = vsel %vm2689, %v7552, 0.0
    %v8078 = vrot.slane %v8077, 4
    %v8079 = vadd.f32 %v8077, %v8078
    %v8080 = vrot.slane %v8079, 2
    %v8081 = vadd.f32 %v8079, %v8080
    %v8082 = vrot.slane %v8081, 1
    %v8083 = vadd.f32 %v8081, %v8082
    %v8084 = vadd.f32 %v8076, 0.0
    %v8085 = vadd.f32 %v8083, 0.0
    %v8086 = vsel %vm2689, %v7545, 0.0
    %v8087 = vrot.slane %v8086, 4
    %v8088 = vadd.f32 %v8086, %v8087
    %v8089 = vrot.slane %v8088, 2
    %v8090 = vadd.f32 %v8088, %v8089
    %v8091 = vrot.slane %v8090, 1
    %v8092 = vadd.f32 %v8090, %v8091
    %v8093 = vsel %vm2689, %v7553, 0.0
    %v8094 = vrot.slane %v8093, 4
    %v8095 = vadd.f32 %v8093, %v8094
    %v8096 = vrot.slane %v8095, 2
    %v8097 = vadd.f32 %v8095, %v8096
    %v8098 = vrot.slane %v8097, 1
    %v8099 = vadd.f32 %v8097, %v8098
    %v8100 = vadd.f32 %v8084, %v8092
    %v8101 = vadd.f32 %v8085, %v8099
    %v8102 = vmul.f32 %v8100, 0.25
    %v8103 = vmul.f32 %v8101, 0.25
    %v8104 = vpack.c.bf16 %v8102, %v8102
    %v8105 = vpack.c.bf16 %v8103, %v8103
    %v8108 = vrot.slane %v7544, 2
    %v8109 = vrot.slane %v7552, 2
    %v8112 = vsel %vm2689, %v8108, 0.0
    %v8113 = vrot.slane %v8112, 4
    %v8114 = vadd.f32 %v8112, %v8113
    %v8115 = vrot.slane %v8114, 2
    %v8116 = vadd.f32 %v8114, %v8115
    %v8117 = vrot.slane %v8116, 1
    %v8118 = vadd.f32 %v8116, %v8117
    %v8119 = vsel %vm2689, %v8109, 0.0
    %v8120 = vrot.slane %v8119, 4
    %v8121 = vadd.f32 %v8119, %v8120
    %v8122 = vrot.slane %v8121, 2
    %v8123 = vadd.f32 %v8121, %v8122
    %v8124 = vrot.slane %v8123, 1
    %v8125 = vadd.f32 %v8123, %v8124
    %v8126 = vadd.f32 %v8118, 0.0
    %v8127 = vadd.f32 %v8125, 0.0
    %v8130 = vrot.slane %v7545, 2
    %v8131 = vrot.slane %v7553, 2
    %v8134 = vsel %vm2689, %v8130, 0.0
    %v8135 = vrot.slane %v8134, 4
    %v8136 = vadd.f32 %v8134, %v8135
    %v8137 = vrot.slane %v8136, 2
    %v8138 = vadd.f32 %v8136, %v8137
    %v8139 = vrot.slane %v8138, 1
    %v8140 = vadd.f32 %v8138, %v8139
    %v8141 = vsel %vm2689, %v8131, 0.0
    %v8142 = vrot.slane %v8141, 4
    %v8143 = vadd.f32 %v8141, %v8142
    %v8144 = vrot.slane %v8143, 2
    %v8145 = vadd.f32 %v8143, %v8144
    %v8146 = vrot.slane %v8145, 1
    %v8147 = vadd.f32 %v8145, %v8146
    %v8148 = vadd.f32 %v8126, %v8140
    %v8149 = vadd.f32 %v8127, %v8147
    %v8150 = vmul.f32 %v8148, 0.25
    %v8151 = vmul.f32 %v8149, 0.25
    %v8152 = vpack.c.bf16 %v8150, %v8150
    %v8153 = vpack.c.bf16 %v8151, %v8151
    %v8154 = vrot.slane %v7544, 4
    %v8155 = vrot.slane %v7552, 4
    %v8158 = vsel %vm2689, %v8154, 0.0
    %v8159 = vrot.slane %v8158, 4
    %v8160 = vadd.f32 %v8158, %v8159
    %v8161 = vrot.slane %v8160, 2
    %v8162 = vadd.f32 %v8160, %v8161
    %v8163 = vrot.slane %v8162, 1
    %v8164 = vadd.f32 %v8162, %v8163
    %v8165 = vsel %vm2689, %v8155, 0.0
    %v8166 = vrot.slane %v8165, 4
    %v8167 = vadd.f32 %v8165, %v8166
    %v8168 = vrot.slane %v8167, 2
    %v8169 = vadd.f32 %v8167, %v8168
    %v8170 = vrot.slane %v8169, 1
    %v8171 = vadd.f32 %v8169, %v8170
    %v8172 = vadd.f32 %v8164, 0.0
    %v8173 = vadd.f32 %v8171, 0.0
    %v8174 = vrot.slane %v7545, 4
    %v8175 = vrot.slane %v7553, 4
    %v8178 = vsel %vm2689, %v8174, 0.0
    %v8179 = vrot.slane %v8178, 4
    %v8180 = vadd.f32 %v8178, %v8179
    %v8181 = vrot.slane %v8180, 2
    %v8182 = vadd.f32 %v8180, %v8181
    %v8183 = vrot.slane %v8182, 1
    %v8184 = vadd.f32 %v8182, %v8183
    %v8185 = vsel %vm2689, %v8175, 0.0
    %v8186 = vrot.slane %v8185, 4
    %v8187 = vadd.f32 %v8185, %v8186
    %v8188 = vrot.slane %v8187, 2
    %v8189 = vadd.f32 %v8187, %v8188
    %v8190 = vrot.slane %v8189, 1
    %v8191 = vadd.f32 %v8189, %v8190
    %v8192 = vadd.f32 %v8172, %v8184
    %v8193 = vadd.f32 %v8173, %v8191
    %v8194 = vmul.f32 %v8192, 0.25
    %v8195 = vmul.f32 %v8193, 0.25
    %v8196 = vpack.c.bf16 %v8194, %v8194
    %v8197 = vpack.c.bf16 %v8195, %v8195
    %v8198 = vrot.slane %v7544, 6
    %v8199 = vrot.slane %v7552, 6
    %v8202 = vsel %vm2689, %v8198, 0.0
    %v8203 = vrot.slane %v8202, 4
    %v8204 = vadd.f32 %v8202, %v8203
    %v8205 = vrot.slane %v8204, 2
    %v8206 = vadd.f32 %v8204, %v8205
    %v8207 = vrot.slane %v8206, 1
    %v8208 = vadd.f32 %v8206, %v8207
    %v8209 = vsel %vm2689, %v8199, 0.0
    %v8210 = vrot.slane %v8209, 4
    %v8211 = vadd.f32 %v8209, %v8210
    %v8212 = vrot.slane %v8211, 2
    %v8213 = vadd.f32 %v8211, %v8212
    %v8214 = vrot.slane %v8213, 1
    %v8215 = vadd.f32 %v8213, %v8214
    %v8216 = vadd.f32 %v8208, 0.0
    %v8217 = vadd.f32 %v8215, 0.0
    %v8218 = vrot.slane %v7545, 6
    %v8219 = vrot.slane %v7553, 6
    %v8222 = vsel %vm2689, %v8218, 0.0
    %v8223 = vrot.slane %v8222, 4
    %v8224 = vadd.f32 %v8222, %v8223
    %v8225 = vrot.slane %v8224, 2
    %v8226 = vadd.f32 %v8224, %v8225
    %v8227 = vrot.slane %v8226, 1
    %v8228 = vadd.f32 %v8226, %v8227
    %v8229 = vsel %vm2689, %v8219, 0.0
    %v8230 = vrot.slane %v8229, 4
    %v8231 = vadd.f32 %v8229, %v8230
    %v8232 = vrot.slane %v8231, 2
    %v8233 = vadd.f32 %v8231, %v8232
    %v8234 = vrot.slane %v8233, 1
    %v8235 = vadd.f32 %v8233, %v8234
    %v8236 = vadd.f32 %v8216, %v8228
    %v8237 = vadd.f32 %v8217, %v8235
    %v8238 = vmul.f32 %v8236, 0.25
    %v8239 = vmul.f32 %v8237, 0.25
    %v8240 = vpack.c.bf16 %v8238, %v8238
    %v8241 = vpack.c.bf16 %v8239, %v8239
    %v8244 = vunpack.c.l.b16 %v7588
    %v8245 = vunpack.c.l.b16 %v7589
    %v8246 = vsel %vm3382, %v8245, %v8244
    %v8247 = vpack.c.b16 %v8246, %v8246
    %v8251 = vunpack.c.l.b16 %v7636
    %v8252 = vunpack.c.l.b16 %v7637
    %v8253 = vsel %vm3382, %v8252, %v8251
    %v8254 = vpack.c.b16 %v8253, %v8253
    %v8258 = vunpack.c.l.b16 %v7680
    %v8259 = vunpack.c.l.b16 %v7681
    %v8260 = vsel %vm3382, %v8259, %v8258
    %v8261 = vpack.c.b16 %v8260, %v8260
    %v8265 = vunpack.c.l.b16 %v7724
    %v8266 = vunpack.c.l.b16 %v7725
    %v8267 = vsel %vm3382, %v8266, %v8265
    %v8268 = vpack.c.b16 %v8267, %v8267
    %v8272 = vunpack.c.l.b16 %v7760
    %v8273 = vunpack.c.l.b16 %v7761
    %v8274 = vsel %vm3382, %v8273, %v8272
    %v8275 = vpack.c.b16 %v8274, %v8274
    %v8279 = vunpack.c.l.b16 %v7808
    %v8280 = vunpack.c.l.b16 %v7809
    %v8281 = vsel %vm3382, %v8280, %v8279
    %v8282 = vpack.c.b16 %v8281, %v8281
    %v8286 = vunpack.c.l.b16 %v7852
    %v8287 = vunpack.c.l.b16 %v7853
    %v8288 = vsel %vm3382, %v8287, %v8286
    %v8289 = vpack.c.b16 %v8288, %v8288
    %v8293 = vunpack.c.l.b16 %v7896
    %v8294 = vunpack.c.l.b16 %v7897
    %v8295 = vsel %vm3382, %v8294, %v8293
    %v8296 = vpack.c.b16 %v8295, %v8295
    %v8300 = vunpack.c.l.b16 %v7932
    %v8301 = vunpack.c.l.b16 %v7933
    %v8302 = vsel %vm3382, %v8301, %v8300
    %v8303 = vpack.c.b16 %v8302, %v8302
    %v8307 = vunpack.c.l.b16 %v7980
    %v8308 = vunpack.c.l.b16 %v7981
    %v8309 = vsel %vm3382, %v8308, %v8307
    %v8310 = vpack.c.b16 %v8309, %v8309
    %v8314 = vunpack.c.l.b16 %v8024
    %v8315 = vunpack.c.l.b16 %v8025
    %v8316 = vsel %vm3382, %v8315, %v8314
    %v8317 = vpack.c.b16 %v8316, %v8316
    %v8321 = vunpack.c.l.b16 %v8068
    %v8322 = vunpack.c.l.b16 %v8069
    %v8323 = vsel %vm3382, %v8322, %v8321
    %v8324 = vpack.c.b16 %v8323, %v8323
    %v8328 = vunpack.c.l.b16 %v8104
    %v8329 = vunpack.c.l.b16 %v8105
    %v8330 = vsel %vm3382, %v8329, %v8328
    %v8331 = vpack.c.b16 %v8330, %v8330
    %v8335 = vunpack.c.l.b16 %v8152
    %v8336 = vunpack.c.l.b16 %v8153
    %v8337 = vsel %vm3382, %v8336, %v8335
    %v8338 = vpack.c.b16 %v8337, %v8337
    %v8342 = vunpack.c.l.b16 %v8196
    %v8343 = vunpack.c.l.b16 %v8197
    %v8344 = vsel %vm3382, %v8343, %v8342
    %v8345 = vpack.c.b16 %v8344, %v8344
    %v8349 = vunpack.c.l.b16 %v8240
    %v8350 = vunpack.c.l.b16 %v8241
    %v8351 = vsel %vm3382, %v8350, %v8349
    %v8352 = vpack.c.b16 %v8351, %v8351
    %s8354 = scalar_lea.vmem [#allocation7], 1024
    %v8355 = vld [vmem:[%s8354] sm:$0xf]
    %v8356 = vld [vmem:[%s8354 + $0x4] sm:$0xf]
    %v8357 = vld [vmem:[%s8354 + $0x8] sm:$0xf]
    %v8358 = vld [vmem:[%s8354 + $0xc] sm:$0xf]
    %v8359 = vld [vmem:[%s8354 + $0x10] sm:$0xf]
    %v8360 = vld [vmem:[%s8354 + $0x14] sm:$0xf]
    %v8361 = vld [vmem:[%s8354 + $0x18] sm:$0xf]
    %v8362 = vld [vmem:[%s8354 + $0x1c] sm:$0xf]
    %v8363 = vld [vmem:[%s8354 + $0x20] sm:$0xf]
    %v8364 = vld [vmem:[%s8354 + $0x24] sm:$0xf]
    %v8365 = vld [vmem:[%s8354 + $0x28] sm:$0xf]
    %v8366 = vld [vmem:[%s8354 + $0x2c] sm:$0xf]
    %v8367 = vld [vmem:[%s8354 + $0x30] sm:$0xf]
    %v8368 = vld [vmem:[%s8354 + $0x34] sm:$0xf]
    %v8369 = vld [vmem:[%s8354 + $0x38] sm:$0xf]
    %v8370 = vld [vmem:[%s8354 + $0x3c] sm:$0xf]
    %v8371 = vld [vmem:[%s8354 + $0x40] sm:$0xf]
    %v8372 = vld [vmem:[%s8354 + $0x44] sm:$0xf]
    %v8373 = vld [vmem:[%s8354 + $0x48] sm:$0xf]
    %v8374 = vld [vmem:[%s8354 + $0x4c] sm:$0xf]
    %v8375 = vld [vmem:[%s8354 + $0x50] sm:$0xf]
    %v8376 = vld [vmem:[%s8354 + $0x54] sm:$0xf]
    %v8377 = vld [vmem:[%s8354 + $0x58] sm:$0xf]
    %v8378 = vld [vmem:[%s8354 + $0x5c] sm:$0xf]
    %v8379 = vld [vmem:[%s8354 + $0x60] sm:$0xf]
    %v8380 = vld [vmem:[%s8354 + $0x64] sm:$0xf]
    %v8381 = vld [vmem:[%s8354 + $0x68] sm:$0xf]
    %v8382 = vld [vmem:[%s8354 + $0x6c] sm:$0xf]
    %v8383 = vld [vmem:[%s8354 + $0x70] sm:$0xf]
    %v8384 = vld [vmem:[%s8354 + $0x74] sm:$0xf]
    %v8385 = vld [vmem:[%s8354 + $0x78] sm:$0xf]
    %v8386 = vld [vmem:[%s8354 + $0x7c] sm:$0xf]
    %v8387 = vld [vmem:[%s8354 + $0x80] sm:$0xf]
    %v8388 = vld [vmem:[%s8354 + $0x84] sm:$0xf]
    %v8389 = vld [vmem:[%s8354 + $0x88] sm:$0xf]
    %v8390 = vld [vmem:[%s8354 + $0x8c] sm:$0xf]
    %v8391 = vld [vmem:[%s8354 + $0x90] sm:$0xf]
    %v8392 = vld [vmem:[%s8354 + $0x94] sm:$0xf]
    %v8393 = vld [vmem:[%s8354 + $0x98] sm:$0xf]
    %v8394 = vld [vmem:[%s8354 + $0x9c] sm:$0xf]
    %v8395 = vld [vmem:[%s8354 + $0xa0] sm:$0xf]
    %v8396 = vld [vmem:[%s8354 + $0xa4] sm:$0xf]
    %v8397 = vld [vmem:[%s8354 + $0xa8] sm:$0xf]
    %v8398 = vld [vmem:[%s8354 + $0xac] sm:$0xf]
    %v8399 = vld [vmem:[%s8354 + $0xb0] sm:$0xf]
    %v8400 = vld [vmem:[%s8354 + $0xb4] sm:$0xf]
    %v8401 = vld [vmem:[%s8354 + $0xb8] sm:$0xf]
    %v8402 = vld [vmem:[%s8354 + $0xbc] sm:$0xf]
    %v8403 = vld [vmem:[%s8354 + $0xc0] sm:$0xf]
    %v8404 = vld [vmem:[%s8354 + $0xc4] sm:$0xf]
    %v8405 = vld [vmem:[%s8354 + $0xc8] sm:$0xf]
    %v8406 = vld [vmem:[%s8354 + $0xcc] sm:$0xf]
    %v8407 = vld [vmem:[%s8354 + $0xd0] sm:$0xf]
    %v8408 = vld [vmem:[%s8354 + $0xd4] sm:$0xf]
    %v8409 = vld [vmem:[%s8354 + $0xd8] sm:$0xf]
    %v8410 = vld [vmem:[%s8354 + $0xdc] sm:$0xf]
    %v8411 = vld [vmem:[%s8354 + $0xe0] sm:$0xf]
    %v8412 = vld [vmem:[%s8354 + $0xe4] sm:$0xf]
    %v8413 = vld [vmem:[%s8354 + $0xe8] sm:$0xf]
    %v8414 = vld [vmem:[%s8354 + $0xec] sm:$0xf]
    %v8415 = vld [vmem:[%s8354 + $0xf0] sm:$0xf]
    %v8416 = vld [vmem:[%s8354 + $0xf4] sm:$0xf]
    %v8417 = vld [vmem:[%s8354 + $0xf8] sm:$0xf]
    %v8418 = vld [vmem:[%s8354 + $0xfc] sm:$0xf]
    %v8419 = vld [vmem:[%s8354 + $0x100] sm:$0xf]
    %v8420 = vld [vmem:[%s8354 + $0x104] sm:$0xf]
    %v8421 = vld [vmem:[%s8354 + $0x108] sm:$0xf]
    %v8422 = vld [vmem:[%s8354 + $0x10c] sm:$0xf]
    %v8423 = vld [vmem:[%s8354 + $0x110] sm:$0xf]
    %v8424 = vld [vmem:[%s8354 + $0x114] sm:$0xf]
    %v8425 = vld [vmem:[%s8354 + $0x118] sm:$0xf]
    %v8426 = vld [vmem:[%s8354 + $0x11c] sm:$0xf]
    %v8427 = vld [vmem:[%s8354 + $0x120] sm:$0xf]
    %v8428 = vld [vmem:[%s8354 + $0x124] sm:$0xf]
    %v8429 = vld [vmem:[%s8354 + $0x128] sm:$0xf]
    %v8430 = vld [vmem:[%s8354 + $0x12c] sm:$0xf]
    %v8431 = vld [vmem:[%s8354 + $0x130] sm:$0xf]
    %v8432 = vld [vmem:[%s8354 + $0x134] sm:$0xf]
    %v8433 = vld [vmem:[%s8354 + $0x138] sm:$0xf]
    %v8434 = vld [vmem:[%s8354 + $0x13c] sm:$0xf]
    %v8435 = vld [vmem:[%s8354 + $0x140] sm:$0xf]
    %v8436 = vld [vmem:[%s8354 + $0x144] sm:$0xf]
    %v8437 = vld [vmem:[%s8354 + $0x148] sm:$0xf]
    %v8438 = vld [vmem:[%s8354 + $0x14c] sm:$0xf]
    %v8439 = vld [vmem:[%s8354 + $0x150] sm:$0xf]
    %v8440 = vld [vmem:[%s8354 + $0x154] sm:$0xf]
    %v8441 = vld [vmem:[%s8354 + $0x158] sm:$0xf]
    %v8442 = vld [vmem:[%s8354 + $0x15c] sm:$0xf]
    %v8443 = vld [vmem:[%s8354 + $0x160] sm:$0xf]
    %v8444 = vld [vmem:[%s8354 + $0x164] sm:$0xf]
    %v8445 = vld [vmem:[%s8354 + $0x168] sm:$0xf]
    %v8446 = vld [vmem:[%s8354 + $0x16c] sm:$0xf]
    %v8447 = vld [vmem:[%s8354 + $0x170] sm:$0xf]
    %v8448 = vld [vmem:[%s8354 + $0x174] sm:$0xf]
    %v8449 = vld [vmem:[%s8354 + $0x178] sm:$0xf]
    %v8450 = vld [vmem:[%s8354 + $0x17c] sm:$0xf]
    %v8451 = vld [vmem:[%s8354 + $0x180] sm:$0xf]
    %v8452 = vld [vmem:[%s8354 + $0x184] sm:$0xf]
    %v8453 = vld [vmem:[%s8354 + $0x188] sm:$0xf]
    %v8454 = vld [vmem:[%s8354 + $0x18c] sm:$0xf]
    %v8455 = vld [vmem:[%s8354 + $0x190] sm:$0xf]
    %v8456 = vld [vmem:[%s8354 + $0x194] sm:$0xf]
    %v8457 = vld [vmem:[%s8354 + $0x198] sm:$0xf]
    %v8458 = vld [vmem:[%s8354 + $0x19c] sm:$0xf]
    %v8459 = vld [vmem:[%s8354 + $0x1a0] sm:$0xf]
    %v8460 = vld [vmem:[%s8354 + $0x1a4] sm:$0xf]
    %v8461 = vld [vmem:[%s8354 + $0x1a8] sm:$0xf]
    %v8462 = vld [vmem:[%s8354 + $0x1ac] sm:$0xf]
    %v8463 = vld [vmem:[%s8354 + $0x1b0] sm:$0xf]
    %v8464 = vld [vmem:[%s8354 + $0x1b4] sm:$0xf]
    %v8465 = vld [vmem:[%s8354 + $0x1b8] sm:$0xf]
    %v8466 = vld [vmem:[%s8354 + $0x1bc] sm:$0xf]
    %v8467 = vld [vmem:[%s8354 + $0x1c0] sm:$0xf]
    %v8468 = vld [vmem:[%s8354 + $0x1c4] sm:$0xf]
    %v8469 = vld [vmem:[%s8354 + $0x1c8] sm:$0xf]
    %v8470 = vld [vmem:[%s8354 + $0x1cc] sm:$0xf]
    %v8471 = vld [vmem:[%s8354 + $0x1d0] sm:$0xf]
    %v8472 = vld [vmem:[%s8354 + $0x1d4] sm:$0xf]
    %v8473 = vld [vmem:[%s8354 + $0x1d8] sm:$0xf]
    %v8474 = vld [vmem:[%s8354 + $0x1dc] sm:$0xf]
    %v8475 = vld [vmem:[%s8354 + $0x1e0] sm:$0xf]
    %v8476 = vld [vmem:[%s8354 + $0x1e4] sm:$0xf]
    %v8477 = vld [vmem:[%s8354 + $0x1e8] sm:$0xf]
    %v8478 = vld [vmem:[%s8354 + $0x1ec] sm:$0xf]
    %v8479 = vld [vmem:[%s8354 + $0x1f0] sm:$0xf]
    %v8480 = vld [vmem:[%s8354 + $0x1f4] sm:$0xf]
    %v8481 = vld [vmem:[%s8354 + $0x1f8] sm:$0xf]
    %v8482 = vld [vmem:[%s8354 + $0x1fc] sm:$0xf]
    %v8483 = vld [vmem:[%s8354 + $0x200] sm:$0xf]
    %v8484 = vld [vmem:[%s8354 + $0x204] sm:$0xf]
    %v8485 = vld [vmem:[%s8354 + $0x208] sm:$0xf]
    %v8486 = vld [vmem:[%s8354 + $0x20c] sm:$0xf]
    %v8487 = vld [vmem:[%s8354 + $0x210] sm:$0xf]
    %v8488 = vld [vmem:[%s8354 + $0x214] sm:$0xf]
    %v8489 = vld [vmem:[%s8354 + $0x218] sm:$0xf]
    %v8490 = vld [vmem:[%s8354 + $0x21c] sm:$0xf]
    %v8491 = vld [vmem:[%s8354 + $0x220] sm:$0xf]
    %v8492 = vld [vmem:[%s8354 + $0x224] sm:$0xf]
    %v8493 = vld [vmem:[%s8354 + $0x228] sm:$0xf]
    %v8494 = vld [vmem:[%s8354 + $0x22c] sm:$0xf]
    %v8495 = vld [vmem:[%s8354 + $0x230] sm:$0xf]
    %v8496 = vld [vmem:[%s8354 + $0x234] sm:$0xf]
    %v8497 = vld [vmem:[%s8354 + $0x238] sm:$0xf]
    %v8498 = vld [vmem:[%s8354 + $0x23c] sm:$0xf]
    %v8499 = vld [vmem:[%s8354 + $0x240] sm:$0xf]
    %v8500 = vld [vmem:[%s8354 + $0x244] sm:$0xf]
    %v8501 = vld [vmem:[%s8354 + $0x248] sm:$0xf]
    %v8502 = vld [vmem:[%s8354 + $0x24c] sm:$0xf]
    %v8503 = vld [vmem:[%s8354 + $0x250] sm:$0xf]
    %v8504 = vld [vmem:[%s8354 + $0x254] sm:$0xf]
    %v8505 = vld [vmem:[%s8354 + $0x258] sm:$0xf]
    %v8506 = vld [vmem:[%s8354 + $0x25c] sm:$0xf]
    %v8507 = vld [vmem:[%s8354 + $0x260] sm:$0xf]
    %v8508 = vld [vmem:[%s8354 + $0x264] sm:$0xf]
    %v8509 = vld [vmem:[%s8354 + $0x268] sm:$0xf]
    %v8510 = vld [vmem:[%s8354 + $0x26c] sm:$0xf]
    %v8511 = vld [vmem:[%s8354 + $0x270] sm:$0xf]
    %v8512 = vld [vmem:[%s8354 + $0x274] sm:$0xf]
    %v8513 = vld [vmem:[%s8354 + $0x278] sm:$0xf]
    %v8514 = vld [vmem:[%s8354 + $0x27c] sm:$0xf]
    %v8515 = vld [vmem:[%s8354 + $0x280] sm:$0xf]
    %v8516 = vld [vmem:[%s8354 + $0x284] sm:$0xf]
    %v8517 = vld [vmem:[%s8354 + $0x288] sm:$0xf]
    %v8518 = vld [vmem:[%s8354 + $0x28c] sm:$0xf]
    %v8519 = vld [vmem:[%s8354 + $0x290] sm:$0xf]
    %v8520 = vld [vmem:[%s8354 + $0x294] sm:$0xf]
    %v8521 = vld [vmem:[%s8354 + $0x298] sm:$0xf]
    %v8522 = vld [vmem:[%s8354 + $0x29c] sm:$0xf]
    %v8523 = vld [vmem:[%s8354 + $0x2a0] sm:$0xf]
    %v8524 = vld [vmem:[%s8354 + $0x2a4] sm:$0xf]
    %v8525 = vld [vmem:[%s8354 + $0x2a8] sm:$0xf]
    %v8526 = vld [vmem:[%s8354 + $0x2ac] sm:$0xf]
    %v8527 = vld [vmem:[%s8354 + $0x2b0] sm:$0xf]
    %v8528 = vld [vmem:[%s8354 + $0x2b4] sm:$0xf]
    %v8529 = vld [vmem:[%s8354 + $0x2b8] sm:$0xf]
    %v8530 = vld [vmem:[%s8354 + $0x2bc] sm:$0xf]
    %v8531 = vld [vmem:[%s8354 + $0x2c0] sm:$0xf]
    %v8532 = vld [vmem:[%s8354 + $0x2c4] sm:$0xf]
    %v8533 = vld [vmem:[%s8354 + $0x2c8] sm:$0xf]
    %v8534 = vld [vmem:[%s8354 + $0x2cc] sm:$0xf]
    %v8535 = vld [vmem:[%s8354 + $0x2d0] sm:$0xf]
    %v8536 = vld [vmem:[%s8354 + $0x2d4] sm:$0xf]
    %v8537 = vld [vmem:[%s8354 + $0x2d8] sm:$0xf]
    %v8538 = vld [vmem:[%s8354 + $0x2dc] sm:$0xf]
    %v8539 = vld [vmem:[%s8354 + $0x2e0] sm:$0xf]
    %v8540 = vld [vmem:[%s8354 + $0x2e4] sm:$0xf]
    %v8541 = vld [vmem:[%s8354 + $0x2e8] sm:$0xf]
    %v8542 = vld [vmem:[%s8354 + $0x2ec] sm:$0xf]
    %v8543 = vld [vmem:[%s8354 + $0x2f0] sm:$0xf]
    %v8544 = vld [vmem:[%s8354 + $0x2f4] sm:$0xf]
    %v8545 = vld [vmem:[%s8354 + $0x2f8] sm:$0xf]
    %v8546 = vld [vmem:[%s8354 + $0x2fc] sm:$0xf]
    %v8547 = vld [vmem:[%s8354 + $0x300] sm:$0xf]
    %v8548 = vld [vmem:[%s8354 + $0x304] sm:$0xf]
    %v8549 = vld [vmem:[%s8354 + $0x308] sm:$0xf]
    %v8550 = vld [vmem:[%s8354 + $0x30c] sm:$0xf]
    %v8551 = vld [vmem:[%s8354 + $0x310] sm:$0xf]
    %v8552 = vld [vmem:[%s8354 + $0x314] sm:$0xf]
    %v8553 = vld [vmem:[%s8354 + $0x318] sm:$0xf]
    %v8554 = vld [vmem:[%s8354 + $0x31c] sm:$0xf]
    %v8555 = vld [vmem:[%s8354 + $0x320] sm:$0xf]
    %v8556 = vld [vmem:[%s8354 + $0x324] sm:$0xf]
    %v8557 = vld [vmem:[%s8354 + $0x328] sm:$0xf]
    %v8558 = vld [vmem:[%s8354 + $0x32c] sm:$0xf]
    %v8559 = vld [vmem:[%s8354 + $0x330] sm:$0xf]
    %v8560 = vld [vmem:[%s8354 + $0x334] sm:$0xf]
    %v8561 = vld [vmem:[%s8354 + $0x338] sm:$0xf]
    %v8562 = vld [vmem:[%s8354 + $0x33c] sm:$0xf]
    %v8563 = vld [vmem:[%s8354 + $0x340] sm:$0xf]
    %v8564 = vld [vmem:[%s8354 + $0x344] sm:$0xf]
    %v8565 = vld [vmem:[%s8354 + $0x348] sm:$0xf]
    %v8566 = vld [vmem:[%s8354 + $0x34c] sm:$0xf]
    %v8567 = vld [vmem:[%s8354 + $0x350] sm:$0xf]
    %v8568 = vld [vmem:[%s8354 + $0x354] sm:$0xf]
    %v8569 = vld [vmem:[%s8354 + $0x358] sm:$0xf]
    %v8570 = vld [vmem:[%s8354 + $0x35c] sm:$0xf]
    %v8571 = vld [vmem:[%s8354 + $0x360] sm:$0xf]
    %v8572 = vld [vmem:[%s8354 + $0x364] sm:$0xf]
    %v8573 = vld [vmem:[%s8354 + $0x368] sm:$0xf]
    %v8574 = vld [vmem:[%s8354 + $0x36c] sm:$0xf]
    %v8575 = vld [vmem:[%s8354 + $0x370] sm:$0xf]
    %v8576 = vld [vmem:[%s8354 + $0x374] sm:$0xf]
    %v8577 = vld [vmem:[%s8354 + $0x378] sm:$0xf]
    %v8578 = vld [vmem:[%s8354 + $0x37c] sm:$0xf]
    %v8579 = vld [vmem:[%s8354 + $0x380] sm:$0xf]
    %v8580 = vld [vmem:[%s8354 + $0x384] sm:$0xf]
    %v8581 = vld [vmem:[%s8354 + $0x388] sm:$0xf]
    %v8582 = vld [vmem:[%s8354 + $0x38c] sm:$0xf]
    %v8583 = vld [vmem:[%s8354 + $0x390] sm:$0xf]
    %v8584 = vld [vmem:[%s8354 + $0x394] sm:$0xf]
    %v8585 = vld [vmem:[%s8354 + $0x398] sm:$0xf]
    %v8586 = vld [vmem:[%s8354 + $0x39c] sm:$0xf]
    %v8587 = vld [vmem:[%s8354 + $0x3a0] sm:$0xf]
    %v8588 = vld [vmem:[%s8354 + $0x3a4] sm:$0xf]
    %v8589 = vld [vmem:[%s8354 + $0x3a8] sm:$0xf]
    %v8590 = vld [vmem:[%s8354 + $0x3ac] sm:$0xf]
    %v8591 = vld [vmem:[%s8354 + $0x3b0] sm:$0xf]
    %v8592 = vld [vmem:[%s8354 + $0x3b4] sm:$0xf]
    %v8593 = vld [vmem:[%s8354 + $0x3b8] sm:$0xf]
    %v8594 = vld [vmem:[%s8354 + $0x3bc] sm:$0xf]
    %v8595 = vld [vmem:[%s8354 + $0x3c0] sm:$0xf]
    %v8596 = vld [vmem:[%s8354 + $0x3c4] sm:$0xf]
    %v8597 = vld [vmem:[%s8354 + $0x3c8] sm:$0xf]
    %v8598 = vld [vmem:[%s8354 + $0x3cc] sm:$0xf]
    %v8599 = vld [vmem:[%s8354 + $0x3d0] sm:$0xf]
    %v8600 = vld [vmem:[%s8354 + $0x3d4] sm:$0xf]
    %v8601 = vld [vmem:[%s8354 + $0x3d8] sm:$0xf]
    %v8602 = vld [vmem:[%s8354 + $0x3dc] sm:$0xf]
    %v8603 = vld [vmem:[%s8354 + $0x3e0] sm:$0xf]
    %v8604 = vld [vmem:[%s8354 + $0x3e4] sm:$0xf]
    %v8605 = vld [vmem:[%s8354 + $0x3e8] sm:$0xf]
    %v8606 = vld [vmem:[%s8354 + $0x3ec] sm:$0xf]
    %v8607 = vld [vmem:[%s8354 + $0x3f0] sm:$0xf]
    %v8608 = vld [vmem:[%s8354 + $0x3f4] sm:$0xf]
    %v8609 = vld [vmem:[%s8354 + $0x3f8] sm:$0xf]
    %v8610 = vld [vmem:[%s8354 + $0x3fc] sm:$0xf]
    %s8611 = scalar_lea.vmem %s5, 1
    %v8612 = vld [vmem:[%s8611] sm:$0x1]
    %v8614 = vlaneseq
    %v8615 = vshrl.u32 %v8614, 7
    %v8616 = vsub.s32 0, %v8615
    %v8617 = vrot.slane %v8612, %v8616
    %v8875 = vunpack.c.l.b16 %v8355
    %v8876 = vunpack.c.l.b16 %v8356
    %v8877 = vunpack.c.l.b16 %v8357
    %v8878 = vunpack.c.l.b16 %v8358
    %v8879 = vunpack.c.l.b16 %v8359
    %v8880 = vunpack.c.l.b16 %v8360
    %v8881 = vunpack.c.l.b16 %v8361
    %v8882 = vunpack.c.l.b16 %v8362
    %v8883 = vunpack.c.l.b16 %v8363
    %v8884 = vunpack.c.l.b16 %v8364
    %v8885 = vunpack.c.l.b16 %v8365
    %v8886 = vunpack.c.l.b16 %v8366
    %v8887 = vunpack.c.l.b16 %v8367
    %v8888 = vunpack.c.l.b16 %v8368
    %v8889 = vunpack.c.l.b16 %v8369
    %v8890 = vunpack.c.l.b16 %v8370
    %v8891 = vunpack.c.l.b16 %v8371
    %v8892 = vunpack.c.l.b16 %v8372
    %v8893 = vunpack.c.l.b16 %v8373
    %v8894 = vunpack.c.l.b16 %v8374
    %v8895 = vunpack.c.l.b16 %v8375
    %v8896 = vunpack.c.l.b16 %v8376
    %v8897 = vunpack.c.l.b16 %v8377
    %v8898 = vunpack.c.l.b16 %v8378
    %v8899 = vunpack.c.l.b16 %v8379
    %v8900 = vunpack.c.l.b16 %v8380
    %v8901 = vunpack.c.l.b16 %v8381
    %v8902 = vunpack.c.l.b16 %v8382
    %v8903 = vunpack.c.l.b16 %v8383
    %v8904 = vunpack.c.l.b16 %v8384
    %v8905 = vunpack.c.l.b16 %v8385
    %v8906 = vunpack.c.l.b16 %v8386
    %v8907 = vunpack.c.l.b16 %v8387
    %v8908 = vunpack.c.l.b16 %v8388
    %v8909 = vunpack.c.l.b16 %v8389
    %v8910 = vunpack.c.l.b16 %v8390
    %v8911 = vunpack.c.l.b16 %v8391
    %v8912 = vunpack.c.l.b16 %v8392
    %v8913 = vunpack.c.l.b16 %v8393
    %v8914 = vunpack.c.l.b16 %v8394
    %v8915 = vunpack.c.l.b16 %v8395
    %v8916 = vunpack.c.l.b16 %v8396
    %v8917 = vunpack.c.l.b16 %v8397
    %v8918 = vunpack.c.l.b16 %v8398
    %v8919 = vunpack.c.l.b16 %v8399
    %v8920 = vunpack.c.l.b16 %v8400
    %v8921 = vunpack.c.l.b16 %v8401
    %v8922 = vunpack.c.l.b16 %v8402
    %v8923 = vunpack.c.l.b16 %v8403
    %v8924 = vunpack.c.l.b16 %v8404
    %v8925 = vunpack.c.l.b16 %v8405
    %v8926 = vunpack.c.l.b16 %v8406
    %v8927 = vunpack.c.l.b16 %v8407
    %v8928 = vunpack.c.l.b16 %v8408
    %v8929 = vunpack.c.l.b16 %v8409
    %v8930 = vunpack.c.l.b16 %v8410
    %v8931 = vunpack.c.l.b16 %v8411
    %v8932 = vunpack.c.l.b16 %v8412
    %v8933 = vunpack.c.l.b16 %v8413
    %v8934 = vunpack.c.l.b16 %v8414
    %v8935 = vunpack.c.l.b16 %v8415
    %v8936 = vunpack.c.l.b16 %v8416
    %v8937 = vunpack.c.l.b16 %v8417
    %v8938 = vunpack.c.l.b16 %v8418
    %v8939 = vunpack.c.l.b16 %v8419
    %v8940 = vunpack.c.l.b16 %v8420
    %v8941 = vunpack.c.l.b16 %v8421
    %v8942 = vunpack.c.l.b16 %v8422
    %v8943 = vunpack.c.l.b16 %v8423
    %v8944 = vunpack.c.l.b16 %v8424
    %v8945 = vunpack.c.l.b16 %v8425
    %v8946 = vunpack.c.l.b16 %v8426
    %v8947 = vunpack.c.l.b16 %v8427
    %v8948 = vunpack.c.l.b16 %v8428
    %v8949 = vunpack.c.l.b16 %v8429
    %v8950 = vunpack.c.l.b16 %v8430
    %v8951 = vunpack.c.l.b16 %v8431
    %v8952 = vunpack.c.l.b16 %v8432
    %v8953 = vunpack.c.l.b16 %v8433
    %v8954 = vunpack.c.l.b16 %v8434
    %v8955 = vunpack.c.l.b16 %v8435
    %v8956 = vunpack.c.l.b16 %v8436
    %v8957 = vunpack.c.l.b16 %v8437
    %v8958 = vunpack.c.l.b16 %v8438
    %v8959 = vunpack.c.l.b16 %v8439
    %v8960 = vunpack.c.l.b16 %v8440
    %v8961 = vunpack.c.l.b16 %v8441
    %v8962 = vunpack.c.l.b16 %v8442
    %v8963 = vunpack.c.l.b16 %v8443
    %v8964 = vunpack.c.l.b16 %v8444
    %v8965 = vunpack.c.l.b16 %v8445
    %v8966 = vunpack.c.l.b16 %v8446
    %v8967 = vunpack.c.l.b16 %v8447
    %v8968 = vunpack.c.l.b16 %v8448
    %v8969 = vunpack.c.l.b16 %v8449
    %v8970 = vunpack.c.l.b16 %v8450
    %v8971 = vunpack.c.l.b16 %v8451
    %v8972 = vunpack.c.l.b16 %v8452
    %v8973 = vunpack.c.l.b16 %v8453
    %v8974 = vunpack.c.l.b16 %v8454
    %v8975 = vunpack.c.l.b16 %v8455
    %v8976 = vunpack.c.l.b16 %v8456
    %v8977 = vunpack.c.l.b16 %v8457
    %v8978 = vunpack.c.l.b16 %v8458
    %v8979 = vunpack.c.l.b16 %v8459
    %v8980 = vunpack.c.l.b16 %v8460
    %v8981 = vunpack.c.l.b16 %v8461
    %v8982 = vunpack.c.l.b16 %v8462
    %v8983 = vunpack.c.l.b16 %v8463
    %v8984 = vunpack.c.l.b16 %v8464
    %v8985 = vunpack.c.l.b16 %v8465
    %v8986 = vunpack.c.l.b16 %v8466
    %v8987 = vunpack.c.l.b16 %v8467
    %v8988 = vunpack.c.l.b16 %v8468
    %v8989 = vunpack.c.l.b16 %v8469
    %v8990 = vunpack.c.l.b16 %v8470
    %v8991 = vunpack.c.l.b16 %v8471
    %v8992 = vunpack.c.l.b16 %v8472
    %v8993 = vunpack.c.l.b16 %v8473
    %v8994 = vunpack.c.l.b16 %v8474
    %v8995 = vunpack.c.l.b16 %v8475
    %v8996 = vunpack.c.l.b16 %v8476
    %v8997 = vunpack.c.l.b16 %v8477
    %v8998 = vunpack.c.l.b16 %v8478
    %v8999 = vunpack.c.l.b16 %v8479
    %v9000 = vunpack.c.l.b16 %v8480
    %v9001 = vunpack.c.l.b16 %v8481
    %v9002 = vunpack.c.l.b16 %v8482
    %v9003 = vunpack.c.l.b16 %v8483
    %v9004 = vunpack.c.l.b16 %v8484
    %v9005 = vunpack.c.l.b16 %v8485
    %v9006 = vunpack.c.l.b16 %v8486
    %v9007 = vunpack.c.l.b16 %v8487
    %v9008 = vunpack.c.l.b16 %v8488
    %v9009 = vunpack.c.l.b16 %v8489
    %v9010 = vunpack.c.l.b16 %v8490
    %v9011 = vunpack.c.l.b16 %v8491
    %v9012 = vunpack.c.l.b16 %v8492
    %v9013 = vunpack.c.l.b16 %v8493
    %v9014 = vunpack.c.l.b16 %v8494
    %v9015 = vunpack.c.l.b16 %v8495
    %v9016 = vunpack.c.l.b16 %v8496
    %v9017 = vunpack.c.l.b16 %v8497
    %v9018 = vunpack.c.l.b16 %v8498
    %v9019 = vunpack.c.l.b16 %v8499
    %v9020 = vunpack.c.l.b16 %v8500
    %v9021 = vunpack.c.l.b16 %v8501
    %v9022 = vunpack.c.l.b16 %v8502
    %v9023 = vunpack.c.l.b16 %v8503
    %v9024 = vunpack.c.l.b16 %v8504
    %v9025 = vunpack.c.l.b16 %v8505
    %v9026 = vunpack.c.l.b16 %v8506
    %v9027 = vunpack.c.l.b16 %v8507
    %v9028 = vunpack.c.l.b16 %v8508
    %v9029 = vunpack.c.l.b16 %v8509
    %v9030 = vunpack.c.l.b16 %v8510
    %v9031 = vunpack.c.l.b16 %v8511
    %v9032 = vunpack.c.l.b16 %v8512
    %v9033 = vunpack.c.l.b16 %v8513
    %v9034 = vunpack.c.l.b16 %v8514
    %v9035 = vunpack.c.l.b16 %v8515
    %v9036 = vunpack.c.l.b16 %v8516
    %v9037 = vunpack.c.l.b16 %v8517
    %v9038 = vunpack.c.l.b16 %v8518
    %v9039 = vunpack.c.l.b16 %v8519
    %v9040 = vunpack.c.l.b16 %v8520
    %v9041 = vunpack.c.l.b16 %v8521
    %v9042 = vunpack.c.l.b16 %v8522
    %v9043 = vunpack.c.l.b16 %v8523
    %v9044 = vunpack.c.l.b16 %v8524
    %v9045 = vunpack.c.l.b16 %v8525
    %v9046 = vunpack.c.l.b16 %v8526
    %v9047 = vunpack.c.l.b16 %v8527
    %v9048 = vunpack.c.l.b16 %v8528
    %v9049 = vunpack.c.l.b16 %v8529
    %v9050 = vunpack.c.l.b16 %v8530
    %v9051 = vunpack.c.l.b16 %v8531
    %v9052 = vunpack.c.l.b16 %v8532
    %v9053 = vunpack.c.l.b16 %v8533
    %v9054 = vunpack.c.l.b16 %v8534
    %v9055 = vunpack.c.l.b16 %v8535
    %v9056 = vunpack.c.l.b16 %v8536
    %v9057 = vunpack.c.l.b16 %v8537
    %v9058 = vunpack.c.l.b16 %v8538
    %v9059 = vunpack.c.l.b16 %v8539
    %v9060 = vunpack.c.l.b16 %v8540
    %v9061 = vunpack.c.l.b16 %v8541
    %v9062 = vunpack.c.l.b16 %v8542
    %v9063 = vunpack.c.l.b16 %v8543
    %v9064 = vunpack.c.l.b16 %v8544
    %v9065 = vunpack.c.l.b16 %v8545
    %v9066 = vunpack.c.l.b16 %v8546
    %v9067 = vunpack.c.l.b16 %v8547
    %v9068 = vunpack.c.l.b16 %v8548
    %v9069 = vunpack.c.l.b16 %v8549
    %v9070 = vunpack.c.l.b16 %v8550
    %v9071 = vunpack.c.l.b16 %v8551
    %v9072 = vunpack.c.l.b16 %v8552
    %v9073 = vunpack.c.l.b16 %v8553
    %v9074 = vunpack.c.l.b16 %v8554
    %v9075 = vunpack.c.l.b16 %v8555
    %v9076 = vunpack.c.l.b16 %v8556
    %v9077 = vunpack.c.l.b16 %v8557
    %v9078 = vunpack.c.l.b16 %v8558
    %v9079 = vunpack.c.l.b16 %v8559
    %v9080 = vunpack.c.l.b16 %v8560
    %v9081 = vunpack.c.l.b16 %v8561
    %v9082 = vunpack.c.l.b16 %v8562
    %v9083 = vunpack.c.l.b16 %v8563
    %v9084 = vunpack.c.l.b16 %v8564
    %v9085 = vunpack.c.l.b16 %v8565
    %v9086 = vunpack.c.l.b16 %v8566
    %v9087 = vunpack.c.l.b16 %v8567
    %v9088 = vunpack.c.l.b16 %v8568
    %v9089 = vunpack.c.l.b16 %v8569
    %v9090 = vunpack.c.l.b16 %v8570
    %v9091 = vunpack.c.l.b16 %v8571
    %v9092 = vunpack.c.l.b16 %v8572
    %v9093 = vunpack.c.l.b16 %v8573
    %v9094 = vunpack.c.l.b16 %v8574
    %v9095 = vunpack.c.l.b16 %v8575
    %v9096 = vunpack.c.l.b16 %v8576
    %v9097 = vunpack.c.l.b16 %v8577
    %v9098 = vunpack.c.l.b16 %v8578
    %v9099 = vunpack.c.l.b16 %v8579
    %v9100 = vunpack.c.l.b16 %v8580
    %v9101 = vunpack.c.l.b16 %v8581
    %v9102 = vunpack.c.l.b16 %v8582
    %v9103 = vunpack.c.l.b16 %v8583
    %v9104 = vunpack.c.l.b16 %v8584
    %v9105 = vunpack.c.l.b16 %v8585
    %v9106 = vunpack.c.l.b16 %v8586
    %v9107 = vunpack.c.l.b16 %v8587
    %v9108 = vunpack.c.l.b16 %v8588
    %v9109 = vunpack.c.l.b16 %v8589
    %v9110 = vunpack.c.l.b16 %v8590
    %v9111 = vunpack.c.l.b16 %v8591
    %v9112 = vunpack.c.l.b16 %v8592
    %v9113 = vunpack.c.l.b16 %v8593
    %v9114 = vunpack.c.l.b16 %v8594
    %v9115 = vunpack.c.l.b16 %v8595
    %v9116 = vunpack.c.l.b16 %v8596
    %v9117 = vunpack.c.l.b16 %v8597
    %v9118 = vunpack.c.l.b16 %v8598
    %v9119 = vunpack.c.l.b16 %v8599
    %v9120 = vunpack.c.l.b16 %v8600
    %v9121 = vunpack.c.l.b16 %v8601
    %v9122 = vunpack.c.l.b16 %v8602
    %v9123 = vunpack.c.l.b16 %v8603
    %v9124 = vunpack.c.l.b16 %v8604
    %v9125 = vunpack.c.l.b16 %v8605
    %v9126 = vunpack.c.l.b16 %v8606
    %v9127 = vunpack.c.l.b16 %v8607
    %v9128 = vunpack.c.l.b16 %v8608
    %v9129 = vunpack.c.l.b16 %v8609
    %v9130 = vunpack.c.l.b16 %v8610
    %v9131 = vpack.c.b16 %v8876, %v8875
    %v9132 = vpack.c.b16 %v8878, %v8877
    %v9133 = vpack.c.b16 %v8880, %v8879
    %v9134 = vpack.c.b16 %v8882, %v8881
    %v9135 = vpack.c.b16 %v8884, %v8883
    %v9136 = vpack.c.b16 %v8886, %v8885
    %v9137 = vpack.c.b16 %v8888, %v8887
    %v9138 = vpack.c.b16 %v8890, %v8889
    %v9139 = vpack.c.b16 %v8892, %v8891
    %v9140 = vpack.c.b16 %v8894, %v8893
    %v9141 = vpack.c.b16 %v8896, %v8895
    %v9142 = vpack.c.b16 %v8898, %v8897
    %v9143 = vpack.c.b16 %v8900, %v8899
    %v9144 = vpack.c.b16 %v8902, %v8901
    %v9145 = vpack.c.b16 %v8904, %v8903
    %v9146 = vpack.c.b16 %v8906, %v8905
    %v9147 = vpack.c.b16 %v8908, %v8907
    %v9148 = vpack.c.b16 %v8910, %v8909
    %v9149 = vpack.c.b16 %v8912, %v8911
    %v9150 = vpack.c.b16 %v8914, %v8913
    %v9151 = vpack.c.b16 %v8916, %v8915
    %v9152 = vpack.c.b16 %v8918, %v8917
    %v9153 = vpack.c.b16 %v8920, %v8919
    %v9154 = vpack.c.b16 %v8922, %v8921
    %v9155 = vpack.c.b16 %v8924, %v8923
    %v9156 = vpack.c.b16 %v8926, %v8925
    %v9157 = vpack.c.b16 %v8928, %v8927
    %v9158 = vpack.c.b16 %v8930, %v8929
    %v9159 = vpack.c.b16 %v8932, %v8931
    %v9160 = vpack.c.b16 %v8934, %v8933
    %v9161 = vpack.c.b16 %v8936, %v8935
    %v9162 = vpack.c.b16 %v8938, %v8937
    %v9163 = vpack.c.b16 %v8940, %v8939
    %v9164 = vpack.c.b16 %v8942, %v8941
    %v9165 = vpack.c.b16 %v8944, %v8943
    %v9166 = vpack.c.b16 %v8946, %v8945
    %v9167 = vpack.c.b16 %v8948, %v8947
    %v9168 = vpack.c.b16 %v8950, %v8949
    %v9169 = vpack.c.b16 %v8952, %v8951
    %v9170 = vpack.c.b16 %v8954, %v8953
    %v9171 = vpack.c.b16 %v8956, %v8955
    %v9172 = vpack.c.b16 %v8958, %v8957
    %v9173 = vpack.c.b16 %v8960, %v8959
    %v9174 = vpack.c.b16 %v8962, %v8961
    %v9175 = vpack.c.b16 %v8964, %v8963
    %v9176 = vpack.c.b16 %v8966, %v8965
    %v9177 = vpack.c.b16 %v8968, %v8967
    %v9178 = vpack.c.b16 %v8970, %v8969
    %v9179 = vpack.c.b16 %v8972, %v8971
    %v9180 = vpack.c.b16 %v8974, %v8973
    %v9181 = vpack.c.b16 %v8976, %v8975
    %v9182 = vpack.c.b16 %v8978, %v8977
    %v9183 = vpack.c.b16 %v8980, %v8979
    %v9184 = vpack.c.b16 %v8982, %v8981
    %v9185 = vpack.c.b16 %v8984, %v8983
    %v9186 = vpack.c.b16 %v8986, %v8985
    %v9187 = vpack.c.b16 %v8988, %v8987
    %v9188 = vpack.c.b16 %v8990, %v8989
    %v9189 = vpack.c.b16 %v8992, %v8991
    %v9190 = vpack.c.b16 %v8994, %v8993
    %v9191 = vpack.c.b16 %v8996, %v8995
    %v9192 = vpack.c.b16 %v8998, %v8997
    %v9193 = vpack.c.b16 %v9000, %v8999
    %v9194 = vpack.c.b16 %v9002, %v9001
    %v9195 = vpack.c.b16 %v9004, %v9003
    %v9196 = vpack.c.b16 %v9006, %v9005
    %v9197 = vpack.c.b16 %v9008, %v9007
    %v9198 = vpack.c.b16 %v9010, %v9009
    %v9199 = vpack.c.b16 %v9012, %v9011
    %v9200 = vpack.c.b16 %v9014, %v9013
    %v9201 = vpack.c.b16 %v9016, %v9015
    %v9202 = vpack.c.b16 %v9018, %v9017
    %v9203 = vpack.c.b16 %v9020, %v9019
    %v9204 = vpack.c.b16 %v9022, %v9021
    %v9205 = vpack.c.b16 %v9024, %v9023
    %v9206 = vpack.c.b16 %v9026, %v9025
    %v9207 = vpack.c.b16 %v9028, %v9027
    %v9208 = vpack.c.b16 %v9030, %v9029
    %v9209 = vpack.c.b16 %v9032, %v9031
    %v9210 = vpack.c.b16 %v9034, %v9033
    %v9211 = vpack.c.b16 %v9036, %v9035
    %v9212 = vpack.c.b16 %v9038, %v9037
    %v9213 = vpack.c.b16 %v9040, %v9039
    %v9214 = vpack.c.b16 %v9042, %v9041
    %v9215 = vpack.c.b16 %v9044, %v9043
    %v9216 = vpack.c.b16 %v9046, %v9045
    %v9217 = vpack.c.b16 %v9048, %v9047
    %v9218 = vpack.c.b16 %v9050, %v9049
    %v9219 = vpack.c.b16 %v9052, %v9051
    %v9220 = vpack.c.b16 %v9054, %v9053
    %v9221 = vpack.c.b16 %v9056, %v9055
    %v9222 = vpack.c.b16 %v9058, %v9057
    %v9223 = vpack.c.b16 %v9060, %v9059
    %v9224 = vpack.c.b16 %v9062, %v9061
    %v9225 = vpack.c.b16 %v9064, %v9063
    %v9226 = vpack.c.b16 %v9066, %v9065
    %v9227 = vpack.c.b16 %v9068, %v9067
    %v9228 = vpack.c.b16 %v9070, %v9069
    %v9229 = vpack.c.b16 %v9072, %v9071
    %v9230 = vpack.c.b16 %v9074, %v9073
    %v9231 = vpack.c.b16 %v9076, %v9075
    %v9232 = vpack.c.b16 %v9078, %v9077
    %v9233 = vpack.c.b16 %v9080, %v9079
    %v9234 = vpack.c.b16 %v9082, %v9081
    %v9235 = vpack.c.b16 %v9084, %v9083
    %v9236 = vpack.c.b16 %v9086, %v9085
    %v9237 = vpack.c.b16 %v9088, %v9087
    %v9238 = vpack.c.b16 %v9090, %v9089
    %v9239 = vpack.c.b16 %v9092, %v9091
    %v9240 = vpack.c.b16 %v9094, %v9093
    %v9241 = vpack.c.b16 %v9096, %v9095
    %v9242 = vpack.c.b16 %v9098, %v9097
    %v9243 = vpack.c.b16 %v9100, %v9099
    %v9244 = vpack.c.b16 %v9102, %v9101
    %v9245 = vpack.c.b16 %v9104, %v9103
    %v9246 = vpack.c.b16 %v9106, %v9105
    %v9247 = vpack.c.b16 %v9108, %v9107
    %v9248 = vpack.c.b16 %v9110, %v9109
    %v9249 = vpack.c.b16 %v9112, %v9111
    %v9250 = vpack.c.b16 %v9114, %v9113
    %v9251 = vpack.c.b16 %v9116, %v9115
    %v9252 = vpack.c.b16 %v9118, %v9117
    %v9253 = vpack.c.b16 %v9120, %v9119
    %v9254 = vpack.c.b16 %v9122, %v9121
    %v9255 = vpack.c.b16 %v9124, %v9123
    %v9256 = vpack.c.b16 %v9126, %v9125
    %v9257 = vpack.c.b16 %v9128, %v9127
    %v9258 = vpack.c.b16 %v9130, %v9129
    %9387 = vmatprep.subr.bf16.mxu0 0
    %9388 = vmatpush1.bf16.msra.mxu0 %v9131
    %9389 = vmatprep.subr.bf16.mxu0 0
    %9390 = vmatpush1.bf16.msra.mxu0 %v9132
    %9391 = vmatprep.subr.bf16.mxu0 0
    %9392 = vmatpush1.bf16.msra.mxu0 %v9133
    %9393 = vmatprep.subr.bf16.mxu0 0
    %9394 = vmatpush1.bf16.msra.mxu0 %v9134
    %9395 = vmatprep.subr.bf16.mxu0 0
    %9396 = vmatpush1.bf16.msra.mxu0 %v9135
    %9397 = vmatprep.subr.bf16.mxu0 0
    %9398 = vmatpush1.bf16.msra.mxu0 %v9136
    %9399 = vmatprep.subr.bf16.mxu0 0
    %9400 = vmatpush1.bf16.msra.mxu0 %v9137
    %9401 = vmatprep.subr.bf16.mxu0 0
    %9402 = vmatpush1.bf16.msra.mxu0 %v9138
    %9403 = vmatprep.subr.bf16.mxu0 0
    %9404 = vmatpush1.bf16.msra.mxu0 %v9139
    %9405 = vmatprep.subr.bf16.mxu0 0
    %9406 = vmatpush1.bf16.msra.mxu0 %v9140
    %9407 = vmatprep.subr.bf16.mxu0 0
    %9408 = vmatpush1.bf16.msra.mxu0 %v9141
    %9409 = vmatprep.subr.bf16.mxu0 0
    %9410 = vmatpush1.bf16.msra.mxu0 %v9142
    %9411 = vmatprep.subr.bf16.mxu0 0
    %9412 = vmatpush1.bf16.msra.mxu0 %v9143
    %9413 = vmatprep.subr.bf16.mxu0 0
    %9414 = vmatpush1.bf16.msra.mxu0 %v9144
    %9415 = vmatprep.subr.bf16.mxu0 0
    %9416 = vmatpush1.bf16.msra.mxu0 %v9145
    %9417 = vmatprep.subr.bf16.mxu0 0
    %9418 = vmatpush1.bf16.msra.mxu0 %v9146
    %9419 = vmatprep.mubr.bf16.mxu0 %v8254
    %9420 = vmatmul.mubr.bf16.gmra.mrb[0].mxu0 %v8247
    %v9421 = vpop.f32.mrb[0].mxu0
    %v9422 = vadd.f32 %v8617, %v9421
    %v9423 = vpop.f32.mrb[0].mxu0
    %v9424 = vpop.f32.mrb[0].mxu0
    %v9425 = vpop.f32.mrb[0].mxu0
    %9426 = vdwg.mxu0
    %9427 = vmatprep.subr.bf16.mxu0 0
    %9428 = vmatpush1.bf16.msra.mxu0 %v9147
    %9429 = vmatprep.subr.bf16.mxu0 0
    %9430 = vmatpush1.bf16.msra.mxu0 %v9148
    %9431 = vmatprep.subr.bf16.mxu0 0
    %9432 = vmatpush1.bf16.msra.mxu0 %v9149
    %9433 = vmatprep.subr.bf16.mxu0 0
    %9434 = vmatpush1.bf16.msra.mxu0 %v9150
    %9435 = vmatprep.subr.bf16.mxu0 0
    %9436 = vmatpush1.bf16.msra.mxu0 %v9151
    %9437 = vmatprep.subr.bf16.mxu0 0
    %9438 = vmatpush1.bf16.msra.mxu0 %v9152
    %9439 = vmatprep.subr.bf16.mxu0 0
    %9440 = vmatpush1.bf16.msra.mxu0 %v9153
    %9441 = vmatprep.subr.bf16.mxu0 0
    %9442 = vmatpush1.bf16.msra.mxu0 %v9154
    %9443 = vmatprep.subr.bf16.mxu0 0
    %9444 = vmatpush1.bf16.msra.mxu0 %v9155
    %9445 = vmatprep.subr.bf16.mxu0 0
    %9446 = vmatpush1.bf16.msra.mxu0 %v9156
    %9447 = vmatprep.subr.bf16.mxu0 0
    %9448 = vmatpush1.bf16.msra.mxu0 %v9157
    %9449 = vmatprep.subr.bf16.mxu0 0
    %9450 = vmatpush1.bf16.msra.mxu0 %v9158
    %9451 = vmatprep.subr.bf16.mxu0 0
    %9452 = vmatpush1.bf16.msra.mxu0 %v9159
    %9453 = vmatprep.subr.bf16.mxu0 0
    %9454 = vmatpush1.bf16.msra.mxu0 %v9160
    %9455 = vmatprep.subr.bf16.mxu0 0
    %9456 = vmatpush1.bf16.msra.mxu0 %v9161
    %9457 = vmatprep.subr.bf16.mxu0 0
    %9458 = vmatpush1.bf16.msra.mxu0 %v9162
    %9459 = vmatprep.mubr.bf16.mxu0 %v8268
    %9460 = vmatmul.mubr.bf16.gmra.mrb[0].mxu0 %v8261
    %v9461 = vpop.f32.mrb[0].mxu0
    %v9462 = vadd.f32 %v9422, %v9461
    %v9463 = vpop.f32.mrb[0].mxu0
    %v9464 = vpop.f32.mrb[0].mxu0
    %v9465 = vpop.f32.mrb[0].mxu0
    %9466 = vdwg.mxu0
    %9467 = vmatprep.subr.bf16.mxu0 0
    %9468 = vmatpush1.bf16.msra.mxu0 %v9163
    %9469 = vmatprep.subr.bf16.mxu0 0
    %9470 = vmatpush1.bf16.msra.mxu0 %v9164
    %9471 = vmatprep.subr.bf16.mxu0 0
    %9472 = vmatpush1.bf16.msra.mxu0 %v9165
    %9473 = vmatprep.subr.bf16.mxu0 0
    %9474 = vmatpush1.bf16.msra.mxu0 %v9166
    %9475 = vmatprep.subr.bf16.mxu0 0
    %9476 = vmatpush1.bf16.msra.mxu0 %v9167
    %9477 = vmatprep.subr.bf16.mxu0 0
    %9478 = vmatpush1.bf16.msra.mxu0 %v9168
    %9479 = vmatprep.subr.bf16.mxu0 0
    %9480 = vmatpush1.bf16.msra.mxu0 %v9169
    %9481 = vmatprep.subr.bf16.mxu0 0
    %9482 = vmatpush1.bf16.msra.mxu0 %v9170
    %9483 = vmatprep.subr.bf16.mxu0 0
    %9484 = vmatpush1.bf16.msra.mxu0 %v9171
    %9485 = vmatprep.subr.bf16.mxu0 0
    %9486 = vmatpush1.bf16.msra.mxu0 %v9172
    %9487 = vmatprep.subr.bf16.mxu0 0
    %9488 = vmatpush1.bf16.msra.mxu0 %v9173
    %9489 = vmatprep.subr.bf16.mxu0 0
    %9490 = vmatpush1.bf16.msra.mxu0 %v9174
    %9491 = vmatprep.subr.bf16.mxu0 0
    %9492 = vmatpush1.bf16.msra.mxu0 %v9175
    %9493 = vmatprep.subr.bf16.mxu0 0
    %9494 = vmatpush1.bf16.msra.mxu0 %v9176
    %9495 = vmatprep.subr.bf16.mxu0 0
    %9496 = vmatpush1.bf16.msra.mxu0 %v9177
    %9497 = vmatprep.subr.bf16.mxu0 0
    %9498 = vmatpush1.bf16.msra.mxu0 %v9178
    %9499 = vmatprep.mubr.bf16.mxu0 %v8282
    %9500 = vmatmul.mubr.bf16.gmra.mrb[0].mxu0 %v8275
    %v9501 = vpop.f32.mrb[0].mxu0
    %v9502 = vadd.f32 %v9462, %v9501
    %v9503 = vpop.f32.mrb[0].mxu0
    %v9504 = vpop.f32.mrb[0].mxu0
    %v9505 = vpop.f32.mrb[0].mxu0
    %9506 = vdwg.mxu0
    %9507 = vmatprep.subr.bf16.mxu0 0
    %9508 = vmatpush1.bf16.msra.mxu0 %v9179
    %9509 = vmatprep.subr.bf16.mxu0 0
    %9510 = vmatpush1.bf16.msra.mxu0 %v9180
    %9511 = vmatprep.subr.bf16.mxu0 0
    %9512 = vmatpush1.bf16.msra.mxu0 %v9181
    %9513 = vmatprep.subr.bf16.mxu0 0
    %9514 = vmatpush1.bf16.msra.mxu0 %v9182
    %9515 = vmatprep.subr.bf16.mxu0 0
    %9516 = vmatpush1.bf16.msra.mxu0 %v9183
    %9517 = vmatprep.subr.bf16.mxu0 0
    %9518 = vmatpush1.bf16.msra.mxu0 %v9184
    %9519 = vmatprep.subr.bf16.mxu0 0
    %9520 = vmatpush1.bf16.msra.mxu0 %v9185
    %9521 = vmatprep.subr.bf16.mxu0 0
    %9522 = vmatpush1.bf16.msra.mxu0 %v9186
    %9523 = vmatprep.subr.bf16.mxu0 0
    %9524 = vmatpush1.bf16.msra.mxu0 %v9187
    %9525 = vmatprep.subr.bf16.mxu0 0
    %9526 = vmatpush1.bf16.msra.mxu0 %v9188
    %9527 = vmatprep.subr.bf16.mxu0 0
    %9528 = vmatpush1.bf16.msra.mxu0 %v9189
    %9529 = vmatprep.subr.bf16.mxu0 0
    %9530 = vmatpush1.bf16.msra.mxu0 %v9190
    %9531 = vmatprep.subr.bf16.mxu0 0
    %9532 = vmatpush1.bf16.msra.mxu0 %v9191
    %9533 = vmatprep.subr.bf16.mxu0 0
    %9534 = vmatpush1.bf16.msra.mxu0 %v9192
    %9535 = vmatprep.subr.bf16.mxu0 0
    %9536 = vmatpush1.bf16.msra.mxu0 %v9193
    %9537 = vmatprep.subr.bf16.mxu0 0
    %9538 = vmatpush1.bf16.msra.mxu0 %v9194
    %9539 = vmatprep.mubr.bf16.mxu0 %v8296
    %9540 = vmatmul.mubr.bf16.gmra.mrb[0].mxu0 %v8289
    %v9541 = vpop.f32.mrb[0].mxu0
    %v9542 = vadd.f32 %v9502, %v9541
    %v9543 = vpop.f32.mrb[0].mxu0
    %v9544 = vpop.f32.mrb[0].mxu0
    %v9545 = vpop.f32.mrb[0].mxu0
    %9546 = vdwg.mxu0
    %9547 = vmatprep.subr.bf16.mxu0 0
    %9548 = vmatpush1.bf16.msra.mxu0 %v9195
    %9549 = vmatprep.subr.bf16.mxu0 0
    %9550 = vmatpush1.bf16.msra.mxu0 %v9196
    %9551 = vmatprep.subr.bf16.mxu0 0
    %9552 = vmatpush1.bf16.msra.mxu0 %v9197
    %9553 = vmatprep.subr.bf16.mxu0 0
    %9554 = vmatpush1.bf16.msra.mxu0 %v9198
    %9555 = vmatprep.subr.bf16.mxu0 0
    %9556 = vmatpush1.bf16.msra.mxu0 %v9199
    %9557 = vmatprep.subr.bf16.mxu0 0
    %9558 = vmatpush1.bf16.msra.mxu0 %v9200
    %9559 = vmatprep.subr.bf16.mxu0 0
    %9560 = vmatpush1.bf16.msra.mxu0 %v9201
    %9561 = vmatprep.subr.bf16.mxu0 0
    %9562 = vmatpush1.bf16.msra.mxu0 %v9202
    %9563 = vmatprep.subr.bf16.mxu0 0
    %9564 = vmatpush1.bf16.msra.mxu0 %v9203
    %9565 = vmatprep.subr.bf16.mxu0 0
    %9566 = vmatpush1.bf16.msra.mxu0 %v9204
    %9567 = vmatprep.subr.bf16.mxu0 0
    %9568 = vmatpush1.bf16.msra.mxu0 %v9205
    %9569 = vmatprep.subr.bf16.mxu0 0
    %9570 = vmatpush1.bf16.msra.mxu0 %v9206
    %9571 = vmatprep.subr.bf16.mxu0 0
    %9572 = vmatpush1.bf16.msra.mxu0 %v9207
    %9573 = vmatprep.subr.bf16.mxu0 0
    %9574 = vmatpush1.bf16.msra.mxu0 %v9208
    %9575 = vmatprep.subr.bf16.mxu0 0
    %9576 = vmatpush1.bf16.msra.mxu0 %v9209
    %9577 = vmatprep.subr.bf16.mxu0 0
    %9578 = vmatpush1.bf16.msra.mxu0 %v9210
    %9579 = vmatprep.mubr.bf16.mxu0 %v8310
    %9580 = vmatmul.mubr.bf16.gmra.mrb[0].mxu0 %v8303
    %v9581 = vpop.f32.mrb[0].mxu0
    %v9582 = vadd.f32 %v9542, %v9581
    %v9583 = vpop.f32.mrb[0].mxu0
    %v9584 = vpop.f32.mrb[0].mxu0
    %v9585 = vpop.f32.mrb[0].mxu0
    %9586 = vdwg.mxu0
    %9587 = vmatprep.subr.bf16.mxu0 0
    %9588 = vmatpush1.bf16.msra.mxu0 %v9211
    %9589 = vmatprep.subr.bf16.mxu0 0
    %9590 = vmatpush1.bf16.msra.mxu0 %v9212
    %9591 = vmatprep.subr.bf16.mxu0 0
    %9592 = vmatpush1.bf16.msra.mxu0 %v9213
    %9593 = vmatprep.subr.bf16.mxu0 0
    %9594 = vmatpush1.bf16.msra.mxu0 %v9214
    %9595 = vmatprep.subr.bf16.mxu0 0
    %9596 = vmatpush1.bf16.msra.mxu0 %v9215
    %9597 = vmatprep.subr.bf16.mxu0 0
    %9598 = vmatpush1.bf16.msra.mxu0 %v9216
    %9599 = vmatprep.subr.bf16.mxu0 0
    %9600 = vmatpush1.bf16.msra.mxu0 %v9217
    %9601 = vmatprep.subr.bf16.mxu0 0
    %9602 = vmatpush1.bf16.msra.mxu0 %v9218
    %9603 = vmatprep.subr.bf16.mxu0 0
    %9604 = vmatpush1.bf16.msra.mxu0 %v9219
    %9605 = vmatprep.subr.bf16.mxu0 0
    %9606 = vmatpush1.bf16.msra.mxu0 %v9220
    %9607 = vmatprep.subr.bf16.mxu0 0
    %9608 = vmatpush1.bf16.msra.mxu0 %v9221
    %9609 = vmatprep.subr.bf16.mxu0 0
    %9610 = vmatpush1.bf16.msra.mxu0 %v9222
    %9611 = vmatprep.subr.bf16.mxu0 0
    %9612 = vmatpush1.bf16.msra.mxu0 %v9223
    %9613 = vmatprep.subr.bf16.mxu0 0
    %9614 = vmatpush1.bf16.msra.mxu0 %v9224
    %9615 = vmatprep.subr.bf16.mxu0 0
    %9616 = vmatpush1.bf16.msra.mxu0 %v9225
    %9617 = vmatprep.subr.bf16.mxu0 0
    %9618 = vmatpush1.bf16.msra.mxu0 %v9226
    %9619 = vmatprep.mubr.bf16.mxu0 %v8324
    %9620 = vmatmul.mubr.bf16.gmra.mrb[0].mxu0 %v8317
    %v9621 = vpop.f32.mrb[0].mxu0
    %v9622 = vadd.f32 %v9582, %v9621
    %v9623 = vpop.f32.mrb[0].mxu0
    %v9624 = vpop.f32.mrb[0].mxu0
    %v9625 = vpop.f32.mrb[0].mxu0
    %9626 = vdwg.mxu0
    %9627 = vmatprep.subr.bf16.mxu0 0
    %9628 = vmatpush1.bf16.msra.mxu0 %v9227
    %9629 = vmatprep.subr.bf16.mxu0 0
    %9630 = vmatpush1.bf16.msra.mxu0 %v9228
    %9631 = vmatprep.subr.bf16.mxu0 0
    %9632 = vmatpush1.bf16.msra.mxu0 %v9229
    %9633 = vmatprep.subr.bf16.mxu0 0
    %9634 = vmatpush1.bf16.msra.mxu0 %v9230
    %9635 = vmatprep.subr.bf16.mxu0 0
    %9636 = vmatpush1.bf16.msra.mxu0 %v9231
    %9637 = vmatprep.subr.bf16.mxu0 0
    %9638 = vmatpush1.bf16.msra.mxu0 %v9232
    %9639 = vmatprep.subr.bf16.mxu0 0
    %9640 = vmatpush1.bf16.msra.mxu0 %v9233
    %9641 = vmatprep.subr.bf16.mxu0 0
    %9642 = vmatpush1.bf16.msra.mxu0 %v9234
    %9643 = vmatprep.subr.bf16.mxu0 0
    %9644 = vmatpush1.bf16.msra.mxu0 %v9235
    %9645 = vmatprep.subr.bf16.mxu0 0
    %9646 = vmatpush1.bf16.msra.mxu0 %v9236
    %9647 = vmatprep.subr.bf16.mxu0 0
    %9648 = vmatpush1.bf16.msra.mxu0 %v9237
    %9649 = vmatprep.subr.bf16.mxu0 0
    %9650 = vmatpush1.bf16.msra.mxu0 %v9238
    %9651 = vmatprep.subr.bf16.mxu0 0
    %9652 = vmatpush1.bf16.msra.mxu0 %v9239
    %9653 = vmatprep.subr.bf16.mxu0 0
    %9654 = vmatpush1.bf16.msra.mxu0 %v9240
    %9655 = vmatprep.subr.bf16.mxu0 0
    %9656 = vmatpush1.bf16.msra.mxu0 %v9241
    %9657 = vmatprep.subr.bf16.mxu0 0
    %9658 = vmatpush1.bf16.msra.mxu0 %v9242
    %9659 = vmatprep.mubr.bf16.mxu0 %v8338
    %9660 = vmatmul.mubr.bf16.gmra.mrb[0].mxu0 %v8331
    %v9661 = vpop.f32.mrb[0].mxu0
    %v9662 = vadd.f32 %v9622, %v9661
    %v9663 = vpop.f32.mrb[0].mxu0
    %v9664 = vpop.f32.mrb[0].mxu0
    %v9665 = vpop.f32.mrb[0].mxu0
    %9666 = vdwg.mxu0
    %9667 = vmatprep.subr.bf16.mxu0 0
    %9668 = vmatpush1.bf16.msra.mxu0 %v9243
    %9669 = vmatprep.subr.bf16.mxu0 0
    %9670 = vmatpush1.bf16.msra.mxu0 %v9244
    %9671 = vmatprep.subr.bf16.mxu0 0
    %9672 = vmatpush1.bf16.msra.mxu0 %v9245
    %9673 = vmatprep.subr.bf16.mxu0 0
    %9674 = vmatpush1.bf16.msra.mxu0 %v9246
    %9675 = vmatprep.subr.bf16.mxu0 0
    %9676 = vmatpush1.bf16.msra.mxu0 %v9247
    %9677 = vmatprep.subr.bf16.mxu0 0
    %9678 = vmatpush1.bf16.msra.mxu0 %v9248
    %9679 = vmatprep.subr.bf16.mxu0 0
    %9680 = vmatpush1.bf16.msra.mxu0 %v9249
    %9681 = vmatprep.subr.bf16.mxu0 0
    %9682 = vmatpush1.bf16.msra.mxu0 %v9250
    %9683 = vmatprep.subr.bf16.mxu0 0
    %9684 = vmatpush1.bf16.msra.mxu0 %v9251
    %9685 = vmatprep.subr.bf16.mxu0 0
    %9686 = vmatpush1.bf16.msra.mxu0 %v9252
    %9687 = vmatprep.subr.bf16.mxu0 0
    %9688 = vmatpush1.bf16.msra.mxu0 %v9253
    %9689 = vmatprep.subr.bf16.mxu0 0
    %9690 = vmatpush1.bf16.msra.mxu0 %v9254
    %9691 = vmatprep.subr.bf16.mxu0 0
    %9692 = vmatpush1.bf16.msra.mxu0 %v9255
    %9693 = vmatprep.subr.bf16.mxu0 0
    %9694 = vmatpush1.bf16.msra.mxu0 %v9256
    %9695 = vmatprep.subr.bf16.mxu0 0
    %9696 = vmatpush1.bf16.msra.mxu0 %v9257
    %9697 = vmatprep.subr.bf16.mxu0 0
    %9698 = vmatpush1.bf16.msra.mxu0 %v9258
    %9699 = vmatprep.mubr.bf16.mxu0 %v8352
    %9700 = vmatmul.mubr.bf16.gmra.mrb[0].mxu0 %v8345
    %v9701 = vpop.f32.mrb[0].mxu0
    %v9702 = vadd.f32 %v9662, %v9701
    %v9703 = vpop.f32.mrb[0].mxu0
    %v9704 = vpop.f32.mrb[0].mxu0
    %v9705 = vpop.f32.mrb[0].mxu0
    %9706 = vdwg.mxu0
    %v9707 = vpack.c.bf16 %v9702, %v9702
    %s9708 = scalar_lea.vmem [#allocation9], 64
    %v9709 = vld [vmem:[%s9708] sm:$0xf]
    %v9710 = vld [vmem:[%s9708 + $0x4] sm:$0xf]
    %v9711 = vld [vmem:[%s9708 + $0x8] sm:$0xf]
    %v9712 = vld [vmem:[%s9708 + $0xc] sm:$0xf]
    %v9713 = vld [vmem:[%s9708 + $0x10] sm:$0xf]
    %v9714 = vld [vmem:[%s9708 + $0x14] sm:$0xf]
    %v9715 = vld [vmem:[%s9708 + $0x18] sm:$0xf]
    %v9716 = vld [vmem:[%s9708 + $0x1c] sm:$0xf]
    %v9717 = vld [vmem:[%s9708 + $0x20] sm:$0xf]
    %v9718 = vld [vmem:[%s9708 + $0x24] sm:$0xf]
    %v9719 = vld [vmem:[%s9708 + $0x28] sm:$0xf]
    %v9720 = vld [vmem:[%s9708 + $0x2c] sm:$0xf]
    %v9721 = vld [vmem:[%s9708 + $0x30] sm:$0xf]
    %v9722 = vld [vmem:[%s9708 + $0x34] sm:$0xf]
    %v9723 = vld [vmem:[%s9708 + $0x38] sm:$0xf]
    %v9724 = vld [vmem:[%s9708 + $0x3c] sm:$0xf]
    %s9725 = scalar_lea.vmem %s7, 1
    %v9726 = vld [vmem:[%s9725] sm:$0x1]
    %v9728 = vlaneseq
    %v9729 = vshrl.u32 %v9728, 7
    %v9730 = vsub.s32 0, %v9729
    %v9731 = vrot.slane %v9726, %v9730
    %v9749 = vunpack.c.l.b16 %v9709
    %v9750 = vunpack.c.l.b16 %v9710
    %v9751 = vunpack.c.l.b16 %v9711
    %v9752 = vunpack.c.l.b16 %v9712
    %v9753 = vunpack.c.l.b16 %v9713
    %v9754 = vunpack.c.l.b16 %v9714
    %v9755 = vunpack.c.l.b16 %v9715
    %v9756 = vunpack.c.l.b16 %v9716
    %v9757 = vunpack.c.l.b16 %v9717
    %v9758 = vunpack.c.l.b16 %v9718
    %v9759 = vunpack.c.l.b16 %v9719
    %v9760 = vunpack.c.l.b16 %v9720
    %v9761 = vunpack.c.l.b16 %v9721
    %v9762 = vunpack.c.l.b16 %v9722
    %v9763 = vunpack.c.l.b16 %v9723
    %v9764 = vunpack.c.l.b16 %v9724
    %v9765 = vpack.c.b16 %v9750, %v9749
    %v9766 = vpack.c.b16 %v9752, %v9751
    %v9767 = vpack.c.b16 %v9754, %v9753
    %v9768 = vpack.c.b16 %v9756, %v9755
    %v9769 = vpack.c.b16 %v9758, %v9757
    %v9770 = vpack.c.b16 %v9760, %v9759
    %v9771 = vpack.c.b16 %v9762, %v9761
    %v9772 = vpack.c.b16 %v9764, %v9763
    %9781 = vmatprep.subr.bf16.mxu0 0
    %9782 = vmatpush1.bf16.msra.mxu0 %v9765
    %9783 = vmatprep.subr.bf16.mxu0 0
    %9784 = vmatpush1.bf16.msra.mxu0 %v9766
    %9785 = vmatprep.subr.bf16.mxu0 0
    %9786 = vmatpush1.bf16.msra.mxu0 %v9767
    %9787 = vmatprep.subr.bf16.mxu0 0
    %9788 = vmatpush1.bf16.msra.mxu0 %v9768
    %9789 = vmatprep.subr.bf16.mxu0 0
    %9790 = vmatpush1.bf16.msra.mxu0 %v9769
    %9791 = vmatprep.subr.bf16.mxu0 0
    %9792 = vmatpush1.bf16.msra.mxu0 %v9770
    %9793 = vmatprep.subr.bf16.mxu0 0
    %9794 = vmatpush1.bf16.msra.mxu0 %v9771
    %9795 = vmatprep.subr.bf16.mxu0 0
    %9796 = vmatpush1.bf16.msra.mxu0 %v9772
    %9797 = vmatprep.subr.bf16.mxu0 0
    %9798 = vmatpush1.bf16.msra.mxu0 0
    %9799 = vmatprep.subr.bf16.mxu0 0
    %9800 = vmatpush1.bf16.msra.mxu0 0
    %9801 = vmatprep.subr.bf16.mxu0 0
    %9802 = vmatpush1.bf16.msra.mxu0 0
    %9803 = vmatprep.subr.bf16.mxu0 0
    %9804 = vmatpush1.bf16.msra.mxu0 0
    %9805 = vmatprep.subr.bf16.mxu0 0
    %9806 = vmatpush1.bf16.msra.mxu0 0
    %9807 = vmatprep.subr.bf16.mxu0 0
    %9808 = vmatpush1.bf16.msra.mxu0 0
    %9809 = vmatprep.subr.bf16.mxu0 0
    %9810 = vmatpush1.bf16.msra.mxu0 0
    %9811 = vmatprep.subr.bf16.mxu0 0
    %9812 = vmatpush1.bf16.msra.mxu0 0
    %9813 = vmatprep.mubr.bf16.mxu0 0
    %9814 = vmatmul.mubr.bf16.gmra.mrb[0].mxu0 %v9707
    %v9815 = vpop.f32.mrb[0].mxu0
    %v9816 = vadd.f32 %v9731, %v9815
    %v9817 = vpop.f32.mrb[0].mxu0
    %v9818 = vpop.f32.mrb[0].mxu0
    %v9819 = vpop.f32.mrb[0].mxu0
    %9820 = vdwg.mxu0
    %v9821 = vxor.u32 %v9816, 2147483648
    %v9822 = vmul.f32 %v9821, 1.442695
    %v9823 = vpow.pop %v9822
    %v9824 = vadd.f32 %v9823, 1.0
    %v9825 = vrcp.pop %v9824
    %v9826 = vmul.f32 1.0, %v9825
    %s9827 = scalar_lea.vmem %s8, 2
    %9828 = vst [vmem:[%s9827] sm:$0x3] %v9826
    // Predicated region
    $region54: #{bnn_forward.1} parent=1 // pred_check
      _
    $region55: #{bnn_forward.1} parent=1 // pred_check_branch
      %9830 = sbr.rel (0) target = $region57
    $region56: #{bnn_forward.1} parent=1 // pred_region
      _
    $region57: #{bnn_forward.1} parent=1 // pred_fallthru
      _
    // Predicated region
    $region58: #{bnn_forward.1} parent=1 // pred_check
      _
    $region59: #{bnn_forward.1} parent=1 // pred_check_branch
      %9832 = sbr.rel (0) target = $region61
    $region60: #{bnn_forward.1} parent=1 // pred_region
      _
    $region61: #{bnn_forward.1} parent=1 // pred_fallthru
      _
    %9833 = vsyncpa [#allocation3], 1
    %9834 = vsyncpa [#allocation5], 1
    %9835 = vsyncpa [#allocation8], 1

</llo_original>
